<compile_context>
chip_gen: v6e
topology: v6e:2x2x1
jax: 0.10.0
libtpu: 0.0.40
codegen_flags: <defaults>
</compile_context>

<pallas_src>
import functools

import jax
import jax.numpy as jnp
import numpy as np
from jax.experimental import pallas as pl
from jax.experimental.pallas import tpu as pltpu


# ----------------------------- window helpers ------------------------------
def _gaussian_1d(window_size, sigma):
    xs = np.arange(window_size, dtype=np.float64)
    g = np.exp(-((xs - window_size // 2) ** 2) / (2.0 * sigma ** 2))
    g = g / g.sum()
    return g.astype(np.float32)


def _conv_band_matrix(n, window_size, sigma):
    """B[i, o] = g[i - o + pad] inside the band, else 0 (symmetric).

    (x @ B) along an axis == 1-D cross-correlation with the normalized
    Gaussian and zero padding of window_size//2, i.e. exactly F.conv2d's
    per-axis behaviour for the separable window.
    """
    g = _gaussian_1d(window_size, sigma)
    pad = window_size // 2
    i = np.arange(n)[:, None]
    o = np.arange(n)[None, :]
    d = i - o + pad
    valid = (d >= 0) & (d < window_size)
    b = np.where(valid, g[np.clip(d, 0, window_size - 1)], 0.0)
    return b.astype(np.float32)


def _block_diag_band(n, reps, window_size, sigma):
    """Block-diagonal stack of `reps` copies of the (n, n) band matrix."""
    b = _conv_band_matrix(n, window_size, sigma)
    out = np.zeros((reps * n, reps * n), np.float32)
    for r in range(reps):
        out[r * n:(r + 1) * n, r * n:(r + 1) * n] = b
    return out


def _choose_planes_per_block(p, h, w):
    """Largest divisor of P whose stacked-row block keeps MXU/VMEM happy."""
    best = 1
    for pb in range(2, p + 1):
        if p % pb:
            continue
        r = pb * h
        # rough f32 temporary footprint: ~12 (R, W) arrays + (R, R) block-diag
        approx_bytes = 4 * (12 * r * w + r * r)
        if r <= 512 and approx_bytes <= (6 << 20):
            best = pb
    return best


# --------------------------------- kernel ----------------------------------
def _ssim_block_kernel(img1_ref, img2_ref, bhb_ref, bw_ref, out_ref, *, pb, h, w):
    """One grid step: SSIM map of PB (H, W) planes, reduced over rows."""
    r = pb * h
    x1 = img1_ref[...].astype(jnp.float32).reshape(r, w)   # (PB*H, W)
    x2 = img2_ref[...].astype(jnp.float32).reshape(r, w)   # (PB*H, W)
    bhb = bhb_ref[...]                                      # (R, R) block-diag band
    bw = bw_ref[...]                                        # (W, W) band

    # W-direction blur of all 5 fields of all PB planes in one MXU matmul.
    fields = jnp.concatenate([x1, x2, x1 * x1, x2 * x2, x1 * x2], axis=0)  # (5R, W)
    tw = jnp.dot(fields, bw, preferred_element_type=jnp.float32,
                 precision=jax.lax.Precision.HIGHEST)                       # (5R, W)

    # H-direction blur: block-diagonal band blurs all PB planes at once
    # (zero off-diagonal blocks => no cross-plane bleed).
    def hblur(idx):
        return jnp.dot(bhb, tw[idx * r:(idx + 1) * r, :],
                       preferred_element_type=jnp.float32,
                       precision=jax.lax.Precision.HIGHEST)

    mu1 = hblur(0)
    mu2 = hblur(1)
    e_x1x1 = hblur(2)
    e_x2x2 = hblur(3)
    e_x1x2 = hblur(4)

    mu1_sq = mu1 * mu1
    mu2_sq = mu2 * mu2
    mu1_mu2 = mu1 * mu2
    sigma1_sq = e_x1x1 - mu1_sq
    sigma2_sq = e_x2x2 - mu2_sq
    sigma12 = e_x1x2 - mu1_mu2

    c1 = jnp.float32(0.01 ** 2)
    c2 = jnp.float32(0.03 ** 2)
    ssim_map = ((2.0 * mu1_mu2 + c1) * (2.0 * sigma12 + c2)) / (
        (mu1_sq + mu2_sq + c1) * (sigma1_sq + sigma2_sq + c2))

    # per-plane partial sums kept as lane vectors (reduced to scalars in JAX)
    out_ref[...] = jnp.sum(ssim_map.reshape(pb, h, w), axis=1, keepdims=True)


# --------------------------------- wrapper ---------------------------------
@functools.partial(jax.jit, static_argnames=("window_size", "size_average"))
def ssim(img1, img2, window_size=11, size_average=True):
    """SSIM matching the PyTorch module (window_size=11, sigma=1.5)."""
    n, c, h, w = img1.shape
    assert img2.shape == (n, c, h, w)
    p = n * c

    # free reshapes only — no transpose, no pad, no extra HBM pass
    x1 = img1.reshape(p, h, w).astype(jnp.float32)
    x2 = img2.reshape(p, h, w).astype(jnp.float32)

    pb = _choose_planes_per_block(p, h, w)
    num_blocks = p // pb
    r = pb * h

    bhb = jnp.asarray(_block_diag_band(h, pb, window_size, 1.5))   # (R, R)
    bw = jnp.asarray(_conv_band_matrix(w, window_size, 1.5))       # (W, W)

    kernel = functools.partial(_ssim_block_kernel, pb=pb, h=h, w=w)

    partials = pl.pallas_call(
        kernel,
        out_shape=jax.ShapeDtypeStruct((p, 1, w), jnp.float32),
        grid_spec=pltpu.PrefetchScalarGridSpec(
            num_scalar_prefetch=0,
            grid=(num_blocks,),                                    # PB planes/step
            in_specs=[
                pl.BlockSpec((pb, h, w), lambda i: (i, 0, 0)),     # img1 block
                pl.BlockSpec((pb, h, w), lambda i: (i, 0, 0)),     # img2 block
                pl.BlockSpec((r, r), lambda i: (0, 0)),            # H block-diag band
                pl.BlockSpec((w, w), lambda i: (0, 0)),            # W band matrix
            ],
            out_specs=pl.BlockSpec((pb, 1, w), lambda i: (i, 0, 0)),
        ),
        compiler_params=pltpu.CompilerParams(
            dimension_semantics=("parallel",)),                    # megacore-safe
    )(x1, x2, bhb, bw)

    per_plane = jnp.sum(partials[:, 0, :], axis=-1)                # (P,)
    if size_average:
        return jnp.sum(per_plane) / (n * c * h * w)
    return per_plane.reshape(n, c).sum(axis=-1) / (c * h * w)


# ------------------------------ JAX reference -------------------------------
def _reference_ssim(img1, img2, window_size=11, size_average=True):
    n, c, h, w = img1.shape
    g = jnp.asarray(_gaussian_1d(window_size, 1.5))
    win2d = jnp.outer(g, g)                                        # (ws, ws)
    kernel = jnp.tile(win2d[None, None], (c, 1, 1, 1))             # (C,1,ws,ws)
    pad = window_size // 2

    def conv(x):
        return jax.lax.conv_general_dilated(
            x.astype(jnp.float32), kernel,
            window_strides=(1, 1), padding=[(pad, pad), (pad, pad)],
            dimension_numbers=("NCHW", "OIHW", "NCHW"),
            feature_group_count=c,
            precision=jax.lax.Precision.HIGHEST)

    mu1, mu2 = conv(img1), conv(img2)
    mu1_sq, mu2_sq, mu1_mu2 = mu1 * mu1, mu2 * mu2, mu1 * mu2
    s1 = conv(img1 * img1) - mu1_sq
    s2 = conv(img2 * img2) - mu2_sq
    s12 = conv(img1 * img2) - mu1_mu2
    c1, c2 = 0.01 ** 2, 0.03 ** 2
    m = ((2 * mu1_mu2 + c1) * (2 * s12 + c2)) / (
        (mu1_sq + mu2_sq + c1) * (s1 + s2 + c2))
    if size_average:
        return m.mean()
    return m.mean(axis=(1, 2, 3))


if __name__ == "__main__":
    key = jax.random.PRNGKey(0)
    k1, k2 = jax.random.split(key)

    n, c, h, w = 2, 4, 16, 16
    img1 = jax.random.uniform(k1, (n, c, h, w), jnp.float32)
    img2 = jnp.clip(
        img1 + 0.1 * jax.random.normal(k2, (n, c, h, w), jnp.float32), 0.0, 1.0)

    out = ssim(img1, img2)
    jax.block_until_ready(out)

    ref = _reference_ssim(img1, img2)
    np.testing.assert_allclose(np.asarray(out), np.asarray(ref),
                               rtol=1e-4, atol=1e-4)

    print("KERNEL_OK")
</pallas_src>

<mosaic_0001>
module attributes {stable_mosaic.version = 11 : i64} {
  func.func @_ssim_block_kernel(%arg0: i32, %arg1: memref<8x16x16xf32, #tpu.memory_space<vmem>>, %arg2: memref<8x16x16xf32, #tpu.memory_space<vmem>>, %arg3: memref<128x128xf32, #tpu.memory_space<vmem>>, %arg4: memref<16x16xf32, #tpu.memory_space<vmem>>, %arg5: memref<8x1x16xf32, #tpu.memory_space<vmem>>) attributes {dimension_semantics = [#tpu.dimension_semantics<parallel>], iteration_bounds = array<i64: 1>, scalar_prefetch = 0 : i64, scratch_operands = 0 : i64, tpu.core_type = #tpu.core_type<tc>, window_params = [{transform_indices = @transform_0, window_bounds = array<i64: 8, 16, 16>}, {transform_indices = @transform_1, window_bounds = array<i64: 8, 16, 16>}, {pipeline_mode = #tpu.pipeline_mode<synchronous>, transform_indices = @transform_2, window_bounds = array<i64: 128, 128>}, {pipeline_mode = #tpu.pipeline_mode<synchronous>, transform_indices = @transform_3, window_bounds = array<i64: 16, 16>}, {transform_indices = @transform_4, window_bounds = array<i64: 8, 1, 16>}]} {
    %c0 = arith.constant 0 : index
    %c0_0 = arith.constant 0 : index
    %c0_1 = arith.constant 0 : index
    %0 = vector.load %arg1[%c0, %c0_0, %c0_1] : memref<8x16x16xf32, #tpu.memory_space<vmem>>, vector<8x16x16xf32>
    %1 = vector.shape_cast %0 : vector<8x16x16xf32> to vector<128x16xf32>
    %c0_2 = arith.constant 0 : index
    %c0_3 = arith.constant 0 : index
    %c0_4 = arith.constant 0 : index
    %2 = vector.load %arg2[%c0_2, %c0_3, %c0_4] : memref<8x16x16xf32, #tpu.memory_space<vmem>>, vector<8x16x16xf32>
    %3 = vector.shape_cast %2 : vector<8x16x16xf32> to vector<128x16xf32>
    %c0_5 = arith.constant 0 : index
    %c0_6 = arith.constant 0 : index
    %4 = vector.load %arg3[%c0_5, %c0_6] : memref<128x128xf32, #tpu.memory_space<vmem>>, vector<128x128xf32>
    %c0_7 = arith.constant 0 : index
    %c0_8 = arith.constant 0 : index
    %5 = vector.load %arg4[%c0_7, %c0_8] : memref<16x16xf32, #tpu.memory_space<vmem>>, vector<16x16xf32>
    %6 = arith.mulf %1, %1 : vector<128x16xf32>
    %7 = arith.mulf %3, %3 : vector<128x16xf32>
    %8 = arith.mulf %1, %3 : vector<128x16xf32>
    %9 = tpu.concatenate %1, %3, %6, %7, %8 in 0 : vector<128x16xf32>, vector<128x16xf32>, vector<128x16xf32>, vector<128x16xf32>, vector<128x16xf32> -> vector<640x16xf32>
    %cst = arith.constant dense<0.000000e+00> : vector<640x16xf32>
    %10 = tpu.matmul %9, %5, %cst {dimension_numbers = #tpu.dot_dimension_numbers<[1], [0], [0], [1], [0, 0, 1, 1], [], []>, precision = #tpu.contract_precision<fp32>} : vector<640x16xf32>, vector<16x16xf32>, vector<640x16xf32> -> vector<640x16xf32>
    %11 = vector.extract_strided_slice %10 {offsets = [0, 0], sizes = [128, 16], strides = [1, 1]} : vector<640x16xf32> to vector<128x16xf32>
    %cst_9 = arith.constant dense<0.000000e+00> : vector<128x16xf32>
    %12 = tpu.matmul %4, %11, %cst_9 {dimension_numbers = #tpu.dot_dimension_numbers<[1], [0], [0], [1], [0, 0, 1, 1], [], []>, precision = #tpu.contract_precision<fp32>} : vector<128x128xf32>, vector<128x16xf32>, vector<128x16xf32> -> vector<128x16xf32>
    %13 = vector.extract_strided_slice %10 {offsets = [128, 0], sizes = [128, 16], strides = [1, 1]} : vector<640x16xf32> to vector<128x16xf32>
    %cst_10 = arith.constant dense<0.000000e+00> : vector<128x16xf32>
    %14 = tpu.matmul %4, %13, %cst_10 {dimension_numbers = #tpu.dot_dimension_numbers<[1], [0], [0], [1], [0, 0, 1, 1], [], []>, precision = #tpu.contract_precision<fp32>} : vector<128x128xf32>, vector<128x16xf32>, vector<128x16xf32> -> vector<128x16xf32>
    %15 = vector.extract_strided_slice %10 {offsets = [256, 0], sizes = [128, 16], strides = [1, 1]} : vector<640x16xf32> to vector<128x16xf32>
    %cst_11 = arith.constant dense<0.000000e+00> : vector<128x16xf32>
    %16 = tpu.matmul %4, %15, %cst_11 {dimension_numbers = #tpu.dot_dimension_numbers<[1], [0], [0], [1], [0, 0, 1, 1], [], []>, precision = #tpu.contract_precision<fp32>} : vector<128x128xf32>, vector<128x16xf32>, vector<128x16xf32> -> vector<128x16xf32>
    %17 = vector.extract_strided_slice %10 {offsets = [384, 0], sizes = [128, 16], strides = [1, 1]} : vector<640x16xf32> to vector<128x16xf32>
    %cst_12 = arith.constant dense<0.000000e+00> : vector<128x16xf32>
    %18 = tpu.matmul %4, %17, %cst_12 {dimension_numbers = #tpu.dot_dimension_numbers<[1], [0], [0], [1], [0, 0, 1, 1], [], []>, precision = #tpu.contract_precision<fp32>} : vector<128x128xf32>, vector<128x16xf32>, vector<128x16xf32> -> vector<128x16xf32>
    %19 = vector.extract_strided_slice %10 {offsets = [512, 0], sizes = [128, 16], strides = [1, 1]} : vector<640x16xf32> to vector<128x16xf32>
    %cst_13 = arith.constant dense<0.000000e+00> : vector<128x16xf32>
    %20 = tpu.matmul %4, %19, %cst_13 {dimension_numbers = #tpu.dot_dimension_numbers<[1], [0], [0], [1], [0, 0, 1, 1], [], []>, precision = #tpu.contract_precision<fp32>} : vector<128x128xf32>, vector<128x16xf32>, vector<128x16xf32> -> vector<128x16xf32>
    %21 = arith.mulf %12, %12 : vector<128x16xf32>
    %22 = arith.mulf %14, %14 : vector<128x16xf32>
    %23 = arith.mulf %12, %14 : vector<128x16xf32>
    %24 = arith.subf %16, %21 : vector<128x16xf32>
    %25 = arith.subf %18, %22 : vector<128x16xf32>
    %26 = arith.subf %20, %23 : vector<128x16xf32>
    %cst_14 = arith.constant 2.000000e+00 : f32
    %27 = vector.broadcast %cst_14 : f32 to vector<128x16xf32>
    %28 = arith.mulf %27, %23 : vector<128x16xf32>
    %cst_15 = arith.constant 9.99999974E-5 : f32
    %29 = vector.broadcast %cst_15 : f32 to vector<128x16xf32>
    %30 = arith.addf %28, %29 : vector<128x16xf32>
    %cst_16 = arith.constant 2.000000e+00 : f32
    %31 = vector.broadcast %cst_16 : f32 to vector<128x16xf32>
    %32 = arith.mulf %31, %26 : vector<128x16xf32>
    %cst_17 = arith.constant 8.99999984E-4 : f32
    %33 = vector.broadcast %cst_17 : f32 to vector<128x16xf32>
    %34 = arith.addf %32, %33 : vector<128x16xf32>
    %35 = arith.mulf %30, %34 : vector<128x16xf32>
    %36 = arith.addf %21, %22 : vector<128x16xf32>
    %cst_18 = arith.constant 9.99999974E-5 : f32
    %37 = vector.broadcast %cst_18 : f32 to vector<128x16xf32>
    %38 = arith.addf %36, %37 : vector<128x16xf32>
    %39 = arith.addf %24, %25 : vector<128x16xf32>
    %cst_19 = arith.constant 8.99999984E-4 : f32
    %40 = vector.broadcast %cst_19 : f32 to vector<128x16xf32>
    %41 = arith.addf %39, %40 : vector<128x16xf32>
    %42 = arith.mulf %38, %41 : vector<128x16xf32>
    %43 = arith.divf %35, %42 : vector<128x16xf32>
    %44 = vector.shape_cast %43 : vector<128x16xf32> to vector<8x16x16xf32>
    %cst_20 = arith.constant dense<0.000000e+00> : vector<8x16xf32>
    %45 = vector.multi_reduction <add>, %44, %cst_20 [1] : vector<8x16x16xf32> to vector<8x16xf32>
    %46 = vector.shape_cast %45 : vector<8x16xf32> to vector<8x1x16xf32>
    %c0_21 = arith.constant 0 : index
    %c0_22 = arith.constant 0 : index
    %c0_23 = arith.constant 0 : index
    %47 = vector.load %arg5[%c0_21, %c0_22, %c0_23] : memref<8x1x16xf32, #tpu.memory_space<vmem>>, vector<8x1x16xf32>
    tpu.vector_store %arg5[%c0_21, %c0_22, %c0_23], %46 {strides = array<i32>} : memref<8x1x16xf32, #tpu.memory_space<vmem>>, vector<8x1x16xf32>,
    return
  }
  func.func @transform_0(%arg0: i32) -> (i32, i32, i32) {
    %c0_i32 = arith.constant 0 : i32
    %c0_i32_0 = arith.constant 0 : i32
    %c0_i32_1 = arith.constant 0 : i32
    return %arg0, %c0_i32, %c0_i32_0 : i32, i32, i32
  }
  func.func @transform_1(%arg0: i32) -> (i32, i32, i32) {
    %c0_i32 = arith.constant 0 : i32
    %c0_i32_0 = arith.constant 0 : i32
    %c0_i32_1 = arith.constant 0 : i32
    return %arg0, %c0_i32, %c0_i32_0 : i32, i32, i32
  }
  func.func @transform_2(%arg0: i32) -> (i32, i32) {
    %c0_i32 = arith.constant 0 : i32
    %c0_i32_0 = arith.constant 0 : i32
    %c0_i32_1 = arith.constant 0 : i32
    return %c0_i32, %c0_i32_0 : i32, i32
  }
  func.func @transform_3(%arg0: i32) -> (i32, i32) {
    %c0_i32 = arith.constant 0 : i32
    %c0_i32_0 = arith.constant 0 : i32
    %c0_i32_1 = arith.constant 0 : i32
    return %c0_i32, %c0_i32_0 : i32, i32
  }
  func.func @transform_4(%arg0: i32) -> (i32, i32, i32) {
    %c0_i32 = arith.constant 0 : i32
    %c0_i32_0 = arith.constant 0 : i32
    %c0_i32_1 = arith.constant 0 : i32
    return %arg0, %c0_i32, %c0_i32_0 : i32, i32, i32
  }
}

</mosaic_0001>

<llo_original>
// kernel: ssim.1
$region0: #{ssim.1}
  #allocation0 [shape = 'u32[]', space=smem, size = 0x4, offset = 0x4, fixed_abs, tag = 'smem constant byte address 0x4 - core index']
  #allocation1 [shape = 'u32[144,128]{1,0:T(1,128)}', space=vmem, size = 0x12000, scoped, tag = 'internal scratch']
  %s0 = inlined_call_operand.hbm [shape: f32[8,16,16], index: 0, kind: input, shape index: {}]
  %s1 = inlined_call_operand.hbm [shape: f32[8,16,16], index: 1, kind: input, shape index: {}]
  %s2 = inlined_call_operand.hbm [shape: f32[128,128], index: 2, kind: input, shape index: {}]
  %s3 = inlined_call_operand.hbm [shape: f32[16,16], index: 3, kind: input, shape index: {}]
  %s4 = inlined_call_operand.vmem [shape: f32[8,1,16], index: 4, kind: output, shape index: {}]
  %s5 = sld [smem:[#allocation0]]
  $region42: #{ssim.1} parent=0
    _
  %s7 = ssub.s32 1, %s5
  %s8 = scalar_select 0, %s7, %s5
  $region1: #{ssim.1} parent=0
    #allocation2 [shape = 'u8[65536]{0}', space=vmem, size = 0x10000, scoped, tag = 'input window, operand 0, single buffered']
    #allocation3 [shape = 's32[1]{0}', space=sflag, size = 0x4, scoped, tag = 'scoped memory for ssim.1']
    #allocation4 [shape = 'u8[65536]{0}', space=vmem, size = 0x10000, scoped, tag = 'input window, operand 1, single buffered']
    #allocation5 [shape = 's32[1]{0}', space=sflag, size = 0x4, scoped, tag = 'scoped memory for ssim.1']
    #allocation6 [shape = 'u8[65536]{0}', space=vmem, size = 0x10000, scoped, tag = 'input window, operand 2, single buffered']
    #allocation7 [shape = 'u8[8192]{0}', space=vmem, size = 0x2000, scoped, tag = 'input window, operand 3, single buffered']
    #allocation8 [shape = 's32[1]{0}', space=sflag, size = 0x4, scoped, tag = 'scoped memory for ssim.1']
    %9 = vsyncpa [#allocation3], 0
    %10 = vsyncpa [#allocation5], 0
    %11 = vsyncpa [#allocation8], 0
    // Predicated region
    $region2: #{ssim.1} parent=1 // pred_check
      _
    $region3: #{ssim.1} parent=1 // pred_check_branch
      %13 = sbr.rel (0) target = $region5
    $region4: #{ssim.1} parent=1 // pred_region
      %s15 = ssub.s32 2048, 2048
      %16 = vsyncadd [#allocation3], %s15
      %s17 = sshll.u32 [#allocation2], 4
      %s18 = int_to_ptr.vmem [resolvable:$true] %s17
      %23 = dma.hbm_to_vmem [thread:$0]  %s0, 2048, %s18, [#allocation3], 128, 128, 8
    $region5: #{ssim.1} parent=1 // pred_fallthru
      _
    // Predicated region
    $region6: #{ssim.1} parent=1 // pred_check
      _
    $region7: #{ssim.1} parent=1 // pred_check_branch
      %25 = sbr.rel (0) target = $region9
    $region8: #{ssim.1} parent=1 // pred_region
      %s27 = ssub.s32 2048, 2048
      %28 = vsyncadd [#allocation5], %s27
      %s29 = sshll.u32 [#allocation4], 4
      %s30 = int_to_ptr.vmem [resolvable:$true] %s29
      %35 = dma.hbm_to_vmem [thread:$0]  %s1, 2048, %s30, [#allocation5], 128, 128, 8
    $region9: #{ssim.1} parent=1 // pred_fallthru
      _
    // Predicated region
    $region10: #{ssim.1} parent=1 // pred_check
      _
    $region11: #{ssim.1} parent=1 // pred_check_branch
      %37 = sbr.rel (0) target = $region13
    $region12: #{ssim.1} parent=1 // pred_region
      %s39 = ssub.s32 2048, 2048
      %40 = vsyncadd [#allocation5], %s39
      %s41 = sshll.u32 [#allocation6], 4
      %s42 = int_to_ptr.vmem [resolvable:$true] %s41
      %47 = dma.hbm_to_vmem [thread:$0]  %s2, 2048, %s42, [#allocation5], 128, 128, 8
    $region13: #{ssim.1} parent=1 // pred_fallthru
      _
    // Predicated region
    $region14: #{ssim.1} parent=1 // pred_check
      _
    $region15: #{ssim.1} parent=1 // pred_check_branch
      %49 = sbr.rel (0) target = $region17
    $region16: #{ssim.1} parent=1 // pred_region
      %s51 = ssub.s32 256, 256
      %52 = vsyncadd [#allocation8], %s51
      %s53 = sshll.u32 [#allocation7], 4
      %s54 = int_to_ptr.vmem [resolvable:$true] %s53
      %59 = dma.hbm_to_vmem [thread:$0]  %s3, 256, %s54, [#allocation8], 128, 128, 8
    $region17: #{ssim.1} parent=1 // pred_fallthru
      _
    // Predicated region
    $region18: #{ssim.1} parent=1 // pred_check
      _
    $region19: #{ssim.1} parent=1 // pred_check_branch
      %61 = sbr.rel (0) target = $region21
    $region20: #{ssim.1} parent=1 // pred_region
      %62 = dma.done [#allocation3], 2048
    $region21: #{ssim.1} parent=1 // pred_fallthru
      _
    // Predicated region
    $region22: #{ssim.1} parent=1 // pred_check
      _
    $region23: #{ssim.1} parent=1 // pred_check_branch
      %64 = sbr.rel (0) target = $region25
    $region24: #{ssim.1} parent=1 // pred_region
      %65 = dma.done [#allocation5], 2048
    $region25: #{ssim.1} parent=1 // pred_fallthru
      _
    // Predicated region
    $region26: #{ssim.1} parent=1 // pred_check
      _
    $region27: #{ssim.1} parent=1 // pred_check_branch
      %67 = sbr.rel (0) target = $region29
    $region28: #{ssim.1} parent=1 // pred_region
      %68 = dma.done [#allocation5], 2048
    $region29: #{ssim.1} parent=1 // pred_fallthru
      _
    // Predicated region
    $region30: #{ssim.1} parent=1 // pred_check
      _
    $region31: #{ssim.1} parent=1 // pred_check_branch
      %70 = sbr.rel (0) target = $region33
    $region32: #{ssim.1} parent=1 // pred_region
      %71 = dma.done [#allocation8], 256
    $region33: #{ssim.1} parent=1 // pred_fallthru
      _
    %v72 = vld [vmem:[#allocation2] sm:$0xff]
    %v73 = vld [vmem:[#allocation2 + $0x8] sm:$0xff]
    %v74 = vld [vmem:[#allocation2 + $0x10] sm:$0xff]
    %v75 = vld [vmem:[#allocation2 + $0x18] sm:$0xff]
    %v76 = vld [vmem:[#allocation2 + $0x20] sm:$0xff]
    %v77 = vld [vmem:[#allocation2 + $0x28] sm:$0xff]
    %v78 = vld [vmem:[#allocation2 + $0x30] sm:$0xff]
    %v79 = vld [vmem:[#allocation2 + $0x38] sm:$0xff]
    %v80 = vld [vmem:[#allocation2 + $0x40] sm:$0xff]
    %v81 = vld [vmem:[#allocation2 + $0x48] sm:$0xff]
    %v82 = vld [vmem:[#allocation2 + $0x50] sm:$0xff]
    %v83 = vld [vmem:[#allocation2 + $0x58] sm:$0xff]
    %v84 = vld [vmem:[#allocation2 + $0x60] sm:$0xff]
    %v85 = vld [vmem:[#allocation2 + $0x68] sm:$0xff]
    %v86 = vld [vmem:[#allocation2 + $0x70] sm:$0xff]
    %v87 = vld [vmem:[#allocation2 + $0x78] sm:$0xff]
    %v88 = vld [vmem:[#allocation4] sm:$0xff]
    %v89 = vld [vmem:[#allocation4 + $0x8] sm:$0xff]
    %v90 = vld [vmem:[#allocation4 + $0x10] sm:$0xff]
    %v91 = vld [vmem:[#allocation4 + $0x18] sm:$0xff]
    %v92 = vld [vmem:[#allocation4 + $0x20] sm:$0xff]
    %v93 = vld [vmem:[#allocation4 + $0x28] sm:$0xff]
    %v94 = vld [vmem:[#allocation4 + $0x30] sm:$0xff]
    %v95 = vld [vmem:[#allocation4 + $0x38] sm:$0xff]
    %v96 = vld [vmem:[#allocation4 + $0x40] sm:$0xff]
    %v97 = vld [vmem:[#allocation4 + $0x48] sm:$0xff]
    %v98 = vld [vmem:[#allocation4 + $0x50] sm:$0xff]
    %v99 = vld [vmem:[#allocation4 + $0x58] sm:$0xff]
    %v100 = vld [vmem:[#allocation4 + $0x60] sm:$0xff]
    %v101 = vld [vmem:[#allocation4 + $0x68] sm:$0xff]
    %v102 = vld [vmem:[#allocation4 + $0x70] sm:$0xff]
    %v103 = vld [vmem:[#allocation4 + $0x78] sm:$0xff]
    %v104 = vld [vmem:[#allocation6] sm:$0xff]
    %v105 = vld [vmem:[#allocation6 + $0x8] sm:$0xff]
    %v106 = vld [vmem:[#allocation6 + $0x10] sm:$0xff]
    %v107 = vld [vmem:[#allocation6 + $0x18] sm:$0xff]
    %v108 = vld [vmem:[#allocation6 + $0x20] sm:$0xff]
    %v109 = vld [vmem:[#allocation6 + $0x28] sm:$0xff]
    %v110 = vld [vmem:[#allocation6 + $0x30] sm:$0xff]
    %v111 = vld [vmem:[#allocation6 + $0x38] sm:$0xff]
    %v112 = vld [vmem:[#allocation6 + $0x40] sm:$0xff]
    %v113 = vld [vmem:[#allocation6 + $0x48] sm:$0xff]
    %v114 = vld [vmem:[#allocation6 + $0x50] sm:$0xff]
    %v115 = vld [vmem:[#allocation6 + $0x58] sm:$0xff]
    %v116 = vld [vmem:[#allocation6 + $0x60] sm:$0xff]
    %v117 = vld [vmem:[#allocation6 + $0x68] sm:$0xff]
    %v118 = vld [vmem:[#allocation6 + $0x70] sm:$0xff]
    %v119 = vld [vmem:[#allocation6 + $0x78] sm:$0xff]
    %v120 = vld [vmem:[#allocation7] sm:$0xff]
    %v121 = vld [vmem:[#allocation7 + $0x8] sm:$0xff]
    %v122 = vmul.f32 %v72, %v72
    %v123 = vmul.f32 %v73, %v73
    %v124 = vmul.f32 %v74, %v74
    %v125 = vmul.f32 %v75, %v75
    %v126 = vmul.f32 %v76, %v76
    %v127 = vmul.f32 %v77, %v77
    %v128 = vmul.f32 %v78, %v78
    %v129 = vmul.f32 %v79, %v79
    %v130 = vmul.f32 %v80, %v80
    %v131 = vmul.f32 %v81, %v81
    %v132 = vmul.f32 %v82, %v82
    %v133 = vmul.f32 %v83, %v83
    %v134 = vmul.f32 %v84, %v84
    %v135 = vmul.f32 %v85, %v85
    %v136 = vmul.f32 %v86, %v86
    %v137 = vmul.f32 %v87, %v87
    %v138 = vmul.f32 %v88, %v88
    %v139 = vmul.f32 %v89, %v89
    %v140 = vmul.f32 %v90, %v90
    %v141 = vmul.f32 %v91, %v91
    %v142 = vmul.f32 %v92, %v92
    %v143 = vmul.f32 %v93, %v93
    %v144 = vmul.f32 %v94, %v94
    %v145 = vmul.f32 %v95, %v95
    %v146 = vmul.f32 %v96, %v96
    %v147 = vmul.f32 %v97, %v97
    %v148 = vmul.f32 %v98, %v98
    %v149 = vmul.f32 %v99, %v99
    %v150 = vmul.f32 %v100, %v100
    %v151 = vmul.f32 %v101, %v101
    %v152 = vmul.f32 %v102, %v102
    %v153 = vmul.f32 %v103, %v103
    %v154 = vmul.f32 %v72, %v88
    %v155 = vmul.f32 %v73, %v89
    %v156 = vmul.f32 %v74, %v90
    %v157 = vmul.f32 %v75, %v91
    %v158 = vmul.f32 %v76, %v92
    %v159 = vmul.f32 %v77, %v93
    %v160 = vmul.f32 %v78, %v94
    %v161 = vmul.f32 %v79, %v95
    %v162 = vmul.f32 %v80, %v96
    %v163 = vmul.f32 %v81, %v97
    %v164 = vmul.f32 %v82, %v98
    %v165 = vmul.f32 %v83, %v99
    %v166 = vmul.f32 %v84, %v100
    %v167 = vmul.f32 %v85, %v101
    %v168 = vmul.f32 %v86, %v102
    %v169 = vmul.f32 %v87, %v103
    %vm170 = vcmask 130048
    %v172 = vsel %vm170, %v72, 0
    %v175 = vsel %vm170, %v73, 0
    %v178 = vsel %vm170, %v74, 0
    %v181 = vsel %vm170, %v75, 0
    %v184 = vsel %vm170, %v76, 0
    %v187 = vsel %vm170, %v77, 0
    %v190 = vsel %vm170, %v78, 0
    %v193 = vsel %vm170, %v79, 0
    %v196 = vsel %vm170, %v80, 0
    %v199 = vsel %vm170, %v81, 0
    %v202 = vsel %vm170, %v82, 0
    %v205 = vsel %vm170, %v83, 0
    %v208 = vsel %vm170, %v84, 0
    %v211 = vsel %vm170, %v85, 0
    %v214 = vsel %vm170, %v86, 0
    %v217 = vsel %vm170, %v87, 0
    %v220 = vsel %vm170, %v88, 0
    %v223 = vsel %vm170, %v89, 0
    %v226 = vsel %vm170, %v90, 0
    %v229 = vsel %vm170, %v91, 0
    %v232 = vsel %vm170, %v92, 0
    %v235 = vsel %vm170, %v93, 0
    %v238 = vsel %vm170, %v94, 0
    %v241 = vsel %vm170, %v95, 0
    %v244 = vsel %vm170, %v96, 0
    %v247 = vsel %vm170, %v97, 0
    %v250 = vsel %vm170, %v98, 0
    %v253 = vsel %vm170, %v99, 0
    %v256 = vsel %vm170, %v100, 0
    %v259 = vsel %vm170, %v101, 0
    %v262 = vsel %vm170, %v102, 0
    %v265 = vsel %vm170, %v103, 0
    %v268 = vsel %vm170, %v122, 0
    %v271 = vsel %vm170, %v123, 0
    %v274 = vsel %vm170, %v124, 0
    %v277 = vsel %vm170, %v125, 0
    %v280 = vsel %vm170, %v126, 0
    %v283 = vsel %vm170, %v127, 0
    %v286 = vsel %vm170, %v128, 0
    %v289 = vsel %vm170, %v129, 0
    %v292 = vsel %vm170, %v130, 0
    %v295 = vsel %vm170, %v131, 0
    %v298 = vsel %vm170, %v132, 0
    %v301 = vsel %vm170, %v133, 0
    %v304 = vsel %vm170, %v134, 0
    %v307 = vsel %vm170, %v135, 0
    %v310 = vsel %vm170, %v136, 0
    %v313 = vsel %vm170, %v137, 0
    %v316 = vsel %vm170, %v138, 0
    %v319 = vsel %vm170, %v139, 0
    %v322 = vsel %vm170, %v140, 0
    %v325 = vsel %vm170, %v141, 0
    %v328 = vsel %vm170, %v142, 0
    %v331 = vsel %vm170, %v143, 0
    %v334 = vsel %vm170, %v144, 0
    %v337 = vsel %vm170, %v145, 0
    %v340 = vsel %vm170, %v146, 0
    %v343 = vsel %vm170, %v147, 0
    %v346 = vsel %vm170, %v148, 0
    %v349 = vsel %vm170, %v149, 0
    %v352 = vsel %vm170, %v150, 0
    %v355 = vsel %vm170, %v151, 0
    %v358 = vsel %vm170, %v152, 0
    %v361 = vsel %vm170, %v153, 0
    %v364 = vsel %vm170, %v154, 0
    %v367 = vsel %vm170, %v155, 0
    %v370 = vsel %vm170, %v156, 0
    %v373 = vsel %vm170, %v157, 0
    %v376 = vsel %vm170, %v158, 0
    %v379 = vsel %vm170, %v159, 0
    %v382 = vsel %vm170, %v160, 0
    %v385 = vsel %vm170, %v161, 0
    %v388 = vsel %vm170, %v162, 0
    %v391 = vsel %vm170, %v163, 0
    %v394 = vsel %vm170, %v164, 0
    %v397 = vsel %vm170, %v165, 0
    %v400 = vsel %vm170, %v166, 0
    %v403 = vsel %vm170, %v167, 0
    %v406 = vsel %vm170, %v168, 0
    %v409 = vsel %vm170, %v169, 0
    %411 = vmatprep.subr.mxu0 0.0
    %412 = vmatpush1.msra.mxu0 0.0
    %413 = vmatprep.subr.mxu0 0.0
    %414 = vmatpush1.msra.mxu0 0.0
    %415 = vmatprep.subr.mxu0 0.0
    %416 = vmatpush1.msra.mxu0 0.0
    %417 = vmatprep.subr.mxu0 0.0
    %418 = vmatpush1.msra.mxu0 0.0
    %419 = vmatprep.subr.mxu0 0.0
    %420 = vmatpush1.msra.mxu0 0.0
    %421 = vmatprep.subr.mxu0 0.0
    %422 = vmatpush1.msra.mxu0 0.0
    %423 = vmatprep.subr.mxu0 0.0
    %424 = vmatpush1.msra.mxu0 0.0
    %425 = vmatprep.subr.mxu0 0.0
    %426 = vmatpush1.msra.mxu0 0.0
    %427 = vmatprep.subr.mxu0 0.0
    %428 = vmatpush1.msra.mxu0 0.0
    %429 = vmatprep.subr.mxu0 0.0
    %430 = vmatpush1.msra.mxu0 0.0
    %431 = vmatprep.subr.mxu0 0.0
    %432 = vmatpush1.msra.mxu0 0.0
    %433 = vmatprep.subr.mxu0 0.0
    %434 = vmatpush1.msra.mxu0 0.0
    %435 = vmatprep.subr.mxu0 0.0
    %436 = vmatpush1.msra.mxu0 0.0
    %437 = vmatprep.subr.mxu0 0.0
    %438 = vmatpush1.msra.mxu0 0.0
    %439 = vmatprep.subr.mxu0 0.0
    %v440 = vand.u32 %v121, 4294901760
    %441 = vmatpush1.msra.mxu0 %v440
    %442 = vmatprep.subr.mxu0 0.0
    %v443 = vand.u32 %v120, 4294901760
    %444 = vmatpush1.msra.mxu0 %v443
    %445 = vmatprep.subr.mxu0 0.0
    %446 = vmatpush2.msra.mxu0 0.0
    %447 = vmatprep.subr.mxu0 0.0
    %448 = vmatpush2.msra.mxu0 0.0
    %449 = vmatprep.subr.mxu0 0.0
    %450 = vmatpush2.msra.mxu0 0.0
    %451 = vmatprep.subr.mxu0 0.0
    %452 = vmatpush2.msra.mxu0 0.0
    %453 = vmatprep.subr.mxu0 0.0
    %454 = vmatpush2.msra.mxu0 0.0
    %455 = vmatprep.subr.mxu0 0.0
    %456 = vmatpush2.msra.mxu0 0.0
    %457 = vmatprep.subr.mxu0 0.0
    %458 = vmatpush2.msra.mxu0 0.0
    %459 = vmatprep.subr.mxu0 0.0
    %460 = vmatpush2.msra.mxu0 0.0
    %461 = vmatprep.subr.mxu0 0.0
    %462 = vmatpush2.msra.mxu0 0.0
    %463 = vmatprep.subr.mxu0 0.0
    %464 = vmatpush2.msra.mxu0 0.0
    %465 = vmatprep.subr.mxu0 0.0
    %466 = vmatpush2.msra.mxu0 0.0
    %467 = vmatprep.subr.mxu0 0.0
    %468 = vmatpush2.msra.mxu0 0.0
    %469 = vmatprep.subr.mxu0 0.0
    %470 = vmatpush2.msra.mxu0 0.0
    %471 = vmatprep.subr.mxu0 0.0
    %472 = vmatpush2.msra.mxu0 0.0
    %473 = vmatprep.subr.mxu0 0.0
    %474 = vmatpush2.msra.mxu0 0.0
    %475 = vmatprep.subr.mxu0 0.0
    %476 = vmatpush2.msra.mxu0 0.0
    %477 = vmatprep.mubr.f32.mxu0 0.0
    %v478 = vand.u32 %v172, 4294901760
    %v479 = vsub.f32 %v172, %v478
    %v480 = vand.u32 %v479, 4294901760
    %v481 = vsub.f32 %v479, %v480
    %v482 = vand.u32 %v481, 4294901760
    %483 = vmatmul.mubr.f32.gmra.mxu0 %v482
    %v484 = vpop.f32.mrf.mxu0
    %v485 = vadd.f32 0.0, %v484
    %v486 = vpop.f32.mrf.mxu0
    %487 = vmatprep.mubr.f32.mxu0 0.0
    %v488 = vand.u32 %v175, 4294901760
    %v489 = vsub.f32 %v175, %v488
    %v490 = vand.u32 %v489, 4294901760
    %v491 = vsub.f32 %v489, %v490
    %v492 = vand.u32 %v491, 4294901760
    %493 = vmatmul.mubr.f32.gmra.mxu0 %v492
    %v494 = vpop.f32.mrf.mxu0
    %v495 = vadd.f32 0.0, %v494
    %v496 = vpop.f32.mrf.mxu0
    %497 = vmatprep.mubr.f32.mxu0 0.0
    %v498 = vand.u32 %v178, 4294901760
    %v499 = vsub.f32 %v178, %v498
    %v500 = vand.u32 %v499, 4294901760
    %v501 = vsub.f32 %v499, %v500
    %v502 = vand.u32 %v501, 4294901760
    %503 = vmatmul.mubr.f32.gmra.mxu0 %v502
    %v504 = vpop.f32.mrf.mxu0
    %v505 = vadd.f32 0.0, %v504
    %v506 = vpop.f32.mrf.mxu0
    %507 = vmatprep.mubr.f32.mxu0 0.0
    %v508 = vand.u32 %v181, 4294901760
    %v509 = vsub.f32 %v181, %v508
    %v510 = vand.u32 %v509, 4294901760
    %v511 = vsub.f32 %v509, %v510
    %v512 = vand.u32 %v511, 4294901760
    %513 = vmatmul.mubr.f32.gmra.mxu0 %v512
    %v514 = vpop.f32.mrf.mxu0
    %v515 = vadd.f32 0.0, %v514
    %v516 = vpop.f32.mrf.mxu0
    %517 = vmatprep.mubr.f32.mxu0 0.0
    %v518 = vand.u32 %v184, 4294901760
    %v519 = vsub.f32 %v184, %v518
    %v520 = vand.u32 %v519, 4294901760
    %v521 = vsub.f32 %v519, %v520
    %v522 = vand.u32 %v521, 4294901760
    %523 = vmatmul.mubr.f32.gmra.mxu0 %v522
    %v524 = vpop.f32.mrf.mxu0
    %v525 = vadd.f32 0.0, %v524
    %v526 = vpop.f32.mrf.mxu0
    %527 = vmatprep.mubr.f32.mxu0 0.0
    %v528 = vand.u32 %v187, 4294901760
    %v529 = vsub.f32 %v187, %v528
    %v530 = vand.u32 %v529, 4294901760
    %v531 = vsub.f32 %v529, %v530
    %v532 = vand.u32 %v531, 4294901760
    %533 = vmatmul.mubr.f32.gmra.mxu0 %v532
    %v534 = vpop.f32.mrf.mxu0
    %v535 = vadd.f32 0.0, %v534
    %v536 = vpop.f32.mrf.mxu0
    %537 = vmatprep.mubr.f32.mxu0 0.0
    %v538 = vand.u32 %v190, 4294901760
    %v539 = vsub.f32 %v190, %v538
    %v540 = vand.u32 %v539, 4294901760
    %v541 = vsub.f32 %v539, %v540
    %v542 = vand.u32 %v541, 4294901760
    %543 = vmatmul.mubr.f32.gmra.mxu0 %v542
    %v544 = vpop.f32.mrf.mxu0
    %v545 = vadd.f32 0.0, %v544
    %v546 = vpop.f32.mrf.mxu0
    %547 = vmatprep.mubr.f32.mxu0 0.0
    %v548 = vand.u32 %v193, 4294901760
    %v549 = vsub.f32 %v193, %v548
    %v550 = vand.u32 %v549, 4294901760
    %v551 = vsub.f32 %v549, %v550
    %v552 = vand.u32 %v551, 4294901760
    %553 = vmatmul.mubr.f32.gmra.mxu0 %v552
    %v554 = vpop.f32.mrf.mxu0
    %v555 = vadd.f32 0.0, %v554
    %v556 = vpop.f32.mrf.mxu0
    %557 = vmatprep.mubr.f32.mxu0 0.0
    %v558 = vand.u32 %v196, 4294901760
    %v559 = vsub.f32 %v196, %v558
    %v560 = vand.u32 %v559, 4294901760
    %v561 = vsub.f32 %v559, %v560
    %v562 = vand.u32 %v561, 4294901760
    %563 = vmatmul.mubr.f32.gmra.mxu0 %v562
    %v564 = vpop.f32.mrf.mxu0
    %v565 = vadd.f32 0.0, %v564
    %v566 = vpop.f32.mrf.mxu0
    %567 = vmatprep.mubr.f32.mxu0 0.0
    %v568 = vand.u32 %v199, 4294901760
    %v569 = vsub.f32 %v199, %v568
    %v570 = vand.u32 %v569, 4294901760
    %v571 = vsub.f32 %v569, %v570
    %v572 = vand.u32 %v571, 4294901760
    %573 = vmatmul.mubr.f32.gmra.mxu0 %v572
    %v574 = vpop.f32.mrf.mxu0
    %v575 = vadd.f32 0.0, %v574
    %v576 = vpop.f32.mrf.mxu0
    %577 = vmatprep.mubr.f32.mxu0 0.0
    %v578 = vand.u32 %v202, 4294901760
    %v579 = vsub.f32 %v202, %v578
    %v580 = vand.u32 %v579, 4294901760
    %v581 = vsub.f32 %v579, %v580
    %v582 = vand.u32 %v581, 4294901760
    %583 = vmatmul.mubr.f32.gmra.mxu0 %v582
    %v584 = vpop.f32.mrf.mxu0
    %v585 = vadd.f32 0.0, %v584
    %v586 = vpop.f32.mrf.mxu0
    %587 = vmatprep.mubr.f32.mxu0 0.0
    %v588 = vand.u32 %v205, 4294901760
    %v589 = vsub.f32 %v205, %v588
    %v590 = vand.u32 %v589, 4294901760
    %v591 = vsub.f32 %v589, %v590
    %v592 = vand.u32 %v591, 4294901760
    %593 = vmatmul.mubr.f32.gmra.mxu0 %v592
    %v594 = vpop.f32.mrf.mxu0
    %v595 = vadd.f32 0.0, %v594
    %v596 = vpop.f32.mrf.mxu0
    %597 = vmatprep.mubr.f32.mxu0 0.0
    %v598 = vand.u32 %v208, 4294901760
    %v599 = vsub.f32 %v208, %v598
    %v600 = vand.u32 %v599, 4294901760
    %v601 = vsub.f32 %v599, %v600
    %v602 = vand.u32 %v601, 4294901760
    %603 = vmatmul.mubr.f32.gmra.mxu0 %v602
    %v604 = vpop.f32.mrf.mxu0
    %v605 = vadd.f32 0.0, %v604
    %v606 = vpop.f32.mrf.mxu0
    %607 = vmatprep.mubr.f32.mxu0 0.0
    %v608 = vand.u32 %v211, 4294901760
    %v609 = vsub.f32 %v211, %v608
    %v610 = vand.u32 %v609, 4294901760
    %v611 = vsub.f32 %v609, %v610
    %v612 = vand.u32 %v611, 4294901760
    %613 = vmatmul.mubr.f32.gmra.mxu0 %v612
    %v614 = vpop.f32.mrf.mxu0
    %v615 = vadd.f32 0.0, %v614
    %v616 = vpop.f32.mrf.mxu0
    %617 = vmatprep.mubr.f32.mxu0 0.0
    %v618 = vand.u32 %v214, 4294901760
    %v619 = vsub.f32 %v214, %v618
    %v620 = vand.u32 %v619, 4294901760
    %v621 = vsub.f32 %v619, %v620
    %v622 = vand.u32 %v621, 4294901760
    %623 = vmatmul.mubr.f32.gmra.mxu0 %v622
    %v624 = vpop.f32.mrf.mxu0
    %v625 = vadd.f32 0.0, %v624
    %v626 = vpop.f32.mrf.mxu0
    %627 = vmatprep.mubr.f32.mxu0 0.0
    %v628 = vand.u32 %v217, 4294901760
    %v629 = vsub.f32 %v217, %v628
    %v630 = vand.u32 %v629, 4294901760
    %v631 = vsub.f32 %v629, %v630
    %v632 = vand.u32 %v631, 4294901760
    %633 = vmatmul.mubr.f32.gmra.mxu0 %v632
    %v634 = vpop.f32.mrf.mxu0
    %v635 = vadd.f32 0.0, %v634
    %v636 = vpop.f32.mrf.mxu0
    %637 = vmatprep.mubr.f32.mxu0 0.0
    %v638 = vand.u32 %v220, 4294901760
    %v639 = vsub.f32 %v220, %v638
    %v640 = vand.u32 %v639, 4294901760
    %v641 = vsub.f32 %v639, %v640
    %v642 = vand.u32 %v641, 4294901760
    %643 = vmatmul.mubr.f32.gmra.mxu0 %v642
    %v644 = vpop.f32.mrf.mxu0
    %v645 = vadd.f32 0.0, %v644
    %v646 = vpop.f32.mrf.mxu0
    %647 = vmatprep.mubr.f32.mxu0 0.0
    %v648 = vand.u32 %v223, 4294901760
    %v649 = vsub.f32 %v223, %v648
    %v650 = vand.u32 %v649, 4294901760
    %v651 = vsub.f32 %v649, %v650
    %v652 = vand.u32 %v651, 4294901760
    %653 = vmatmul.mubr.f32.gmra.mxu0 %v652
    %v654 = vpop.f32.mrf.mxu0
    %v655 = vadd.f32 0.0, %v654
    %v656 = vpop.f32.mrf.mxu0
    %657 = vmatprep.mubr.f32.mxu0 0.0
    %v658 = vand.u32 %v226, 4294901760
    %v659 = vsub.f32 %v226, %v658
    %v660 = vand.u32 %v659, 4294901760
    %v661 = vsub.f32 %v659, %v660
    %v662 = vand.u32 %v661, 4294901760
    %663 = vmatmul.mubr.f32.gmra.mxu0 %v662
    %v664 = vpop.f32.mrf.mxu0
    %v665 = vadd.f32 0.0, %v664
    %v666 = vpop.f32.mrf.mxu0
    %667 = vmatprep.mubr.f32.mxu0 0.0
    %v668 = vand.u32 %v229, 4294901760
    %v669 = vsub.f32 %v229, %v668
    %v670 = vand.u32 %v669, 4294901760
    %v671 = vsub.f32 %v669, %v670
    %v672 = vand.u32 %v671, 4294901760
    %673 = vmatmul.mubr.f32.gmra.mxu0 %v672
    %v674 = vpop.f32.mrf.mxu0
    %v675 = vadd.f32 0.0, %v674
    %v676 = vpop.f32.mrf.mxu0
    %677 = vmatprep.mubr.f32.mxu0 0.0
    %v678 = vand.u32 %v232, 4294901760
    %v679 = vsub.f32 %v232, %v678
    %v680 = vand.u32 %v679, 4294901760
    %v681 = vsub.f32 %v679, %v680
    %v682 = vand.u32 %v681, 4294901760
    %683 = vmatmul.mubr.f32.gmra.mxu0 %v682
    %v684 = vpop.f32.mrf.mxu0
    %v685 = vadd.f32 0.0, %v684
    %v686 = vpop.f32.mrf.mxu0
    %687 = vmatprep.mubr.f32.mxu0 0.0
    %v688 = vand.u32 %v235, 4294901760
    %v689 = vsub.f32 %v235, %v688
    %v690 = vand.u32 %v689, 4294901760
    %v691 = vsub.f32 %v689, %v690
    %v692 = vand.u32 %v691, 4294901760
    %693 = vmatmul.mubr.f32.gmra.mxu0 %v692
    %v694 = vpop.f32.mrf.mxu0
    %v695 = vadd.f32 0.0, %v694
    %v696 = vpop.f32.mrf.mxu0
    %697 = vmatprep.mubr.f32.mxu0 0.0
    %v698 = vand.u32 %v238, 4294901760
    %v699 = vsub.f32 %v238, %v698
    %v700 = vand.u32 %v699, 4294901760
    %v701 = vsub.f32 %v699, %v700
    %v702 = vand.u32 %v701, 4294901760
    %703 = vmatmul.mubr.f32.gmra.mxu0 %v702
    %v704 = vpop.f32.mrf.mxu0
    %v705 = vadd.f32 0.0, %v704
    %v706 = vpop.f32.mrf.mxu0
    %707 = vmatprep.mubr.f32.mxu0 0.0
    %v708 = vand.u32 %v241, 4294901760
    %v709 = vsub.f32 %v241, %v708
    %v710 = vand.u32 %v709, 4294901760
    %v711 = vsub.f32 %v709, %v710
    %v712 = vand.u32 %v711, 4294901760
    %713 = vmatmul.mubr.f32.gmra.mxu0 %v712
    %v714 = vpop.f32.mrf.mxu0
    %v715 = vadd.f32 0.0, %v714
    %v716 = vpop.f32.mrf.mxu0
    %717 = vmatprep.mubr.f32.mxu0 0.0
    %v718 = vand.u32 %v244, 4294901760
    %v719 = vsub.f32 %v244, %v718
    %v720 = vand.u32 %v719, 4294901760
    %v721 = vsub.f32 %v719, %v720
    %v722 = vand.u32 %v721, 4294901760
    %723 = vmatmul.mubr.f32.gmra.mxu0 %v722
    %v724 = vpop.f32.mrf.mxu0
    %v725 = vadd.f32 0.0, %v724
    %v726 = vpop.f32.mrf.mxu0
    %727 = vmatprep.mubr.f32.mxu0 0.0
    %v728 = vand.u32 %v247, 4294901760
    %v729 = vsub.f32 %v247, %v728
    %v730 = vand.u32 %v729, 4294901760
    %v731 = vsub.f32 %v729, %v730
    %v732 = vand.u32 %v731, 4294901760
    %733 = vmatmul.mubr.f32.gmra.mxu0 %v732
    %v734 = vpop.f32.mrf.mxu0
    %v735 = vadd.f32 0.0, %v734
    %v736 = vpop.f32.mrf.mxu0
    %737 = vmatprep.mubr.f32.mxu0 0.0
    %v738 = vand.u32 %v250, 4294901760
    %v739 = vsub.f32 %v250, %v738
    %v740 = vand.u32 %v739, 4294901760
    %v741 = vsub.f32 %v739, %v740
    %v742 = vand.u32 %v741, 4294901760
    %743 = vmatmul.mubr.f32.gmra.mxu0 %v742
    %v744 = vpop.f32.mrf.mxu0
    %v745 = vadd.f32 0.0, %v744
    %v746 = vpop.f32.mrf.mxu0
    %747 = vmatprep.mubr.f32.mxu0 0.0
    %v748 = vand.u32 %v253, 4294901760
    %v749 = vsub.f32 %v253, %v748
    %v750 = vand.u32 %v749, 4294901760
    %v751 = vsub.f32 %v749, %v750
    %v752 = vand.u32 %v751, 4294901760
    %753 = vmatmul.mubr.f32.gmra.mxu0 %v752
    %v754 = vpop.f32.mrf.mxu0
    %v755 = vadd.f32 0.0, %v754
    %v756 = vpop.f32.mrf.mxu0
    %757 = vmatprep.mubr.f32.mxu0 0.0
    %v758 = vand.u32 %v256, 4294901760
    %v759 = vsub.f32 %v256, %v758
    %v760 = vand.u32 %v759, 4294901760
    %v761 = vsub.f32 %v759, %v760
    %v762 = vand.u32 %v761, 4294901760
    %763 = vmatmul.mubr.f32.gmra.mxu0 %v762
    %v764 = vpop.f32.mrf.mxu0
    %v765 = vadd.f32 0.0, %v764
    %v766 = vpop.f32.mrf.mxu0
    %767 = vmatprep.mubr.f32.mxu0 0.0
    %v768 = vand.u32 %v259, 4294901760
    %v769 = vsub.f32 %v259, %v768
    %v770 = vand.u32 %v769, 4294901760
    %v771 = vsub.f32 %v769, %v770
    %v772 = vand.u32 %v771, 4294901760
    %773 = vmatmul.mubr.f32.gmra.mxu0 %v772
    %v774 = vpop.f32.mrf.mxu0
    %v775 = vadd.f32 0.0, %v774
    %v776 = vpop.f32.mrf.mxu0
    %777 = vmatprep.mubr.f32.mxu0 0.0
    %v778 = vand.u32 %v262, 4294901760
    %v779 = vsub.f32 %v262, %v778
    %v780 = vand.u32 %v779, 4294901760
    %v781 = vsub.f32 %v779, %v780
    %v782 = vand.u32 %v781, 4294901760
    %783 = vmatmul.mubr.f32.gmra.mxu0 %v782
    %v784 = vpop.f32.mrf.mxu0
    %v785 = vadd.f32 0.0, %v784
    %v786 = vpop.f32.mrf.mxu0
    %787 = vmatprep.mubr.f32.mxu0 0.0
    %v788 = vand.u32 %v265, 4294901760
    %v789 = vsub.f32 %v265, %v788
    %v790 = vand.u32 %v789, 4294901760
    %v791 = vsub.f32 %v789, %v790
    %v792 = vand.u32 %v791, 4294901760
    %793 = vmatmul.mubr.f32.gmra.mxu0 %v792
    %v794 = vpop.f32.mrf.mxu0
    %v795 = vadd.f32 0.0, %v794
    %v796 = vpop.f32.mrf.mxu0
    %797 = vmatprep.mubr.f32.mxu0 0.0
    %v798 = vand.u32 %v268, 4294901760
    %v799 = vsub.f32 %v268, %v798
    %v800 = vand.u32 %v799, 4294901760
    %v801 = vsub.f32 %v799, %v800
    %v802 = vand.u32 %v801, 4294901760
    %803 = vmatmul.mubr.f32.gmra.mxu0 %v802
    %v804 = vpop.f32.mrf.mxu0
    %v805 = vadd.f32 0.0, %v804
    %v806 = vpop.f32.mrf.mxu0
    %807 = vmatprep.mubr.f32.mxu0 0.0
    %v808 = vand.u32 %v271, 4294901760
    %v809 = vsub.f32 %v271, %v808
    %v810 = vand.u32 %v809, 4294901760
    %v811 = vsub.f32 %v809, %v810
    %v812 = vand.u32 %v811, 4294901760
    %813 = vmatmul.mubr.f32.gmra.mxu0 %v812
    %v814 = vpop.f32.mrf.mxu0
    %v815 = vadd.f32 0.0, %v814
    %v816 = vpop.f32.mrf.mxu0
    %817 = vmatprep.mubr.f32.mxu0 0.0
    %v818 = vand.u32 %v274, 4294901760
    %v819 = vsub.f32 %v274, %v818
    %v820 = vand.u32 %v819, 4294901760
    %v821 = vsub.f32 %v819, %v820
    %v822 = vand.u32 %v821, 4294901760
    %823 = vmatmul.mubr.f32.gmra.mxu0 %v822
    %v824 = vpop.f32.mrf.mxu0
    %v825 = vadd.f32 0.0, %v824
    %v826 = vpop.f32.mrf.mxu0
    %827 = vmatprep.mubr.f32.mxu0 0.0
    %v828 = vand.u32 %v277, 4294901760
    %v829 = vsub.f32 %v277, %v828
    %v830 = vand.u32 %v829, 4294901760
    %v831 = vsub.f32 %v829, %v830
    %v832 = vand.u32 %v831, 4294901760
    %833 = vmatmul.mubr.f32.gmra.mxu0 %v832
    %v834 = vpop.f32.mrf.mxu0
    %v835 = vadd.f32 0.0, %v834
    %v836 = vpop.f32.mrf.mxu0
    %837 = vmatprep.mubr.f32.mxu0 0.0
    %v838 = vand.u32 %v280, 4294901760
    %v839 = vsub.f32 %v280, %v838
    %v840 = vand.u32 %v839, 4294901760
    %v841 = vsub.f32 %v839, %v840
    %v842 = vand.u32 %v841, 4294901760
    %843 = vmatmul.mubr.f32.gmra.mxu0 %v842
    %v844 = vpop.f32.mrf.mxu0
    %v845 = vadd.f32 0.0, %v844
    %v846 = vpop.f32.mrf.mxu0
    %847 = vmatprep.mubr.f32.mxu0 0.0
    %v848 = vand.u32 %v283, 4294901760
    %v849 = vsub.f32 %v283, %v848
    %v850 = vand.u32 %v849, 4294901760
    %v851 = vsub.f32 %v849, %v850
    %v852 = vand.u32 %v851, 4294901760
    %853 = vmatmul.mubr.f32.gmra.mxu0 %v852
    %v854 = vpop.f32.mrf.mxu0
    %v855 = vadd.f32 0.0, %v854
    %v856 = vpop.f32.mrf.mxu0
    %857 = vmatprep.mubr.f32.mxu0 0.0
    %v858 = vand.u32 %v286, 4294901760
    %v859 = vsub.f32 %v286, %v858
    %v860 = vand.u32 %v859, 4294901760
    %v861 = vsub.f32 %v859, %v860
    %v862 = vand.u32 %v861, 4294901760
    %863 = vmatmul.mubr.f32.gmra.mxu0 %v862
    %v864 = vpop.f32.mrf.mxu0
    %v865 = vadd.f32 0.0, %v864
    %v866 = vpop.f32.mrf.mxu0
    %867 = vmatprep.mubr.f32.mxu0 0.0
    %v868 = vand.u32 %v289, 4294901760
    %v869 = vsub.f32 %v289, %v868
    %v870 = vand.u32 %v869, 4294901760
    %v871 = vsub.f32 %v869, %v870
    %v872 = vand.u32 %v871, 4294901760
    %873 = vmatmul.mubr.f32.gmra.mxu0 %v872
    %v874 = vpop.f32.mrf.mxu0
    %v875 = vadd.f32 0.0, %v874
    %v876 = vpop.f32.mrf.mxu0
    %877 = vmatprep.mubr.f32.mxu0 0.0
    %v878 = vand.u32 %v292, 4294901760
    %v879 = vsub.f32 %v292, %v878
    %v880 = vand.u32 %v879, 4294901760
    %v881 = vsub.f32 %v879, %v880
    %v882 = vand.u32 %v881, 4294901760
    %883 = vmatmul.mubr.f32.gmra.mxu0 %v882
    %v884 = vpop.f32.mrf.mxu0
    %v885 = vadd.f32 0.0, %v884
    %v886 = vpop.f32.mrf.mxu0
    %887 = vmatprep.mubr.f32.mxu0 0.0
    %v888 = vand.u32 %v295, 4294901760
    %v889 = vsub.f32 %v295, %v888
    %v890 = vand.u32 %v889, 4294901760
    %v891 = vsub.f32 %v889, %v890
    %v892 = vand.u32 %v891, 4294901760
    %893 = vmatmul.mubr.f32.gmra.mxu0 %v892
    %v894 = vpop.f32.mrf.mxu0
    %v895 = vadd.f32 0.0, %v894
    %v896 = vpop.f32.mrf.mxu0
    %897 = vmatprep.mubr.f32.mxu0 0.0
    %v898 = vand.u32 %v298, 4294901760
    %v899 = vsub.f32 %v298, %v898
    %v900 = vand.u32 %v899, 4294901760
    %v901 = vsub.f32 %v899, %v900
    %v902 = vand.u32 %v901, 4294901760
    %903 = vmatmul.mubr.f32.gmra.mxu0 %v902
    %v904 = vpop.f32.mrf.mxu0
    %v905 = vadd.f32 0.0, %v904
    %v906 = vpop.f32.mrf.mxu0
    %907 = vmatprep.mubr.f32.mxu0 0.0
    %v908 = vand.u32 %v301, 4294901760
    %v909 = vsub.f32 %v301, %v908
    %v910 = vand.u32 %v909, 4294901760
    %v911 = vsub.f32 %v909, %v910
    %v912 = vand.u32 %v911, 4294901760
    %913 = vmatmul.mubr.f32.gmra.mxu0 %v912
    %v914 = vpop.f32.mrf.mxu0
    %v915 = vadd.f32 0.0, %v914
    %v916 = vpop.f32.mrf.mxu0
    %917 = vmatprep.mubr.f32.mxu0 0.0
    %v918 = vand.u32 %v304, 4294901760
    %v919 = vsub.f32 %v304, %v918
    %v920 = vand.u32 %v919, 4294901760
    %v921 = vsub.f32 %v919, %v920
    %v922 = vand.u32 %v921, 4294901760
    %923 = vmatmul.mubr.f32.gmra.mxu0 %v922
    %v924 = vpop.f32.mrf.mxu0
    %v925 = vadd.f32 0.0, %v924
    %v926 = vpop.f32.mrf.mxu0
    %927 = vmatprep.mubr.f32.mxu0 0.0
    %v928 = vand.u32 %v307, 4294901760
    %v929 = vsub.f32 %v307, %v928
    %v930 = vand.u32 %v929, 4294901760
    %v931 = vsub.f32 %v929, %v930
    %v932 = vand.u32 %v931, 4294901760
    %933 = vmatmul.mubr.f32.gmra.mxu0 %v932
    %v934 = vpop.f32.mrf.mxu0
    %v935 = vadd.f32 0.0, %v934
    %v936 = vpop.f32.mrf.mxu0
    %937 = vmatprep.mubr.f32.mxu0 0.0
    %v938 = vand.u32 %v310, 4294901760
    %v939 = vsub.f32 %v310, %v938
    %v940 = vand.u32 %v939, 4294901760
    %v941 = vsub.f32 %v939, %v940
    %v942 = vand.u32 %v941, 4294901760
    %943 = vmatmul.mubr.f32.gmra.mxu0 %v942
    %v944 = vpop.f32.mrf.mxu0
    %v945 = vadd.f32 0.0, %v944
    %v946 = vpop.f32.mrf.mxu0
    %947 = vmatprep.mubr.f32.mxu0 0.0
    %v948 = vand.u32 %v313, 4294901760
    %v949 = vsub.f32 %v313, %v948
    %v950 = vand.u32 %v949, 4294901760
    %v951 = vsub.f32 %v949, %v950
    %v952 = vand.u32 %v951, 4294901760
    %953 = vmatmul.mubr.f32.gmra.mxu0 %v952
    %v954 = vpop.f32.mrf.mxu0
    %v955 = vadd.f32 0.0, %v954
    %v956 = vpop.f32.mrf.mxu0
    %957 = vmatprep.mubr.f32.mxu0 0.0
    %v958 = vand.u32 %v316, 4294901760
    %v959 = vsub.f32 %v316, %v958
    %v960 = vand.u32 %v959, 4294901760
    %v961 = vsub.f32 %v959, %v960
    %v962 = vand.u32 %v961, 4294901760
    %963 = vmatmul.mubr.f32.gmra.mxu0 %v962
    %v964 = vpop.f32.mrf.mxu0
    %v965 = vadd.f32 0.0, %v964
    %v966 = vpop.f32.mrf.mxu0
    %967 = vmatprep.mubr.f32.mxu0 0.0
    %v968 = vand.u32 %v319, 4294901760
    %v969 = vsub.f32 %v319, %v968
    %v970 = vand.u32 %v969, 4294901760
    %v971 = vsub.f32 %v969, %v970
    %v972 = vand.u32 %v971, 4294901760
    %973 = vmatmul.mubr.f32.gmra.mxu0 %v972
    %v974 = vpop.f32.mrf.mxu0
    %v975 = vadd.f32 0.0, %v974
    %v976 = vpop.f32.mrf.mxu0
    %977 = vmatprep.mubr.f32.mxu0 0.0
    %v978 = vand.u32 %v322, 4294901760
    %v979 = vsub.f32 %v322, %v978
    %v980 = vand.u32 %v979, 4294901760
    %v981 = vsub.f32 %v979, %v980
    %v982 = vand.u32 %v981, 4294901760
    %983 = vmatmul.mubr.f32.gmra.mxu0 %v982
    %v984 = vpop.f32.mrf.mxu0
    %v985 = vadd.f32 0.0, %v984
    %v986 = vpop.f32.mrf.mxu0
    %987 = vmatprep.mubr.f32.mxu0 0.0
    %v988 = vand.u32 %v325, 4294901760
    %v989 = vsub.f32 %v325, %v988
    %v990 = vand.u32 %v989, 4294901760
    %v991 = vsub.f32 %v989, %v990
    %v992 = vand.u32 %v991, 4294901760
    %993 = vmatmul.mubr.f32.gmra.mxu0 %v992
    %v994 = vpop.f32.mrf.mxu0
    %v995 = vadd.f32 0.0, %v994
    %v996 = vpop.f32.mrf.mxu0
    %997 = vmatprep.mubr.f32.mxu0 0.0
    %v998 = vand.u32 %v328, 4294901760
    %v999 = vsub.f32 %v328, %v998
    %v1000 = vand.u32 %v999, 4294901760
    %v1001 = vsub.f32 %v999, %v1000
    %v1002 = vand.u32 %v1001, 4294901760
    %1003 = vmatmul.mubr.f32.gmra.mxu0 %v1002
    %v1004 = vpop.f32.mrf.mxu0
    %v1005 = vadd.f32 0.0, %v1004
    %v1006 = vpop.f32.mrf.mxu0
    %1007 = vmatprep.mubr.f32.mxu0 0.0
    %v1008 = vand.u32 %v331, 4294901760
    %v1009 = vsub.f32 %v331, %v1008
    %v1010 = vand.u32 %v1009, 4294901760
    %v1011 = vsub.f32 %v1009, %v1010
    %v1012 = vand.u32 %v1011, 4294901760
    %1013 = vmatmul.mubr.f32.gmra.mxu0 %v1012
    %v1014 = vpop.f32.mrf.mxu0
    %v1015 = vadd.f32 0.0, %v1014
    %v1016 = vpop.f32.mrf.mxu0
    %1017 = vmatprep.mubr.f32.mxu0 0.0
    %v1018 = vand.u32 %v334, 4294901760
    %v1019 = vsub.f32 %v334, %v1018
    %v1020 = vand.u32 %v1019, 4294901760
    %v1021 = vsub.f32 %v1019, %v1020
    %v1022 = vand.u32 %v1021, 4294901760
    %1023 = vmatmul.mubr.f32.gmra.mxu0 %v1022
    %v1024 = vpop.f32.mrf.mxu0
    %v1025 = vadd.f32 0.0, %v1024
    %v1026 = vpop.f32.mrf.mxu0
    %1027 = vmatprep.mubr.f32.mxu0 0.0
    %v1028 = vand.u32 %v337, 4294901760
    %v1029 = vsub.f32 %v337, %v1028
    %v1030 = vand.u32 %v1029, 4294901760
    %v1031 = vsub.f32 %v1029, %v1030
    %v1032 = vand.u32 %v1031, 4294901760
    %1033 = vmatmul.mubr.f32.gmra.mxu0 %v1032
    %v1034 = vpop.f32.mrf.mxu0
    %v1035 = vadd.f32 0.0, %v1034
    %v1036 = vpop.f32.mrf.mxu0
    %1037 = vmatprep.mubr.f32.mxu0 0.0
    %v1038 = vand.u32 %v340, 4294901760
    %v1039 = vsub.f32 %v340, %v1038
    %v1040 = vand.u32 %v1039, 4294901760
    %v1041 = vsub.f32 %v1039, %v1040
    %v1042 = vand.u32 %v1041, 4294901760
    %1043 = vmatmul.mubr.f32.gmra.mxu0 %v1042
    %v1044 = vpop.f32.mrf.mxu0
    %v1045 = vadd.f32 0.0, %v1044
    %v1046 = vpop.f32.mrf.mxu0
    %1047 = vmatprep.mubr.f32.mxu0 0.0
    %v1048 = vand.u32 %v343, 4294901760
    %v1049 = vsub.f32 %v343, %v1048
    %v1050 = vand.u32 %v1049, 4294901760
    %v1051 = vsub.f32 %v1049, %v1050
    %v1052 = vand.u32 %v1051, 4294901760
    %1053 = vmatmul.mubr.f32.gmra.mxu0 %v1052
    %v1054 = vpop.f32.mrf.mxu0
    %v1055 = vadd.f32 0.0, %v1054
    %v1056 = vpop.f32.mrf.mxu0
    %1057 = vmatprep.mubr.f32.mxu0 0.0
    %v1058 = vand.u32 %v346, 4294901760
    %v1059 = vsub.f32 %v346, %v1058
    %v1060 = vand.u32 %v1059, 4294901760
    %v1061 = vsub.f32 %v1059, %v1060
    %v1062 = vand.u32 %v1061, 4294901760
    %1063 = vmatmul.mubr.f32.gmra.mxu0 %v1062
    %v1064 = vpop.f32.mrf.mxu0
    %v1065 = vadd.f32 0.0, %v1064
    %v1066 = vpop.f32.mrf.mxu0
    %1067 = vmatprep.mubr.f32.mxu0 0.0
    %v1068 = vand.u32 %v349, 4294901760
    %v1069 = vsub.f32 %v349, %v1068
    %v1070 = vand.u32 %v1069, 4294901760
    %v1071 = vsub.f32 %v1069, %v1070
    %v1072 = vand.u32 %v1071, 4294901760
    %1073 = vmatmul.mubr.f32.gmra.mxu0 %v1072
    %v1074 = vpop.f32.mrf.mxu0
    %v1075 = vadd.f32 0.0, %v1074
    %v1076 = vpop.f32.mrf.mxu0
    %1077 = vmatprep.mubr.f32.mxu0 0.0
    %v1078 = vand.u32 %v352, 4294901760
    %v1079 = vsub.f32 %v352, %v1078
    %v1080 = vand.u32 %v1079, 4294901760
    %v1081 = vsub.f32 %v1079, %v1080
    %v1082 = vand.u32 %v1081, 4294901760
    %1083 = vmatmul.mubr.f32.gmra.mxu0 %v1082
    %v1084 = vpop.f32.mrf.mxu0
    %v1085 = vadd.f32 0.0, %v1084
    %v1086 = vpop.f32.mrf.mxu0
    %1087 = vmatprep.mubr.f32.mxu0 0.0
    %v1088 = vand.u32 %v355, 4294901760
    %v1089 = vsub.f32 %v355, %v1088
    %v1090 = vand.u32 %v1089, 4294901760
    %v1091 = vsub.f32 %v1089, %v1090
    %v1092 = vand.u32 %v1091, 4294901760
    %1093 = vmatmul.mubr.f32.gmra.mxu0 %v1092
    %v1094 = vpop.f32.mrf.mxu0
    %v1095 = vadd.f32 0.0, %v1094
    %v1096 = vpop.f32.mrf.mxu0
    %1097 = vmatprep.mubr.f32.mxu0 0.0
    %v1098 = vand.u32 %v358, 4294901760
    %v1099 = vsub.f32 %v358, %v1098
    %v1100 = vand.u32 %v1099, 4294901760
    %v1101 = vsub.f32 %v1099, %v1100
    %v1102 = vand.u32 %v1101, 4294901760
    %1103 = vmatmul.mubr.f32.gmra.mxu0 %v1102
    %v1104 = vpop.f32.mrf.mxu0
    %v1105 = vadd.f32 0.0, %v1104
    %v1106 = vpop.f32.mrf.mxu0
    %1107 = vmatprep.mubr.f32.mxu0 0.0
    %v1108 = vand.u32 %v361, 4294901760
    %v1109 = vsub.f32 %v361, %v1108
    %v1110 = vand.u32 %v1109, 4294901760
    %v1111 = vsub.f32 %v1109, %v1110
    %v1112 = vand.u32 %v1111, 4294901760
    %1113 = vmatmul.mubr.f32.gmra.mxu0 %v1112
    %v1114 = vpop.f32.mrf.mxu0
    %v1115 = vadd.f32 0.0, %v1114
    %v1116 = vpop.f32.mrf.mxu0
    %1117 = vmatprep.mubr.f32.mxu0 0.0
    %v1118 = vand.u32 %v364, 4294901760
    %v1119 = vsub.f32 %v364, %v1118
    %v1120 = vand.u32 %v1119, 4294901760
    %v1121 = vsub.f32 %v1119, %v1120
    %v1122 = vand.u32 %v1121, 4294901760
    %1123 = vmatmul.mubr.f32.gmra.mxu0 %v1122
    %v1124 = vpop.f32.mrf.mxu0
    %v1125 = vadd.f32 0.0, %v1124
    %v1126 = vpop.f32.mrf.mxu0
    %1127 = vmatprep.mubr.f32.mxu0 0.0
    %v1128 = vand.u32 %v367, 4294901760
    %v1129 = vsub.f32 %v367, %v1128
    %v1130 = vand.u32 %v1129, 4294901760
    %v1131 = vsub.f32 %v1129, %v1130
    %v1132 = vand.u32 %v1131, 4294901760
    %1133 = vmatmul.mubr.f32.gmra.mxu0 %v1132
    %v1134 = vpop.f32.mrf.mxu0
    %v1135 = vadd.f32 0.0, %v1134
    %v1136 = vpop.f32.mrf.mxu0
    %1137 = vmatprep.mubr.f32.mxu0 0.0
    %v1138 = vand.u32 %v370, 4294901760
    %v1139 = vsub.f32 %v370, %v1138
    %v1140 = vand.u32 %v1139, 4294901760
    %v1141 = vsub.f32 %v1139, %v1140
    %v1142 = vand.u32 %v1141, 4294901760
    %1143 = vmatmul.mubr.f32.gmra.mxu0 %v1142
    %v1144 = vpop.f32.mrf.mxu0
    %v1145 = vadd.f32 0.0, %v1144
    %v1146 = vpop.f32.mrf.mxu0
    %1147 = vmatprep.mubr.f32.mxu0 0.0
    %v1148 = vand.u32 %v373, 4294901760
    %v1149 = vsub.f32 %v373, %v1148
    %v1150 = vand.u32 %v1149, 4294901760
    %v1151 = vsub.f32 %v1149, %v1150
    %v1152 = vand.u32 %v1151, 4294901760
    %1153 = vmatmul.mubr.f32.gmra.mxu0 %v1152
    %v1154 = vpop.f32.mrf.mxu0
    %v1155 = vadd.f32 0.0, %v1154
    %v1156 = vpop.f32.mrf.mxu0
    %1157 = vmatprep.mubr.f32.mxu0 0.0
    %v1158 = vand.u32 %v376, 4294901760
    %v1159 = vsub.f32 %v376, %v1158
    %v1160 = vand.u32 %v1159, 4294901760
    %v1161 = vsub.f32 %v1159, %v1160
    %v1162 = vand.u32 %v1161, 4294901760
    %1163 = vmatmul.mubr.f32.gmra.mxu0 %v1162
    %v1164 = vpop.f32.mrf.mxu0
    %v1165 = vadd.f32 0.0, %v1164
    %v1166 = vpop.f32.mrf.mxu0
    %1167 = vmatprep.mubr.f32.mxu0 0.0
    %v1168 = vand.u32 %v379, 4294901760
    %v1169 = vsub.f32 %v379, %v1168
    %v1170 = vand.u32 %v1169, 4294901760
    %v1171 = vsub.f32 %v1169, %v1170
    %v1172 = vand.u32 %v1171, 4294901760
    %1173 = vmatmul.mubr.f32.gmra.mxu0 %v1172
    %v1174 = vpop.f32.mrf.mxu0
    %v1175 = vadd.f32 0.0, %v1174
    %v1176 = vpop.f32.mrf.mxu0
    %1177 = vmatprep.mubr.f32.mxu0 0.0
    %v1178 = vand.u32 %v382, 4294901760
    %v1179 = vsub.f32 %v382, %v1178
    %v1180 = vand.u32 %v1179, 4294901760
    %v1181 = vsub.f32 %v1179, %v1180
    %v1182 = vand.u32 %v1181, 4294901760
    %1183 = vmatmul.mubr.f32.gmra.mxu0 %v1182
    %v1184 = vpop.f32.mrf.mxu0
    %v1185 = vadd.f32 0.0, %v1184
    %v1186 = vpop.f32.mrf.mxu0
    %1187 = vmatprep.mubr.f32.mxu0 0.0
    %v1188 = vand.u32 %v385, 4294901760
    %v1189 = vsub.f32 %v385, %v1188
    %v1190 = vand.u32 %v1189, 4294901760
    %v1191 = vsub.f32 %v1189, %v1190
    %v1192 = vand.u32 %v1191, 4294901760
    %1193 = vmatmul.mubr.f32.gmra.mxu0 %v1192
    %v1194 = vpop.f32.mrf.mxu0
    %v1195 = vadd.f32 0.0, %v1194
    %v1196 = vpop.f32.mrf.mxu0
    %1197 = vmatprep.mubr.f32.mxu0 0.0
    %v1198 = vand.u32 %v388, 4294901760
    %v1199 = vsub.f32 %v388, %v1198
    %v1200 = vand.u32 %v1199, 4294901760
    %v1201 = vsub.f32 %v1199, %v1200
    %v1202 = vand.u32 %v1201, 4294901760
    %1203 = vmatmul.mubr.f32.gmra.mxu0 %v1202
    %v1204 = vpop.f32.mrf.mxu0
    %v1205 = vadd.f32 0.0, %v1204
    %v1206 = vpop.f32.mrf.mxu0
    %1207 = vmatprep.mubr.f32.mxu0 0.0
    %v1208 = vand.u32 %v391, 4294901760
    %v1209 = vsub.f32 %v391, %v1208
    %v1210 = vand.u32 %v1209, 4294901760
    %v1211 = vsub.f32 %v1209, %v1210
    %v1212 = vand.u32 %v1211, 4294901760
    %1213 = vmatmul.mubr.f32.gmra.mxu0 %v1212
    %v1214 = vpop.f32.mrf.mxu0
    %v1215 = vadd.f32 0.0, %v1214
    %v1216 = vpop.f32.mrf.mxu0
    %1217 = vmatprep.mubr.f32.mxu0 0.0
    %v1218 = vand.u32 %v394, 4294901760
    %v1219 = vsub.f32 %v394, %v1218
    %v1220 = vand.u32 %v1219, 4294901760
    %v1221 = vsub.f32 %v1219, %v1220
    %v1222 = vand.u32 %v1221, 4294901760
    %1223 = vmatmul.mubr.f32.gmra.mxu0 %v1222
    %v1224 = vpop.f32.mrf.mxu0
    %v1225 = vadd.f32 0.0, %v1224
    %v1226 = vpop.f32.mrf.mxu0
    %1227 = vmatprep.mubr.f32.mxu0 0.0
    %v1228 = vand.u32 %v397, 4294901760
    %v1229 = vsub.f32 %v397, %v1228
    %v1230 = vand.u32 %v1229, 4294901760
    %v1231 = vsub.f32 %v1229, %v1230
    %v1232 = vand.u32 %v1231, 4294901760
    %1233 = vmatmul.mubr.f32.gmra.mxu0 %v1232
    %v1234 = vpop.f32.mrf.mxu0
    %v1235 = vadd.f32 0.0, %v1234
    %v1236 = vpop.f32.mrf.mxu0
    %1237 = vmatprep.mubr.f32.mxu0 0.0
    %v1238 = vand.u32 %v400, 4294901760
    %v1239 = vsub.f32 %v400, %v1238
    %v1240 = vand.u32 %v1239, 4294901760
    %v1241 = vsub.f32 %v1239, %v1240
    %v1242 = vand.u32 %v1241, 4294901760
    %1243 = vmatmul.mubr.f32.gmra.mxu0 %v1242
    %v1244 = vpop.f32.mrf.mxu0
    %v1245 = vadd.f32 0.0, %v1244
    %v1246 = vpop.f32.mrf.mxu0
    %1247 = vmatprep.mubr.f32.mxu0 0.0
    %v1248 = vand.u32 %v403, 4294901760
    %v1249 = vsub.f32 %v403, %v1248
    %v1250 = vand.u32 %v1249, 4294901760
    %v1251 = vsub.f32 %v1249, %v1250
    %v1252 = vand.u32 %v1251, 4294901760
    %1253 = vmatmul.mubr.f32.gmra.mxu0 %v1252
    %v1254 = vpop.f32.mrf.mxu0
    %v1255 = vadd.f32 0.0, %v1254
    %v1256 = vpop.f32.mrf.mxu0
    %1257 = vmatprep.mubr.f32.mxu0 0.0
    %v1258 = vand.u32 %v406, 4294901760
    %v1259 = vsub.f32 %v406, %v1258
    %v1260 = vand.u32 %v1259, 4294901760
    %v1261 = vsub.f32 %v1259, %v1260
    %v1262 = vand.u32 %v1261, 4294901760
    %1263 = vmatmul.mubr.f32.gmra.mxu0 %v1262
    %v1264 = vpop.f32.mrf.mxu0
    %v1265 = vadd.f32 0.0, %v1264
    %v1266 = vpop.f32.mrf.mxu0
    %1267 = vmatprep.mubr.f32.mxu0 0.0
    %v1268 = vand.u32 %v409, 4294901760
    %v1269 = vsub.f32 %v409, %v1268
    %v1270 = vand.u32 %v1269, 4294901760
    %v1271 = vsub.f32 %v1269, %v1270
    %v1272 = vand.u32 %v1271, 4294901760
    %1273 = vmatmul.mubr.f32.gmra.mxu0 %v1272
    %v1274 = vpop.f32.mrf.mxu0
    %v1275 = vadd.f32 0.0, %v1274
    %v1276 = vpop.f32.mrf.mxu0
    %1277 = vdwg.mxu0
    %1278 = vmatprep.subr.mxu0 0.0
    %1279 = vmatpush1.msra.mxu0 0.0
    %1280 = vmatprep.subr.mxu0 0.0
    %1281 = vmatpush1.msra.mxu0 0.0
    %1282 = vmatprep.subr.mxu0 0.0
    %1283 = vmatpush1.msra.mxu0 0.0
    %1284 = vmatprep.subr.mxu0 0.0
    %1285 = vmatpush1.msra.mxu0 0.0
    %1286 = vmatprep.subr.mxu0 0.0
    %1287 = vmatpush1.msra.mxu0 0.0
    %1288 = vmatprep.subr.mxu0 0.0
    %1289 = vmatpush1.msra.mxu0 0.0
    %1290 = vmatprep.subr.mxu0 0.0
    %1291 = vmatpush1.msra.mxu0 0.0
    %1292 = vmatprep.subr.mxu0 0.0
    %1293 = vmatpush1.msra.mxu0 0.0
    %1294 = vmatprep.subr.mxu0 0.0
    %1295 = vmatpush1.msra.mxu0 0.0
    %1296 = vmatprep.subr.mxu0 0.0
    %1297 = vmatpush1.msra.mxu0 0.0
    %1298 = vmatprep.subr.mxu0 0.0
    %1299 = vmatpush1.msra.mxu0 0.0
    %1300 = vmatprep.subr.mxu0 0.0
    %1301 = vmatpush1.msra.mxu0 0.0
    %1302 = vmatprep.subr.mxu0 0.0
    %1303 = vmatpush1.msra.mxu0 0.0
    %1304 = vmatprep.subr.mxu0 0.0
    %1305 = vmatpush1.msra.mxu0 0.0
    %1306 = vmatprep.subr.mxu0 0.0
    %v1307 = vand.u32 %v121, 4294901760
    %v1308 = vsub.f32 %v121, %v1307
    %v1309 = vand.u32 %v1308, 4294901760
    %v1310 = vsub.f32 %v1308, %v1309
    %v1311 = vand.u32 %v1310, 4294901760
    %1312 = vmatpush1.msra.mxu0 %v1311
    %1313 = vmatprep.subr.mxu0 0.0
    %v1314 = vand.u32 %v120, 4294901760
    %v1315 = vsub.f32 %v120, %v1314
    %v1316 = vand.u32 %v1315, 4294901760
    %v1317 = vsub.f32 %v1315, %v1316
    %v1318 = vand.u32 %v1317, 4294901760
    %1319 = vmatpush1.msra.mxu0 %v1318
    %1320 = vmatprep.subr.mxu0 0.0
    %1321 = vmatpush2.msra.mxu0 0.0
    %1322 = vmatprep.subr.mxu0 0.0
    %1323 = vmatpush2.msra.mxu0 0.0
    %1324 = vmatprep.subr.mxu0 0.0
    %1325 = vmatpush2.msra.mxu0 0.0
    %1326 = vmatprep.subr.mxu0 0.0
    %1327 = vmatpush2.msra.mxu0 0.0
    %1328 = vmatprep.subr.mxu0 0.0
    %1329 = vmatpush2.msra.mxu0 0.0
    %1330 = vmatprep.subr.mxu0 0.0
    %1331 = vmatpush2.msra.mxu0 0.0
    %1332 = vmatprep.subr.mxu0 0.0
    %1333 = vmatpush2.msra.mxu0 0.0
    %1334 = vmatprep.subr.mxu0 0.0
    %1335 = vmatpush2.msra.mxu0 0.0
    %1336 = vmatprep.subr.mxu0 0.0
    %1337 = vmatpush2.msra.mxu0 0.0
    %1338 = vmatprep.subr.mxu0 0.0
    %1339 = vmatpush2.msra.mxu0 0.0
    %1340 = vmatprep.subr.mxu0 0.0
    %1341 = vmatpush2.msra.mxu0 0.0
    %1342 = vmatprep.subr.mxu0 0.0
    %1343 = vmatpush2.msra.mxu0 0.0
    %1344 = vmatprep.subr.mxu0 0.0
    %1345 = vmatpush2.msra.mxu0 0.0
    %1346 = vmatprep.subr.mxu0 0.0
    %1347 = vmatpush2.msra.mxu0 0.0
    %1348 = vmatprep.subr.mxu0 0.0
    %1349 = vmatpush2.msra.mxu0 0.0
    %1350 = vmatprep.subr.mxu0 0.0
    %1351 = vmatpush2.msra.mxu0 0.0
    %1352 = vmatprep.mubr.f32.mxu0 0.0
    %v1353 = vand.u32 %v172, 4294901760
    %1354 = vmatmul.mubr.f32.gmra.mxu0 %v1353
    %v1355 = vpop.f32.mrf.mxu0
    %v1356 = vadd.f32 %v485, %v1355
    %v1357 = vpop.f32.mrf.mxu0
    %1358 = vmatprep.mubr.f32.mxu0 0.0
    %v1359 = vand.u32 %v175, 4294901760
    %1360 = vmatmul.mubr.f32.gmra.mxu0 %v1359
    %v1361 = vpop.f32.mrf.mxu0
    %v1362 = vadd.f32 %v495, %v1361
    %v1363 = vpop.f32.mrf.mxu0
    %1364 = vmatprep.mubr.f32.mxu0 0.0
    %v1365 = vand.u32 %v178, 4294901760
    %1366 = vmatmul.mubr.f32.gmra.mxu0 %v1365
    %v1367 = vpop.f32.mrf.mxu0
    %v1368 = vadd.f32 %v505, %v1367
    %v1369 = vpop.f32.mrf.mxu0
    %1370 = vmatprep.mubr.f32.mxu0 0.0
    %v1371 = vand.u32 %v181, 4294901760
    %1372 = vmatmul.mubr.f32.gmra.mxu0 %v1371
    %v1373 = vpop.f32.mrf.mxu0
    %v1374 = vadd.f32 %v515, %v1373
    %v1375 = vpop.f32.mrf.mxu0
    %1376 = vmatprep.mubr.f32.mxu0 0.0
    %v1377 = vand.u32 %v184, 4294901760
    %1378 = vmatmul.mubr.f32.gmra.mxu0 %v1377
    %v1379 = vpop.f32.mrf.mxu0
    %v1380 = vadd.f32 %v525, %v1379
    %v1381 = vpop.f32.mrf.mxu0
    %1382 = vmatprep.mubr.f32.mxu0 0.0
    %v1383 = vand.u32 %v187, 4294901760
    %1384 = vmatmul.mubr.f32.gmra.mxu0 %v1383
    %v1385 = vpop.f32.mrf.mxu0
    %v1386 = vadd.f32 %v535, %v1385
    %v1387 = vpop.f32.mrf.mxu0
    %1388 = vmatprep.mubr.f32.mxu0 0.0
    %v1389 = vand.u32 %v190, 4294901760
    %1390 = vmatmul.mubr.f32.gmra.mxu0 %v1389
    %v1391 = vpop.f32.mrf.mxu0
    %v1392 = vadd.f32 %v545, %v1391
    %v1393 = vpop.f32.mrf.mxu0
    %1394 = vmatprep.mubr.f32.mxu0 0.0
    %v1395 = vand.u32 %v193, 4294901760
    %1396 = vmatmul.mubr.f32.gmra.mxu0 %v1395
    %v1397 = vpop.f32.mrf.mxu0
    %v1398 = vadd.f32 %v555, %v1397
    %v1399 = vpop.f32.mrf.mxu0
    %1400 = vmatprep.mubr.f32.mxu0 0.0
    %v1401 = vand.u32 %v196, 4294901760
    %1402 = vmatmul.mubr.f32.gmra.mxu0 %v1401
    %v1403 = vpop.f32.mrf.mxu0
    %v1404 = vadd.f32 %v565, %v1403
    %v1405 = vpop.f32.mrf.mxu0
    %1406 = vmatprep.mubr.f32.mxu0 0.0
    %v1407 = vand.u32 %v199, 4294901760
    %1408 = vmatmul.mubr.f32.gmra.mxu0 %v1407
    %v1409 = vpop.f32.mrf.mxu0
    %v1410 = vadd.f32 %v575, %v1409
    %v1411 = vpop.f32.mrf.mxu0
    %1412 = vmatprep.mubr.f32.mxu0 0.0
    %v1413 = vand.u32 %v202, 4294901760
    %1414 = vmatmul.mubr.f32.gmra.mxu0 %v1413
    %v1415 = vpop.f32.mrf.mxu0
    %v1416 = vadd.f32 %v585, %v1415
    %v1417 = vpop.f32.mrf.mxu0
    %1418 = vmatprep.mubr.f32.mxu0 0.0
    %v1419 = vand.u32 %v205, 4294901760
    %1420 = vmatmul.mubr.f32.gmra.mxu0 %v1419
    %v1421 = vpop.f32.mrf.mxu0
    %v1422 = vadd.f32 %v595, %v1421
    %v1423 = vpop.f32.mrf.mxu0
    %1424 = vmatprep.mubr.f32.mxu0 0.0
    %v1425 = vand.u32 %v208, 4294901760
    %1426 = vmatmul.mubr.f32.gmra.mxu0 %v1425
    %v1427 = vpop.f32.mrf.mxu0
    %v1428 = vadd.f32 %v605, %v1427
    %v1429 = vpop.f32.mrf.mxu0
    %1430 = vmatprep.mubr.f32.mxu0 0.0
    %v1431 = vand.u32 %v211, 4294901760
    %1432 = vmatmul.mubr.f32.gmra.mxu0 %v1431
    %v1433 = vpop.f32.mrf.mxu0
    %v1434 = vadd.f32 %v615, %v1433
    %v1435 = vpop.f32.mrf.mxu0
    %1436 = vmatprep.mubr.f32.mxu0 0.0
    %v1437 = vand.u32 %v214, 4294901760
    %1438 = vmatmul.mubr.f32.gmra.mxu0 %v1437
    %v1439 = vpop.f32.mrf.mxu0
    %v1440 = vadd.f32 %v625, %v1439
    %v1441 = vpop.f32.mrf.mxu0
    %1442 = vmatprep.mubr.f32.mxu0 0.0
    %v1443 = vand.u32 %v217, 4294901760
    %1444 = vmatmul.mubr.f32.gmra.mxu0 %v1443
    %v1445 = vpop.f32.mrf.mxu0
    %v1446 = vadd.f32 %v635, %v1445
    %v1447 = vpop.f32.mrf.mxu0
    %1448 = vmatprep.mubr.f32.mxu0 0.0
    %v1449 = vand.u32 %v220, 4294901760
    %1450 = vmatmul.mubr.f32.gmra.mxu0 %v1449
    %v1451 = vpop.f32.mrf.mxu0
    %v1452 = vadd.f32 %v645, %v1451
    %v1453 = vpop.f32.mrf.mxu0
    %1454 = vmatprep.mubr.f32.mxu0 0.0
    %v1455 = vand.u32 %v223, 4294901760
    %1456 = vmatmul.mubr.f32.gmra.mxu0 %v1455
    %v1457 = vpop.f32.mrf.mxu0
    %v1458 = vadd.f32 %v655, %v1457
    %v1459 = vpop.f32.mrf.mxu0
    %1460 = vmatprep.mubr.f32.mxu0 0.0
    %v1461 = vand.u32 %v226, 4294901760
    %1462 = vmatmul.mubr.f32.gmra.mxu0 %v1461
    %v1463 = vpop.f32.mrf.mxu0
    %v1464 = vadd.f32 %v665, %v1463
    %v1465 = vpop.f32.mrf.mxu0
    %1466 = vmatprep.mubr.f32.mxu0 0.0
    %v1467 = vand.u32 %v229, 4294901760
    %1468 = vmatmul.mubr.f32.gmra.mxu0 %v1467
    %v1469 = vpop.f32.mrf.mxu0
    %v1470 = vadd.f32 %v675, %v1469
    %v1471 = vpop.f32.mrf.mxu0
    %1472 = vmatprep.mubr.f32.mxu0 0.0
    %v1473 = vand.u32 %v232, 4294901760
    %1474 = vmatmul.mubr.f32.gmra.mxu0 %v1473
    %v1475 = vpop.f32.mrf.mxu0
    %v1476 = vadd.f32 %v685, %v1475
    %v1477 = vpop.f32.mrf.mxu0
    %1478 = vmatprep.mubr.f32.mxu0 0.0
    %v1479 = vand.u32 %v235, 4294901760
    %1480 = vmatmul.mubr.f32.gmra.mxu0 %v1479
    %v1481 = vpop.f32.mrf.mxu0
    %v1482 = vadd.f32 %v695, %v1481
    %v1483 = vpop.f32.mrf.mxu0
    %1484 = vmatprep.mubr.f32.mxu0 0.0
    %v1485 = vand.u32 %v238, 4294901760
    %1486 = vmatmul.mubr.f32.gmra.mxu0 %v1485
    %v1487 = vpop.f32.mrf.mxu0
    %v1488 = vadd.f32 %v705, %v1487
    %v1489 = vpop.f32.mrf.mxu0
    %1490 = vmatprep.mubr.f32.mxu0 0.0
    %v1491 = vand.u32 %v241, 4294901760
    %1492 = vmatmul.mubr.f32.gmra.mxu0 %v1491
    %v1493 = vpop.f32.mrf.mxu0
    %v1494 = vadd.f32 %v715, %v1493
    %v1495 = vpop.f32.mrf.mxu0
    %1496 = vmatprep.mubr.f32.mxu0 0.0
    %v1497 = vand.u32 %v244, 4294901760
    %1498 = vmatmul.mubr.f32.gmra.mxu0 %v1497
    %v1499 = vpop.f32.mrf.mxu0
    %v1500 = vadd.f32 %v725, %v1499
    %v1501 = vpop.f32.mrf.mxu0
    %1502 = vmatprep.mubr.f32.mxu0 0.0
    %v1503 = vand.u32 %v247, 4294901760
    %1504 = vmatmul.mubr.f32.gmra.mxu0 %v1503
    %v1505 = vpop.f32.mrf.mxu0
    %v1506 = vadd.f32 %v735, %v1505
    %v1507 = vpop.f32.mrf.mxu0
    %1508 = vmatprep.mubr.f32.mxu0 0.0
    %v1509 = vand.u32 %v250, 4294901760
    %1510 = vmatmul.mubr.f32.gmra.mxu0 %v1509
    %v1511 = vpop.f32.mrf.mxu0
    %v1512 = vadd.f32 %v745, %v1511
    %v1513 = vpop.f32.mrf.mxu0
    %1514 = vmatprep.mubr.f32.mxu0 0.0
    %v1515 = vand.u32 %v253, 4294901760
    %1516 = vmatmul.mubr.f32.gmra.mxu0 %v1515
    %v1517 = vpop.f32.mrf.mxu0
    %v1518 = vadd.f32 %v755, %v1517
    %v1519 = vpop.f32.mrf.mxu0
    %1520 = vmatprep.mubr.f32.mxu0 0.0
    %v1521 = vand.u32 %v256, 4294901760
    %1522 = vmatmul.mubr.f32.gmra.mxu0 %v1521
    %v1523 = vpop.f32.mrf.mxu0
    %v1524 = vadd.f32 %v765, %v1523
    %v1525 = vpop.f32.mrf.mxu0
    %1526 = vmatprep.mubr.f32.mxu0 0.0
    %v1527 = vand.u32 %v259, 4294901760
    %1528 = vmatmul.mubr.f32.gmra.mxu0 %v1527
    %v1529 = vpop.f32.mrf.mxu0
    %v1530 = vadd.f32 %v775, %v1529
    %v1531 = vpop.f32.mrf.mxu0
    %1532 = vmatprep.mubr.f32.mxu0 0.0
    %v1533 = vand.u32 %v262, 4294901760
    %1534 = vmatmul.mubr.f32.gmra.mxu0 %v1533
    %v1535 = vpop.f32.mrf.mxu0
    %v1536 = vadd.f32 %v785, %v1535
    %v1537 = vpop.f32.mrf.mxu0
    %1538 = vmatprep.mubr.f32.mxu0 0.0
    %v1539 = vand.u32 %v265, 4294901760
    %1540 = vmatmul.mubr.f32.gmra.mxu0 %v1539
    %v1541 = vpop.f32.mrf.mxu0
    %v1542 = vadd.f32 %v795, %v1541
    %v1543 = vpop.f32.mrf.mxu0
    %1544 = vmatprep.mubr.f32.mxu0 0.0
    %v1545 = vand.u32 %v268, 4294901760
    %1546 = vmatmul.mubr.f32.gmra.mxu0 %v1545
    %v1547 = vpop.f32.mrf.mxu0
    %v1548 = vadd.f32 %v805, %v1547
    %v1549 = vpop.f32.mrf.mxu0
    %1550 = vmatprep.mubr.f32.mxu0 0.0
    %v1551 = vand.u32 %v271, 4294901760
    %1552 = vmatmul.mubr.f32.gmra.mxu0 %v1551
    %v1553 = vpop.f32.mrf.mxu0
    %v1554 = vadd.f32 %v815, %v1553
    %v1555 = vpop.f32.mrf.mxu0
    %1556 = vmatprep.mubr.f32.mxu0 0.0
    %v1557 = vand.u32 %v274, 4294901760
    %1558 = vmatmul.mubr.f32.gmra.mxu0 %v1557
    %v1559 = vpop.f32.mrf.mxu0
    %v1560 = vadd.f32 %v825, %v1559
    %v1561 = vpop.f32.mrf.mxu0
    %1562 = vmatprep.mubr.f32.mxu0 0.0
    %v1563 = vand.u32 %v277, 4294901760
    %1564 = vmatmul.mubr.f32.gmra.mxu0 %v1563
    %v1565 = vpop.f32.mrf.mxu0
    %v1566 = vadd.f32 %v835, %v1565
    %v1567 = vpop.f32.mrf.mxu0
    %1568 = vmatprep.mubr.f32.mxu0 0.0
    %v1569 = vand.u32 %v280, 4294901760
    %1570 = vmatmul.mubr.f32.gmra.mxu0 %v1569
    %v1571 = vpop.f32.mrf.mxu0
    %v1572 = vadd.f32 %v845, %v1571
    %v1573 = vpop.f32.mrf.mxu0
    %1574 = vmatprep.mubr.f32.mxu0 0.0
    %v1575 = vand.u32 %v283, 4294901760
    %1576 = vmatmul.mubr.f32.gmra.mxu0 %v1575
    %v1577 = vpop.f32.mrf.mxu0
    %v1578 = vadd.f32 %v855, %v1577
    %v1579 = vpop.f32.mrf.mxu0
    %1580 = vmatprep.mubr.f32.mxu0 0.0
    %v1581 = vand.u32 %v286, 4294901760
    %1582 = vmatmul.mubr.f32.gmra.mxu0 %v1581
    %v1583 = vpop.f32.mrf.mxu0
    %v1584 = vadd.f32 %v865, %v1583
    %v1585 = vpop.f32.mrf.mxu0
    %1586 = vmatprep.mubr.f32.mxu0 0.0
    %v1587 = vand.u32 %v289, 4294901760
    %1588 = vmatmul.mubr.f32.gmra.mxu0 %v1587
    %v1589 = vpop.f32.mrf.mxu0
    %v1590 = vadd.f32 %v875, %v1589
    %v1591 = vpop.f32.mrf.mxu0
    %1592 = vmatprep.mubr.f32.mxu0 0.0
    %v1593 = vand.u32 %v292, 4294901760
    %1594 = vmatmul.mubr.f32.gmra.mxu0 %v1593
    %v1595 = vpop.f32.mrf.mxu0
    %v1596 = vadd.f32 %v885, %v1595
    %v1597 = vpop.f32.mrf.mxu0
    %1598 = vmatprep.mubr.f32.mxu0 0.0
    %v1599 = vand.u32 %v295, 4294901760
    %1600 = vmatmul.mubr.f32.gmra.mxu0 %v1599
    %v1601 = vpop.f32.mrf.mxu0
    %v1602 = vadd.f32 %v895, %v1601
    %v1603 = vpop.f32.mrf.mxu0
    %1604 = vmatprep.mubr.f32.mxu0 0.0
    %v1605 = vand.u32 %v298, 4294901760
    %1606 = vmatmul.mubr.f32.gmra.mxu0 %v1605
    %v1607 = vpop.f32.mrf.mxu0
    %v1608 = vadd.f32 %v905, %v1607
    %v1609 = vpop.f32.mrf.mxu0
    %1610 = vmatprep.mubr.f32.mxu0 0.0
    %v1611 = vand.u32 %v301, 4294901760
    %1612 = vmatmul.mubr.f32.gmra.mxu0 %v1611
    %v1613 = vpop.f32.mrf.mxu0
    %v1614 = vadd.f32 %v915, %v1613
    %v1615 = vpop.f32.mrf.mxu0
    %1616 = vmatprep.mubr.f32.mxu0 0.0
    %v1617 = vand.u32 %v304, 4294901760
    %1618 = vmatmul.mubr.f32.gmra.mxu0 %v1617
    %v1619 = vpop.f32.mrf.mxu0
    %v1620 = vadd.f32 %v925, %v1619
    %v1621 = vpop.f32.mrf.mxu0
    %1622 = vmatprep.mubr.f32.mxu0 0.0
    %v1623 = vand.u32 %v307, 4294901760
    %1624 = vmatmul.mubr.f32.gmra.mxu0 %v1623
    %v1625 = vpop.f32.mrf.mxu0
    %v1626 = vadd.f32 %v935, %v1625
    %v1627 = vpop.f32.mrf.mxu0
    %1628 = vmatprep.mubr.f32.mxu0 0.0
    %v1629 = vand.u32 %v310, 4294901760
    %1630 = vmatmul.mubr.f32.gmra.mxu0 %v1629
    %v1631 = vpop.f32.mrf.mxu0
    %v1632 = vadd.f32 %v945, %v1631
    %v1633 = vpop.f32.mrf.mxu0
    %1634 = vmatprep.mubr.f32.mxu0 0.0
    %v1635 = vand.u32 %v313, 4294901760
    %1636 = vmatmul.mubr.f32.gmra.mxu0 %v1635
    %v1637 = vpop.f32.mrf.mxu0
    %v1638 = vadd.f32 %v955, %v1637
    %v1639 = vpop.f32.mrf.mxu0
    %1640 = vmatprep.mubr.f32.mxu0 0.0
    %v1641 = vand.u32 %v316, 4294901760
    %1642 = vmatmul.mubr.f32.gmra.mxu0 %v1641
    %v1643 = vpop.f32.mrf.mxu0
    %v1644 = vadd.f32 %v965, %v1643
    %v1645 = vpop.f32.mrf.mxu0
    %1646 = vmatprep.mubr.f32.mxu0 0.0
    %v1647 = vand.u32 %v319, 4294901760
    %1648 = vmatmul.mubr.f32.gmra.mxu0 %v1647
    %v1649 = vpop.f32.mrf.mxu0
    %v1650 = vadd.f32 %v975, %v1649
    %v1651 = vpop.f32.mrf.mxu0
    %1652 = vmatprep.mubr.f32.mxu0 0.0
    %v1653 = vand.u32 %v322, 4294901760
    %1654 = vmatmul.mubr.f32.gmra.mxu0 %v1653
    %v1655 = vpop.f32.mrf.mxu0
    %v1656 = vadd.f32 %v985, %v1655
    %v1657 = vpop.f32.mrf.mxu0
    %1658 = vmatprep.mubr.f32.mxu0 0.0
    %v1659 = vand.u32 %v325, 4294901760
    %1660 = vmatmul.mubr.f32.gmra.mxu0 %v1659
    %v1661 = vpop.f32.mrf.mxu0
    %v1662 = vadd.f32 %v995, %v1661
    %v1663 = vpop.f32.mrf.mxu0
    %1664 = vmatprep.mubr.f32.mxu0 0.0
    %v1665 = vand.u32 %v328, 4294901760
    %1666 = vmatmul.mubr.f32.gmra.mxu0 %v1665
    %v1667 = vpop.f32.mrf.mxu0
    %v1668 = vadd.f32 %v1005, %v1667
    %v1669 = vpop.f32.mrf.mxu0
    %1670 = vmatprep.mubr.f32.mxu0 0.0
    %v1671 = vand.u32 %v331, 4294901760
    %1672 = vmatmul.mubr.f32.gmra.mxu0 %v1671
    %v1673 = vpop.f32.mrf.mxu0
    %v1674 = vadd.f32 %v1015, %v1673
    %v1675 = vpop.f32.mrf.mxu0
    %1676 = vmatprep.mubr.f32.mxu0 0.0
    %v1677 = vand.u32 %v334, 4294901760
    %1678 = vmatmul.mubr.f32.gmra.mxu0 %v1677
    %v1679 = vpop.f32.mrf.mxu0
    %v1680 = vadd.f32 %v1025, %v1679
    %v1681 = vpop.f32.mrf.mxu0
    %1682 = vmatprep.mubr.f32.mxu0 0.0
    %v1683 = vand.u32 %v337, 4294901760
    %1684 = vmatmul.mubr.f32.gmra.mxu0 %v1683
    %v1685 = vpop.f32.mrf.mxu0
    %v1686 = vadd.f32 %v1035, %v1685
    %v1687 = vpop.f32.mrf.mxu0
    %1688 = vmatprep.mubr.f32.mxu0 0.0
    %v1689 = vand.u32 %v340, 4294901760
    %1690 = vmatmul.mubr.f32.gmra.mxu0 %v1689
    %v1691 = vpop.f32.mrf.mxu0
    %v1692 = vadd.f32 %v1045, %v1691
    %v1693 = vpop.f32.mrf.mxu0
    %1694 = vmatprep.mubr.f32.mxu0 0.0
    %v1695 = vand.u32 %v343, 4294901760
    %1696 = vmatmul.mubr.f32.gmra.mxu0 %v1695
    %v1697 = vpop.f32.mrf.mxu0
    %v1698 = vadd.f32 %v1055, %v1697
    %v1699 = vpop.f32.mrf.mxu0
    %1700 = vmatprep.mubr.f32.mxu0 0.0
    %v1701 = vand.u32 %v346, 4294901760
    %1702 = vmatmul.mubr.f32.gmra.mxu0 %v1701
    %v1703 = vpop.f32.mrf.mxu0
    %v1704 = vadd.f32 %v1065, %v1703
    %v1705 = vpop.f32.mrf.mxu0
    %1706 = vmatprep.mubr.f32.mxu0 0.0
    %v1707 = vand.u32 %v349, 4294901760
    %1708 = vmatmul.mubr.f32.gmra.mxu0 %v1707
    %v1709 = vpop.f32.mrf.mxu0
    %v1710 = vadd.f32 %v1075, %v1709
    %v1711 = vpop.f32.mrf.mxu0
    %1712 = vmatprep.mubr.f32.mxu0 0.0
    %v1713 = vand.u32 %v352, 4294901760
    %1714 = vmatmul.mubr.f32.gmra.mxu0 %v1713
    %v1715 = vpop.f32.mrf.mxu0
    %v1716 = vadd.f32 %v1085, %v1715
    %v1717 = vpop.f32.mrf.mxu0
    %1718 = vmatprep.mubr.f32.mxu0 0.0
    %v1719 = vand.u32 %v355, 4294901760
    %1720 = vmatmul.mubr.f32.gmra.mxu0 %v1719
    %v1721 = vpop.f32.mrf.mxu0
    %v1722 = vadd.f32 %v1095, %v1721
    %v1723 = vpop.f32.mrf.mxu0
    %1724 = vmatprep.mubr.f32.mxu0 0.0
    %v1725 = vand.u32 %v358, 4294901760
    %1726 = vmatmul.mubr.f32.gmra.mxu0 %v1725
    %v1727 = vpop.f32.mrf.mxu0
    %v1728 = vadd.f32 %v1105, %v1727
    %v1729 = vpop.f32.mrf.mxu0
    %1730 = vmatprep.mubr.f32.mxu0 0.0
    %v1731 = vand.u32 %v361, 4294901760
    %1732 = vmatmul.mubr.f32.gmra.mxu0 %v1731
    %v1733 = vpop.f32.mrf.mxu0
    %v1734 = vadd.f32 %v1115, %v1733
    %v1735 = vpop.f32.mrf.mxu0
    %1736 = vmatprep.mubr.f32.mxu0 0.0
    %v1737 = vand.u32 %v364, 4294901760
    %1738 = vmatmul.mubr.f32.gmra.mxu0 %v1737
    %v1739 = vpop.f32.mrf.mxu0
    %v1740 = vadd.f32 %v1125, %v1739
    %v1741 = vpop.f32.mrf.mxu0
    %1742 = vmatprep.mubr.f32.mxu0 0.0
    %v1743 = vand.u32 %v367, 4294901760
    %1744 = vmatmul.mubr.f32.gmra.mxu0 %v1743
    %v1745 = vpop.f32.mrf.mxu0
    %v1746 = vadd.f32 %v1135, %v1745
    %v1747 = vpop.f32.mrf.mxu0
    %1748 = vmatprep.mubr.f32.mxu0 0.0
    %v1749 = vand.u32 %v370, 4294901760
    %1750 = vmatmul.mubr.f32.gmra.mxu0 %v1749
    %v1751 = vpop.f32.mrf.mxu0
    %v1752 = vadd.f32 %v1145, %v1751
    %v1753 = vpop.f32.mrf.mxu0
    %1754 = vmatprep.mubr.f32.mxu0 0.0
    %v1755 = vand.u32 %v373, 4294901760
    %1756 = vmatmul.mubr.f32.gmra.mxu0 %v1755
    %v1757 = vpop.f32.mrf.mxu0
    %v1758 = vadd.f32 %v1155, %v1757
    %v1759 = vpop.f32.mrf.mxu0
    %1760 = vmatprep.mubr.f32.mxu0 0.0
    %v1761 = vand.u32 %v376, 4294901760
    %1762 = vmatmul.mubr.f32.gmra.mxu0 %v1761
    %v1763 = vpop.f32.mrf.mxu0
    %v1764 = vadd.f32 %v1165, %v1763
    %v1765 = vpop.f32.mrf.mxu0
    %1766 = vmatprep.mubr.f32.mxu0 0.0
    %v1767 = vand.u32 %v379, 4294901760
    %1768 = vmatmul.mubr.f32.gmra.mxu0 %v1767
    %v1769 = vpop.f32.mrf.mxu0
    %v1770 = vadd.f32 %v1175, %v1769
    %v1771 = vpop.f32.mrf.mxu0
    %1772 = vmatprep.mubr.f32.mxu0 0.0
    %v1773 = vand.u32 %v382, 4294901760
    %1774 = vmatmul.mubr.f32.gmra.mxu0 %v1773
    %v1775 = vpop.f32.mrf.mxu0
    %v1776 = vadd.f32 %v1185, %v1775
    %v1777 = vpop.f32.mrf.mxu0
    %1778 = vmatprep.mubr.f32.mxu0 0.0
    %v1779 = vand.u32 %v385, 4294901760
    %1780 = vmatmul.mubr.f32.gmra.mxu0 %v1779
    %v1781 = vpop.f32.mrf.mxu0
    %v1782 = vadd.f32 %v1195, %v1781
    %v1783 = vpop.f32.mrf.mxu0
    %1784 = vmatprep.mubr.f32.mxu0 0.0
    %v1785 = vand.u32 %v388, 4294901760
    %1786 = vmatmul.mubr.f32.gmra.mxu0 %v1785
    %v1787 = vpop.f32.mrf.mxu0
    %v1788 = vadd.f32 %v1205, %v1787
    %v1789 = vpop.f32.mrf.mxu0
    %1790 = vmatprep.mubr.f32.mxu0 0.0
    %v1791 = vand.u32 %v391, 4294901760
    %1792 = vmatmul.mubr.f32.gmra.mxu0 %v1791
    %v1793 = vpop.f32.mrf.mxu0
    %v1794 = vadd.f32 %v1215, %v1793
    %v1795 = vpop.f32.mrf.mxu0
    %1796 = vmatprep.mubr.f32.mxu0 0.0
    %v1797 = vand.u32 %v394, 4294901760
    %1798 = vmatmul.mubr.f32.gmra.mxu0 %v1797
    %v1799 = vpop.f32.mrf.mxu0
    %v1800 = vadd.f32 %v1225, %v1799
    %v1801 = vpop.f32.mrf.mxu0
    %1802 = vmatprep.mubr.f32.mxu0 0.0
    %v1803 = vand.u32 %v397, 4294901760
    %1804 = vmatmul.mubr.f32.gmra.mxu0 %v1803
    %v1805 = vpop.f32.mrf.mxu0
    %v1806 = vadd.f32 %v1235, %v1805
    %v1807 = vpop.f32.mrf.mxu0
    %1808 = vmatprep.mubr.f32.mxu0 0.0
    %v1809 = vand.u32 %v400, 4294901760
    %1810 = vmatmul.mubr.f32.gmra.mxu0 %v1809
    %v1811 = vpop.f32.mrf.mxu0
    %v1812 = vadd.f32 %v1245, %v1811
    %v1813 = vpop.f32.mrf.mxu0
    %1814 = vmatprep.mubr.f32.mxu0 0.0
    %v1815 = vand.u32 %v403, 4294901760
    %1816 = vmatmul.mubr.f32.gmra.mxu0 %v1815
    %v1817 = vpop.f32.mrf.mxu0
    %v1818 = vadd.f32 %v1255, %v1817
    %v1819 = vpop.f32.mrf.mxu0
    %1820 = vmatprep.mubr.f32.mxu0 0.0
    %v1821 = vand.u32 %v406, 4294901760
    %1822 = vmatmul.mubr.f32.gmra.mxu0 %v1821
    %v1823 = vpop.f32.mrf.mxu0
    %v1824 = vadd.f32 %v1265, %v1823
    %v1825 = vpop.f32.mrf.mxu0
    %1826 = vmatprep.mubr.f32.mxu0 0.0
    %v1827 = vand.u32 %v409, 4294901760
    %1828 = vmatmul.mubr.f32.gmra.mxu0 %v1827
    %v1829 = vpop.f32.mrf.mxu0
    %v1830 = vadd.f32 %v1275, %v1829
    %v1831 = vpop.f32.mrf.mxu0
    %1832 = vdwg.mxu0
    %1833 = vmatprep.subr.mxu0 0.0
    %1834 = vmatpush1.msra.mxu0 0.0
    %1835 = vmatprep.subr.mxu0 0.0
    %1836 = vmatpush1.msra.mxu0 0.0
    %1837 = vmatprep.subr.mxu0 0.0
    %1838 = vmatpush1.msra.mxu0 0.0
    %1839 = vmatprep.subr.mxu0 0.0
    %1840 = vmatpush1.msra.mxu0 0.0
    %1841 = vmatprep.subr.mxu0 0.0
    %1842 = vmatpush1.msra.mxu0 0.0
    %1843 = vmatprep.subr.mxu0 0.0
    %1844 = vmatpush1.msra.mxu0 0.0
    %1845 = vmatprep.subr.mxu0 0.0
    %1846 = vmatpush1.msra.mxu0 0.0
    %1847 = vmatprep.subr.mxu0 0.0
    %1848 = vmatpush1.msra.mxu0 0.0
    %1849 = vmatprep.subr.mxu0 0.0
    %1850 = vmatpush1.msra.mxu0 0.0
    %1851 = vmatprep.subr.mxu0 0.0
    %1852 = vmatpush1.msra.mxu0 0.0
    %1853 = vmatprep.subr.mxu0 0.0
    %1854 = vmatpush1.msra.mxu0 0.0
    %1855 = vmatprep.subr.mxu0 0.0
    %1856 = vmatpush1.msra.mxu0 0.0
    %1857 = vmatprep.subr.mxu0 0.0
    %1858 = vmatpush1.msra.mxu0 0.0
    %1859 = vmatprep.subr.mxu0 0.0
    %1860 = vmatpush1.msra.mxu0 0.0
    %1861 = vmatprep.subr.mxu0 0.0
    %v1862 = vand.u32 %v121, 4294901760
    %v1863 = vsub.f32 %v121, %v1862
    %1864 = vmatpush1.msra.mxu0 %v1863
    %1865 = vmatprep.subr.mxu0 0.0
    %v1866 = vand.u32 %v120, 4294901760
    %v1867 = vsub.f32 %v120, %v1866
    %1868 = vmatpush1.msra.mxu0 %v1867
    %1869 = vmatprep.subr.mxu0 0.0
    %1870 = vmatpush2.msra.mxu0 0.0
    %1871 = vmatprep.subr.mxu0 0.0
    %1872 = vmatpush2.msra.mxu0 0.0
    %1873 = vmatprep.subr.mxu0 0.0
    %1874 = vmatpush2.msra.mxu0 0.0
    %1875 = vmatprep.subr.mxu0 0.0
    %1876 = vmatpush2.msra.mxu0 0.0
    %1877 = vmatprep.subr.mxu0 0.0
    %1878 = vmatpush2.msra.mxu0 0.0
    %1879 = vmatprep.subr.mxu0 0.0
    %1880 = vmatpush2.msra.mxu0 0.0
    %1881 = vmatprep.subr.mxu0 0.0
    %1882 = vmatpush2.msra.mxu0 0.0
    %1883 = vmatprep.subr.mxu0 0.0
    %1884 = vmatpush2.msra.mxu0 0.0
    %1885 = vmatprep.subr.mxu0 0.0
    %1886 = vmatpush2.msra.mxu0 0.0
    %1887 = vmatprep.subr.mxu0 0.0
    %1888 = vmatpush2.msra.mxu0 0.0
    %1889 = vmatprep.subr.mxu0 0.0
    %1890 = vmatpush2.msra.mxu0 0.0
    %1891 = vmatprep.subr.mxu0 0.0
    %1892 = vmatpush2.msra.mxu0 0.0
    %1893 = vmatprep.subr.mxu0 0.0
    %1894 = vmatpush2.msra.mxu0 0.0
    %1895 = vmatprep.subr.mxu0 0.0
    %1896 = vmatpush2.msra.mxu0 0.0
    %1897 = vmatprep.subr.mxu0 0.0
    %1898 = vmatpush2.msra.mxu0 0.0
    %1899 = vmatprep.subr.mxu0 0.0
    %1900 = vmatpush2.msra.mxu0 0.0
    %1901 = vmatprep.mubr.f32.mxu0 0.0
    %v1902 = vand.u32 %v172, 4294901760
    %v1903 = vsub.f32 %v172, %v1902
    %1904 = vmatmul.mubr.f32.gmra.mxu0 %v1903
    %v1905 = vpop.f32.mrf.mxu0
    %v1906 = vadd.f32 %v1356, %v1905
    %v1907 = vpop.f32.mrf.mxu0
    %1908 = vmatprep.mubr.f32.mxu0 0.0
    %v1909 = vand.u32 %v175, 4294901760
    %v1910 = vsub.f32 %v175, %v1909
    %1911 = vmatmul.mubr.f32.gmra.mxu0 %v1910
    %v1912 = vpop.f32.mrf.mxu0
    %v1913 = vadd.f32 %v1362, %v1912
    %v1914 = vpop.f32.mrf.mxu0
    %1915 = vmatprep.mubr.f32.mxu0 0.0
    %v1916 = vand.u32 %v178, 4294901760
    %v1917 = vsub.f32 %v178, %v1916
    %1918 = vmatmul.mubr.f32.gmra.mxu0 %v1917
    %v1919 = vpop.f32.mrf.mxu0
    %v1920 = vadd.f32 %v1368, %v1919
    %v1921 = vpop.f32.mrf.mxu0
    %1922 = vmatprep.mubr.f32.mxu0 0.0
    %v1923 = vand.u32 %v181, 4294901760
    %v1924 = vsub.f32 %v181, %v1923
    %1925 = vmatmul.mubr.f32.gmra.mxu0 %v1924
    %v1926 = vpop.f32.mrf.mxu0
    %v1927 = vadd.f32 %v1374, %v1926
    %v1928 = vpop.f32.mrf.mxu0
    %1929 = vmatprep.mubr.f32.mxu0 0.0
    %v1930 = vand.u32 %v184, 4294901760
    %v1931 = vsub.f32 %v184, %v1930
    %1932 = vmatmul.mubr.f32.gmra.mxu0 %v1931
    %v1933 = vpop.f32.mrf.mxu0
    %v1934 = vadd.f32 %v1380, %v1933
    %v1935 = vpop.f32.mrf.mxu0
    %1936 = vmatprep.mubr.f32.mxu0 0.0
    %v1937 = vand.u32 %v187, 4294901760
    %v1938 = vsub.f32 %v187, %v1937
    %1939 = vmatmul.mubr.f32.gmra.mxu0 %v1938
    %v1940 = vpop.f32.mrf.mxu0
    %v1941 = vadd.f32 %v1386, %v1940
    %v1942 = vpop.f32.mrf.mxu0
    %1943 = vmatprep.mubr.f32.mxu0 0.0
    %v1944 = vand.u32 %v190, 4294901760
    %v1945 = vsub.f32 %v190, %v1944
    %1946 = vmatmul.mubr.f32.gmra.mxu0 %v1945
    %v1947 = vpop.f32.mrf.mxu0
    %v1948 = vadd.f32 %v1392, %v1947
    %v1949 = vpop.f32.mrf.mxu0
    %1950 = vmatprep.mubr.f32.mxu0 0.0
    %v1951 = vand.u32 %v193, 4294901760
    %v1952 = vsub.f32 %v193, %v1951
    %1953 = vmatmul.mubr.f32.gmra.mxu0 %v1952
    %v1954 = vpop.f32.mrf.mxu0
    %v1955 = vadd.f32 %v1398, %v1954
    %v1956 = vpop.f32.mrf.mxu0
    %1957 = vmatprep.mubr.f32.mxu0 0.0
    %v1958 = vand.u32 %v196, 4294901760
    %v1959 = vsub.f32 %v196, %v1958
    %1960 = vmatmul.mubr.f32.gmra.mxu0 %v1959
    %v1961 = vpop.f32.mrf.mxu0
    %v1962 = vadd.f32 %v1404, %v1961
    %v1963 = vpop.f32.mrf.mxu0
    %1964 = vmatprep.mubr.f32.mxu0 0.0
    %v1965 = vand.u32 %v199, 4294901760
    %v1966 = vsub.f32 %v199, %v1965
    %1967 = vmatmul.mubr.f32.gmra.mxu0 %v1966
    %v1968 = vpop.f32.mrf.mxu0
    %v1969 = vadd.f32 %v1410, %v1968
    %v1970 = vpop.f32.mrf.mxu0
    %1971 = vmatprep.mubr.f32.mxu0 0.0
    %v1972 = vand.u32 %v202, 4294901760
    %v1973 = vsub.f32 %v202, %v1972
    %1974 = vmatmul.mubr.f32.gmra.mxu0 %v1973
    %v1975 = vpop.f32.mrf.mxu0
    %v1976 = vadd.f32 %v1416, %v1975
    %v1977 = vpop.f32.mrf.mxu0
    %1978 = vmatprep.mubr.f32.mxu0 0.0
    %v1979 = vand.u32 %v205, 4294901760
    %v1980 = vsub.f32 %v205, %v1979
    %1981 = vmatmul.mubr.f32.gmra.mxu0 %v1980
    %v1982 = vpop.f32.mrf.mxu0
    %v1983 = vadd.f32 %v1422, %v1982
    %v1984 = vpop.f32.mrf.mxu0
    %1985 = vmatprep.mubr.f32.mxu0 0.0
    %v1986 = vand.u32 %v208, 4294901760
    %v1987 = vsub.f32 %v208, %v1986
    %1988 = vmatmul.mubr.f32.gmra.mxu0 %v1987
    %v1989 = vpop.f32.mrf.mxu0
    %v1990 = vadd.f32 %v1428, %v1989
    %v1991 = vpop.f32.mrf.mxu0
    %1992 = vmatprep.mubr.f32.mxu0 0.0
    %v1993 = vand.u32 %v211, 4294901760
    %v1994 = vsub.f32 %v211, %v1993
    %1995 = vmatmul.mubr.f32.gmra.mxu0 %v1994
    %v1996 = vpop.f32.mrf.mxu0
    %v1997 = vadd.f32 %v1434, %v1996
    %v1998 = vpop.f32.mrf.mxu0
    %1999 = vmatprep.mubr.f32.mxu0 0.0
    %v2000 = vand.u32 %v214, 4294901760
    %v2001 = vsub.f32 %v214, %v2000
    %2002 = vmatmul.mubr.f32.gmra.mxu0 %v2001
    %v2003 = vpop.f32.mrf.mxu0
    %v2004 = vadd.f32 %v1440, %v2003
    %v2005 = vpop.f32.mrf.mxu0
    %2006 = vmatprep.mubr.f32.mxu0 0.0
    %v2007 = vand.u32 %v217, 4294901760
    %v2008 = vsub.f32 %v217, %v2007
    %2009 = vmatmul.mubr.f32.gmra.mxu0 %v2008
    %v2010 = vpop.f32.mrf.mxu0
    %v2011 = vadd.f32 %v1446, %v2010
    %v2012 = vpop.f32.mrf.mxu0
    %2013 = vmatprep.mubr.f32.mxu0 0.0
    %v2014 = vand.u32 %v220, 4294901760
    %v2015 = vsub.f32 %v220, %v2014
    %2016 = vmatmul.mubr.f32.gmra.mxu0 %v2015
    %v2017 = vpop.f32.mrf.mxu0
    %v2018 = vadd.f32 %v1452, %v2017
    %v2019 = vpop.f32.mrf.mxu0
    %2020 = vmatprep.mubr.f32.mxu0 0.0
    %v2021 = vand.u32 %v223, 4294901760
    %v2022 = vsub.f32 %v223, %v2021
    %2023 = vmatmul.mubr.f32.gmra.mxu0 %v2022
    %v2024 = vpop.f32.mrf.mxu0
    %v2025 = vadd.f32 %v1458, %v2024
    %v2026 = vpop.f32.mrf.mxu0
    %2027 = vmatprep.mubr.f32.mxu0 0.0
    %v2028 = vand.u32 %v226, 4294901760
    %v2029 = vsub.f32 %v226, %v2028
    %2030 = vmatmul.mubr.f32.gmra.mxu0 %v2029
    %v2031 = vpop.f32.mrf.mxu0
    %v2032 = vadd.f32 %v1464, %v2031
    %v2033 = vpop.f32.mrf.mxu0
    %2034 = vmatprep.mubr.f32.mxu0 0.0
    %v2035 = vand.u32 %v229, 4294901760
    %v2036 = vsub.f32 %v229, %v2035
    %2037 = vmatmul.mubr.f32.gmra.mxu0 %v2036
    %v2038 = vpop.f32.mrf.mxu0
    %v2039 = vadd.f32 %v1470, %v2038
    %v2040 = vpop.f32.mrf.mxu0
    %2041 = vmatprep.mubr.f32.mxu0 0.0
    %v2042 = vand.u32 %v232, 4294901760
    %v2043 = vsub.f32 %v232, %v2042
    %2044 = vmatmul.mubr.f32.gmra.mxu0 %v2043
    %v2045 = vpop.f32.mrf.mxu0
    %v2046 = vadd.f32 %v1476, %v2045
    %v2047 = vpop.f32.mrf.mxu0
    %2048 = vmatprep.mubr.f32.mxu0 0.0
    %v2049 = vand.u32 %v235, 4294901760
    %v2050 = vsub.f32 %v235, %v2049
    %2051 = vmatmul.mubr.f32.gmra.mxu0 %v2050
    %v2052 = vpop.f32.mrf.mxu0
    %v2053 = vadd.f32 %v1482, %v2052
    %v2054 = vpop.f32.mrf.mxu0
    %2055 = vmatprep.mubr.f32.mxu0 0.0
    %v2056 = vand.u32 %v238, 4294901760
    %v2057 = vsub.f32 %v238, %v2056
    %2058 = vmatmul.mubr.f32.gmra.mxu0 %v2057
    %v2059 = vpop.f32.mrf.mxu0
    %v2060 = vadd.f32 %v1488, %v2059
    %v2061 = vpop.f32.mrf.mxu0
    %2062 = vmatprep.mubr.f32.mxu0 0.0
    %v2063 = vand.u32 %v241, 4294901760
    %v2064 = vsub.f32 %v241, %v2063
    %2065 = vmatmul.mubr.f32.gmra.mxu0 %v2064
    %v2066 = vpop.f32.mrf.mxu0
    %v2067 = vadd.f32 %v1494, %v2066
    %v2068 = vpop.f32.mrf.mxu0
    %2069 = vmatprep.mubr.f32.mxu0 0.0
    %v2070 = vand.u32 %v244, 4294901760
    %v2071 = vsub.f32 %v244, %v2070
    %2072 = vmatmul.mubr.f32.gmra.mxu0 %v2071
    %v2073 = vpop.f32.mrf.mxu0
    %v2074 = vadd.f32 %v1500, %v2073
    %v2075 = vpop.f32.mrf.mxu0
    %2076 = vmatprep.mubr.f32.mxu0 0.0
    %v2077 = vand.u32 %v247, 4294901760
    %v2078 = vsub.f32 %v247, %v2077
    %2079 = vmatmul.mubr.f32.gmra.mxu0 %v2078
    %v2080 = vpop.f32.mrf.mxu0
    %v2081 = vadd.f32 %v1506, %v2080
    %v2082 = vpop.f32.mrf.mxu0
    %2083 = vmatprep.mubr.f32.mxu0 0.0
    %v2084 = vand.u32 %v250, 4294901760
    %v2085 = vsub.f32 %v250, %v2084
    %2086 = vmatmul.mubr.f32.gmra.mxu0 %v2085
    %v2087 = vpop.f32.mrf.mxu0
    %v2088 = vadd.f32 %v1512, %v2087
    %v2089 = vpop.f32.mrf.mxu0
    %2090 = vmatprep.mubr.f32.mxu0 0.0
    %v2091 = vand.u32 %v253, 4294901760
    %v2092 = vsub.f32 %v253, %v2091
    %2093 = vmatmul.mubr.f32.gmra.mxu0 %v2092
    %v2094 = vpop.f32.mrf.mxu0
    %v2095 = vadd.f32 %v1518, %v2094
    %v2096 = vpop.f32.mrf.mxu0
    %2097 = vmatprep.mubr.f32.mxu0 0.0
    %v2098 = vand.u32 %v256, 4294901760
    %v2099 = vsub.f32 %v256, %v2098
    %2100 = vmatmul.mubr.f32.gmra.mxu0 %v2099
    %v2101 = vpop.f32.mrf.mxu0
    %v2102 = vadd.f32 %v1524, %v2101
    %v2103 = vpop.f32.mrf.mxu0
    %2104 = vmatprep.mubr.f32.mxu0 0.0
    %v2105 = vand.u32 %v259, 4294901760
    %v2106 = vsub.f32 %v259, %v2105
    %2107 = vmatmul.mubr.f32.gmra.mxu0 %v2106
    %v2108 = vpop.f32.mrf.mxu0
    %v2109 = vadd.f32 %v1530, %v2108
    %v2110 = vpop.f32.mrf.mxu0
    %2111 = vmatprep.mubr.f32.mxu0 0.0
    %v2112 = vand.u32 %v262, 4294901760
    %v2113 = vsub.f32 %v262, %v2112
    %2114 = vmatmul.mubr.f32.gmra.mxu0 %v2113
    %v2115 = vpop.f32.mrf.mxu0
    %v2116 = vadd.f32 %v1536, %v2115
    %v2117 = vpop.f32.mrf.mxu0
    %2118 = vmatprep.mubr.f32.mxu0 0.0
    %v2119 = vand.u32 %v265, 4294901760
    %v2120 = vsub.f32 %v265, %v2119
    %2121 = vmatmul.mubr.f32.gmra.mxu0 %v2120
    %v2122 = vpop.f32.mrf.mxu0
    %v2123 = vadd.f32 %v1542, %v2122
    %v2124 = vpop.f32.mrf.mxu0
    %2125 = vmatprep.mubr.f32.mxu0 0.0
    %v2126 = vand.u32 %v268, 4294901760
    %v2127 = vsub.f32 %v268, %v2126
    %2128 = vmatmul.mubr.f32.gmra.mxu0 %v2127
    %v2129 = vpop.f32.mrf.mxu0
    %v2130 = vadd.f32 %v1548, %v2129
    %v2131 = vpop.f32.mrf.mxu0
    %2132 = vmatprep.mubr.f32.mxu0 0.0
    %v2133 = vand.u32 %v271, 4294901760
    %v2134 = vsub.f32 %v271, %v2133
    %2135 = vmatmul.mubr.f32.gmra.mxu0 %v2134
    %v2136 = vpop.f32.mrf.mxu0
    %v2137 = vadd.f32 %v1554, %v2136
    %v2138 = vpop.f32.mrf.mxu0
    %2139 = vmatprep.mubr.f32.mxu0 0.0
    %v2140 = vand.u32 %v274, 4294901760
    %v2141 = vsub.f32 %v274, %v2140
    %2142 = vmatmul.mubr.f32.gmra.mxu0 %v2141
    %v2143 = vpop.f32.mrf.mxu0
    %v2144 = vadd.f32 %v1560, %v2143
    %v2145 = vpop.f32.mrf.mxu0
    %2146 = vmatprep.mubr.f32.mxu0 0.0
    %v2147 = vand.u32 %v277, 4294901760
    %v2148 = vsub.f32 %v277, %v2147
    %2149 = vmatmul.mubr.f32.gmra.mxu0 %v2148
    %v2150 = vpop.f32.mrf.mxu0
    %v2151 = vadd.f32 %v1566, %v2150
    %v2152 = vpop.f32.mrf.mxu0
    %2153 = vmatprep.mubr.f32.mxu0 0.0
    %v2154 = vand.u32 %v280, 4294901760
    %v2155 = vsub.f32 %v280, %v2154
    %2156 = vmatmul.mubr.f32.gmra.mxu0 %v2155
    %v2157 = vpop.f32.mrf.mxu0
    %v2158 = vadd.f32 %v1572, %v2157
    %v2159 = vpop.f32.mrf.mxu0
    %2160 = vmatprep.mubr.f32.mxu0 0.0
    %v2161 = vand.u32 %v283, 4294901760
    %v2162 = vsub.f32 %v283, %v2161
    %2163 = vmatmul.mubr.f32.gmra.mxu0 %v2162
    %v2164 = vpop.f32.mrf.mxu0
    %v2165 = vadd.f32 %v1578, %v2164
    %v2166 = vpop.f32.mrf.mxu0
    %2167 = vmatprep.mubr.f32.mxu0 0.0
    %v2168 = vand.u32 %v286, 4294901760
    %v2169 = vsub.f32 %v286, %v2168
    %2170 = vmatmul.mubr.f32.gmra.mxu0 %v2169
    %v2171 = vpop.f32.mrf.mxu0
    %v2172 = vadd.f32 %v1584, %v2171
    %v2173 = vpop.f32.mrf.mxu0
    %2174 = vmatprep.mubr.f32.mxu0 0.0
    %v2175 = vand.u32 %v289, 4294901760
    %v2176 = vsub.f32 %v289, %v2175
    %2177 = vmatmul.mubr.f32.gmra.mxu0 %v2176
    %v2178 = vpop.f32.mrf.mxu0
    %v2179 = vadd.f32 %v1590, %v2178
    %v2180 = vpop.f32.mrf.mxu0
    %2181 = vmatprep.mubr.f32.mxu0 0.0
    %v2182 = vand.u32 %v292, 4294901760
    %v2183 = vsub.f32 %v292, %v2182
    %2184 = vmatmul.mubr.f32.gmra.mxu0 %v2183
    %v2185 = vpop.f32.mrf.mxu0
    %v2186 = vadd.f32 %v1596, %v2185
    %v2187 = vpop.f32.mrf.mxu0
    %2188 = vmatprep.mubr.f32.mxu0 0.0
    %v2189 = vand.u32 %v295, 4294901760
    %v2190 = vsub.f32 %v295, %v2189
    %2191 = vmatmul.mubr.f32.gmra.mxu0 %v2190
    %v2192 = vpop.f32.mrf.mxu0
    %v2193 = vadd.f32 %v1602, %v2192
    %v2194 = vpop.f32.mrf.mxu0
    %2195 = vmatprep.mubr.f32.mxu0 0.0
    %v2196 = vand.u32 %v298, 4294901760
    %v2197 = vsub.f32 %v298, %v2196
    %2198 = vmatmul.mubr.f32.gmra.mxu0 %v2197
    %v2199 = vpop.f32.mrf.mxu0
    %v2200 = vadd.f32 %v1608, %v2199
    %v2201 = vpop.f32.mrf.mxu0
    %2202 = vmatprep.mubr.f32.mxu0 0.0
    %v2203 = vand.u32 %v301, 4294901760
    %v2204 = vsub.f32 %v301, %v2203
    %2205 = vmatmul.mubr.f32.gmra.mxu0 %v2204
    %v2206 = vpop.f32.mrf.mxu0
    %v2207 = vadd.f32 %v1614, %v2206
    %v2208 = vpop.f32.mrf.mxu0
    %2209 = vmatprep.mubr.f32.mxu0 0.0
    %v2210 = vand.u32 %v304, 4294901760
    %v2211 = vsub.f32 %v304, %v2210
    %2212 = vmatmul.mubr.f32.gmra.mxu0 %v2211
    %v2213 = vpop.f32.mrf.mxu0
    %v2214 = vadd.f32 %v1620, %v2213
    %v2215 = vpop.f32.mrf.mxu0
    %2216 = vmatprep.mubr.f32.mxu0 0.0
    %v2217 = vand.u32 %v307, 4294901760
    %v2218 = vsub.f32 %v307, %v2217
    %2219 = vmatmul.mubr.f32.gmra.mxu0 %v2218
    %v2220 = vpop.f32.mrf.mxu0
    %v2221 = vadd.f32 %v1626, %v2220
    %v2222 = vpop.f32.mrf.mxu0
    %2223 = vmatprep.mubr.f32.mxu0 0.0
    %v2224 = vand.u32 %v310, 4294901760
    %v2225 = vsub.f32 %v310, %v2224
    %2226 = vmatmul.mubr.f32.gmra.mxu0 %v2225
    %v2227 = vpop.f32.mrf.mxu0
    %v2228 = vadd.f32 %v1632, %v2227
    %v2229 = vpop.f32.mrf.mxu0
    %2230 = vmatprep.mubr.f32.mxu0 0.0
    %v2231 = vand.u32 %v313, 4294901760
    %v2232 = vsub.f32 %v313, %v2231
    %2233 = vmatmul.mubr.f32.gmra.mxu0 %v2232
    %v2234 = vpop.f32.mrf.mxu0
    %v2235 = vadd.f32 %v1638, %v2234
    %v2236 = vpop.f32.mrf.mxu0
    %2237 = vmatprep.mubr.f32.mxu0 0.0
    %v2238 = vand.u32 %v316, 4294901760
    %v2239 = vsub.f32 %v316, %v2238
    %2240 = vmatmul.mubr.f32.gmra.mxu0 %v2239
    %v2241 = vpop.f32.mrf.mxu0
    %v2242 = vadd.f32 %v1644, %v2241
    %v2243 = vpop.f32.mrf.mxu0
    %2244 = vmatprep.mubr.f32.mxu0 0.0
    %v2245 = vand.u32 %v319, 4294901760
    %v2246 = vsub.f32 %v319, %v2245
    %2247 = vmatmul.mubr.f32.gmra.mxu0 %v2246
    %v2248 = vpop.f32.mrf.mxu0
    %v2249 = vadd.f32 %v1650, %v2248
    %v2250 = vpop.f32.mrf.mxu0
    %2251 = vmatprep.mubr.f32.mxu0 0.0
    %v2252 = vand.u32 %v322, 4294901760
    %v2253 = vsub.f32 %v322, %v2252
    %2254 = vmatmul.mubr.f32.gmra.mxu0 %v2253
    %v2255 = vpop.f32.mrf.mxu0
    %v2256 = vadd.f32 %v1656, %v2255
    %v2257 = vpop.f32.mrf.mxu0
    %2258 = vmatprep.mubr.f32.mxu0 0.0
    %v2259 = vand.u32 %v325, 4294901760
    %v2260 = vsub.f32 %v325, %v2259
    %2261 = vmatmul.mubr.f32.gmra.mxu0 %v2260
    %v2262 = vpop.f32.mrf.mxu0
    %v2263 = vadd.f32 %v1662, %v2262
    %v2264 = vpop.f32.mrf.mxu0
    %2265 = vmatprep.mubr.f32.mxu0 0.0
    %v2266 = vand.u32 %v328, 4294901760
    %v2267 = vsub.f32 %v328, %v2266
    %2268 = vmatmul.mubr.f32.gmra.mxu0 %v2267
    %v2269 = vpop.f32.mrf.mxu0
    %v2270 = vadd.f32 %v1668, %v2269
    %v2271 = vpop.f32.mrf.mxu0
    %2272 = vmatprep.mubr.f32.mxu0 0.0
    %v2273 = vand.u32 %v331, 4294901760
    %v2274 = vsub.f32 %v331, %v2273
    %2275 = vmatmul.mubr.f32.gmra.mxu0 %v2274
    %v2276 = vpop.f32.mrf.mxu0
    %v2277 = vadd.f32 %v1674, %v2276
    %v2278 = vpop.f32.mrf.mxu0
    %2279 = vmatprep.mubr.f32.mxu0 0.0
    %v2280 = vand.u32 %v334, 4294901760
    %v2281 = vsub.f32 %v334, %v2280
    %2282 = vmatmul.mubr.f32.gmra.mxu0 %v2281
    %v2283 = vpop.f32.mrf.mxu0
    %v2284 = vadd.f32 %v1680, %v2283
    %v2285 = vpop.f32.mrf.mxu0
    %2286 = vmatprep.mubr.f32.mxu0 0.0
    %v2287 = vand.u32 %v337, 4294901760
    %v2288 = vsub.f32 %v337, %v2287
    %2289 = vmatmul.mubr.f32.gmra.mxu0 %v2288
    %v2290 = vpop.f32.mrf.mxu0
    %v2291 = vadd.f32 %v1686, %v2290
    %v2292 = vpop.f32.mrf.mxu0
    %2293 = vmatprep.mubr.f32.mxu0 0.0
    %v2294 = vand.u32 %v340, 4294901760
    %v2295 = vsub.f32 %v340, %v2294
    %2296 = vmatmul.mubr.f32.gmra.mxu0 %v2295
    %v2297 = vpop.f32.mrf.mxu0
    %v2298 = vadd.f32 %v1692, %v2297
    %v2299 = vpop.f32.mrf.mxu0
    %2300 = vmatprep.mubr.f32.mxu0 0.0
    %v2301 = vand.u32 %v343, 4294901760
    %v2302 = vsub.f32 %v343, %v2301
    %2303 = vmatmul.mubr.f32.gmra.mxu0 %v2302
    %v2304 = vpop.f32.mrf.mxu0
    %v2305 = vadd.f32 %v1698, %v2304
    %v2306 = vpop.f32.mrf.mxu0
    %2307 = vmatprep.mubr.f32.mxu0 0.0
    %v2308 = vand.u32 %v346, 4294901760
    %v2309 = vsub.f32 %v346, %v2308
    %2310 = vmatmul.mubr.f32.gmra.mxu0 %v2309
    %v2311 = vpop.f32.mrf.mxu0
    %v2312 = vadd.f32 %v1704, %v2311
    %v2313 = vpop.f32.mrf.mxu0
    %2314 = vmatprep.mubr.f32.mxu0 0.0
    %v2315 = vand.u32 %v349, 4294901760
    %v2316 = vsub.f32 %v349, %v2315
    %2317 = vmatmul.mubr.f32.gmra.mxu0 %v2316
    %v2318 = vpop.f32.mrf.mxu0
    %v2319 = vadd.f32 %v1710, %v2318
    %v2320 = vpop.f32.mrf.mxu0
    %2321 = vmatprep.mubr.f32.mxu0 0.0
    %v2322 = vand.u32 %v352, 4294901760
    %v2323 = vsub.f32 %v352, %v2322
    %2324 = vmatmul.mubr.f32.gmra.mxu0 %v2323
    %v2325 = vpop.f32.mrf.mxu0
    %v2326 = vadd.f32 %v1716, %v2325
    %v2327 = vpop.f32.mrf.mxu0
    %2328 = vmatprep.mubr.f32.mxu0 0.0
    %v2329 = vand.u32 %v355, 4294901760
    %v2330 = vsub.f32 %v355, %v2329
    %2331 = vmatmul.mubr.f32.gmra.mxu0 %v2330
    %v2332 = vpop.f32.mrf.mxu0
    %v2333 = vadd.f32 %v1722, %v2332
    %v2334 = vpop.f32.mrf.mxu0
    %2335 = vmatprep.mubr.f32.mxu0 0.0
    %v2336 = vand.u32 %v358, 4294901760
    %v2337 = vsub.f32 %v358, %v2336
    %2338 = vmatmul.mubr.f32.gmra.mxu0 %v2337
    %v2339 = vpop.f32.mrf.mxu0
    %v2340 = vadd.f32 %v1728, %v2339
    %v2341 = vpop.f32.mrf.mxu0
    %2342 = vmatprep.mubr.f32.mxu0 0.0
    %v2343 = vand.u32 %v361, 4294901760
    %v2344 = vsub.f32 %v361, %v2343
    %2345 = vmatmul.mubr.f32.gmra.mxu0 %v2344
    %v2346 = vpop.f32.mrf.mxu0
    %v2347 = vadd.f32 %v1734, %v2346
    %v2348 = vpop.f32.mrf.mxu0
    %2349 = vmatprep.mubr.f32.mxu0 0.0
    %v2350 = vand.u32 %v364, 4294901760
    %v2351 = vsub.f32 %v364, %v2350
    %2352 = vmatmul.mubr.f32.gmra.mxu0 %v2351
    %v2353 = vpop.f32.mrf.mxu0
    %v2354 = vadd.f32 %v1740, %v2353
    %v2355 = vpop.f32.mrf.mxu0
    %2356 = vmatprep.mubr.f32.mxu0 0.0
    %v2357 = vand.u32 %v367, 4294901760
    %v2358 = vsub.f32 %v367, %v2357
    %2359 = vmatmul.mubr.f32.gmra.mxu0 %v2358
    %v2360 = vpop.f32.mrf.mxu0
    %v2361 = vadd.f32 %v1746, %v2360
    %v2362 = vpop.f32.mrf.mxu0
    %2363 = vmatprep.mubr.f32.mxu0 0.0
    %v2364 = vand.u32 %v370, 4294901760
    %v2365 = vsub.f32 %v370, %v2364
    %2366 = vmatmul.mubr.f32.gmra.mxu0 %v2365
    %v2367 = vpop.f32.mrf.mxu0
    %v2368 = vadd.f32 %v1752, %v2367
    %v2369 = vpop.f32.mrf.mxu0
    %2370 = vmatprep.mubr.f32.mxu0 0.0
    %v2371 = vand.u32 %v373, 4294901760
    %v2372 = vsub.f32 %v373, %v2371
    %2373 = vmatmul.mubr.f32.gmra.mxu0 %v2372
    %v2374 = vpop.f32.mrf.mxu0
    %v2375 = vadd.f32 %v1758, %v2374
    %v2376 = vpop.f32.mrf.mxu0
    %2377 = vmatprep.mubr.f32.mxu0 0.0
    %v2378 = vand.u32 %v376, 4294901760
    %v2379 = vsub.f32 %v376, %v2378
    %2380 = vmatmul.mubr.f32.gmra.mxu0 %v2379
    %v2381 = vpop.f32.mrf.mxu0
    %v2382 = vadd.f32 %v1764, %v2381
    %v2383 = vpop.f32.mrf.mxu0
    %2384 = vmatprep.mubr.f32.mxu0 0.0
    %v2385 = vand.u32 %v379, 4294901760
    %v2386 = vsub.f32 %v379, %v2385
    %2387 = vmatmul.mubr.f32.gmra.mxu0 %v2386
    %v2388 = vpop.f32.mrf.mxu0
    %v2389 = vadd.f32 %v1770, %v2388
    %v2390 = vpop.f32.mrf.mxu0
    %2391 = vmatprep.mubr.f32.mxu0 0.0
    %v2392 = vand.u32 %v382, 4294901760
    %v2393 = vsub.f32 %v382, %v2392
    %2394 = vmatmul.mubr.f32.gmra.mxu0 %v2393
    %v2395 = vpop.f32.mrf.mxu0
    %v2396 = vadd.f32 %v1776, %v2395
    %v2397 = vpop.f32.mrf.mxu0
    %2398 = vmatprep.mubr.f32.mxu0 0.0
    %v2399 = vand.u32 %v385, 4294901760
    %v2400 = vsub.f32 %v385, %v2399
    %2401 = vmatmul.mubr.f32.gmra.mxu0 %v2400
    %v2402 = vpop.f32.mrf.mxu0
    %v2403 = vadd.f32 %v1782, %v2402
    %v2404 = vpop.f32.mrf.mxu0
    %2405 = vmatprep.mubr.f32.mxu0 0.0
    %v2406 = vand.u32 %v388, 4294901760
    %v2407 = vsub.f32 %v388, %v2406
    %2408 = vmatmul.mubr.f32.gmra.mxu0 %v2407
    %v2409 = vpop.f32.mrf.mxu0
    %v2410 = vadd.f32 %v1788, %v2409
    %v2411 = vpop.f32.mrf.mxu0
    %2412 = vmatprep.mubr.f32.mxu0 0.0
    %v2413 = vand.u32 %v391, 4294901760
    %v2414 = vsub.f32 %v391, %v2413
    %2415 = vmatmul.mubr.f32.gmra.mxu0 %v2414
    %v2416 = vpop.f32.mrf.mxu0
    %v2417 = vadd.f32 %v1794, %v2416
    %v2418 = vpop.f32.mrf.mxu0
    %2419 = vmatprep.mubr.f32.mxu0 0.0
    %v2420 = vand.u32 %v394, 4294901760
    %v2421 = vsub.f32 %v394, %v2420
    %2422 = vmatmul.mubr.f32.gmra.mxu0 %v2421
    %v2423 = vpop.f32.mrf.mxu0
    %v2424 = vadd.f32 %v1800, %v2423
    %v2425 = vpop.f32.mrf.mxu0
    %2426 = vmatprep.mubr.f32.mxu0 0.0
    %v2427 = vand.u32 %v397, 4294901760
    %v2428 = vsub.f32 %v397, %v2427
    %2429 = vmatmul.mubr.f32.gmra.mxu0 %v2428
    %v2430 = vpop.f32.mrf.mxu0
    %v2431 = vadd.f32 %v1806, %v2430
    %v2432 = vpop.f32.mrf.mxu0
    %2433 = vmatprep.mubr.f32.mxu0 0.0
    %v2434 = vand.u32 %v400, 4294901760
    %v2435 = vsub.f32 %v400, %v2434
    %2436 = vmatmul.mubr.f32.gmra.mxu0 %v2435
    %v2437 = vpop.f32.mrf.mxu0
    %v2438 = vadd.f32 %v1812, %v2437
    %v2439 = vpop.f32.mrf.mxu0
    %2440 = vmatprep.mubr.f32.mxu0 0.0
    %v2441 = vand.u32 %v403, 4294901760
    %v2442 = vsub.f32 %v403, %v2441
    %2443 = vmatmul.mubr.f32.gmra.mxu0 %v2442
    %v2444 = vpop.f32.mrf.mxu0
    %v2445 = vadd.f32 %v1818, %v2444
    %v2446 = vpop.f32.mrf.mxu0
    %2447 = vmatprep.mubr.f32.mxu0 0.0
    %v2448 = vand.u32 %v406, 4294901760
    %v2449 = vsub.f32 %v406, %v2448
    %2450 = vmatmul.mubr.f32.gmra.mxu0 %v2449
    %v2451 = vpop.f32.mrf.mxu0
    %v2452 = vadd.f32 %v1824, %v2451
    %v2453 = vpop.f32.mrf.mxu0
    %2454 = vmatprep.mubr.f32.mxu0 0.0
    %v2455 = vand.u32 %v409, 4294901760
    %v2456 = vsub.f32 %v409, %v2455
    %2457 = vmatmul.mubr.f32.gmra.mxu0 %v2456
    %v2458 = vpop.f32.mrf.mxu0
    %v2459 = vadd.f32 %v1830, %v2458
    %v2460 = vpop.f32.mrf.mxu0
    %2461 = vdwg.mxu0
    %2462 = vmatprep.subr.mxu0 0.0
    %2463 = vmatpush1.msra.mxu0 0.0
    %2464 = vmatprep.subr.mxu0 0.0
    %2465 = vmatpush1.msra.mxu0 0.0
    %2466 = vmatprep.subr.mxu0 0.0
    %2467 = vmatpush1.msra.mxu0 0.0
    %2468 = vmatprep.subr.mxu0 0.0
    %2469 = vmatpush1.msra.mxu0 0.0
    %2470 = vmatprep.subr.mxu0 0.0
    %2471 = vmatpush1.msra.mxu0 0.0
    %2472 = vmatprep.subr.mxu0 0.0
    %2473 = vmatpush1.msra.mxu0 0.0
    %2474 = vmatprep.subr.mxu0 0.0
    %2475 = vmatpush1.msra.mxu0 0.0
    %2476 = vmatprep.subr.mxu0 0.0
    %2477 = vmatpush1.msra.mxu0 0.0
    %2478 = vmatprep.subr.mxu0 0.0
    %2479 = vmatpush1.msra.mxu0 0.0
    %2480 = vmatprep.subr.mxu0 0.0
    %2481 = vmatpush1.msra.mxu0 0.0
    %2482 = vmatprep.subr.mxu0 0.0
    %2483 = vmatpush1.msra.mxu0 0.0
    %2484 = vmatprep.subr.mxu0 0.0
    %2485 = vmatpush1.msra.mxu0 0.0
    %2486 = vmatprep.subr.mxu0 0.0
    %2487 = vmatpush1.msra.mxu0 0.0
    %2488 = vmatprep.subr.mxu0 0.0
    %2489 = vmatpush1.msra.mxu0 0.0
    %2490 = vmatprep.subr.mxu0 0.0
    %v2491 = vand.u32 %v121, 4294901760
    %2492 = vmatpush1.msra.mxu0 %v2491
    %2493 = vmatprep.subr.mxu0 0.0
    %v2494 = vand.u32 %v120, 4294901760
    %2495 = vmatpush1.msra.mxu0 %v2494
    %2496 = vmatprep.subr.mxu0 0.0
    %2497 = vmatpush2.msra.mxu0 0.0
    %2498 = vmatprep.subr.mxu0 0.0
    %2499 = vmatpush2.msra.mxu0 0.0
    %2500 = vmatprep.subr.mxu0 0.0
    %2501 = vmatpush2.msra.mxu0 0.0
    %2502 = vmatprep.subr.mxu0 0.0
    %2503 = vmatpush2.msra.mxu0 0.0
    %2504 = vmatprep.subr.mxu0 0.0
    %2505 = vmatpush2.msra.mxu0 0.0
    %2506 = vmatprep.subr.mxu0 0.0
    %2507 = vmatpush2.msra.mxu0 0.0
    %2508 = vmatprep.subr.mxu0 0.0
    %2509 = vmatpush2.msra.mxu0 0.0
    %2510 = vmatprep.subr.mxu0 0.0
    %2511 = vmatpush2.msra.mxu0 0.0
    %2512 = vmatprep.subr.mxu0 0.0
    %2513 = vmatpush2.msra.mxu0 0.0
    %2514 = vmatprep.subr.mxu0 0.0
    %2515 = vmatpush2.msra.mxu0 0.0
    %2516 = vmatprep.subr.mxu0 0.0
    %2517 = vmatpush2.msra.mxu0 0.0
    %2518 = vmatprep.subr.mxu0 0.0
    %2519 = vmatpush2.msra.mxu0 0.0
    %2520 = vmatprep.subr.mxu0 0.0
    %2521 = vmatpush2.msra.mxu0 0.0
    %2522 = vmatprep.subr.mxu0 0.0
    %2523 = vmatpush2.msra.mxu0 0.0
    %2524 = vmatprep.subr.mxu0 0.0
    %2525 = vmatpush2.msra.mxu0 0.0
    %2526 = vmatprep.subr.mxu0 0.0
    %2527 = vmatpush2.msra.mxu0 0.0
    %2528 = vmatprep.mubr.f32.mxu0 0.0
    %v2529 = vand.u32 %v172, 4294901760
    %v2530 = vsub.f32 %v172, %v2529
    %v2531 = vand.u32 %v2530, 4294901760
    %2532 = vmatmul.mubr.f32.gmra.mxu0 %v2531
    %v2533 = vpop.f32.mrf.mxu0
    %v2534 = vadd.f32 %v1906, %v2533
    %v2535 = vpop.f32.mrf.mxu0
    %2536 = vmatprep.mubr.f32.mxu0 0.0
    %v2537 = vand.u32 %v175, 4294901760
    %v2538 = vsub.f32 %v175, %v2537
    %v2539 = vand.u32 %v2538, 4294901760
    %2540 = vmatmul.mubr.f32.gmra.mxu0 %v2539
    %v2541 = vpop.f32.mrf.mxu0
    %v2542 = vadd.f32 %v1913, %v2541
    %v2543 = vpop.f32.mrf.mxu0
    %2544 = vmatprep.mubr.f32.mxu0 0.0
    %v2545 = vand.u32 %v178, 4294901760
    %v2546 = vsub.f32 %v178, %v2545
    %v2547 = vand.u32 %v2546, 4294901760
    %2548 = vmatmul.mubr.f32.gmra.mxu0 %v2547
    %v2549 = vpop.f32.mrf.mxu0
    %v2550 = vadd.f32 %v1920, %v2549
    %v2551 = vpop.f32.mrf.mxu0
    %2552 = vmatprep.mubr.f32.mxu0 0.0
    %v2553 = vand.u32 %v181, 4294901760
    %v2554 = vsub.f32 %v181, %v2553
    %v2555 = vand.u32 %v2554, 4294901760
    %2556 = vmatmul.mubr.f32.gmra.mxu0 %v2555
    %v2557 = vpop.f32.mrf.mxu0
    %v2558 = vadd.f32 %v1927, %v2557
    %v2559 = vpop.f32.mrf.mxu0
    %2560 = vmatprep.mubr.f32.mxu0 0.0
    %v2561 = vand.u32 %v184, 4294901760
    %v2562 = vsub.f32 %v184, %v2561
    %v2563 = vand.u32 %v2562, 4294901760
    %2564 = vmatmul.mubr.f32.gmra.mxu0 %v2563
    %v2565 = vpop.f32.mrf.mxu0
    %v2566 = vadd.f32 %v1934, %v2565
    %v2567 = vpop.f32.mrf.mxu0
    %2568 = vmatprep.mubr.f32.mxu0 0.0
    %v2569 = vand.u32 %v187, 4294901760
    %v2570 = vsub.f32 %v187, %v2569
    %v2571 = vand.u32 %v2570, 4294901760
    %2572 = vmatmul.mubr.f32.gmra.mxu0 %v2571
    %v2573 = vpop.f32.mrf.mxu0
    %v2574 = vadd.f32 %v1941, %v2573
    %v2575 = vpop.f32.mrf.mxu0
    %2576 = vmatprep.mubr.f32.mxu0 0.0
    %v2577 = vand.u32 %v190, 4294901760
    %v2578 = vsub.f32 %v190, %v2577
    %v2579 = vand.u32 %v2578, 4294901760
    %2580 = vmatmul.mubr.f32.gmra.mxu0 %v2579
    %v2581 = vpop.f32.mrf.mxu0
    %v2582 = vadd.f32 %v1948, %v2581
    %v2583 = vpop.f32.mrf.mxu0
    %2584 = vmatprep.mubr.f32.mxu0 0.0
    %v2585 = vand.u32 %v193, 4294901760
    %v2586 = vsub.f32 %v193, %v2585
    %v2587 = vand.u32 %v2586, 4294901760
    %2588 = vmatmul.mubr.f32.gmra.mxu0 %v2587
    %v2589 = vpop.f32.mrf.mxu0
    %v2590 = vadd.f32 %v1955, %v2589
    %v2591 = vpop.f32.mrf.mxu0
    %2592 = vmatprep.mubr.f32.mxu0 0.0
    %v2593 = vand.u32 %v196, 4294901760
    %v2594 = vsub.f32 %v196, %v2593
    %v2595 = vand.u32 %v2594, 4294901760
    %2596 = vmatmul.mubr.f32.gmra.mxu0 %v2595
    %v2597 = vpop.f32.mrf.mxu0
    %v2598 = vadd.f32 %v1962, %v2597
    %v2599 = vpop.f32.mrf.mxu0
    %2600 = vmatprep.mubr.f32.mxu0 0.0
    %v2601 = vand.u32 %v199, 4294901760
    %v2602 = vsub.f32 %v199, %v2601
    %v2603 = vand.u32 %v2602, 4294901760
    %2604 = vmatmul.mubr.f32.gmra.mxu0 %v2603
    %v2605 = vpop.f32.mrf.mxu0
    %v2606 = vadd.f32 %v1969, %v2605
    %v2607 = vpop.f32.mrf.mxu0
    %2608 = vmatprep.mubr.f32.mxu0 0.0
    %v2609 = vand.u32 %v202, 4294901760
    %v2610 = vsub.f32 %v202, %v2609
    %v2611 = vand.u32 %v2610, 4294901760
    %2612 = vmatmul.mubr.f32.gmra.mxu0 %v2611
    %v2613 = vpop.f32.mrf.mxu0
    %v2614 = vadd.f32 %v1976, %v2613
    %v2615 = vpop.f32.mrf.mxu0
    %2616 = vmatprep.mubr.f32.mxu0 0.0
    %v2617 = vand.u32 %v205, 4294901760
    %v2618 = vsub.f32 %v205, %v2617
    %v2619 = vand.u32 %v2618, 4294901760
    %2620 = vmatmul.mubr.f32.gmra.mxu0 %v2619
    %v2621 = vpop.f32.mrf.mxu0
    %v2622 = vadd.f32 %v1983, %v2621
    %v2623 = vpop.f32.mrf.mxu0
    %2624 = vmatprep.mubr.f32.mxu0 0.0
    %v2625 = vand.u32 %v208, 4294901760
    %v2626 = vsub.f32 %v208, %v2625
    %v2627 = vand.u32 %v2626, 4294901760
    %2628 = vmatmul.mubr.f32.gmra.mxu0 %v2627
    %v2629 = vpop.f32.mrf.mxu0
    %v2630 = vadd.f32 %v1990, %v2629
    %v2631 = vpop.f32.mrf.mxu0
    %2632 = vmatprep.mubr.f32.mxu0 0.0
    %v2633 = vand.u32 %v211, 4294901760
    %v2634 = vsub.f32 %v211, %v2633
    %v2635 = vand.u32 %v2634, 4294901760
    %2636 = vmatmul.mubr.f32.gmra.mxu0 %v2635
    %v2637 = vpop.f32.mrf.mxu0
    %v2638 = vadd.f32 %v1997, %v2637
    %v2639 = vpop.f32.mrf.mxu0
    %2640 = vmatprep.mubr.f32.mxu0 0.0
    %v2641 = vand.u32 %v214, 4294901760
    %v2642 = vsub.f32 %v214, %v2641
    %v2643 = vand.u32 %v2642, 4294901760
    %2644 = vmatmul.mubr.f32.gmra.mxu0 %v2643
    %v2645 = vpop.f32.mrf.mxu0
    %v2646 = vadd.f32 %v2004, %v2645
    %v2647 = vpop.f32.mrf.mxu0
    %2648 = vmatprep.mubr.f32.mxu0 0.0
    %v2649 = vand.u32 %v217, 4294901760
    %v2650 = vsub.f32 %v217, %v2649
    %v2651 = vand.u32 %v2650, 4294901760
    %2652 = vmatmul.mubr.f32.gmra.mxu0 %v2651
    %v2653 = vpop.f32.mrf.mxu0
    %v2654 = vadd.f32 %v2011, %v2653
    %v2655 = vpop.f32.mrf.mxu0
    %2656 = vmatprep.mubr.f32.mxu0 0.0
    %v2657 = vand.u32 %v220, 4294901760
    %v2658 = vsub.f32 %v220, %v2657
    %v2659 = vand.u32 %v2658, 4294901760
    %2660 = vmatmul.mubr.f32.gmra.mxu0 %v2659
    %v2661 = vpop.f32.mrf.mxu0
    %v2662 = vadd.f32 %v2018, %v2661
    %v2663 = vpop.f32.mrf.mxu0
    %2664 = vmatprep.mubr.f32.mxu0 0.0
    %v2665 = vand.u32 %v223, 4294901760
    %v2666 = vsub.f32 %v223, %v2665
    %v2667 = vand.u32 %v2666, 4294901760
    %2668 = vmatmul.mubr.f32.gmra.mxu0 %v2667
    %v2669 = vpop.f32.mrf.mxu0
    %v2670 = vadd.f32 %v2025, %v2669
    %v2671 = vpop.f32.mrf.mxu0
    %2672 = vmatprep.mubr.f32.mxu0 0.0
    %v2673 = vand.u32 %v226, 4294901760
    %v2674 = vsub.f32 %v226, %v2673
    %v2675 = vand.u32 %v2674, 4294901760
    %2676 = vmatmul.mubr.f32.gmra.mxu0 %v2675
    %v2677 = vpop.f32.mrf.mxu0
    %v2678 = vadd.f32 %v2032, %v2677
    %v2679 = vpop.f32.mrf.mxu0
    %2680 = vmatprep.mubr.f32.mxu0 0.0
    %v2681 = vand.u32 %v229, 4294901760
    %v2682 = vsub.f32 %v229, %v2681
    %v2683 = vand.u32 %v2682, 4294901760
    %2684 = vmatmul.mubr.f32.gmra.mxu0 %v2683
    %v2685 = vpop.f32.mrf.mxu0
    %v2686 = vadd.f32 %v2039, %v2685
    %v2687 = vpop.f32.mrf.mxu0
    %2688 = vmatprep.mubr.f32.mxu0 0.0
    %v2689 = vand.u32 %v232, 4294901760
    %v2690 = vsub.f32 %v232, %v2689
    %v2691 = vand.u32 %v2690, 4294901760
    %2692 = vmatmul.mubr.f32.gmra.mxu0 %v2691
    %v2693 = vpop.f32.mrf.mxu0
    %v2694 = vadd.f32 %v2046, %v2693
    %v2695 = vpop.f32.mrf.mxu0
    %2696 = vmatprep.mubr.f32.mxu0 0.0
    %v2697 = vand.u32 %v235, 4294901760
    %v2698 = vsub.f32 %v235, %v2697
    %v2699 = vand.u32 %v2698, 4294901760
    %2700 = vmatmul.mubr.f32.gmra.mxu0 %v2699
    %v2701 = vpop.f32.mrf.mxu0
    %v2702 = vadd.f32 %v2053, %v2701
    %v2703 = vpop.f32.mrf.mxu0
    %2704 = vmatprep.mubr.f32.mxu0 0.0
    %v2705 = vand.u32 %v238, 4294901760
    %v2706 = vsub.f32 %v238, %v2705
    %v2707 = vand.u32 %v2706, 4294901760
    %2708 = vmatmul.mubr.f32.gmra.mxu0 %v2707
    %v2709 = vpop.f32.mrf.mxu0
    %v2710 = vadd.f32 %v2060, %v2709
    %v2711 = vpop.f32.mrf.mxu0
    %2712 = vmatprep.mubr.f32.mxu0 0.0
    %v2713 = vand.u32 %v241, 4294901760
    %v2714 = vsub.f32 %v241, %v2713
    %v2715 = vand.u32 %v2714, 4294901760
    %2716 = vmatmul.mubr.f32.gmra.mxu0 %v2715
    %v2717 = vpop.f32.mrf.mxu0
    %v2718 = vadd.f32 %v2067, %v2717
    %v2719 = vpop.f32.mrf.mxu0
    %2720 = vmatprep.mubr.f32.mxu0 0.0
    %v2721 = vand.u32 %v244, 4294901760
    %v2722 = vsub.f32 %v244, %v2721
    %v2723 = vand.u32 %v2722, 4294901760
    %2724 = vmatmul.mubr.f32.gmra.mxu0 %v2723
    %v2725 = vpop.f32.mrf.mxu0
    %v2726 = vadd.f32 %v2074, %v2725
    %v2727 = vpop.f32.mrf.mxu0
    %2728 = vmatprep.mubr.f32.mxu0 0.0
    %v2729 = vand.u32 %v247, 4294901760
    %v2730 = vsub.f32 %v247, %v2729
    %v2731 = vand.u32 %v2730, 4294901760
    %2732 = vmatmul.mubr.f32.gmra.mxu0 %v2731
    %v2733 = vpop.f32.mrf.mxu0
    %v2734 = vadd.f32 %v2081, %v2733
    %v2735 = vpop.f32.mrf.mxu0
    %2736 = vmatprep.mubr.f32.mxu0 0.0
    %v2737 = vand.u32 %v250, 4294901760
    %v2738 = vsub.f32 %v250, %v2737
    %v2739 = vand.u32 %v2738, 4294901760
    %2740 = vmatmul.mubr.f32.gmra.mxu0 %v2739
    %v2741 = vpop.f32.mrf.mxu0
    %v2742 = vadd.f32 %v2088, %v2741
    %v2743 = vpop.f32.mrf.mxu0
    %2744 = vmatprep.mubr.f32.mxu0 0.0
    %v2745 = vand.u32 %v253, 4294901760
    %v2746 = vsub.f32 %v253, %v2745
    %v2747 = vand.u32 %v2746, 4294901760
    %2748 = vmatmul.mubr.f32.gmra.mxu0 %v2747
    %v2749 = vpop.f32.mrf.mxu0
    %v2750 = vadd.f32 %v2095, %v2749
    %v2751 = vpop.f32.mrf.mxu0
    %2752 = vmatprep.mubr.f32.mxu0 0.0
    %v2753 = vand.u32 %v256, 4294901760
    %v2754 = vsub.f32 %v256, %v2753
    %v2755 = vand.u32 %v2754, 4294901760
    %2756 = vmatmul.mubr.f32.gmra.mxu0 %v2755
    %v2757 = vpop.f32.mrf.mxu0
    %v2758 = vadd.f32 %v2102, %v2757
    %v2759 = vpop.f32.mrf.mxu0
    %2760 = vmatprep.mubr.f32.mxu0 0.0
    %v2761 = vand.u32 %v259, 4294901760
    %v2762 = vsub.f32 %v259, %v2761
    %v2763 = vand.u32 %v2762, 4294901760
    %2764 = vmatmul.mubr.f32.gmra.mxu0 %v2763
    %v2765 = vpop.f32.mrf.mxu0
    %v2766 = vadd.f32 %v2109, %v2765
    %v2767 = vpop.f32.mrf.mxu0
    %2768 = vmatprep.mubr.f32.mxu0 0.0
    %v2769 = vand.u32 %v262, 4294901760
    %v2770 = vsub.f32 %v262, %v2769
    %v2771 = vand.u32 %v2770, 4294901760
    %2772 = vmatmul.mubr.f32.gmra.mxu0 %v2771
    %v2773 = vpop.f32.mrf.mxu0
    %v2774 = vadd.f32 %v2116, %v2773
    %v2775 = vpop.f32.mrf.mxu0
    %2776 = vmatprep.mubr.f32.mxu0 0.0
    %v2777 = vand.u32 %v265, 4294901760
    %v2778 = vsub.f32 %v265, %v2777
    %v2779 = vand.u32 %v2778, 4294901760
    %2780 = vmatmul.mubr.f32.gmra.mxu0 %v2779
    %v2781 = vpop.f32.mrf.mxu0
    %v2782 = vadd.f32 %v2123, %v2781
    %v2783 = vpop.f32.mrf.mxu0
    %2784 = vmatprep.mubr.f32.mxu0 0.0
    %v2785 = vand.u32 %v268, 4294901760
    %v2786 = vsub.f32 %v268, %v2785
    %v2787 = vand.u32 %v2786, 4294901760
    %2788 = vmatmul.mubr.f32.gmra.mxu0 %v2787
    %v2789 = vpop.f32.mrf.mxu0
    %v2790 = vadd.f32 %v2130, %v2789
    %v2791 = vpop.f32.mrf.mxu0
    %2792 = vmatprep.mubr.f32.mxu0 0.0
    %v2793 = vand.u32 %v271, 4294901760
    %v2794 = vsub.f32 %v271, %v2793
    %v2795 = vand.u32 %v2794, 4294901760
    %2796 = vmatmul.mubr.f32.gmra.mxu0 %v2795
    %v2797 = vpop.f32.mrf.mxu0
    %v2798 = vadd.f32 %v2137, %v2797
    %v2799 = vpop.f32.mrf.mxu0
    %2800 = vmatprep.mubr.f32.mxu0 0.0
    %v2801 = vand.u32 %v274, 4294901760
    %v2802 = vsub.f32 %v274, %v2801
    %v2803 = vand.u32 %v2802, 4294901760
    %2804 = vmatmul.mubr.f32.gmra.mxu0 %v2803
    %v2805 = vpop.f32.mrf.mxu0
    %v2806 = vadd.f32 %v2144, %v2805
    %v2807 = vpop.f32.mrf.mxu0
    %2808 = vmatprep.mubr.f32.mxu0 0.0
    %v2809 = vand.u32 %v277, 4294901760
    %v2810 = vsub.f32 %v277, %v2809
    %v2811 = vand.u32 %v2810, 4294901760
    %2812 = vmatmul.mubr.f32.gmra.mxu0 %v2811
    %v2813 = vpop.f32.mrf.mxu0
    %v2814 = vadd.f32 %v2151, %v2813
    %v2815 = vpop.f32.mrf.mxu0
    %2816 = vmatprep.mubr.f32.mxu0 0.0
    %v2817 = vand.u32 %v280, 4294901760
    %v2818 = vsub.f32 %v280, %v2817
    %v2819 = vand.u32 %v2818, 4294901760
    %2820 = vmatmul.mubr.f32.gmra.mxu0 %v2819
    %v2821 = vpop.f32.mrf.mxu0
    %v2822 = vadd.f32 %v2158, %v2821
    %v2823 = vpop.f32.mrf.mxu0
    %2824 = vmatprep.mubr.f32.mxu0 0.0
    %v2825 = vand.u32 %v283, 4294901760
    %v2826 = vsub.f32 %v283, %v2825
    %v2827 = vand.u32 %v2826, 4294901760
    %2828 = vmatmul.mubr.f32.gmra.mxu0 %v2827
    %v2829 = vpop.f32.mrf.mxu0
    %v2830 = vadd.f32 %v2165, %v2829
    %v2831 = vpop.f32.mrf.mxu0
    %2832 = vmatprep.mubr.f32.mxu0 0.0
    %v2833 = vand.u32 %v286, 4294901760
    %v2834 = vsub.f32 %v286, %v2833
    %v2835 = vand.u32 %v2834, 4294901760
    %2836 = vmatmul.mubr.f32.gmra.mxu0 %v2835
    %v2837 = vpop.f32.mrf.mxu0
    %v2838 = vadd.f32 %v2172, %v2837
    %v2839 = vpop.f32.mrf.mxu0
    %2840 = vmatprep.mubr.f32.mxu0 0.0
    %v2841 = vand.u32 %v289, 4294901760
    %v2842 = vsub.f32 %v289, %v2841
    %v2843 = vand.u32 %v2842, 4294901760
    %2844 = vmatmul.mubr.f32.gmra.mxu0 %v2843
    %v2845 = vpop.f32.mrf.mxu0
    %v2846 = vadd.f32 %v2179, %v2845
    %v2847 = vpop.f32.mrf.mxu0
    %2848 = vmatprep.mubr.f32.mxu0 0.0
    %v2849 = vand.u32 %v292, 4294901760
    %v2850 = vsub.f32 %v292, %v2849
    %v2851 = vand.u32 %v2850, 4294901760
    %2852 = vmatmul.mubr.f32.gmra.mxu0 %v2851
    %v2853 = vpop.f32.mrf.mxu0
    %v2854 = vadd.f32 %v2186, %v2853
    %v2855 = vpop.f32.mrf.mxu0
    %2856 = vmatprep.mubr.f32.mxu0 0.0
    %v2857 = vand.u32 %v295, 4294901760
    %v2858 = vsub.f32 %v295, %v2857
    %v2859 = vand.u32 %v2858, 4294901760
    %2860 = vmatmul.mubr.f32.gmra.mxu0 %v2859
    %v2861 = vpop.f32.mrf.mxu0
    %v2862 = vadd.f32 %v2193, %v2861
    %v2863 = vpop.f32.mrf.mxu0
    %2864 = vmatprep.mubr.f32.mxu0 0.0
    %v2865 = vand.u32 %v298, 4294901760
    %v2866 = vsub.f32 %v298, %v2865
    %v2867 = vand.u32 %v2866, 4294901760
    %2868 = vmatmul.mubr.f32.gmra.mxu0 %v2867
    %v2869 = vpop.f32.mrf.mxu0
    %v2870 = vadd.f32 %v2200, %v2869
    %v2871 = vpop.f32.mrf.mxu0
    %2872 = vmatprep.mubr.f32.mxu0 0.0
    %v2873 = vand.u32 %v301, 4294901760
    %v2874 = vsub.f32 %v301, %v2873
    %v2875 = vand.u32 %v2874, 4294901760
    %2876 = vmatmul.mubr.f32.gmra.mxu0 %v2875
    %v2877 = vpop.f32.mrf.mxu0
    %v2878 = vadd.f32 %v2207, %v2877
    %v2879 = vpop.f32.mrf.mxu0
    %2880 = vmatprep.mubr.f32.mxu0 0.0
    %v2881 = vand.u32 %v304, 4294901760
    %v2882 = vsub.f32 %v304, %v2881
    %v2883 = vand.u32 %v2882, 4294901760
    %2884 = vmatmul.mubr.f32.gmra.mxu0 %v2883
    %v2885 = vpop.f32.mrf.mxu0
    %v2886 = vadd.f32 %v2214, %v2885
    %v2887 = vpop.f32.mrf.mxu0
    %2888 = vmatprep.mubr.f32.mxu0 0.0
    %v2889 = vand.u32 %v307, 4294901760
    %v2890 = vsub.f32 %v307, %v2889
    %v2891 = vand.u32 %v2890, 4294901760
    %2892 = vmatmul.mubr.f32.gmra.mxu0 %v2891
    %v2893 = vpop.f32.mrf.mxu0
    %v2894 = vadd.f32 %v2221, %v2893
    %v2895 = vpop.f32.mrf.mxu0
    %2896 = vmatprep.mubr.f32.mxu0 0.0
    %v2897 = vand.u32 %v310, 4294901760
    %v2898 = vsub.f32 %v310, %v2897
    %v2899 = vand.u32 %v2898, 4294901760
    %2900 = vmatmul.mubr.f32.gmra.mxu0 %v2899
    %v2901 = vpop.f32.mrf.mxu0
    %v2902 = vadd.f32 %v2228, %v2901
    %v2903 = vpop.f32.mrf.mxu0
    %2904 = vmatprep.mubr.f32.mxu0 0.0
    %v2905 = vand.u32 %v313, 4294901760
    %v2906 = vsub.f32 %v313, %v2905
    %v2907 = vand.u32 %v2906, 4294901760
    %2908 = vmatmul.mubr.f32.gmra.mxu0 %v2907
    %v2909 = vpop.f32.mrf.mxu0
    %v2910 = vadd.f32 %v2235, %v2909
    %v2911 = vpop.f32.mrf.mxu0
    %2912 = vmatprep.mubr.f32.mxu0 0.0
    %v2913 = vand.u32 %v316, 4294901760
    %v2914 = vsub.f32 %v316, %v2913
    %v2915 = vand.u32 %v2914, 4294901760
    %2916 = vmatmul.mubr.f32.gmra.mxu0 %v2915
    %v2917 = vpop.f32.mrf.mxu0
    %v2918 = vadd.f32 %v2242, %v2917
    %v2919 = vpop.f32.mrf.mxu0
    %2920 = vmatprep.mubr.f32.mxu0 0.0
    %v2921 = vand.u32 %v319, 4294901760
    %v2922 = vsub.f32 %v319, %v2921
    %v2923 = vand.u32 %v2922, 4294901760
    %2924 = vmatmul.mubr.f32.gmra.mxu0 %v2923
    %v2925 = vpop.f32.mrf.mxu0
    %v2926 = vadd.f32 %v2249, %v2925
    %v2927 = vpop.f32.mrf.mxu0
    %2928 = vmatprep.mubr.f32.mxu0 0.0
    %v2929 = vand.u32 %v322, 4294901760
    %v2930 = vsub.f32 %v322, %v2929
    %v2931 = vand.u32 %v2930, 4294901760
    %2932 = vmatmul.mubr.f32.gmra.mxu0 %v2931
    %v2933 = vpop.f32.mrf.mxu0
    %v2934 = vadd.f32 %v2256, %v2933
    %v2935 = vpop.f32.mrf.mxu0
    %2936 = vmatprep.mubr.f32.mxu0 0.0
    %v2937 = vand.u32 %v325, 4294901760
    %v2938 = vsub.f32 %v325, %v2937
    %v2939 = vand.u32 %v2938, 4294901760
    %2940 = vmatmul.mubr.f32.gmra.mxu0 %v2939
    %v2941 = vpop.f32.mrf.mxu0
    %v2942 = vadd.f32 %v2263, %v2941
    %v2943 = vpop.f32.mrf.mxu0
    %2944 = vmatprep.mubr.f32.mxu0 0.0
    %v2945 = vand.u32 %v328, 4294901760
    %v2946 = vsub.f32 %v328, %v2945
    %v2947 = vand.u32 %v2946, 4294901760
    %2948 = vmatmul.mubr.f32.gmra.mxu0 %v2947
    %v2949 = vpop.f32.mrf.mxu0
    %v2950 = vadd.f32 %v2270, %v2949
    %v2951 = vpop.f32.mrf.mxu0
    %2952 = vmatprep.mubr.f32.mxu0 0.0
    %v2953 = vand.u32 %v331, 4294901760
    %v2954 = vsub.f32 %v331, %v2953
    %v2955 = vand.u32 %v2954, 4294901760
    %2956 = vmatmul.mubr.f32.gmra.mxu0 %v2955
    %v2957 = vpop.f32.mrf.mxu0
    %v2958 = vadd.f32 %v2277, %v2957
    %v2959 = vpop.f32.mrf.mxu0
    %2960 = vmatprep.mubr.f32.mxu0 0.0
    %v2961 = vand.u32 %v334, 4294901760
    %v2962 = vsub.f32 %v334, %v2961
    %v2963 = vand.u32 %v2962, 4294901760
    %2964 = vmatmul.mubr.f32.gmra.mxu0 %v2963
    %v2965 = vpop.f32.mrf.mxu0
    %v2966 = vadd.f32 %v2284, %v2965
    %v2967 = vpop.f32.mrf.mxu0
    %2968 = vmatprep.mubr.f32.mxu0 0.0
    %v2969 = vand.u32 %v337, 4294901760
    %v2970 = vsub.f32 %v337, %v2969
    %v2971 = vand.u32 %v2970, 4294901760
    %2972 = vmatmul.mubr.f32.gmra.mxu0 %v2971
    %v2973 = vpop.f32.mrf.mxu0
    %v2974 = vadd.f32 %v2291, %v2973
    %v2975 = vpop.f32.mrf.mxu0
    %2976 = vmatprep.mubr.f32.mxu0 0.0
    %v2977 = vand.u32 %v340, 4294901760
    %v2978 = vsub.f32 %v340, %v2977
    %v2979 = vand.u32 %v2978, 4294901760
    %2980 = vmatmul.mubr.f32.gmra.mxu0 %v2979
    %v2981 = vpop.f32.mrf.mxu0
    %v2982 = vadd.f32 %v2298, %v2981
    %v2983 = vpop.f32.mrf.mxu0
    %2984 = vmatprep.mubr.f32.mxu0 0.0
    %v2985 = vand.u32 %v343, 4294901760
    %v2986 = vsub.f32 %v343, %v2985
    %v2987 = vand.u32 %v2986, 4294901760
    %2988 = vmatmul.mubr.f32.gmra.mxu0 %v2987
    %v2989 = vpop.f32.mrf.mxu0
    %v2990 = vadd.f32 %v2305, %v2989
    %v2991 = vpop.f32.mrf.mxu0
    %2992 = vmatprep.mubr.f32.mxu0 0.0
    %v2993 = vand.u32 %v346, 4294901760
    %v2994 = vsub.f32 %v346, %v2993
    %v2995 = vand.u32 %v2994, 4294901760
    %2996 = vmatmul.mubr.f32.gmra.mxu0 %v2995
    %v2997 = vpop.f32.mrf.mxu0
    %v2998 = vadd.f32 %v2312, %v2997
    %v2999 = vpop.f32.mrf.mxu0
    %3000 = vmatprep.mubr.f32.mxu0 0.0
    %v3001 = vand.u32 %v349, 4294901760
    %v3002 = vsub.f32 %v349, %v3001
    %v3003 = vand.u32 %v3002, 4294901760
    %3004 = vmatmul.mubr.f32.gmra.mxu0 %v3003
    %v3005 = vpop.f32.mrf.mxu0
    %v3006 = vadd.f32 %v2319, %v3005
    %v3007 = vpop.f32.mrf.mxu0
    %3008 = vmatprep.mubr.f32.mxu0 0.0
    %v3009 = vand.u32 %v352, 4294901760
    %v3010 = vsub.f32 %v352, %v3009
    %v3011 = vand.u32 %v3010, 4294901760
    %3012 = vmatmul.mubr.f32.gmra.mxu0 %v3011
    %v3013 = vpop.f32.mrf.mxu0
    %v3014 = vadd.f32 %v2326, %v3013
    %v3015 = vpop.f32.mrf.mxu0
    %3016 = vmatprep.mubr.f32.mxu0 0.0
    %v3017 = vand.u32 %v355, 4294901760
    %v3018 = vsub.f32 %v355, %v3017
    %v3019 = vand.u32 %v3018, 4294901760
    %3020 = vmatmul.mubr.f32.gmra.mxu0 %v3019
    %v3021 = vpop.f32.mrf.mxu0
    %v3022 = vadd.f32 %v2333, %v3021
    %v3023 = vpop.f32.mrf.mxu0
    %3024 = vmatprep.mubr.f32.mxu0 0.0
    %v3025 = vand.u32 %v358, 4294901760
    %v3026 = vsub.f32 %v358, %v3025
    %v3027 = vand.u32 %v3026, 4294901760
    %3028 = vmatmul.mubr.f32.gmra.mxu0 %v3027
    %v3029 = vpop.f32.mrf.mxu0
    %v3030 = vadd.f32 %v2340, %v3029
    %v3031 = vpop.f32.mrf.mxu0
    %3032 = vmatprep.mubr.f32.mxu0 0.0
    %v3033 = vand.u32 %v361, 4294901760
    %v3034 = vsub.f32 %v361, %v3033
    %v3035 = vand.u32 %v3034, 4294901760
    %3036 = vmatmul.mubr.f32.gmra.mxu0 %v3035
    %v3037 = vpop.f32.mrf.mxu0
    %v3038 = vadd.f32 %v2347, %v3037
    %v3039 = vpop.f32.mrf.mxu0
    %3040 = vmatprep.mubr.f32.mxu0 0.0
    %v3041 = vand.u32 %v364, 4294901760
    %v3042 = vsub.f32 %v364, %v3041
    %v3043 = vand.u32 %v3042, 4294901760
    %3044 = vmatmul.mubr.f32.gmra.mxu0 %v3043
    %v3045 = vpop.f32.mrf.mxu0
    %v3046 = vadd.f32 %v2354, %v3045
    %v3047 = vpop.f32.mrf.mxu0
    %3048 = vmatprep.mubr.f32.mxu0 0.0
    %v3049 = vand.u32 %v367, 4294901760
    %v3050 = vsub.f32 %v367, %v3049
    %v3051 = vand.u32 %v3050, 4294901760
    %3052 = vmatmul.mubr.f32.gmra.mxu0 %v3051
    %v3053 = vpop.f32.mrf.mxu0
    %v3054 = vadd.f32 %v2361, %v3053
    %v3055 = vpop.f32.mrf.mxu0
    %3056 = vmatprep.mubr.f32.mxu0 0.0
    %v3057 = vand.u32 %v370, 4294901760
    %v3058 = vsub.f32 %v370, %v3057
    %v3059 = vand.u32 %v3058, 4294901760
    %3060 = vmatmul.mubr.f32.gmra.mxu0 %v3059
    %v3061 = vpop.f32.mrf.mxu0
    %v3062 = vadd.f32 %v2368, %v3061
    %v3063 = vpop.f32.mrf.mxu0
    %3064 = vmatprep.mubr.f32.mxu0 0.0
    %v3065 = vand.u32 %v373, 4294901760
    %v3066 = vsub.f32 %v373, %v3065
    %v3067 = vand.u32 %v3066, 4294901760
    %3068 = vmatmul.mubr.f32.gmra.mxu0 %v3067
    %v3069 = vpop.f32.mrf.mxu0
    %v3070 = vadd.f32 %v2375, %v3069
    %v3071 = vpop.f32.mrf.mxu0
    %3072 = vmatprep.mubr.f32.mxu0 0.0
    %v3073 = vand.u32 %v376, 4294901760
    %v3074 = vsub.f32 %v376, %v3073
    %v3075 = vand.u32 %v3074, 4294901760
    %3076 = vmatmul.mubr.f32.gmra.mxu0 %v3075
    %v3077 = vpop.f32.mrf.mxu0
    %v3078 = vadd.f32 %v2382, %v3077
    %v3079 = vpop.f32.mrf.mxu0
    %3080 = vmatprep.mubr.f32.mxu0 0.0
    %v3081 = vand.u32 %v379, 4294901760
    %v3082 = vsub.f32 %v379, %v3081
    %v3083 = vand.u32 %v3082, 4294901760
    %3084 = vmatmul.mubr.f32.gmra.mxu0 %v3083
    %v3085 = vpop.f32.mrf.mxu0
    %v3086 = vadd.f32 %v2389, %v3085
    %v3087 = vpop.f32.mrf.mxu0
    %3088 = vmatprep.mubr.f32.mxu0 0.0
    %v3089 = vand.u32 %v382, 4294901760
    %v3090 = vsub.f32 %v382, %v3089
    %v3091 = vand.u32 %v3090, 4294901760
    %3092 = vmatmul.mubr.f32.gmra.mxu0 %v3091
    %v3093 = vpop.f32.mrf.mxu0
    %v3094 = vadd.f32 %v2396, %v3093
    %v3095 = vpop.f32.mrf.mxu0
    %3096 = vmatprep.mubr.f32.mxu0 0.0
    %v3097 = vand.u32 %v385, 4294901760
    %v3098 = vsub.f32 %v385, %v3097
    %v3099 = vand.u32 %v3098, 4294901760
    %3100 = vmatmul.mubr.f32.gmra.mxu0 %v3099
    %v3101 = vpop.f32.mrf.mxu0
    %v3102 = vadd.f32 %v2403, %v3101
    %v3103 = vpop.f32.mrf.mxu0
    %3104 = vmatprep.mubr.f32.mxu0 0.0
    %v3105 = vand.u32 %v388, 4294901760
    %v3106 = vsub.f32 %v388, %v3105
    %v3107 = vand.u32 %v3106, 4294901760
    %3108 = vmatmul.mubr.f32.gmra.mxu0 %v3107
    %v3109 = vpop.f32.mrf.mxu0
    %v3110 = vadd.f32 %v2410, %v3109
    %v3111 = vpop.f32.mrf.mxu0
    %3112 = vmatprep.mubr.f32.mxu0 0.0
    %v3113 = vand.u32 %v391, 4294901760
    %v3114 = vsub.f32 %v391, %v3113
    %v3115 = vand.u32 %v3114, 4294901760
    %3116 = vmatmul.mubr.f32.gmra.mxu0 %v3115
    %v3117 = vpop.f32.mrf.mxu0
    %v3118 = vadd.f32 %v2417, %v3117
    %v3119 = vpop.f32.mrf.mxu0
    %3120 = vmatprep.mubr.f32.mxu0 0.0
    %v3121 = vand.u32 %v394, 4294901760
    %v3122 = vsub.f32 %v394, %v3121
    %v3123 = vand.u32 %v3122, 4294901760
    %3124 = vmatmul.mubr.f32.gmra.mxu0 %v3123
    %v3125 = vpop.f32.mrf.mxu0
    %v3126 = vadd.f32 %v2424, %v3125
    %v3127 = vpop.f32.mrf.mxu0
    %3128 = vmatprep.mubr.f32.mxu0 0.0
    %v3129 = vand.u32 %v397, 4294901760
    %v3130 = vsub.f32 %v397, %v3129
    %v3131 = vand.u32 %v3130, 4294901760
    %3132 = vmatmul.mubr.f32.gmra.mxu0 %v3131
    %v3133 = vpop.f32.mrf.mxu0
    %v3134 = vadd.f32 %v2431, %v3133
    %v3135 = vpop.f32.mrf.mxu0
    %3136 = vmatprep.mubr.f32.mxu0 0.0
    %v3137 = vand.u32 %v400, 4294901760
    %v3138 = vsub.f32 %v400, %v3137
    %v3139 = vand.u32 %v3138, 4294901760
    %3140 = vmatmul.mubr.f32.gmra.mxu0 %v3139
    %v3141 = vpop.f32.mrf.mxu0
    %v3142 = vadd.f32 %v2438, %v3141
    %v3143 = vpop.f32.mrf.mxu0
    %3144 = vmatprep.mubr.f32.mxu0 0.0
    %v3145 = vand.u32 %v403, 4294901760
    %v3146 = vsub.f32 %v403, %v3145
    %v3147 = vand.u32 %v3146, 4294901760
    %3148 = vmatmul.mubr.f32.gmra.mxu0 %v3147
    %v3149 = vpop.f32.mrf.mxu0
    %v3150 = vadd.f32 %v2445, %v3149
    %v3151 = vpop.f32.mrf.mxu0
    %3152 = vmatprep.mubr.f32.mxu0 0.0
    %v3153 = vand.u32 %v406, 4294901760
    %v3154 = vsub.f32 %v406, %v3153
    %v3155 = vand.u32 %v3154, 4294901760
    %3156 = vmatmul.mubr.f32.gmra.mxu0 %v3155
    %v3157 = vpop.f32.mrf.mxu0
    %v3158 = vadd.f32 %v2452, %v3157
    %v3159 = vpop.f32.mrf.mxu0
    %3160 = vmatprep.mubr.f32.mxu0 0.0
    %v3161 = vand.u32 %v409, 4294901760
    %v3162 = vsub.f32 %v409, %v3161
    %v3163 = vand.u32 %v3162, 4294901760
    %3164 = vmatmul.mubr.f32.gmra.mxu0 %v3163
    %v3165 = vpop.f32.mrf.mxu0
    %v3166 = vadd.f32 %v2459, %v3165
    %v3167 = vpop.f32.mrf.mxu0
    %3168 = vdwg.mxu0
    %3169 = vmatprep.subr.mxu0 0.0
    %3170 = vmatpush1.msra.mxu0 0.0
    %3171 = vmatprep.subr.mxu0 0.0
    %3172 = vmatpush1.msra.mxu0 0.0
    %3173 = vmatprep.subr.mxu0 0.0
    %3174 = vmatpush1.msra.mxu0 0.0
    %3175 = vmatprep.subr.mxu0 0.0
    %3176 = vmatpush1.msra.mxu0 0.0
    %3177 = vmatprep.subr.mxu0 0.0
    %3178 = vmatpush1.msra.mxu0 0.0
    %3179 = vmatprep.subr.mxu0 0.0
    %3180 = vmatpush1.msra.mxu0 0.0
    %3181 = vmatprep.subr.mxu0 0.0
    %3182 = vmatpush1.msra.mxu0 0.0
    %3183 = vmatprep.subr.mxu0 0.0
    %3184 = vmatpush1.msra.mxu0 0.0
    %3185 = vmatprep.subr.mxu0 0.0
    %3186 = vmatpush1.msra.mxu0 0.0
    %3187 = vmatprep.subr.mxu0 0.0
    %3188 = vmatpush1.msra.mxu0 0.0
    %3189 = vmatprep.subr.mxu0 0.0
    %3190 = vmatpush1.msra.mxu0 0.0
    %3191 = vmatprep.subr.mxu0 0.0
    %3192 = vmatpush1.msra.mxu0 0.0
    %3193 = vmatprep.subr.mxu0 0.0
    %3194 = vmatpush1.msra.mxu0 0.0
    %3195 = vmatprep.subr.mxu0 0.0
    %3196 = vmatpush1.msra.mxu0 0.0
    %3197 = vmatprep.subr.mxu0 0.0
    %v3198 = vand.u32 %v121, 4294901760
    %v3199 = vsub.f32 %v121, %v3198
    %v3200 = vand.u32 %v3199, 4294901760
    %3201 = vmatpush1.msra.mxu0 %v3200
    %3202 = vmatprep.subr.mxu0 0.0
    %v3203 = vand.u32 %v120, 4294901760
    %v3204 = vsub.f32 %v120, %v3203
    %v3205 = vand.u32 %v3204, 4294901760
    %3206 = vmatpush1.msra.mxu0 %v3205
    %3207 = vmatprep.subr.mxu0 0.0
    %3208 = vmatpush2.msra.mxu0 0.0
    %3209 = vmatprep.subr.mxu0 0.0
    %3210 = vmatpush2.msra.mxu0 0.0
    %3211 = vmatprep.subr.mxu0 0.0
    %3212 = vmatpush2.msra.mxu0 0.0
    %3213 = vmatprep.subr.mxu0 0.0
    %3214 = vmatpush2.msra.mxu0 0.0
    %3215 = vmatprep.subr.mxu0 0.0
    %3216 = vmatpush2.msra.mxu0 0.0
    %3217 = vmatprep.subr.mxu0 0.0
    %3218 = vmatpush2.msra.mxu0 0.0
    %3219 = vmatprep.subr.mxu0 0.0
    %3220 = vmatpush2.msra.mxu0 0.0
    %3221 = vmatprep.subr.mxu0 0.0
    %3222 = vmatpush2.msra.mxu0 0.0
    %3223 = vmatprep.subr.mxu0 0.0
    %3224 = vmatpush2.msra.mxu0 0.0
    %3225 = vmatprep.subr.mxu0 0.0
    %3226 = vmatpush2.msra.mxu0 0.0
    %3227 = vmatprep.subr.mxu0 0.0
    %3228 = vmatpush2.msra.mxu0 0.0
    %3229 = vmatprep.subr.mxu0 0.0
    %3230 = vmatpush2.msra.mxu0 0.0
    %3231 = vmatprep.subr.mxu0 0.0
    %3232 = vmatpush2.msra.mxu0 0.0
    %3233 = vmatprep.subr.mxu0 0.0
    %3234 = vmatpush2.msra.mxu0 0.0
    %3235 = vmatprep.subr.mxu0 0.0
    %3236 = vmatpush2.msra.mxu0 0.0
    %3237 = vmatprep.subr.mxu0 0.0
    %3238 = vmatpush2.msra.mxu0 0.0
    %3239 = vmatprep.mubr.f32.mxu0 0.0
    %v3240 = vand.u32 %v172, 4294901760
    %3241 = vmatmul.mubr.f32.gmra.mxu0 %v3240
    %v3242 = vpop.f32.mrf.mxu0
    %v3243 = vadd.f32 %v2534, %v3242
    %v3244 = vpop.f32.mrf.mxu0
    %3245 = vmatprep.mubr.f32.mxu0 0.0
    %v3246 = vand.u32 %v175, 4294901760
    %3247 = vmatmul.mubr.f32.gmra.mxu0 %v3246
    %v3248 = vpop.f32.mrf.mxu0
    %v3249 = vadd.f32 %v2542, %v3248
    %v3250 = vpop.f32.mrf.mxu0
    %3251 = vmatprep.mubr.f32.mxu0 0.0
    %v3252 = vand.u32 %v178, 4294901760
    %3253 = vmatmul.mubr.f32.gmra.mxu0 %v3252
    %v3254 = vpop.f32.mrf.mxu0
    %v3255 = vadd.f32 %v2550, %v3254
    %v3256 = vpop.f32.mrf.mxu0
    %3257 = vmatprep.mubr.f32.mxu0 0.0
    %v3258 = vand.u32 %v181, 4294901760
    %3259 = vmatmul.mubr.f32.gmra.mxu0 %v3258
    %v3260 = vpop.f32.mrf.mxu0
    %v3261 = vadd.f32 %v2558, %v3260
    %v3262 = vpop.f32.mrf.mxu0
    %3263 = vmatprep.mubr.f32.mxu0 0.0
    %v3264 = vand.u32 %v184, 4294901760
    %3265 = vmatmul.mubr.f32.gmra.mxu0 %v3264
    %v3266 = vpop.f32.mrf.mxu0
    %v3267 = vadd.f32 %v2566, %v3266
    %v3268 = vpop.f32.mrf.mxu0
    %3269 = vmatprep.mubr.f32.mxu0 0.0
    %v3270 = vand.u32 %v187, 4294901760
    %3271 = vmatmul.mubr.f32.gmra.mxu0 %v3270
    %v3272 = vpop.f32.mrf.mxu0
    %v3273 = vadd.f32 %v2574, %v3272
    %v3274 = vpop.f32.mrf.mxu0
    %3275 = vmatprep.mubr.f32.mxu0 0.0
    %v3276 = vand.u32 %v190, 4294901760
    %3277 = vmatmul.mubr.f32.gmra.mxu0 %v3276
    %v3278 = vpop.f32.mrf.mxu0
    %v3279 = vadd.f32 %v2582, %v3278
    %v3280 = vpop.f32.mrf.mxu0
    %3281 = vmatprep.mubr.f32.mxu0 0.0
    %v3282 = vand.u32 %v193, 4294901760
    %3283 = vmatmul.mubr.f32.gmra.mxu0 %v3282
    %v3284 = vpop.f32.mrf.mxu0
    %v3285 = vadd.f32 %v2590, %v3284
    %v3286 = vpop.f32.mrf.mxu0
    %3287 = vmatprep.mubr.f32.mxu0 0.0
    %v3288 = vand.u32 %v196, 4294901760
    %3289 = vmatmul.mubr.f32.gmra.mxu0 %v3288
    %v3290 = vpop.f32.mrf.mxu0
    %v3291 = vadd.f32 %v2598, %v3290
    %v3292 = vpop.f32.mrf.mxu0
    %3293 = vmatprep.mubr.f32.mxu0 0.0
    %v3294 = vand.u32 %v199, 4294901760
    %3295 = vmatmul.mubr.f32.gmra.mxu0 %v3294
    %v3296 = vpop.f32.mrf.mxu0
    %v3297 = vadd.f32 %v2606, %v3296
    %v3298 = vpop.f32.mrf.mxu0
    %3299 = vmatprep.mubr.f32.mxu0 0.0
    %v3300 = vand.u32 %v202, 4294901760
    %3301 = vmatmul.mubr.f32.gmra.mxu0 %v3300
    %v3302 = vpop.f32.mrf.mxu0
    %v3303 = vadd.f32 %v2614, %v3302
    %v3304 = vpop.f32.mrf.mxu0
    %3305 = vmatprep.mubr.f32.mxu0 0.0
    %v3306 = vand.u32 %v205, 4294901760
    %3307 = vmatmul.mubr.f32.gmra.mxu0 %v3306
    %v3308 = vpop.f32.mrf.mxu0
    %v3309 = vadd.f32 %v2622, %v3308
    %v3310 = vpop.f32.mrf.mxu0
    %3311 = vmatprep.mubr.f32.mxu0 0.0
    %v3312 = vand.u32 %v208, 4294901760
    %3313 = vmatmul.mubr.f32.gmra.mxu0 %v3312
    %v3314 = vpop.f32.mrf.mxu0
    %v3315 = vadd.f32 %v2630, %v3314
    %v3316 = vpop.f32.mrf.mxu0
    %3317 = vmatprep.mubr.f32.mxu0 0.0
    %v3318 = vand.u32 %v211, 4294901760
    %3319 = vmatmul.mubr.f32.gmra.mxu0 %v3318
    %v3320 = vpop.f32.mrf.mxu0
    %v3321 = vadd.f32 %v2638, %v3320
    %v3322 = vpop.f32.mrf.mxu0
    %3323 = vmatprep.mubr.f32.mxu0 0.0
    %v3324 = vand.u32 %v214, 4294901760
    %3325 = vmatmul.mubr.f32.gmra.mxu0 %v3324
    %v3326 = vpop.f32.mrf.mxu0
    %v3327 = vadd.f32 %v2646, %v3326
    %v3328 = vpop.f32.mrf.mxu0
    %3329 = vmatprep.mubr.f32.mxu0 0.0
    %v3330 = vand.u32 %v217, 4294901760
    %3331 = vmatmul.mubr.f32.gmra.mxu0 %v3330
    %v3332 = vpop.f32.mrf.mxu0
    %v3333 = vadd.f32 %v2654, %v3332
    %v3334 = vpop.f32.mrf.mxu0
    %3335 = vmatprep.mubr.f32.mxu0 0.0
    %v3336 = vand.u32 %v220, 4294901760
    %3337 = vmatmul.mubr.f32.gmra.mxu0 %v3336
    %v3338 = vpop.f32.mrf.mxu0
    %v3339 = vadd.f32 %v2662, %v3338
    %v3340 = vpop.f32.mrf.mxu0
    %3341 = vmatprep.mubr.f32.mxu0 0.0
    %v3342 = vand.u32 %v223, 4294901760
    %3343 = vmatmul.mubr.f32.gmra.mxu0 %v3342
    %v3344 = vpop.f32.mrf.mxu0
    %v3345 = vadd.f32 %v2670, %v3344
    %v3346 = vpop.f32.mrf.mxu0
    %3347 = vmatprep.mubr.f32.mxu0 0.0
    %v3348 = vand.u32 %v226, 4294901760
    %3349 = vmatmul.mubr.f32.gmra.mxu0 %v3348
    %v3350 = vpop.f32.mrf.mxu0
    %v3351 = vadd.f32 %v2678, %v3350
    %v3352 = vpop.f32.mrf.mxu0
    %3353 = vmatprep.mubr.f32.mxu0 0.0
    %v3354 = vand.u32 %v229, 4294901760
    %3355 = vmatmul.mubr.f32.gmra.mxu0 %v3354
    %v3356 = vpop.f32.mrf.mxu0
    %v3357 = vadd.f32 %v2686, %v3356
    %v3358 = vpop.f32.mrf.mxu0
    %3359 = vmatprep.mubr.f32.mxu0 0.0
    %v3360 = vand.u32 %v232, 4294901760
    %3361 = vmatmul.mubr.f32.gmra.mxu0 %v3360
    %v3362 = vpop.f32.mrf.mxu0
    %v3363 = vadd.f32 %v2694, %v3362
    %v3364 = vpop.f32.mrf.mxu0
    %3365 = vmatprep.mubr.f32.mxu0 0.0
    %v3366 = vand.u32 %v235, 4294901760
    %3367 = vmatmul.mubr.f32.gmra.mxu0 %v3366
    %v3368 = vpop.f32.mrf.mxu0
    %v3369 = vadd.f32 %v2702, %v3368
    %v3370 = vpop.f32.mrf.mxu0
    %3371 = vmatprep.mubr.f32.mxu0 0.0
    %v3372 = vand.u32 %v238, 4294901760
    %3373 = vmatmul.mubr.f32.gmra.mxu0 %v3372
    %v3374 = vpop.f32.mrf.mxu0
    %v3375 = vadd.f32 %v2710, %v3374
    %v3376 = vpop.f32.mrf.mxu0
    %3377 = vmatprep.mubr.f32.mxu0 0.0
    %v3378 = vand.u32 %v241, 4294901760
    %3379 = vmatmul.mubr.f32.gmra.mxu0 %v3378
    %v3380 = vpop.f32.mrf.mxu0
    %v3381 = vadd.f32 %v2718, %v3380
    %v3382 = vpop.f32.mrf.mxu0
    %3383 = vmatprep.mubr.f32.mxu0 0.0
    %v3384 = vand.u32 %v244, 4294901760
    %3385 = vmatmul.mubr.f32.gmra.mxu0 %v3384
    %v3386 = vpop.f32.mrf.mxu0
    %v3387 = vadd.f32 %v2726, %v3386
    %v3388 = vpop.f32.mrf.mxu0
    %3389 = vmatprep.mubr.f32.mxu0 0.0
    %v3390 = vand.u32 %v247, 4294901760
    %3391 = vmatmul.mubr.f32.gmra.mxu0 %v3390
    %v3392 = vpop.f32.mrf.mxu0
    %v3393 = vadd.f32 %v2734, %v3392
    %v3394 = vpop.f32.mrf.mxu0
    %3395 = vmatprep.mubr.f32.mxu0 0.0
    %v3396 = vand.u32 %v250, 4294901760
    %3397 = vmatmul.mubr.f32.gmra.mxu0 %v3396
    %v3398 = vpop.f32.mrf.mxu0
    %v3399 = vadd.f32 %v2742, %v3398
    %v3400 = vpop.f32.mrf.mxu0
    %3401 = vmatprep.mubr.f32.mxu0 0.0
    %v3402 = vand.u32 %v253, 4294901760
    %3403 = vmatmul.mubr.f32.gmra.mxu0 %v3402
    %v3404 = vpop.f32.mrf.mxu0
    %v3405 = vadd.f32 %v2750, %v3404
    %v3406 = vpop.f32.mrf.mxu0
    %3407 = vmatprep.mubr.f32.mxu0 0.0
    %v3408 = vand.u32 %v256, 4294901760
    %3409 = vmatmul.mubr.f32.gmra.mxu0 %v3408
    %v3410 = vpop.f32.mrf.mxu0
    %v3411 = vadd.f32 %v2758, %v3410
    %v3412 = vpop.f32.mrf.mxu0
    %3413 = vmatprep.mubr.f32.mxu0 0.0
    %v3414 = vand.u32 %v259, 4294901760
    %3415 = vmatmul.mubr.f32.gmra.mxu0 %v3414
    %v3416 = vpop.f32.mrf.mxu0
    %v3417 = vadd.f32 %v2766, %v3416
    %v3418 = vpop.f32.mrf.mxu0
    %3419 = vmatprep.mubr.f32.mxu0 0.0
    %v3420 = vand.u32 %v262, 4294901760
    %3421 = vmatmul.mubr.f32.gmra.mxu0 %v3420
    %v3422 = vpop.f32.mrf.mxu0
    %v3423 = vadd.f32 %v2774, %v3422
    %v3424 = vpop.f32.mrf.mxu0
    %3425 = vmatprep.mubr.f32.mxu0 0.0
    %v3426 = vand.u32 %v265, 4294901760
    %3427 = vmatmul.mubr.f32.gmra.mxu0 %v3426
    %v3428 = vpop.f32.mrf.mxu0
    %v3429 = vadd.f32 %v2782, %v3428
    %v3430 = vpop.f32.mrf.mxu0
    %3431 = vmatprep.mubr.f32.mxu0 0.0
    %v3432 = vand.u32 %v268, 4294901760
    %3433 = vmatmul.mubr.f32.gmra.mxu0 %v3432
    %v3434 = vpop.f32.mrf.mxu0
    %v3435 = vadd.f32 %v2790, %v3434
    %v3436 = vpop.f32.mrf.mxu0
    %3437 = vmatprep.mubr.f32.mxu0 0.0
    %v3438 = vand.u32 %v271, 4294901760
    %3439 = vmatmul.mubr.f32.gmra.mxu0 %v3438
    %v3440 = vpop.f32.mrf.mxu0
    %v3441 = vadd.f32 %v2798, %v3440
    %v3442 = vpop.f32.mrf.mxu0
    %3443 = vmatprep.mubr.f32.mxu0 0.0
    %v3444 = vand.u32 %v274, 4294901760
    %3445 = vmatmul.mubr.f32.gmra.mxu0 %v3444
    %v3446 = vpop.f32.mrf.mxu0
    %v3447 = vadd.f32 %v2806, %v3446
    %v3448 = vpop.f32.mrf.mxu0
    %3449 = vmatprep.mubr.f32.mxu0 0.0
    %v3450 = vand.u32 %v277, 4294901760
    %3451 = vmatmul.mubr.f32.gmra.mxu0 %v3450
    %v3452 = vpop.f32.mrf.mxu0
    %v3453 = vadd.f32 %v2814, %v3452
    %v3454 = vpop.f32.mrf.mxu0
    %3455 = vmatprep.mubr.f32.mxu0 0.0
    %v3456 = vand.u32 %v280, 4294901760
    %3457 = vmatmul.mubr.f32.gmra.mxu0 %v3456
    %v3458 = vpop.f32.mrf.mxu0
    %v3459 = vadd.f32 %v2822, %v3458
    %v3460 = vpop.f32.mrf.mxu0
    %3461 = vmatprep.mubr.f32.mxu0 0.0
    %v3462 = vand.u32 %v283, 4294901760
    %3463 = vmatmul.mubr.f32.gmra.mxu0 %v3462
    %v3464 = vpop.f32.mrf.mxu0
    %v3465 = vadd.f32 %v2830, %v3464
    %v3466 = vpop.f32.mrf.mxu0
    %3467 = vmatprep.mubr.f32.mxu0 0.0
    %v3468 = vand.u32 %v286, 4294901760
    %3469 = vmatmul.mubr.f32.gmra.mxu0 %v3468
    %v3470 = vpop.f32.mrf.mxu0
    %v3471 = vadd.f32 %v2838, %v3470
    %v3472 = vpop.f32.mrf.mxu0
    %3473 = vmatprep.mubr.f32.mxu0 0.0
    %v3474 = vand.u32 %v289, 4294901760
    %3475 = vmatmul.mubr.f32.gmra.mxu0 %v3474
    %v3476 = vpop.f32.mrf.mxu0
    %v3477 = vadd.f32 %v2846, %v3476
    %v3478 = vpop.f32.mrf.mxu0
    %3479 = vmatprep.mubr.f32.mxu0 0.0
    %v3480 = vand.u32 %v292, 4294901760
    %3481 = vmatmul.mubr.f32.gmra.mxu0 %v3480
    %v3482 = vpop.f32.mrf.mxu0
    %v3483 = vadd.f32 %v2854, %v3482
    %v3484 = vpop.f32.mrf.mxu0
    %3485 = vmatprep.mubr.f32.mxu0 0.0
    %v3486 = vand.u32 %v295, 4294901760
    %3487 = vmatmul.mubr.f32.gmra.mxu0 %v3486
    %v3488 = vpop.f32.mrf.mxu0
    %v3489 = vadd.f32 %v2862, %v3488
    %v3490 = vpop.f32.mrf.mxu0
    %3491 = vmatprep.mubr.f32.mxu0 0.0
    %v3492 = vand.u32 %v298, 4294901760
    %3493 = vmatmul.mubr.f32.gmra.mxu0 %v3492
    %v3494 = vpop.f32.mrf.mxu0
    %v3495 = vadd.f32 %v2870, %v3494
    %v3496 = vpop.f32.mrf.mxu0
    %3497 = vmatprep.mubr.f32.mxu0 0.0
    %v3498 = vand.u32 %v301, 4294901760
    %3499 = vmatmul.mubr.f32.gmra.mxu0 %v3498
    %v3500 = vpop.f32.mrf.mxu0
    %v3501 = vadd.f32 %v2878, %v3500
    %v3502 = vpop.f32.mrf.mxu0
    %3503 = vmatprep.mubr.f32.mxu0 0.0
    %v3504 = vand.u32 %v304, 4294901760
    %3505 = vmatmul.mubr.f32.gmra.mxu0 %v3504
    %v3506 = vpop.f32.mrf.mxu0
    %v3507 = vadd.f32 %v2886, %v3506
    %v3508 = vpop.f32.mrf.mxu0
    %3509 = vmatprep.mubr.f32.mxu0 0.0
    %v3510 = vand.u32 %v307, 4294901760
    %3511 = vmatmul.mubr.f32.gmra.mxu0 %v3510
    %v3512 = vpop.f32.mrf.mxu0
    %v3513 = vadd.f32 %v2894, %v3512
    %v3514 = vpop.f32.mrf.mxu0
    %3515 = vmatprep.mubr.f32.mxu0 0.0
    %v3516 = vand.u32 %v310, 4294901760
    %3517 = vmatmul.mubr.f32.gmra.mxu0 %v3516
    %v3518 = vpop.f32.mrf.mxu0
    %v3519 = vadd.f32 %v2902, %v3518
    %v3520 = vpop.f32.mrf.mxu0
    %3521 = vmatprep.mubr.f32.mxu0 0.0
    %v3522 = vand.u32 %v313, 4294901760
    %3523 = vmatmul.mubr.f32.gmra.mxu0 %v3522
    %v3524 = vpop.f32.mrf.mxu0
    %v3525 = vadd.f32 %v2910, %v3524
    %v3526 = vpop.f32.mrf.mxu0
    %3527 = vmatprep.mubr.f32.mxu0 0.0
    %v3528 = vand.u32 %v316, 4294901760
    %3529 = vmatmul.mubr.f32.gmra.mxu0 %v3528
    %v3530 = vpop.f32.mrf.mxu0
    %v3531 = vadd.f32 %v2918, %v3530
    %v3532 = vpop.f32.mrf.mxu0
    %3533 = vmatprep.mubr.f32.mxu0 0.0
    %v3534 = vand.u32 %v319, 4294901760
    %3535 = vmatmul.mubr.f32.gmra.mxu0 %v3534
    %v3536 = vpop.f32.mrf.mxu0
    %v3537 = vadd.f32 %v2926, %v3536
    %v3538 = vpop.f32.mrf.mxu0
    %3539 = vmatprep.mubr.f32.mxu0 0.0
    %v3540 = vand.u32 %v322, 4294901760
    %3541 = vmatmul.mubr.f32.gmra.mxu0 %v3540
    %v3542 = vpop.f32.mrf.mxu0
    %v3543 = vadd.f32 %v2934, %v3542
    %v3544 = vpop.f32.mrf.mxu0
    %3545 = vmatprep.mubr.f32.mxu0 0.0
    %v3546 = vand.u32 %v325, 4294901760
    %3547 = vmatmul.mubr.f32.gmra.mxu0 %v3546
    %v3548 = vpop.f32.mrf.mxu0
    %v3549 = vadd.f32 %v2942, %v3548
    %v3550 = vpop.f32.mrf.mxu0
    %3551 = vmatprep.mubr.f32.mxu0 0.0
    %v3552 = vand.u32 %v328, 4294901760
    %3553 = vmatmul.mubr.f32.gmra.mxu0 %v3552
    %v3554 = vpop.f32.mrf.mxu0
    %v3555 = vadd.f32 %v2950, %v3554
    %v3556 = vpop.f32.mrf.mxu0
    %3557 = vmatprep.mubr.f32.mxu0 0.0
    %v3558 = vand.u32 %v331, 4294901760
    %3559 = vmatmul.mubr.f32.gmra.mxu0 %v3558
    %v3560 = vpop.f32.mrf.mxu0
    %v3561 = vadd.f32 %v2958, %v3560
    %v3562 = vpop.f32.mrf.mxu0
    %3563 = vmatprep.mubr.f32.mxu0 0.0
    %v3564 = vand.u32 %v334, 4294901760
    %3565 = vmatmul.mubr.f32.gmra.mxu0 %v3564
    %v3566 = vpop.f32.mrf.mxu0
    %v3567 = vadd.f32 %v2966, %v3566
    %v3568 = vpop.f32.mrf.mxu0
    %3569 = vmatprep.mubr.f32.mxu0 0.0
    %v3570 = vand.u32 %v337, 4294901760
    %3571 = vmatmul.mubr.f32.gmra.mxu0 %v3570
    %v3572 = vpop.f32.mrf.mxu0
    %v3573 = vadd.f32 %v2974, %v3572
    %v3574 = vpop.f32.mrf.mxu0
    %3575 = vmatprep.mubr.f32.mxu0 0.0
    %v3576 = vand.u32 %v340, 4294901760
    %3577 = vmatmul.mubr.f32.gmra.mxu0 %v3576
    %v3578 = vpop.f32.mrf.mxu0
    %v3579 = vadd.f32 %v2982, %v3578
    %v3580 = vpop.f32.mrf.mxu0
    %3581 = vmatprep.mubr.f32.mxu0 0.0
    %v3582 = vand.u32 %v343, 4294901760
    %3583 = vmatmul.mubr.f32.gmra.mxu0 %v3582
    %v3584 = vpop.f32.mrf.mxu0
    %v3585 = vadd.f32 %v2990, %v3584
    %v3586 = vpop.f32.mrf.mxu0
    %3587 = vmatprep.mubr.f32.mxu0 0.0
    %v3588 = vand.u32 %v346, 4294901760
    %3589 = vmatmul.mubr.f32.gmra.mxu0 %v3588
    %v3590 = vpop.f32.mrf.mxu0
    %v3591 = vadd.f32 %v2998, %v3590
    %v3592 = vpop.f32.mrf.mxu0
    %3593 = vmatprep.mubr.f32.mxu0 0.0
    %v3594 = vand.u32 %v349, 4294901760
    %3595 = vmatmul.mubr.f32.gmra.mxu0 %v3594
    %v3596 = vpop.f32.mrf.mxu0
    %v3597 = vadd.f32 %v3006, %v3596
    %v3598 = vpop.f32.mrf.mxu0
    %3599 = vmatprep.mubr.f32.mxu0 0.0
    %v3600 = vand.u32 %v352, 4294901760
    %3601 = vmatmul.mubr.f32.gmra.mxu0 %v3600
    %v3602 = vpop.f32.mrf.mxu0
    %v3603 = vadd.f32 %v3014, %v3602
    %v3604 = vpop.f32.mrf.mxu0
    %3605 = vmatprep.mubr.f32.mxu0 0.0
    %v3606 = vand.u32 %v355, 4294901760
    %3607 = vmatmul.mubr.f32.gmra.mxu0 %v3606
    %v3608 = vpop.f32.mrf.mxu0
    %v3609 = vadd.f32 %v3022, %v3608
    %v3610 = vpop.f32.mrf.mxu0
    %3611 = vmatprep.mubr.f32.mxu0 0.0
    %v3612 = vand.u32 %v358, 4294901760
    %3613 = vmatmul.mubr.f32.gmra.mxu0 %v3612
    %v3614 = vpop.f32.mrf.mxu0
    %v3615 = vadd.f32 %v3030, %v3614
    %v3616 = vpop.f32.mrf.mxu0
    %3617 = vmatprep.mubr.f32.mxu0 0.0
    %v3618 = vand.u32 %v361, 4294901760
    %3619 = vmatmul.mubr.f32.gmra.mxu0 %v3618
    %v3620 = vpop.f32.mrf.mxu0
    %v3621 = vadd.f32 %v3038, %v3620
    %v3622 = vpop.f32.mrf.mxu0
    %3623 = vmatprep.mubr.f32.mxu0 0.0
    %v3624 = vand.u32 %v364, 4294901760
    %3625 = vmatmul.mubr.f32.gmra.mxu0 %v3624
    %v3626 = vpop.f32.mrf.mxu0
    %v3627 = vadd.f32 %v3046, %v3626
    %v3628 = vpop.f32.mrf.mxu0
    %3629 = vmatprep.mubr.f32.mxu0 0.0
    %v3630 = vand.u32 %v367, 4294901760
    %3631 = vmatmul.mubr.f32.gmra.mxu0 %v3630
    %v3632 = vpop.f32.mrf.mxu0
    %v3633 = vadd.f32 %v3054, %v3632
    %v3634 = vpop.f32.mrf.mxu0
    %3635 = vmatprep.mubr.f32.mxu0 0.0
    %v3636 = vand.u32 %v370, 4294901760
    %3637 = vmatmul.mubr.f32.gmra.mxu0 %v3636
    %v3638 = vpop.f32.mrf.mxu0
    %v3639 = vadd.f32 %v3062, %v3638
    %v3640 = vpop.f32.mrf.mxu0
    %3641 = vmatprep.mubr.f32.mxu0 0.0
    %v3642 = vand.u32 %v373, 4294901760
    %3643 = vmatmul.mubr.f32.gmra.mxu0 %v3642
    %v3644 = vpop.f32.mrf.mxu0
    %v3645 = vadd.f32 %v3070, %v3644
    %v3646 = vpop.f32.mrf.mxu0
    %3647 = vmatprep.mubr.f32.mxu0 0.0
    %v3648 = vand.u32 %v376, 4294901760
    %3649 = vmatmul.mubr.f32.gmra.mxu0 %v3648
    %v3650 = vpop.f32.mrf.mxu0
    %v3651 = vadd.f32 %v3078, %v3650
    %v3652 = vpop.f32.mrf.mxu0
    %3653 = vmatprep.mubr.f32.mxu0 0.0
    %v3654 = vand.u32 %v379, 4294901760
    %3655 = vmatmul.mubr.f32.gmra.mxu0 %v3654
    %v3656 = vpop.f32.mrf.mxu0
    %v3657 = vadd.f32 %v3086, %v3656
    %v3658 = vpop.f32.mrf.mxu0
    %3659 = vmatprep.mubr.f32.mxu0 0.0
    %v3660 = vand.u32 %v382, 4294901760
    %3661 = vmatmul.mubr.f32.gmra.mxu0 %v3660
    %v3662 = vpop.f32.mrf.mxu0
    %v3663 = vadd.f32 %v3094, %v3662
    %v3664 = vpop.f32.mrf.mxu0
    %3665 = vmatprep.mubr.f32.mxu0 0.0
    %v3666 = vand.u32 %v385, 4294901760
    %3667 = vmatmul.mubr.f32.gmra.mxu0 %v3666
    %v3668 = vpop.f32.mrf.mxu0
    %v3669 = vadd.f32 %v3102, %v3668
    %v3670 = vpop.f32.mrf.mxu0
    %3671 = vmatprep.mubr.f32.mxu0 0.0
    %v3672 = vand.u32 %v388, 4294901760
    %3673 = vmatmul.mubr.f32.gmra.mxu0 %v3672
    %v3674 = vpop.f32.mrf.mxu0
    %v3675 = vadd.f32 %v3110, %v3674
    %v3676 = vpop.f32.mrf.mxu0
    %3677 = vmatprep.mubr.f32.mxu0 0.0
    %v3678 = vand.u32 %v391, 4294901760
    %3679 = vmatmul.mubr.f32.gmra.mxu0 %v3678
    %v3680 = vpop.f32.mrf.mxu0
    %v3681 = vadd.f32 %v3118, %v3680
    %v3682 = vpop.f32.mrf.mxu0
    %3683 = vmatprep.mubr.f32.mxu0 0.0
    %v3684 = vand.u32 %v394, 4294901760
    %3685 = vmatmul.mubr.f32.gmra.mxu0 %v3684
    %v3686 = vpop.f32.mrf.mxu0
    %v3687 = vadd.f32 %v3126, %v3686
    %v3688 = vpop.f32.mrf.mxu0
    %3689 = vmatprep.mubr.f32.mxu0 0.0
    %v3690 = vand.u32 %v397, 4294901760
    %3691 = vmatmul.mubr.f32.gmra.mxu0 %v3690
    %v3692 = vpop.f32.mrf.mxu0
    %v3693 = vadd.f32 %v3134, %v3692
    %v3694 = vpop.f32.mrf.mxu0
    %3695 = vmatprep.mubr.f32.mxu0 0.0
    %v3696 = vand.u32 %v400, 4294901760
    %3697 = vmatmul.mubr.f32.gmra.mxu0 %v3696
    %v3698 = vpop.f32.mrf.mxu0
    %v3699 = vadd.f32 %v3142, %v3698
    %v3700 = vpop.f32.mrf.mxu0
    %3701 = vmatprep.mubr.f32.mxu0 0.0
    %v3702 = vand.u32 %v403, 4294901760
    %3703 = vmatmul.mubr.f32.gmra.mxu0 %v3702
    %v3704 = vpop.f32.mrf.mxu0
    %v3705 = vadd.f32 %v3150, %v3704
    %v3706 = vpop.f32.mrf.mxu0
    %3707 = vmatprep.mubr.f32.mxu0 0.0
    %v3708 = vand.u32 %v406, 4294901760
    %3709 = vmatmul.mubr.f32.gmra.mxu0 %v3708
    %v3710 = vpop.f32.mrf.mxu0
    %v3711 = vadd.f32 %v3158, %v3710
    %v3712 = vpop.f32.mrf.mxu0
    %3713 = vmatprep.mubr.f32.mxu0 0.0
    %v3714 = vand.u32 %v409, 4294901760
    %3715 = vmatmul.mubr.f32.gmra.mxu0 %v3714
    %v3716 = vpop.f32.mrf.mxu0
    %v3717 = vadd.f32 %v3166, %v3716
    %v3718 = vpop.f32.mrf.mxu0
    %3719 = vdwg.mxu0
    %3720 = vmatprep.subr.mxu0 0.0
    %3721 = vmatpush1.msra.mxu0 0.0
    %3722 = vmatprep.subr.mxu0 0.0
    %3723 = vmatpush1.msra.mxu0 0.0
    %3724 = vmatprep.subr.mxu0 0.0
    %3725 = vmatpush1.msra.mxu0 0.0
    %3726 = vmatprep.subr.mxu0 0.0
    %3727 = vmatpush1.msra.mxu0 0.0
    %3728 = vmatprep.subr.mxu0 0.0
    %3729 = vmatpush1.msra.mxu0 0.0
    %3730 = vmatprep.subr.mxu0 0.0
    %3731 = vmatpush1.msra.mxu0 0.0
    %3732 = vmatprep.subr.mxu0 0.0
    %3733 = vmatpush1.msra.mxu0 0.0
    %3734 = vmatprep.subr.mxu0 0.0
    %3735 = vmatpush1.msra.mxu0 0.0
    %3736 = vmatprep.subr.mxu0 0.0
    %3737 = vmatpush1.msra.mxu0 0.0
    %3738 = vmatprep.subr.mxu0 0.0
    %3739 = vmatpush1.msra.mxu0 0.0
    %3740 = vmatprep.subr.mxu0 0.0
    %3741 = vmatpush1.msra.mxu0 0.0
    %3742 = vmatprep.subr.mxu0 0.0
    %3743 = vmatpush1.msra.mxu0 0.0
    %3744 = vmatprep.subr.mxu0 0.0
    %3745 = vmatpush1.msra.mxu0 0.0
    %3746 = vmatprep.subr.mxu0 0.0
    %3747 = vmatpush1.msra.mxu0 0.0
    %3748 = vmatprep.subr.mxu0 0.0
    %v3749 = vand.u32 %v121, 4294901760
    %3750 = vmatpush1.msra.mxu0 %v3749
    %3751 = vmatprep.subr.mxu0 0.0
    %v3752 = vand.u32 %v120, 4294901760
    %3753 = vmatpush1.msra.mxu0 %v3752
    %3754 = vmatprep.subr.mxu0 0.0
    %3755 = vmatpush2.msra.mxu0 0.0
    %3756 = vmatprep.subr.mxu0 0.0
    %3757 = vmatpush2.msra.mxu0 0.0
    %3758 = vmatprep.subr.mxu0 0.0
    %3759 = vmatpush2.msra.mxu0 0.0
    %3760 = vmatprep.subr.mxu0 0.0
    %3761 = vmatpush2.msra.mxu0 0.0
    %3762 = vmatprep.subr.mxu0 0.0
    %3763 = vmatpush2.msra.mxu0 0.0
    %3764 = vmatprep.subr.mxu0 0.0
    %3765 = vmatpush2.msra.mxu0 0.0
    %3766 = vmatprep.subr.mxu0 0.0
    %3767 = vmatpush2.msra.mxu0 0.0
    %3768 = vmatprep.subr.mxu0 0.0
    %3769 = vmatpush2.msra.mxu0 0.0
    %3770 = vmatprep.subr.mxu0 0.0
    %3771 = vmatpush2.msra.mxu0 0.0
    %3772 = vmatprep.subr.mxu0 0.0
    %3773 = vmatpush2.msra.mxu0 0.0
    %3774 = vmatprep.subr.mxu0 0.0
    %3775 = vmatpush2.msra.mxu0 0.0
    %3776 = vmatprep.subr.mxu0 0.0
    %3777 = vmatpush2.msra.mxu0 0.0
    %3778 = vmatprep.subr.mxu0 0.0
    %3779 = vmatpush2.msra.mxu0 0.0
    %3780 = vmatprep.subr.mxu0 0.0
    %3781 = vmatpush2.msra.mxu0 0.0
    %3782 = vmatprep.subr.mxu0 0.0
    %3783 = vmatpush2.msra.mxu0 0.0
    %3784 = vmatprep.subr.mxu0 0.0
    %3785 = vmatpush2.msra.mxu0 0.0
    %3786 = vmatprep.mubr.f32.mxu0 0.0
    %v3787 = vand.u32 %v172, 4294901760
    %3788 = vmatmul.mubr.f32.gmra.mxu0 %v3787
    %v3789 = vpop.f32.mrf.mxu0
    %v3790 = vadd.f32 %v3243, %v3789
    %v3791 = vpop.f32.mrf.mxu0
    %3792 = vmatprep.mubr.f32.mxu0 0.0
    %v3793 = vand.u32 %v175, 4294901760
    %3794 = vmatmul.mubr.f32.gmra.mxu0 %v3793
    %v3795 = vpop.f32.mrf.mxu0
    %v3796 = vadd.f32 %v3249, %v3795
    %v3797 = vpop.f32.mrf.mxu0
    %3798 = vmatprep.mubr.f32.mxu0 0.0
    %v3799 = vand.u32 %v178, 4294901760
    %3800 = vmatmul.mubr.f32.gmra.mxu0 %v3799
    %v3801 = vpop.f32.mrf.mxu0
    %v3802 = vadd.f32 %v3255, %v3801
    %v3803 = vpop.f32.mrf.mxu0
    %3804 = vmatprep.mubr.f32.mxu0 0.0
    %v3805 = vand.u32 %v181, 4294901760
    %3806 = vmatmul.mubr.f32.gmra.mxu0 %v3805
    %v3807 = vpop.f32.mrf.mxu0
    %v3808 = vadd.f32 %v3261, %v3807
    %v3809 = vpop.f32.mrf.mxu0
    %3810 = vmatprep.mubr.f32.mxu0 0.0
    %v3811 = vand.u32 %v184, 4294901760
    %3812 = vmatmul.mubr.f32.gmra.mxu0 %v3811
    %v3813 = vpop.f32.mrf.mxu0
    %v3814 = vadd.f32 %v3267, %v3813
    %v3815 = vpop.f32.mrf.mxu0
    %3816 = vmatprep.mubr.f32.mxu0 0.0
    %v3817 = vand.u32 %v187, 4294901760
    %3818 = vmatmul.mubr.f32.gmra.mxu0 %v3817
    %v3819 = vpop.f32.mrf.mxu0
    %v3820 = vadd.f32 %v3273, %v3819
    %v3821 = vpop.f32.mrf.mxu0
    %3822 = vmatprep.mubr.f32.mxu0 0.0
    %v3823 = vand.u32 %v190, 4294901760
    %3824 = vmatmul.mubr.f32.gmra.mxu0 %v3823
    %v3825 = vpop.f32.mrf.mxu0
    %v3826 = vadd.f32 %v3279, %v3825
    %v3827 = vpop.f32.mrf.mxu0
    %3828 = vmatprep.mubr.f32.mxu0 0.0
    %v3829 = vand.u32 %v193, 4294901760
    %3830 = vmatmul.mubr.f32.gmra.mxu0 %v3829
    %v3831 = vpop.f32.mrf.mxu0
    %v3832 = vadd.f32 %v3285, %v3831
    %v3833 = vpop.f32.mrf.mxu0
    %3834 = vmatprep.mubr.f32.mxu0 0.0
    %v3835 = vand.u32 %v196, 4294901760
    %3836 = vmatmul.mubr.f32.gmra.mxu0 %v3835
    %v3837 = vpop.f32.mrf.mxu0
    %v3838 = vadd.f32 %v3291, %v3837
    %v3839 = vpop.f32.mrf.mxu0
    %3840 = vmatprep.mubr.f32.mxu0 0.0
    %v3841 = vand.u32 %v199, 4294901760
    %3842 = vmatmul.mubr.f32.gmra.mxu0 %v3841
    %v3843 = vpop.f32.mrf.mxu0
    %v3844 = vadd.f32 %v3297, %v3843
    %v3845 = vpop.f32.mrf.mxu0
    %3846 = vmatprep.mubr.f32.mxu0 0.0
    %v3847 = vand.u32 %v202, 4294901760
    %3848 = vmatmul.mubr.f32.gmra.mxu0 %v3847
    %v3849 = vpop.f32.mrf.mxu0
    %v3850 = vadd.f32 %v3303, %v3849
    %v3851 = vpop.f32.mrf.mxu0
    %3852 = vmatprep.mubr.f32.mxu0 0.0
    %v3853 = vand.u32 %v205, 4294901760
    %3854 = vmatmul.mubr.f32.gmra.mxu0 %v3853
    %v3855 = vpop.f32.mrf.mxu0
    %v3856 = vadd.f32 %v3309, %v3855
    %v3857 = vpop.f32.mrf.mxu0
    %3858 = vmatprep.mubr.f32.mxu0 0.0
    %v3859 = vand.u32 %v208, 4294901760
    %3860 = vmatmul.mubr.f32.gmra.mxu0 %v3859
    %v3861 = vpop.f32.mrf.mxu0
    %v3862 = vadd.f32 %v3315, %v3861
    %v3863 = vpop.f32.mrf.mxu0
    %3864 = vmatprep.mubr.f32.mxu0 0.0
    %v3865 = vand.u32 %v211, 4294901760
    %3866 = vmatmul.mubr.f32.gmra.mxu0 %v3865
    %v3867 = vpop.f32.mrf.mxu0
    %v3868 = vadd.f32 %v3321, %v3867
    %v3869 = vpop.f32.mrf.mxu0
    %3870 = vmatprep.mubr.f32.mxu0 0.0
    %v3871 = vand.u32 %v214, 4294901760
    %3872 = vmatmul.mubr.f32.gmra.mxu0 %v3871
    %v3873 = vpop.f32.mrf.mxu0
    %v3874 = vadd.f32 %v3327, %v3873
    %v3875 = vpop.f32.mrf.mxu0
    %3876 = vmatprep.mubr.f32.mxu0 0.0
    %v3877 = vand.u32 %v217, 4294901760
    %3878 = vmatmul.mubr.f32.gmra.mxu0 %v3877
    %v3879 = vpop.f32.mrf.mxu0
    %v3880 = vadd.f32 %v3333, %v3879
    %v3881 = vpop.f32.mrf.mxu0
    %3882 = vmatprep.mubr.f32.mxu0 0.0
    %v3883 = vand.u32 %v220, 4294901760
    %3884 = vmatmul.mubr.f32.gmra.mxu0 %v3883
    %v3885 = vpop.f32.mrf.mxu0
    %v3886 = vadd.f32 %v3339, %v3885
    %v3887 = vpop.f32.mrf.mxu0
    %3888 = vmatprep.mubr.f32.mxu0 0.0
    %v3889 = vand.u32 %v223, 4294901760
    %3890 = vmatmul.mubr.f32.gmra.mxu0 %v3889
    %v3891 = vpop.f32.mrf.mxu0
    %v3892 = vadd.f32 %v3345, %v3891
    %v3893 = vpop.f32.mrf.mxu0
    %3894 = vmatprep.mubr.f32.mxu0 0.0
    %v3895 = vand.u32 %v226, 4294901760
    %3896 = vmatmul.mubr.f32.gmra.mxu0 %v3895
    %v3897 = vpop.f32.mrf.mxu0
    %v3898 = vadd.f32 %v3351, %v3897
    %v3899 = vpop.f32.mrf.mxu0
    %3900 = vmatprep.mubr.f32.mxu0 0.0
    %v3901 = vand.u32 %v229, 4294901760
    %3902 = vmatmul.mubr.f32.gmra.mxu0 %v3901
    %v3903 = vpop.f32.mrf.mxu0
    %v3904 = vadd.f32 %v3357, %v3903
    %v3905 = vpop.f32.mrf.mxu0
    %3906 = vmatprep.mubr.f32.mxu0 0.0
    %v3907 = vand.u32 %v232, 4294901760
    %3908 = vmatmul.mubr.f32.gmra.mxu0 %v3907
    %v3909 = vpop.f32.mrf.mxu0
    %v3910 = vadd.f32 %v3363, %v3909
    %v3911 = vpop.f32.mrf.mxu0
    %3912 = vmatprep.mubr.f32.mxu0 0.0
    %v3913 = vand.u32 %v235, 4294901760
    %3914 = vmatmul.mubr.f32.gmra.mxu0 %v3913
    %v3915 = vpop.f32.mrf.mxu0
    %v3916 = vadd.f32 %v3369, %v3915
    %v3917 = vpop.f32.mrf.mxu0
    %3918 = vmatprep.mubr.f32.mxu0 0.0
    %v3919 = vand.u32 %v238, 4294901760
    %3920 = vmatmul.mubr.f32.gmra.mxu0 %v3919
    %v3921 = vpop.f32.mrf.mxu0
    %v3922 = vadd.f32 %v3375, %v3921
    %v3923 = vpop.f32.mrf.mxu0
    %3924 = vmatprep.mubr.f32.mxu0 0.0
    %v3925 = vand.u32 %v241, 4294901760
    %3926 = vmatmul.mubr.f32.gmra.mxu0 %v3925
    %v3927 = vpop.f32.mrf.mxu0
    %v3928 = vadd.f32 %v3381, %v3927
    %v3929 = vpop.f32.mrf.mxu0
    %3930 = vmatprep.mubr.f32.mxu0 0.0
    %v3931 = vand.u32 %v244, 4294901760
    %3932 = vmatmul.mubr.f32.gmra.mxu0 %v3931
    %v3933 = vpop.f32.mrf.mxu0
    %v3934 = vadd.f32 %v3387, %v3933
    %v3935 = vpop.f32.mrf.mxu0
    %3936 = vmatprep.mubr.f32.mxu0 0.0
    %v3937 = vand.u32 %v247, 4294901760
    %3938 = vmatmul.mubr.f32.gmra.mxu0 %v3937
    %v3939 = vpop.f32.mrf.mxu0
    %v3940 = vadd.f32 %v3393, %v3939
    %v3941 = vpop.f32.mrf.mxu0
    %3942 = vmatprep.mubr.f32.mxu0 0.0
    %v3943 = vand.u32 %v250, 4294901760
    %3944 = vmatmul.mubr.f32.gmra.mxu0 %v3943
    %v3945 = vpop.f32.mrf.mxu0
    %v3946 = vadd.f32 %v3399, %v3945
    %v3947 = vpop.f32.mrf.mxu0
    %3948 = vmatprep.mubr.f32.mxu0 0.0
    %v3949 = vand.u32 %v253, 4294901760
    %3950 = vmatmul.mubr.f32.gmra.mxu0 %v3949
    %v3951 = vpop.f32.mrf.mxu0
    %v3952 = vadd.f32 %v3405, %v3951
    %v3953 = vpop.f32.mrf.mxu0
    %3954 = vmatprep.mubr.f32.mxu0 0.0
    %v3955 = vand.u32 %v256, 4294901760
    %3956 = vmatmul.mubr.f32.gmra.mxu0 %v3955
    %v3957 = vpop.f32.mrf.mxu0
    %v3958 = vadd.f32 %v3411, %v3957
    %v3959 = vpop.f32.mrf.mxu0
    %3960 = vmatprep.mubr.f32.mxu0 0.0
    %v3961 = vand.u32 %v259, 4294901760
    %3962 = vmatmul.mubr.f32.gmra.mxu0 %v3961
    %v3963 = vpop.f32.mrf.mxu0
    %v3964 = vadd.f32 %v3417, %v3963
    %v3965 = vpop.f32.mrf.mxu0
    %3966 = vmatprep.mubr.f32.mxu0 0.0
    %v3967 = vand.u32 %v262, 4294901760
    %3968 = vmatmul.mubr.f32.gmra.mxu0 %v3967
    %v3969 = vpop.f32.mrf.mxu0
    %v3970 = vadd.f32 %v3423, %v3969
    %v3971 = vpop.f32.mrf.mxu0
    %3972 = vmatprep.mubr.f32.mxu0 0.0
    %v3973 = vand.u32 %v265, 4294901760
    %3974 = vmatmul.mubr.f32.gmra.mxu0 %v3973
    %v3975 = vpop.f32.mrf.mxu0
    %v3976 = vadd.f32 %v3429, %v3975
    %v3977 = vpop.f32.mrf.mxu0
    %3978 = vmatprep.mubr.f32.mxu0 0.0
    %v3979 = vand.u32 %v268, 4294901760
    %3980 = vmatmul.mubr.f32.gmra.mxu0 %v3979
    %v3981 = vpop.f32.mrf.mxu0
    %v3982 = vadd.f32 %v3435, %v3981
    %v3983 = vpop.f32.mrf.mxu0
    %3984 = vmatprep.mubr.f32.mxu0 0.0
    %v3985 = vand.u32 %v271, 4294901760
    %3986 = vmatmul.mubr.f32.gmra.mxu0 %v3985
    %v3987 = vpop.f32.mrf.mxu0
    %v3988 = vadd.f32 %v3441, %v3987
    %v3989 = vpop.f32.mrf.mxu0
    %3990 = vmatprep.mubr.f32.mxu0 0.0
    %v3991 = vand.u32 %v274, 4294901760
    %3992 = vmatmul.mubr.f32.gmra.mxu0 %v3991
    %v3993 = vpop.f32.mrf.mxu0
    %v3994 = vadd.f32 %v3447, %v3993
    %v3995 = vpop.f32.mrf.mxu0
    %3996 = vmatprep.mubr.f32.mxu0 0.0
    %v3997 = vand.u32 %v277, 4294901760
    %3998 = vmatmul.mubr.f32.gmra.mxu0 %v3997
    %v3999 = vpop.f32.mrf.mxu0
    %v4000 = vadd.f32 %v3453, %v3999
    %v4001 = vpop.f32.mrf.mxu0
    %4002 = vmatprep.mubr.f32.mxu0 0.0
    %v4003 = vand.u32 %v280, 4294901760
    %4004 = vmatmul.mubr.f32.gmra.mxu0 %v4003
    %v4005 = vpop.f32.mrf.mxu0
    %v4006 = vadd.f32 %v3459, %v4005
    %v4007 = vpop.f32.mrf.mxu0
    %4008 = vmatprep.mubr.f32.mxu0 0.0
    %v4009 = vand.u32 %v283, 4294901760
    %4010 = vmatmul.mubr.f32.gmra.mxu0 %v4009
    %v4011 = vpop.f32.mrf.mxu0
    %v4012 = vadd.f32 %v3465, %v4011
    %v4013 = vpop.f32.mrf.mxu0
    %4014 = vmatprep.mubr.f32.mxu0 0.0
    %v4015 = vand.u32 %v286, 4294901760
    %4016 = vmatmul.mubr.f32.gmra.mxu0 %v4015
    %v4017 = vpop.f32.mrf.mxu0
    %v4018 = vadd.f32 %v3471, %v4017
    %v4019 = vpop.f32.mrf.mxu0
    %4020 = vmatprep.mubr.f32.mxu0 0.0
    %v4021 = vand.u32 %v289, 4294901760
    %4022 = vmatmul.mubr.f32.gmra.mxu0 %v4021
    %v4023 = vpop.f32.mrf.mxu0
    %v4024 = vadd.f32 %v3477, %v4023
    %v4025 = vpop.f32.mrf.mxu0
    %4026 = vmatprep.mubr.f32.mxu0 0.0
    %v4027 = vand.u32 %v292, 4294901760
    %4028 = vmatmul.mubr.f32.gmra.mxu0 %v4027
    %v4029 = vpop.f32.mrf.mxu0
    %v4030 = vadd.f32 %v3483, %v4029
    %v4031 = vpop.f32.mrf.mxu0
    %4032 = vmatprep.mubr.f32.mxu0 0.0
    %v4033 = vand.u32 %v295, 4294901760
    %4034 = vmatmul.mubr.f32.gmra.mxu0 %v4033
    %v4035 = vpop.f32.mrf.mxu0
    %v4036 = vadd.f32 %v3489, %v4035
    %v4037 = vpop.f32.mrf.mxu0
    %4038 = vmatprep.mubr.f32.mxu0 0.0
    %v4039 = vand.u32 %v298, 4294901760
    %4040 = vmatmul.mubr.f32.gmra.mxu0 %v4039
    %v4041 = vpop.f32.mrf.mxu0
    %v4042 = vadd.f32 %v3495, %v4041
    %v4043 = vpop.f32.mrf.mxu0
    %4044 = vmatprep.mubr.f32.mxu0 0.0
    %v4045 = vand.u32 %v301, 4294901760
    %4046 = vmatmul.mubr.f32.gmra.mxu0 %v4045
    %v4047 = vpop.f32.mrf.mxu0
    %v4048 = vadd.f32 %v3501, %v4047
    %v4049 = vpop.f32.mrf.mxu0
    %4050 = vmatprep.mubr.f32.mxu0 0.0
    %v4051 = vand.u32 %v304, 4294901760
    %4052 = vmatmul.mubr.f32.gmra.mxu0 %v4051
    %v4053 = vpop.f32.mrf.mxu0
    %v4054 = vadd.f32 %v3507, %v4053
    %v4055 = vpop.f32.mrf.mxu0
    %4056 = vmatprep.mubr.f32.mxu0 0.0
    %v4057 = vand.u32 %v307, 4294901760
    %4058 = vmatmul.mubr.f32.gmra.mxu0 %v4057
    %v4059 = vpop.f32.mrf.mxu0
    %v4060 = vadd.f32 %v3513, %v4059
    %v4061 = vpop.f32.mrf.mxu0
    %4062 = vmatprep.mubr.f32.mxu0 0.0
    %v4063 = vand.u32 %v310, 4294901760
    %4064 = vmatmul.mubr.f32.gmra.mxu0 %v4063
    %v4065 = vpop.f32.mrf.mxu0
    %v4066 = vadd.f32 %v3519, %v4065
    %v4067 = vpop.f32.mrf.mxu0
    %4068 = vmatprep.mubr.f32.mxu0 0.0
    %v4069 = vand.u32 %v313, 4294901760
    %4070 = vmatmul.mubr.f32.gmra.mxu0 %v4069
    %v4071 = vpop.f32.mrf.mxu0
    %v4072 = vadd.f32 %v3525, %v4071
    %v4073 = vpop.f32.mrf.mxu0
    %4074 = vmatprep.mubr.f32.mxu0 0.0
    %v4075 = vand.u32 %v316, 4294901760
    %4076 = vmatmul.mubr.f32.gmra.mxu0 %v4075
    %v4077 = vpop.f32.mrf.mxu0
    %v4078 = vadd.f32 %v3531, %v4077
    %v4079 = vpop.f32.mrf.mxu0
    %4080 = vmatprep.mubr.f32.mxu0 0.0
    %v4081 = vand.u32 %v319, 4294901760
    %4082 = vmatmul.mubr.f32.gmra.mxu0 %v4081
    %v4083 = vpop.f32.mrf.mxu0
    %v4084 = vadd.f32 %v3537, %v4083
    %v4085 = vpop.f32.mrf.mxu0
    %4086 = vmatprep.mubr.f32.mxu0 0.0
    %v4087 = vand.u32 %v322, 4294901760
    %4088 = vmatmul.mubr.f32.gmra.mxu0 %v4087
    %v4089 = vpop.f32.mrf.mxu0
    %v4090 = vadd.f32 %v3543, %v4089
    %v4091 = vpop.f32.mrf.mxu0
    %4092 = vmatprep.mubr.f32.mxu0 0.0
    %v4093 = vand.u32 %v325, 4294901760
    %4094 = vmatmul.mubr.f32.gmra.mxu0 %v4093
    %v4095 = vpop.f32.mrf.mxu0
    %v4096 = vadd.f32 %v3549, %v4095
    %v4097 = vpop.f32.mrf.mxu0
    %4098 = vmatprep.mubr.f32.mxu0 0.0
    %v4099 = vand.u32 %v328, 4294901760
    %4100 = vmatmul.mubr.f32.gmra.mxu0 %v4099
    %v4101 = vpop.f32.mrf.mxu0
    %v4102 = vadd.f32 %v3555, %v4101
    %v4103 = vpop.f32.mrf.mxu0
    %4104 = vmatprep.mubr.f32.mxu0 0.0
    %v4105 = vand.u32 %v331, 4294901760
    %4106 = vmatmul.mubr.f32.gmra.mxu0 %v4105
    %v4107 = vpop.f32.mrf.mxu0
    %v4108 = vadd.f32 %v3561, %v4107
    %v4109 = vpop.f32.mrf.mxu0
    %4110 = vmatprep.mubr.f32.mxu0 0.0
    %v4111 = vand.u32 %v334, 4294901760
    %4112 = vmatmul.mubr.f32.gmra.mxu0 %v4111
    %v4113 = vpop.f32.mrf.mxu0
    %v4114 = vadd.f32 %v3567, %v4113
    %v4115 = vpop.f32.mrf.mxu0
    %4116 = vmatprep.mubr.f32.mxu0 0.0
    %v4117 = vand.u32 %v337, 4294901760
    %4118 = vmatmul.mubr.f32.gmra.mxu0 %v4117
    %v4119 = vpop.f32.mrf.mxu0
    %v4120 = vadd.f32 %v3573, %v4119
    %v4121 = vpop.f32.mrf.mxu0
    %4122 = vmatprep.mubr.f32.mxu0 0.0
    %v4123 = vand.u32 %v340, 4294901760
    %4124 = vmatmul.mubr.f32.gmra.mxu0 %v4123
    %v4125 = vpop.f32.mrf.mxu0
    %v4126 = vadd.f32 %v3579, %v4125
    %v4127 = vpop.f32.mrf.mxu0
    %4128 = vmatprep.mubr.f32.mxu0 0.0
    %v4129 = vand.u32 %v343, 4294901760
    %4130 = vmatmul.mubr.f32.gmra.mxu0 %v4129
    %v4131 = vpop.f32.mrf.mxu0
    %v4132 = vadd.f32 %v3585, %v4131
    %v4133 = vpop.f32.mrf.mxu0
    %4134 = vmatprep.mubr.f32.mxu0 0.0
    %v4135 = vand.u32 %v346, 4294901760
    %4136 = vmatmul.mubr.f32.gmra.mxu0 %v4135
    %v4137 = vpop.f32.mrf.mxu0
    %v4138 = vadd.f32 %v3591, %v4137
    %v4139 = vpop.f32.mrf.mxu0
    %4140 = vmatprep.mubr.f32.mxu0 0.0
    %v4141 = vand.u32 %v349, 4294901760
    %4142 = vmatmul.mubr.f32.gmra.mxu0 %v4141
    %v4143 = vpop.f32.mrf.mxu0
    %v4144 = vadd.f32 %v3597, %v4143
    %v4145 = vpop.f32.mrf.mxu0
    %4146 = vmatprep.mubr.f32.mxu0 0.0
    %v4147 = vand.u32 %v352, 4294901760
    %4148 = vmatmul.mubr.f32.gmra.mxu0 %v4147
    %v4149 = vpop.f32.mrf.mxu0
    %v4150 = vadd.f32 %v3603, %v4149
    %v4151 = vpop.f32.mrf.mxu0
    %4152 = vmatprep.mubr.f32.mxu0 0.0
    %v4153 = vand.u32 %v355, 4294901760
    %4154 = vmatmul.mubr.f32.gmra.mxu0 %v4153
    %v4155 = vpop.f32.mrf.mxu0
    %v4156 = vadd.f32 %v3609, %v4155
    %v4157 = vpop.f32.mrf.mxu0
    %4158 = vmatprep.mubr.f32.mxu0 0.0
    %v4159 = vand.u32 %v358, 4294901760
    %4160 = vmatmul.mubr.f32.gmra.mxu0 %v4159
    %v4161 = vpop.f32.mrf.mxu0
    %v4162 = vadd.f32 %v3615, %v4161
    %v4163 = vpop.f32.mrf.mxu0
    %4164 = vmatprep.mubr.f32.mxu0 0.0
    %v4165 = vand.u32 %v361, 4294901760
    %4166 = vmatmul.mubr.f32.gmra.mxu0 %v4165
    %v4167 = vpop.f32.mrf.mxu0
    %v4168 = vadd.f32 %v3621, %v4167
    %v4169 = vpop.f32.mrf.mxu0
    %4170 = vmatprep.mubr.f32.mxu0 0.0
    %v4171 = vand.u32 %v364, 4294901760
    %4172 = vmatmul.mubr.f32.gmra.mxu0 %v4171
    %v4173 = vpop.f32.mrf.mxu0
    %v4174 = vadd.f32 %v3627, %v4173
    %v4175 = vpop.f32.mrf.mxu0
    %4176 = vmatprep.mubr.f32.mxu0 0.0
    %v4177 = vand.u32 %v367, 4294901760
    %4178 = vmatmul.mubr.f32.gmra.mxu0 %v4177
    %v4179 = vpop.f32.mrf.mxu0
    %v4180 = vadd.f32 %v3633, %v4179
    %v4181 = vpop.f32.mrf.mxu0
    %4182 = vmatprep.mubr.f32.mxu0 0.0
    %v4183 = vand.u32 %v370, 4294901760
    %4184 = vmatmul.mubr.f32.gmra.mxu0 %v4183
    %v4185 = vpop.f32.mrf.mxu0
    %v4186 = vadd.f32 %v3639, %v4185
    %v4187 = vpop.f32.mrf.mxu0
    %4188 = vmatprep.mubr.f32.mxu0 0.0
    %v4189 = vand.u32 %v373, 4294901760
    %4190 = vmatmul.mubr.f32.gmra.mxu0 %v4189
    %v4191 = vpop.f32.mrf.mxu0
    %v4192 = vadd.f32 %v3645, %v4191
    %v4193 = vpop.f32.mrf.mxu0
    %4194 = vmatprep.mubr.f32.mxu0 0.0
    %v4195 = vand.u32 %v376, 4294901760
    %4196 = vmatmul.mubr.f32.gmra.mxu0 %v4195
    %v4197 = vpop.f32.mrf.mxu0
    %v4198 = vadd.f32 %v3651, %v4197
    %v4199 = vpop.f32.mrf.mxu0
    %4200 = vmatprep.mubr.f32.mxu0 0.0
    %v4201 = vand.u32 %v379, 4294901760
    %4202 = vmatmul.mubr.f32.gmra.mxu0 %v4201
    %v4203 = vpop.f32.mrf.mxu0
    %v4204 = vadd.f32 %v3657, %v4203
    %v4205 = vpop.f32.mrf.mxu0
    %4206 = vmatprep.mubr.f32.mxu0 0.0
    %v4207 = vand.u32 %v382, 4294901760
    %4208 = vmatmul.mubr.f32.gmra.mxu0 %v4207
    %v4209 = vpop.f32.mrf.mxu0
    %v4210 = vadd.f32 %v3663, %v4209
    %v4211 = vpop.f32.mrf.mxu0
    %4212 = vmatprep.mubr.f32.mxu0 0.0
    %v4213 = vand.u32 %v385, 4294901760
    %4214 = vmatmul.mubr.f32.gmra.mxu0 %v4213
    %v4215 = vpop.f32.mrf.mxu0
    %v4216 = vadd.f32 %v3669, %v4215
    %v4217 = vpop.f32.mrf.mxu0
    %4218 = vmatprep.mubr.f32.mxu0 0.0
    %v4219 = vand.u32 %v388, 4294901760
    %4220 = vmatmul.mubr.f32.gmra.mxu0 %v4219
    %v4221 = vpop.f32.mrf.mxu0
    %v4222 = vadd.f32 %v3675, %v4221
    %v4223 = vpop.f32.mrf.mxu0
    %4224 = vmatprep.mubr.f32.mxu0 0.0
    %v4225 = vand.u32 %v391, 4294901760
    %4226 = vmatmul.mubr.f32.gmra.mxu0 %v4225
    %v4227 = vpop.f32.mrf.mxu0
    %v4228 = vadd.f32 %v3681, %v4227
    %v4229 = vpop.f32.mrf.mxu0
    %4230 = vmatprep.mubr.f32.mxu0 0.0
    %v4231 = vand.u32 %v394, 4294901760
    %4232 = vmatmul.mubr.f32.gmra.mxu0 %v4231
    %v4233 = vpop.f32.mrf.mxu0
    %v4234 = vadd.f32 %v3687, %v4233
    %v4235 = vpop.f32.mrf.mxu0
    %4236 = vmatprep.mubr.f32.mxu0 0.0
    %v4237 = vand.u32 %v397, 4294901760
    %4238 = vmatmul.mubr.f32.gmra.mxu0 %v4237
    %v4239 = vpop.f32.mrf.mxu0
    %v4240 = vadd.f32 %v3693, %v4239
    %v4241 = vpop.f32.mrf.mxu0
    %4242 = vmatprep.mubr.f32.mxu0 0.0
    %v4243 = vand.u32 %v400, 4294901760
    %4244 = vmatmul.mubr.f32.gmra.mxu0 %v4243
    %v4245 = vpop.f32.mrf.mxu0
    %v4246 = vadd.f32 %v3699, %v4245
    %v4247 = vpop.f32.mrf.mxu0
    %4248 = vmatprep.mubr.f32.mxu0 0.0
    %v4249 = vand.u32 %v403, 4294901760
    %4250 = vmatmul.mubr.f32.gmra.mxu0 %v4249
    %v4251 = vpop.f32.mrf.mxu0
    %v4252 = vadd.f32 %v3705, %v4251
    %v4253 = vpop.f32.mrf.mxu0
    %4254 = vmatprep.mubr.f32.mxu0 0.0
    %v4255 = vand.u32 %v406, 4294901760
    %4256 = vmatmul.mubr.f32.gmra.mxu0 %v4255
    %v4257 = vpop.f32.mrf.mxu0
    %v4258 = vadd.f32 %v3711, %v4257
    %v4259 = vpop.f32.mrf.mxu0
    %4260 = vmatprep.mubr.f32.mxu0 0.0
    %v4261 = vand.u32 %v409, 4294901760
    %4262 = vmatmul.mubr.f32.gmra.mxu0 %v4261
    %v4263 = vpop.f32.mrf.mxu0
    %v4264 = vadd.f32 %v3717, %v4263
    %v4265 = vpop.f32.mrf.mxu0
    %4266 = vdwg.mxu0
    %4267 = vmatprep.subr.mxu0 0.0
    %v4268 = vand.u32 %v3880, 4294901760
    %4269 = vmatpush1.msra.mxu0 %v4268
    %4270 = vmatprep.subr.mxu0 0.0
    %v4271 = vand.u32 %v3874, 4294901760
    %4272 = vmatpush1.msra.mxu0 %v4271
    %4273 = vmatprep.subr.mxu0 0.0
    %v4274 = vand.u32 %v3868, 4294901760
    %4275 = vmatpush1.msra.mxu0 %v4274
    %4276 = vmatprep.subr.mxu0 0.0
    %v4277 = vand.u32 %v3862, 4294901760
    %4278 = vmatpush1.msra.mxu0 %v4277
    %4279 = vmatprep.subr.mxu0 0.0
    %v4280 = vand.u32 %v3856, 4294901760
    %4281 = vmatpush1.msra.mxu0 %v4280
    %4282 = vmatprep.subr.mxu0 0.0
    %v4283 = vand.u32 %v3850, 4294901760
    %4284 = vmatpush1.msra.mxu0 %v4283
    %4285 = vmatprep.subr.mxu0 0.0
    %v4286 = vand.u32 %v3844, 4294901760
    %4287 = vmatpush1.msra.mxu0 %v4286
    %4288 = vmatprep.subr.mxu0 0.0
    %v4289 = vand.u32 %v3838, 4294901760
    %4290 = vmatpush1.msra.mxu0 %v4289
    %4291 = vmatprep.subr.mxu0 0.0
    %v4292 = vand.u32 %v3832, 4294901760
    %4293 = vmatpush1.msra.mxu0 %v4292
    %4294 = vmatprep.subr.mxu0 0.0
    %v4295 = vand.u32 %v3826, 4294901760
    %4296 = vmatpush1.msra.mxu0 %v4295
    %4297 = vmatprep.subr.mxu0 0.0
    %v4298 = vand.u32 %v3820, 4294901760
    %4299 = vmatpush1.msra.mxu0 %v4298
    %4300 = vmatprep.subr.mxu0 0.0
    %v4301 = vand.u32 %v3814, 4294901760
    %4302 = vmatpush1.msra.mxu0 %v4301
    %4303 = vmatprep.subr.mxu0 0.0
    %v4304 = vand.u32 %v3808, 4294901760
    %4305 = vmatpush1.msra.mxu0 %v4304
    %4306 = vmatprep.subr.mxu0 0.0
    %v4307 = vand.u32 %v3802, 4294901760
    %4308 = vmatpush1.msra.mxu0 %v4307
    %4309 = vmatprep.subr.mxu0 0.0
    %v4310 = vand.u32 %v3796, 4294901760
    %4311 = vmatpush1.msra.mxu0 %v4310
    %4312 = vmatprep.subr.mxu0 0.0
    %v4313 = vand.u32 %v3790, 4294901760
    %4314 = vmatpush1.msra.mxu0 %v4313
    %4315 = vmatprep.subr.mxu0 0.0
    %4316 = vmatpush2.msra.mxu0 0.0
    %4317 = vmatprep.subr.mxu0 0.0
    %4318 = vmatpush2.msra.mxu0 0.0
    %4319 = vmatprep.subr.mxu0 0.0
    %4320 = vmatpush2.msra.mxu0 0.0
    %4321 = vmatprep.subr.mxu0 0.0
    %4322 = vmatpush2.msra.mxu0 0.0
    %4323 = vmatprep.subr.mxu0 0.0
    %4324 = vmatpush2.msra.mxu0 0.0
    %4325 = vmatprep.subr.mxu0 0.0
    %4326 = vmatpush2.msra.mxu0 0.0
    %4327 = vmatprep.subr.mxu0 0.0
    %4328 = vmatpush2.msra.mxu0 0.0
    %4329 = vmatprep.subr.mxu0 0.0
    %4330 = vmatpush2.msra.mxu0 0.0
    %4331 = vmatprep.subr.mxu0 0.0
    %4332 = vmatpush2.msra.mxu0 0.0
    %4333 = vmatprep.subr.mxu0 0.0
    %4334 = vmatpush2.msra.mxu0 0.0
    %4335 = vmatprep.subr.mxu0 0.0
    %4336 = vmatpush2.msra.mxu0 0.0
    %4337 = vmatprep.subr.mxu0 0.0
    %4338 = vmatpush2.msra.mxu0 0.0
    %4339 = vmatprep.subr.mxu0 0.0
    %4340 = vmatpush2.msra.mxu0 0.0
    %4341 = vmatprep.subr.mxu0 0.0
    %4342 = vmatpush2.msra.mxu0 0.0
    %4343 = vmatprep.subr.mxu0 0.0
    %4344 = vmatpush2.msra.mxu0 0.0
    %4345 = vmatprep.subr.mxu0 0.0
    %4346 = vmatpush2.msra.mxu0 0.0
    %4347 = vmatprep.mubr.f32.mxu0 0.0
    %v4348 = vand.u32 %v104, 4294901760
    %v4349 = vsub.f32 %v104, %v4348
    %v4350 = vand.u32 %v4349, 4294901760
    %v4351 = vsub.f32 %v4349, %v4350
    %v4352 = vand.u32 %v4351, 4294901760
    %4353 = vmatmul.mubr.f32.gmra.mxu0 %v4352
    %v4354 = vpop.f32.mrf.mxu0
    %v4355 = vadd.f32 0.0, %v4354
    %v4356 = vpop.f32.mrf.mxu0
    %4357 = vmatprep.mubr.f32.mxu0 0.0
    %v4358 = vand.u32 %v105, 4294901760
    %v4359 = vsub.f32 %v105, %v4358
    %v4360 = vand.u32 %v4359, 4294901760
    %v4361 = vsub.f32 %v4359, %v4360
    %v4362 = vand.u32 %v4361, 4294901760
    %4363 = vmatmul.mubr.f32.gmra.mxu0 %v4362
    %v4364 = vpop.f32.mrf.mxu0
    %v4365 = vadd.f32 0.0, %v4364
    %v4366 = vpop.f32.mrf.mxu0
    %4367 = vmatprep.mubr.f32.mxu0 0.0
    %v4368 = vand.u32 %v106, 4294901760
    %v4369 = vsub.f32 %v106, %v4368
    %v4370 = vand.u32 %v4369, 4294901760
    %v4371 = vsub.f32 %v4369, %v4370
    %v4372 = vand.u32 %v4371, 4294901760
    %4373 = vmatmul.mubr.f32.gmra.mxu0 %v4372
    %v4374 = vpop.f32.mrf.mxu0
    %v4375 = vadd.f32 0.0, %v4374
    %v4376 = vpop.f32.mrf.mxu0
    %4377 = vmatprep.mubr.f32.mxu0 0.0
    %v4378 = vand.u32 %v107, 4294901760
    %v4379 = vsub.f32 %v107, %v4378
    %v4380 = vand.u32 %v4379, 4294901760
    %v4381 = vsub.f32 %v4379, %v4380
    %v4382 = vand.u32 %v4381, 4294901760
    %4383 = vmatmul.mubr.f32.gmra.mxu0 %v4382
    %v4384 = vpop.f32.mrf.mxu0
    %v4385 = vadd.f32 0.0, %v4384
    %v4386 = vpop.f32.mrf.mxu0
    %4387 = vmatprep.mubr.f32.mxu0 0.0
    %v4388 = vand.u32 %v108, 4294901760
    %v4389 = vsub.f32 %v108, %v4388
    %v4390 = vand.u32 %v4389, 4294901760
    %v4391 = vsub.f32 %v4389, %v4390
    %v4392 = vand.u32 %v4391, 4294901760
    %4393 = vmatmul.mubr.f32.gmra.mxu0 %v4392
    %v4394 = vpop.f32.mrf.mxu0
    %v4395 = vadd.f32 0.0, %v4394
    %v4396 = vpop.f32.mrf.mxu0
    %4397 = vmatprep.mubr.f32.mxu0 0.0
    %v4398 = vand.u32 %v109, 4294901760
    %v4399 = vsub.f32 %v109, %v4398
    %v4400 = vand.u32 %v4399, 4294901760
    %v4401 = vsub.f32 %v4399, %v4400
    %v4402 = vand.u32 %v4401, 4294901760
    %4403 = vmatmul.mubr.f32.gmra.mxu0 %v4402
    %v4404 = vpop.f32.mrf.mxu0
    %v4405 = vadd.f32 0.0, %v4404
    %v4406 = vpop.f32.mrf.mxu0
    %4407 = vmatprep.mubr.f32.mxu0 0.0
    %v4408 = vand.u32 %v110, 4294901760
    %v4409 = vsub.f32 %v110, %v4408
    %v4410 = vand.u32 %v4409, 4294901760
    %v4411 = vsub.f32 %v4409, %v4410
    %v4412 = vand.u32 %v4411, 4294901760
    %4413 = vmatmul.mubr.f32.gmra.mxu0 %v4412
    %v4414 = vpop.f32.mrf.mxu0
    %v4415 = vadd.f32 0.0, %v4414
    %v4416 = vpop.f32.mrf.mxu0
    %4417 = vmatprep.mubr.f32.mxu0 0.0
    %v4418 = vand.u32 %v111, 4294901760
    %v4419 = vsub.f32 %v111, %v4418
    %v4420 = vand.u32 %v4419, 4294901760
    %v4421 = vsub.f32 %v4419, %v4420
    %v4422 = vand.u32 %v4421, 4294901760
    %4423 = vmatmul.mubr.f32.gmra.mxu0 %v4422
    %v4424 = vpop.f32.mrf.mxu0
    %v4425 = vadd.f32 0.0, %v4424
    %v4426 = vpop.f32.mrf.mxu0
    %4427 = vmatprep.mubr.f32.mxu0 0.0
    %v4428 = vand.u32 %v112, 4294901760
    %v4429 = vsub.f32 %v112, %v4428
    %v4430 = vand.u32 %v4429, 4294901760
    %v4431 = vsub.f32 %v4429, %v4430
    %v4432 = vand.u32 %v4431, 4294901760
    %4433 = vmatmul.mubr.f32.gmra.mxu0 %v4432
    %v4434 = vpop.f32.mrf.mxu0
    %v4435 = vadd.f32 0.0, %v4434
    %v4436 = vpop.f32.mrf.mxu0
    %4437 = vmatprep.mubr.f32.mxu0 0.0
    %v4438 = vand.u32 %v113, 4294901760
    %v4439 = vsub.f32 %v113, %v4438
    %v4440 = vand.u32 %v4439, 4294901760
    %v4441 = vsub.f32 %v4439, %v4440
    %v4442 = vand.u32 %v4441, 4294901760
    %4443 = vmatmul.mubr.f32.gmra.mxu0 %v4442
    %v4444 = vpop.f32.mrf.mxu0
    %v4445 = vadd.f32 0.0, %v4444
    %v4446 = vpop.f32.mrf.mxu0
    %4447 = vmatprep.mubr.f32.mxu0 0.0
    %v4448 = vand.u32 %v114, 4294901760
    %v4449 = vsub.f32 %v114, %v4448
    %v4450 = vand.u32 %v4449, 4294901760
    %v4451 = vsub.f32 %v4449, %v4450
    %v4452 = vand.u32 %v4451, 4294901760
    %4453 = vmatmul.mubr.f32.gmra.mxu0 %v4452
    %v4454 = vpop.f32.mrf.mxu0
    %v4455 = vadd.f32 0.0, %v4454
    %v4456 = vpop.f32.mrf.mxu0
    %4457 = vmatprep.mubr.f32.mxu0 0.0
    %v4458 = vand.u32 %v115, 4294901760
    %v4459 = vsub.f32 %v115, %v4458
    %v4460 = vand.u32 %v4459, 4294901760
    %v4461 = vsub.f32 %v4459, %v4460
    %v4462 = vand.u32 %v4461, 4294901760
    %4463 = vmatmul.mubr.f32.gmra.mxu0 %v4462
    %v4464 = vpop.f32.mrf.mxu0
    %v4465 = vadd.f32 0.0, %v4464
    %v4466 = vpop.f32.mrf.mxu0
    %4467 = vmatprep.mubr.f32.mxu0 0.0
    %v4468 = vand.u32 %v116, 4294901760
    %v4469 = vsub.f32 %v116, %v4468
    %v4470 = vand.u32 %v4469, 4294901760
    %v4471 = vsub.f32 %v4469, %v4470
    %v4472 = vand.u32 %v4471, 4294901760
    %4473 = vmatmul.mubr.f32.gmra.mxu0 %v4472
    %v4474 = vpop.f32.mrf.mxu0
    %v4475 = vadd.f32 0.0, %v4474
    %v4476 = vpop.f32.mrf.mxu0
    %4477 = vmatprep.mubr.f32.mxu0 0.0
    %v4478 = vand.u32 %v117, 4294901760
    %v4479 = vsub.f32 %v117, %v4478
    %v4480 = vand.u32 %v4479, 4294901760
    %v4481 = vsub.f32 %v4479, %v4480
    %v4482 = vand.u32 %v4481, 4294901760
    %4483 = vmatmul.mubr.f32.gmra.mxu0 %v4482
    %v4484 = vpop.f32.mrf.mxu0
    %v4485 = vadd.f32 0.0, %v4484
    %v4486 = vpop.f32.mrf.mxu0
    %4487 = vmatprep.mubr.f32.mxu0 0.0
    %v4488 = vand.u32 %v118, 4294901760
    %v4489 = vsub.f32 %v118, %v4488
    %v4490 = vand.u32 %v4489, 4294901760
    %v4491 = vsub.f32 %v4489, %v4490
    %v4492 = vand.u32 %v4491, 4294901760
    %4493 = vmatmul.mubr.f32.gmra.mxu0 %v4492
    %v4494 = vpop.f32.mrf.mxu0
    %v4495 = vadd.f32 0.0, %v4494
    %v4496 = vpop.f32.mrf.mxu0
    %4497 = vmatprep.mubr.f32.mxu0 0.0
    %v4498 = vand.u32 %v119, 4294901760
    %v4499 = vsub.f32 %v119, %v4498
    %v4500 = vand.u32 %v4499, 4294901760
    %v4501 = vsub.f32 %v4499, %v4500
    %v4502 = vand.u32 %v4501, 4294901760
    %4503 = vmatmul.mubr.f32.gmra.mxu0 %v4502
    %v4504 = vpop.f32.mrf.mxu0
    %v4505 = vadd.f32 0.0, %v4504
    %v4506 = vpop.f32.mrf.mxu0
    %4507 = vdwg.mxu0
    %4508 = vmatprep.subr.mxu0 0.0
    %v4509 = vand.u32 %v3880, 4294901760
    %v4510 = vsub.f32 %v3880, %v4509
    %v4511 = vand.u32 %v4510, 4294901760
    %v4512 = vsub.f32 %v4510, %v4511
    %v4513 = vand.u32 %v4512, 4294901760
    %4514 = vmatpush1.msra.mxu0 %v4513
    %4515 = vmatprep.subr.mxu0 0.0
    %v4516 = vand.u32 %v3874, 4294901760
    %v4517 = vsub.f32 %v3874, %v4516
    %v4518 = vand.u32 %v4517, 4294901760
    %v4519 = vsub.f32 %v4517, %v4518
    %v4520 = vand.u32 %v4519, 4294901760
    %4521 = vmatpush1.msra.mxu0 %v4520
    %4522 = vmatprep.subr.mxu0 0.0
    %v4523 = vand.u32 %v3868, 4294901760
    %v4524 = vsub.f32 %v3868, %v4523
    %v4525 = vand.u32 %v4524, 4294901760
    %v4526 = vsub.f32 %v4524, %v4525
    %v4527 = vand.u32 %v4526, 4294901760
    %4528 = vmatpush1.msra.mxu0 %v4527
    %4529 = vmatprep.subr.mxu0 0.0
    %v4530 = vand.u32 %v3862, 4294901760
    %v4531 = vsub.f32 %v3862, %v4530
    %v4532 = vand.u32 %v4531, 4294901760
    %v4533 = vsub.f32 %v4531, %v4532
    %v4534 = vand.u32 %v4533, 4294901760
    %4535 = vmatpush1.msra.mxu0 %v4534
    %4536 = vmatprep.subr.mxu0 0.0
    %v4537 = vand.u32 %v3856, 4294901760
    %v4538 = vsub.f32 %v3856, %v4537
    %v4539 = vand.u32 %v4538, 4294901760
    %v4540 = vsub.f32 %v4538, %v4539
    %v4541 = vand.u32 %v4540, 4294901760
    %4542 = vmatpush1.msra.mxu0 %v4541
    %4543 = vmatprep.subr.mxu0 0.0
    %v4544 = vand.u32 %v3850, 4294901760
    %v4545 = vsub.f32 %v3850, %v4544
    %v4546 = vand.u32 %v4545, 4294901760
    %v4547 = vsub.f32 %v4545, %v4546
    %v4548 = vand.u32 %v4547, 4294901760
    %4549 = vmatpush1.msra.mxu0 %v4548
    %4550 = vmatprep.subr.mxu0 0.0
    %v4551 = vand.u32 %v3844, 4294901760
    %v4552 = vsub.f32 %v3844, %v4551
    %v4553 = vand.u32 %v4552, 4294901760
    %v4554 = vsub.f32 %v4552, %v4553
    %v4555 = vand.u32 %v4554, 4294901760
    %4556 = vmatpush1.msra.mxu0 %v4555
    %4557 = vmatprep.subr.mxu0 0.0
    %v4558 = vand.u32 %v3838, 4294901760
    %v4559 = vsub.f32 %v3838, %v4558
    %v4560 = vand.u32 %v4559, 4294901760
    %v4561 = vsub.f32 %v4559, %v4560
    %v4562 = vand.u32 %v4561, 4294901760
    %4563 = vmatpush1.msra.mxu0 %v4562
    %4564 = vmatprep.subr.mxu0 0.0
    %v4565 = vand.u32 %v3832, 4294901760
    %v4566 = vsub.f32 %v3832, %v4565
    %v4567 = vand.u32 %v4566, 4294901760
    %v4568 = vsub.f32 %v4566, %v4567
    %v4569 = vand.u32 %v4568, 4294901760
    %4570 = vmatpush1.msra.mxu0 %v4569
    %4571 = vmatprep.subr.mxu0 0.0
    %v4572 = vand.u32 %v3826, 4294901760
    %v4573 = vsub.f32 %v3826, %v4572
    %v4574 = vand.u32 %v4573, 4294901760
    %v4575 = vsub.f32 %v4573, %v4574
    %v4576 = vand.u32 %v4575, 4294901760
    %4577 = vmatpush1.msra.mxu0 %v4576
    %4578 = vmatprep.subr.mxu0 0.0
    %v4579 = vand.u32 %v3820, 4294901760
    %v4580 = vsub.f32 %v3820, %v4579
    %v4581 = vand.u32 %v4580, 4294901760
    %v4582 = vsub.f32 %v4580, %v4581
    %v4583 = vand.u32 %v4582, 4294901760
    %4584 = vmatpush1.msra.mxu0 %v4583
    %4585 = vmatprep.subr.mxu0 0.0
    %v4586 = vand.u32 %v3814, 4294901760
    %v4587 = vsub.f32 %v3814, %v4586
    %v4588 = vand.u32 %v4587, 4294901760
    %v4589 = vsub.f32 %v4587, %v4588
    %v4590 = vand.u32 %v4589, 4294901760
    %4591 = vmatpush1.msra.mxu0 %v4590
    %4592 = vmatprep.subr.mxu0 0.0
    %v4593 = vand.u32 %v3808, 4294901760
    %v4594 = vsub.f32 %v3808, %v4593
    %v4595 = vand.u32 %v4594, 4294901760
    %v4596 = vsub.f32 %v4594, %v4595
    %v4597 = vand.u32 %v4596, 4294901760
    %4598 = vmatpush1.msra.mxu0 %v4597
    %4599 = vmatprep.subr.mxu0 0.0
    %v4600 = vand.u32 %v3802, 4294901760
    %v4601 = vsub.f32 %v3802, %v4600
    %v4602 = vand.u32 %v4601, 4294901760
    %v4603 = vsub.f32 %v4601, %v4602
    %v4604 = vand.u32 %v4603, 4294901760
    %4605 = vmatpush1.msra.mxu0 %v4604
    %4606 = vmatprep.subr.mxu0 0.0
    %v4607 = vand.u32 %v3796, 4294901760
    %v4608 = vsub.f32 %v3796, %v4607
    %v4609 = vand.u32 %v4608, 4294901760
    %v4610 = vsub.f32 %v4608, %v4609
    %v4611 = vand.u32 %v4610, 4294901760
    %4612 = vmatpush1.msra.mxu0 %v4611
    %4613 = vmatprep.subr.mxu0 0.0
    %v4614 = vand.u32 %v3790, 4294901760
    %v4615 = vsub.f32 %v3790, %v4614
    %v4616 = vand.u32 %v4615, 4294901760
    %v4617 = vsub.f32 %v4615, %v4616
    %v4618 = vand.u32 %v4617, 4294901760
    %4619 = vmatpush1.msra.mxu0 %v4618
    %4620 = vmatprep.subr.mxu0 0.0
    %4621 = vmatpush2.msra.mxu0 0.0
    %4622 = vmatprep.subr.mxu0 0.0
    %4623 = vmatpush2.msra.mxu0 0.0
    %4624 = vmatprep.subr.mxu0 0.0
    %4625 = vmatpush2.msra.mxu0 0.0
    %4626 = vmatprep.subr.mxu0 0.0
    %4627 = vmatpush2.msra.mxu0 0.0
    %4628 = vmatprep.subr.mxu0 0.0
    %4629 = vmatpush2.msra.mxu0 0.0
    %4630 = vmatprep.subr.mxu0 0.0
    %4631 = vmatpush2.msra.mxu0 0.0
    %4632 = vmatprep.subr.mxu0 0.0
    %4633 = vmatpush2.msra.mxu0 0.0
    %4634 = vmatprep.subr.mxu0 0.0
    %4635 = vmatpush2.msra.mxu0 0.0
    %4636 = vmatprep.subr.mxu0 0.0
    %4637 = vmatpush2.msra.mxu0 0.0
    %4638 = vmatprep.subr.mxu0 0.0
    %4639 = vmatpush2.msra.mxu0 0.0
    %4640 = vmatprep.subr.mxu0 0.0
    %4641 = vmatpush2.msra.mxu0 0.0
    %4642 = vmatprep.subr.mxu0 0.0
    %4643 = vmatpush2.msra.mxu0 0.0
    %4644 = vmatprep.subr.mxu0 0.0
    %4645 = vmatpush2.msra.mxu0 0.0
    %4646 = vmatprep.subr.mxu0 0.0
    %4647 = vmatpush2.msra.mxu0 0.0
    %4648 = vmatprep.subr.mxu0 0.0
    %4649 = vmatpush2.msra.mxu0 0.0
    %4650 = vmatprep.subr.mxu0 0.0
    %4651 = vmatpush2.msra.mxu0 0.0
    %4652 = vmatprep.mubr.f32.mxu0 0.0
    %v4653 = vand.u32 %v104, 4294901760
    %4654 = vmatmul.mubr.f32.gmra.mxu0 %v4653
    %v4655 = vpop.f32.mrf.mxu0
    %v4656 = vadd.f32 %v4355, %v4655
    %v4657 = vpop.f32.mrf.mxu0
    %4658 = vmatprep.mubr.f32.mxu0 0.0
    %v4659 = vand.u32 %v105, 4294901760
    %4660 = vmatmul.mubr.f32.gmra.mxu0 %v4659
    %v4661 = vpop.f32.mrf.mxu0
    %v4662 = vadd.f32 %v4365, %v4661
    %v4663 = vpop.f32.mrf.mxu0
    %4664 = vmatprep.mubr.f32.mxu0 0.0
    %v4665 = vand.u32 %v106, 4294901760
    %4666 = vmatmul.mubr.f32.gmra.mxu0 %v4665
    %v4667 = vpop.f32.mrf.mxu0
    %v4668 = vadd.f32 %v4375, %v4667
    %v4669 = vpop.f32.mrf.mxu0
    %4670 = vmatprep.mubr.f32.mxu0 0.0
    %v4671 = vand.u32 %v107, 4294901760
    %4672 = vmatmul.mubr.f32.gmra.mxu0 %v4671
    %v4673 = vpop.f32.mrf.mxu0
    %v4674 = vadd.f32 %v4385, %v4673
    %v4675 = vpop.f32.mrf.mxu0
    %4676 = vmatprep.mubr.f32.mxu0 0.0
    %v4677 = vand.u32 %v108, 4294901760
    %4678 = vmatmul.mubr.f32.gmra.mxu0 %v4677
    %v4679 = vpop.f32.mrf.mxu0
    %v4680 = vadd.f32 %v4395, %v4679
    %v4681 = vpop.f32.mrf.mxu0
    %4682 = vmatprep.mubr.f32.mxu0 0.0
    %v4683 = vand.u32 %v109, 4294901760
    %4684 = vmatmul.mubr.f32.gmra.mxu0 %v4683
    %v4685 = vpop.f32.mrf.mxu0
    %v4686 = vadd.f32 %v4405, %v4685
    %v4687 = vpop.f32.mrf.mxu0
    %4688 = vmatprep.mubr.f32.mxu0 0.0
    %v4689 = vand.u32 %v110, 4294901760
    %4690 = vmatmul.mubr.f32.gmra.mxu0 %v4689
    %v4691 = vpop.f32.mrf.mxu0
    %v4692 = vadd.f32 %v4415, %v4691
    %v4693 = vpop.f32.mrf.mxu0
    %4694 = vmatprep.mubr.f32.mxu0 0.0
    %v4695 = vand.u32 %v111, 4294901760
    %4696 = vmatmul.mubr.f32.gmra.mxu0 %v4695
    %v4697 = vpop.f32.mrf.mxu0
    %v4698 = vadd.f32 %v4425, %v4697
    %v4699 = vpop.f32.mrf.mxu0
    %4700 = vmatprep.mubr.f32.mxu0 0.0
    %v4701 = vand.u32 %v112, 4294901760
    %4702 = vmatmul.mubr.f32.gmra.mxu0 %v4701
    %v4703 = vpop.f32.mrf.mxu0
    %v4704 = vadd.f32 %v4435, %v4703
    %v4705 = vpop.f32.mrf.mxu0
    %4706 = vmatprep.mubr.f32.mxu0 0.0
    %v4707 = vand.u32 %v113, 4294901760
    %4708 = vmatmul.mubr.f32.gmra.mxu0 %v4707
    %v4709 = vpop.f32.mrf.mxu0
    %v4710 = vadd.f32 %v4445, %v4709
    %v4711 = vpop.f32.mrf.mxu0
    %4712 = vmatprep.mubr.f32.mxu0 0.0
    %v4713 = vand.u32 %v114, 4294901760
    %4714 = vmatmul.mubr.f32.gmra.mxu0 %v4713
    %v4715 = vpop.f32.mrf.mxu0
    %v4716 = vadd.f32 %v4455, %v4715
    %v4717 = vpop.f32.mrf.mxu0
    %4718 = vmatprep.mubr.f32.mxu0 0.0
    %v4719 = vand.u32 %v115, 4294901760
    %4720 = vmatmul.mubr.f32.gmra.mxu0 %v4719
    %v4721 = vpop.f32.mrf.mxu0
    %v4722 = vadd.f32 %v4465, %v4721
    %v4723 = vpop.f32.mrf.mxu0
    %4724 = vmatprep.mubr.f32.mxu0 0.0
    %v4725 = vand.u32 %v116, 4294901760
    %4726 = vmatmul.mubr.f32.gmra.mxu0 %v4725
    %v4727 = vpop.f32.mrf.mxu0
    %v4728 = vadd.f32 %v4475, %v4727
    %v4729 = vpop.f32.mrf.mxu0
    %4730 = vmatprep.mubr.f32.mxu0 0.0
    %v4731 = vand.u32 %v117, 4294901760
    %4732 = vmatmul.mubr.f32.gmra.mxu0 %v4731
    %v4733 = vpop.f32.mrf.mxu0
    %v4734 = vadd.f32 %v4485, %v4733
    %v4735 = vpop.f32.mrf.mxu0
    %4736 = vmatprep.mubr.f32.mxu0 0.0
    %v4737 = vand.u32 %v118, 4294901760
    %4738 = vmatmul.mubr.f32.gmra.mxu0 %v4737
    %v4739 = vpop.f32.mrf.mxu0
    %v4740 = vadd.f32 %v4495, %v4739
    %v4741 = vpop.f32.mrf.mxu0
    %4742 = vmatprep.mubr.f32.mxu0 0.0
    %v4743 = vand.u32 %v119, 4294901760
    %4744 = vmatmul.mubr.f32.gmra.mxu0 %v4743
    %v4745 = vpop.f32.mrf.mxu0
    %v4746 = vadd.f32 %v4505, %v4745
    %v4747 = vpop.f32.mrf.mxu0
    %4748 = vdwg.mxu0
    %4749 = vmatprep.subr.mxu0 0.0
    %v4750 = vand.u32 %v3880, 4294901760
    %v4751 = vsub.f32 %v3880, %v4750
    %4752 = vmatpush1.msra.mxu0 %v4751
    %4753 = vmatprep.subr.mxu0 0.0
    %v4754 = vand.u32 %v3874, 4294901760
    %v4755 = vsub.f32 %v3874, %v4754
    %4756 = vmatpush1.msra.mxu0 %v4755
    %4757 = vmatprep.subr.mxu0 0.0
    %v4758 = vand.u32 %v3868, 4294901760
    %v4759 = vsub.f32 %v3868, %v4758
    %4760 = vmatpush1.msra.mxu0 %v4759
    %4761 = vmatprep.subr.mxu0 0.0
    %v4762 = vand.u32 %v3862, 4294901760
    %v4763 = vsub.f32 %v3862, %v4762
    %4764 = vmatpush1.msra.mxu0 %v4763
    %4765 = vmatprep.subr.mxu0 0.0
    %v4766 = vand.u32 %v3856, 4294901760
    %v4767 = vsub.f32 %v3856, %v4766
    %4768 = vmatpush1.msra.mxu0 %v4767
    %4769 = vmatprep.subr.mxu0 0.0
    %v4770 = vand.u32 %v3850, 4294901760
    %v4771 = vsub.f32 %v3850, %v4770
    %4772 = vmatpush1.msra.mxu0 %v4771
    %4773 = vmatprep.subr.mxu0 0.0
    %v4774 = vand.u32 %v3844, 4294901760
    %v4775 = vsub.f32 %v3844, %v4774
    %4776 = vmatpush1.msra.mxu0 %v4775
    %4777 = vmatprep.subr.mxu0 0.0
    %v4778 = vand.u32 %v3838, 4294901760
    %v4779 = vsub.f32 %v3838, %v4778
    %4780 = vmatpush1.msra.mxu0 %v4779
    %4781 = vmatprep.subr.mxu0 0.0
    %v4782 = vand.u32 %v3832, 4294901760
    %v4783 = vsub.f32 %v3832, %v4782
    %4784 = vmatpush1.msra.mxu0 %v4783
    %4785 = vmatprep.subr.mxu0 0.0
    %v4786 = vand.u32 %v3826, 4294901760
    %v4787 = vsub.f32 %v3826, %v4786
    %4788 = vmatpush1.msra.mxu0 %v4787
    %4789 = vmatprep.subr.mxu0 0.0
    %v4790 = vand.u32 %v3820, 4294901760
    %v4791 = vsub.f32 %v3820, %v4790
    %4792 = vmatpush1.msra.mxu0 %v4791
    %4793 = vmatprep.subr.mxu0 0.0
    %v4794 = vand.u32 %v3814, 4294901760
    %v4795 = vsub.f32 %v3814, %v4794
    %4796 = vmatpush1.msra.mxu0 %v4795
    %4797 = vmatprep.subr.mxu0 0.0
    %v4798 = vand.u32 %v3808, 4294901760
    %v4799 = vsub.f32 %v3808, %v4798
    %4800 = vmatpush1.msra.mxu0 %v4799
    %4801 = vmatprep.subr.mxu0 0.0
    %v4802 = vand.u32 %v3802, 4294901760
    %v4803 = vsub.f32 %v3802, %v4802
    %4804 = vmatpush1.msra.mxu0 %v4803
    %4805 = vmatprep.subr.mxu0 0.0
    %v4806 = vand.u32 %v3796, 4294901760
    %v4807 = vsub.f32 %v3796, %v4806
    %4808 = vmatpush1.msra.mxu0 %v4807
    %4809 = vmatprep.subr.mxu0 0.0
    %v4810 = vand.u32 %v3790, 4294901760
    %v4811 = vsub.f32 %v3790, %v4810
    %4812 = vmatpush1.msra.mxu0 %v4811
    %4813 = vmatprep.subr.mxu0 0.0
    %4814 = vmatpush2.msra.mxu0 0.0
    %4815 = vmatprep.subr.mxu0 0.0
    %4816 = vmatpush2.msra.mxu0 0.0
    %4817 = vmatprep.subr.mxu0 0.0
    %4818 = vmatpush2.msra.mxu0 0.0
    %4819 = vmatprep.subr.mxu0 0.0
    %4820 = vmatpush2.msra.mxu0 0.0
    %4821 = vmatprep.subr.mxu0 0.0
    %4822 = vmatpush2.msra.mxu0 0.0
    %4823 = vmatprep.subr.mxu0 0.0
    %4824 = vmatpush2.msra.mxu0 0.0
    %4825 = vmatprep.subr.mxu0 0.0
    %4826 = vmatpush2.msra.mxu0 0.0
    %4827 = vmatprep.subr.mxu0 0.0
    %4828 = vmatpush2.msra.mxu0 0.0
    %4829 = vmatprep.subr.mxu0 0.0
    %4830 = vmatpush2.msra.mxu0 0.0
    %4831 = vmatprep.subr.mxu0 0.0
    %4832 = vmatpush2.msra.mxu0 0.0
    %4833 = vmatprep.subr.mxu0 0.0
    %4834 = vmatpush2.msra.mxu0 0.0
    %4835 = vmatprep.subr.mxu0 0.0
    %4836 = vmatpush2.msra.mxu0 0.0
    %4837 = vmatprep.subr.mxu0 0.0
    %4838 = vmatpush2.msra.mxu0 0.0
    %4839 = vmatprep.subr.mxu0 0.0
    %4840 = vmatpush2.msra.mxu0 0.0
    %4841 = vmatprep.subr.mxu0 0.0
    %4842 = vmatpush2.msra.mxu0 0.0
    %4843 = vmatprep.subr.mxu0 0.0
    %4844 = vmatpush2.msra.mxu0 0.0
    %4845 = vmatprep.mubr.f32.mxu0 0.0
    %v4846 = vand.u32 %v104, 4294901760
    %v4847 = vsub.f32 %v104, %v4846
    %4848 = vmatmul.mubr.f32.gmra.mxu0 %v4847
    %v4849 = vpop.f32.mrf.mxu0
    %v4850 = vadd.f32 %v4656, %v4849
    %v4851 = vpop.f32.mrf.mxu0
    %4852 = vmatprep.mubr.f32.mxu0 0.0
    %v4853 = vand.u32 %v105, 4294901760
    %v4854 = vsub.f32 %v105, %v4853
    %4855 = vmatmul.mubr.f32.gmra.mxu0 %v4854
    %v4856 = vpop.f32.mrf.mxu0
    %v4857 = vadd.f32 %v4662, %v4856
    %v4858 = vpop.f32.mrf.mxu0
    %4859 = vmatprep.mubr.f32.mxu0 0.0
    %v4860 = vand.u32 %v106, 4294901760
    %v4861 = vsub.f32 %v106, %v4860
    %4862 = vmatmul.mubr.f32.gmra.mxu0 %v4861
    %v4863 = vpop.f32.mrf.mxu0
    %v4864 = vadd.f32 %v4668, %v4863
    %v4865 = vpop.f32.mrf.mxu0
    %4866 = vmatprep.mubr.f32.mxu0 0.0
    %v4867 = vand.u32 %v107, 4294901760
    %v4868 = vsub.f32 %v107, %v4867
    %4869 = vmatmul.mubr.f32.gmra.mxu0 %v4868
    %v4870 = vpop.f32.mrf.mxu0
    %v4871 = vadd.f32 %v4674, %v4870
    %v4872 = vpop.f32.mrf.mxu0
    %4873 = vmatprep.mubr.f32.mxu0 0.0
    %v4874 = vand.u32 %v108, 4294901760
    %v4875 = vsub.f32 %v108, %v4874
    %4876 = vmatmul.mubr.f32.gmra.mxu0 %v4875
    %v4877 = vpop.f32.mrf.mxu0
    %v4878 = vadd.f32 %v4680, %v4877
    %v4879 = vpop.f32.mrf.mxu0
    %4880 = vmatprep.mubr.f32.mxu0 0.0
    %v4881 = vand.u32 %v109, 4294901760
    %v4882 = vsub.f32 %v109, %v4881
    %4883 = vmatmul.mubr.f32.gmra.mxu0 %v4882
    %v4884 = vpop.f32.mrf.mxu0
    %v4885 = vadd.f32 %v4686, %v4884
    %v4886 = vpop.f32.mrf.mxu0
    %4887 = vmatprep.mubr.f32.mxu0 0.0
    %v4888 = vand.u32 %v110, 4294901760
    %v4889 = vsub.f32 %v110, %v4888
    %4890 = vmatmul.mubr.f32.gmra.mxu0 %v4889
    %v4891 = vpop.f32.mrf.mxu0
    %v4892 = vadd.f32 %v4692, %v4891
    %v4893 = vpop.f32.mrf.mxu0
    %4894 = vmatprep.mubr.f32.mxu0 0.0
    %v4895 = vand.u32 %v111, 4294901760
    %v4896 = vsub.f32 %v111, %v4895
    %4897 = vmatmul.mubr.f32.gmra.mxu0 %v4896
    %v4898 = vpop.f32.mrf.mxu0
    %v4899 = vadd.f32 %v4698, %v4898
    %v4900 = vpop.f32.mrf.mxu0
    %4901 = vmatprep.mubr.f32.mxu0 0.0
    %v4902 = vand.u32 %v112, 4294901760
    %v4903 = vsub.f32 %v112, %v4902
    %4904 = vmatmul.mubr.f32.gmra.mxu0 %v4903
    %v4905 = vpop.f32.mrf.mxu0
    %v4906 = vadd.f32 %v4704, %v4905
    %v4907 = vpop.f32.mrf.mxu0
    %4908 = vmatprep.mubr.f32.mxu0 0.0
    %v4909 = vand.u32 %v113, 4294901760
    %v4910 = vsub.f32 %v113, %v4909
    %4911 = vmatmul.mubr.f32.gmra.mxu0 %v4910
    %v4912 = vpop.f32.mrf.mxu0
    %v4913 = vadd.f32 %v4710, %v4912
    %v4914 = vpop.f32.mrf.mxu0
    %4915 = vmatprep.mubr.f32.mxu0 0.0
    %v4916 = vand.u32 %v114, 4294901760
    %v4917 = vsub.f32 %v114, %v4916
    %4918 = vmatmul.mubr.f32.gmra.mxu0 %v4917
    %v4919 = vpop.f32.mrf.mxu0
    %v4920 = vadd.f32 %v4716, %v4919
    %v4921 = vpop.f32.mrf.mxu0
    %4922 = vmatprep.mubr.f32.mxu0 0.0
    %v4923 = vand.u32 %v115, 4294901760
    %v4924 = vsub.f32 %v115, %v4923
    %4925 = vmatmul.mubr.f32.gmra.mxu0 %v4924
    %v4926 = vpop.f32.mrf.mxu0
    %v4927 = vadd.f32 %v4722, %v4926
    %v4928 = vpop.f32.mrf.mxu0
    %4929 = vmatprep.mubr.f32.mxu0 0.0
    %v4930 = vand.u32 %v116, 4294901760
    %v4931 = vsub.f32 %v116, %v4930
    %4932 = vmatmul.mubr.f32.gmra.mxu0 %v4931
    %v4933 = vpop.f32.mrf.mxu0
    %v4934 = vadd.f32 %v4728, %v4933
    %v4935 = vpop.f32.mrf.mxu0
    %4936 = vmatprep.mubr.f32.mxu0 0.0
    %v4937 = vand.u32 %v117, 4294901760
    %v4938 = vsub.f32 %v117, %v4937
    %4939 = vmatmul.mubr.f32.gmra.mxu0 %v4938
    %v4940 = vpop.f32.mrf.mxu0
    %v4941 = vadd.f32 %v4734, %v4940
    %v4942 = vpop.f32.mrf.mxu0
    %4943 = vmatprep.mubr.f32.mxu0 0.0
    %v4944 = vand.u32 %v118, 4294901760
    %v4945 = vsub.f32 %v118, %v4944
    %4946 = vmatmul.mubr.f32.gmra.mxu0 %v4945
    %v4947 = vpop.f32.mrf.mxu0
    %v4948 = vadd.f32 %v4740, %v4947
    %v4949 = vpop.f32.mrf.mxu0
    %4950 = vmatprep.mubr.f32.mxu0 0.0
    %v4951 = vand.u32 %v119, 4294901760
    %v4952 = vsub.f32 %v119, %v4951
    %4953 = vmatmul.mubr.f32.gmra.mxu0 %v4952
    %v4954 = vpop.f32.mrf.mxu0
    %v4955 = vadd.f32 %v4746, %v4954
    %v4956 = vpop.f32.mrf.mxu0
    %4957 = vdwg.mxu0
    %4958 = vmatprep.subr.mxu0 0.0
    %v4959 = vand.u32 %v3880, 4294901760
    %4960 = vmatpush1.msra.mxu0 %v4959
    %4961 = vmatprep.subr.mxu0 0.0
    %v4962 = vand.u32 %v3874, 4294901760
    %4963 = vmatpush1.msra.mxu0 %v4962
    %4964 = vmatprep.subr.mxu0 0.0
    %v4965 = vand.u32 %v3868, 4294901760
    %4966 = vmatpush1.msra.mxu0 %v4965
    %4967 = vmatprep.subr.mxu0 0.0
    %v4968 = vand.u32 %v3862, 4294901760
    %4969 = vmatpush1.msra.mxu0 %v4968
    %4970 = vmatprep.subr.mxu0 0.0
    %v4971 = vand.u32 %v3856, 4294901760
    %4972 = vmatpush1.msra.mxu0 %v4971
    %4973 = vmatprep.subr.mxu0 0.0
    %v4974 = vand.u32 %v3850, 4294901760
    %4975 = vmatpush1.msra.mxu0 %v4974
    %4976 = vmatprep.subr.mxu0 0.0
    %v4977 = vand.u32 %v3844, 4294901760
    %4978 = vmatpush1.msra.mxu0 %v4977
    %4979 = vmatprep.subr.mxu0 0.0
    %v4980 = vand.u32 %v3838, 4294901760
    %4981 = vmatpush1.msra.mxu0 %v4980
    %4982 = vmatprep.subr.mxu0 0.0
    %v4983 = vand.u32 %v3832, 4294901760
    %4984 = vmatpush1.msra.mxu0 %v4983
    %4985 = vmatprep.subr.mxu0 0.0
    %v4986 = vand.u32 %v3826, 4294901760
    %4987 = vmatpush1.msra.mxu0 %v4986
    %4988 = vmatprep.subr.mxu0 0.0
    %v4989 = vand.u32 %v3820, 4294901760
    %4990 = vmatpush1.msra.mxu0 %v4989
    %4991 = vmatprep.subr.mxu0 0.0
    %v4992 = vand.u32 %v3814, 4294901760
    %4993 = vmatpush1.msra.mxu0 %v4992
    %4994 = vmatprep.subr.mxu0 0.0
    %v4995 = vand.u32 %v3808, 4294901760
    %4996 = vmatpush1.msra.mxu0 %v4995
    %4997 = vmatprep.subr.mxu0 0.0
    %v4998 = vand.u32 %v3802, 4294901760
    %4999 = vmatpush1.msra.mxu0 %v4998
    %5000 = vmatprep.subr.mxu0 0.0
    %v5001 = vand.u32 %v3796, 4294901760
    %5002 = vmatpush1.msra.mxu0 %v5001
    %5003 = vmatprep.subr.mxu0 0.0
    %v5004 = vand.u32 %v3790, 4294901760
    %5005 = vmatpush1.msra.mxu0 %v5004
    %5006 = vmatprep.subr.mxu0 0.0
    %5007 = vmatpush2.msra.mxu0 0.0
    %5008 = vmatprep.subr.mxu0 0.0
    %5009 = vmatpush2.msra.mxu0 0.0
    %5010 = vmatprep.subr.mxu0 0.0
    %5011 = vmatpush2.msra.mxu0 0.0
    %5012 = vmatprep.subr.mxu0 0.0
    %5013 = vmatpush2.msra.mxu0 0.0
    %5014 = vmatprep.subr.mxu0 0.0
    %5015 = vmatpush2.msra.mxu0 0.0
    %5016 = vmatprep.subr.mxu0 0.0
    %5017 = vmatpush2.msra.mxu0 0.0
    %5018 = vmatprep.subr.mxu0 0.0
    %5019 = vmatpush2.msra.mxu0 0.0
    %5020 = vmatprep.subr.mxu0 0.0
    %5021 = vmatpush2.msra.mxu0 0.0
    %5022 = vmatprep.subr.mxu0 0.0
    %5023 = vmatpush2.msra.mxu0 0.0
    %5024 = vmatprep.subr.mxu0 0.0
    %5025 = vmatpush2.msra.mxu0 0.0
    %5026 = vmatprep.subr.mxu0 0.0
    %5027 = vmatpush2.msra.mxu0 0.0
    %5028 = vmatprep.subr.mxu0 0.0
    %5029 = vmatpush2.msra.mxu0 0.0
    %5030 = vmatprep.subr.mxu0 0.0
    %5031 = vmatpush2.msra.mxu0 0.0
    %5032 = vmatprep.subr.mxu0 0.0
    %5033 = vmatpush2.msra.mxu0 0.0
    %5034 = vmatprep.subr.mxu0 0.0
    %5035 = vmatpush2.msra.mxu0 0.0
    %5036 = vmatprep.subr.mxu0 0.0
    %5037 = vmatpush2.msra.mxu0 0.0
    %5038 = vmatprep.mubr.f32.mxu0 0.0
    %v5039 = vand.u32 %v104, 4294901760
    %v5040 = vsub.f32 %v104, %v5039
    %v5041 = vand.u32 %v5040, 4294901760
    %5042 = vmatmul.mubr.f32.gmra.mxu0 %v5041
    %v5043 = vpop.f32.mrf.mxu0
    %v5044 = vadd.f32 %v4850, %v5043
    %v5045 = vpop.f32.mrf.mxu0
    %5046 = vmatprep.mubr.f32.mxu0 0.0
    %v5047 = vand.u32 %v105, 4294901760
    %v5048 = vsub.f32 %v105, %v5047
    %v5049 = vand.u32 %v5048, 4294901760
    %5050 = vmatmul.mubr.f32.gmra.mxu0 %v5049
    %v5051 = vpop.f32.mrf.mxu0
    %v5052 = vadd.f32 %v4857, %v5051
    %v5053 = vpop.f32.mrf.mxu0
    %5054 = vmatprep.mubr.f32.mxu0 0.0
    %v5055 = vand.u32 %v106, 4294901760
    %v5056 = vsub.f32 %v106, %v5055
    %v5057 = vand.u32 %v5056, 4294901760
    %5058 = vmatmul.mubr.f32.gmra.mxu0 %v5057
    %v5059 = vpop.f32.mrf.mxu0
    %v5060 = vadd.f32 %v4864, %v5059
    %v5061 = vpop.f32.mrf.mxu0
    %5062 = vmatprep.mubr.f32.mxu0 0.0
    %v5063 = vand.u32 %v107, 4294901760
    %v5064 = vsub.f32 %v107, %v5063
    %v5065 = vand.u32 %v5064, 4294901760
    %5066 = vmatmul.mubr.f32.gmra.mxu0 %v5065
    %v5067 = vpop.f32.mrf.mxu0
    %v5068 = vadd.f32 %v4871, %v5067
    %v5069 = vpop.f32.mrf.mxu0
    %5070 = vmatprep.mubr.f32.mxu0 0.0
    %v5071 = vand.u32 %v108, 4294901760
    %v5072 = vsub.f32 %v108, %v5071
    %v5073 = vand.u32 %v5072, 4294901760
    %5074 = vmatmul.mubr.f32.gmra.mxu0 %v5073
    %v5075 = vpop.f32.mrf.mxu0
    %v5076 = vadd.f32 %v4878, %v5075
    %v5077 = vpop.f32.mrf.mxu0
    %5078 = vmatprep.mubr.f32.mxu0 0.0
    %v5079 = vand.u32 %v109, 4294901760
    %v5080 = vsub.f32 %v109, %v5079
    %v5081 = vand.u32 %v5080, 4294901760
    %5082 = vmatmul.mubr.f32.gmra.mxu0 %v5081
    %v5083 = vpop.f32.mrf.mxu0
    %v5084 = vadd.f32 %v4885, %v5083
    %v5085 = vpop.f32.mrf.mxu0
    %5086 = vmatprep.mubr.f32.mxu0 0.0
    %v5087 = vand.u32 %v110, 4294901760
    %v5088 = vsub.f32 %v110, %v5087
    %v5089 = vand.u32 %v5088, 4294901760
    %5090 = vmatmul.mubr.f32.gmra.mxu0 %v5089
    %v5091 = vpop.f32.mrf.mxu0
    %v5092 = vadd.f32 %v4892, %v5091
    %v5093 = vpop.f32.mrf.mxu0
    %5094 = vmatprep.mubr.f32.mxu0 0.0
    %v5095 = vand.u32 %v111, 4294901760
    %v5096 = vsub.f32 %v111, %v5095
    %v5097 = vand.u32 %v5096, 4294901760
    %5098 = vmatmul.mubr.f32.gmra.mxu0 %v5097
    %v5099 = vpop.f32.mrf.mxu0
    %v5100 = vadd.f32 %v4899, %v5099
    %v5101 = vpop.f32.mrf.mxu0
    %5102 = vmatprep.mubr.f32.mxu0 0.0
    %v5103 = vand.u32 %v112, 4294901760
    %v5104 = vsub.f32 %v112, %v5103
    %v5105 = vand.u32 %v5104, 4294901760
    %5106 = vmatmul.mubr.f32.gmra.mxu0 %v5105
    %v5107 = vpop.f32.mrf.mxu0
    %v5108 = vadd.f32 %v4906, %v5107
    %v5109 = vpop.f32.mrf.mxu0
    %5110 = vmatprep.mubr.f32.mxu0 0.0
    %v5111 = vand.u32 %v113, 4294901760
    %v5112 = vsub.f32 %v113, %v5111
    %v5113 = vand.u32 %v5112, 4294901760
    %5114 = vmatmul.mubr.f32.gmra.mxu0 %v5113
    %v5115 = vpop.f32.mrf.mxu0
    %v5116 = vadd.f32 %v4913, %v5115
    %v5117 = vpop.f32.mrf.mxu0
    %5118 = vmatprep.mubr.f32.mxu0 0.0
    %v5119 = vand.u32 %v114, 4294901760
    %v5120 = vsub.f32 %v114, %v5119
    %v5121 = vand.u32 %v5120, 4294901760
    %5122 = vmatmul.mubr.f32.gmra.mxu0 %v5121
    %v5123 = vpop.f32.mrf.mxu0
    %v5124 = vadd.f32 %v4920, %v5123
    %v5125 = vpop.f32.mrf.mxu0
    %5126 = vmatprep.mubr.f32.mxu0 0.0
    %v5127 = vand.u32 %v115, 4294901760
    %v5128 = vsub.f32 %v115, %v5127
    %v5129 = vand.u32 %v5128, 4294901760
    %5130 = vmatmul.mubr.f32.gmra.mxu0 %v5129
    %v5131 = vpop.f32.mrf.mxu0
    %v5132 = vadd.f32 %v4927, %v5131
    %v5133 = vpop.f32.mrf.mxu0
    %5134 = vmatprep.mubr.f32.mxu0 0.0
    %v5135 = vand.u32 %v116, 4294901760
    %v5136 = vsub.f32 %v116, %v5135
    %v5137 = vand.u32 %v5136, 4294901760
    %5138 = vmatmul.mubr.f32.gmra.mxu0 %v5137
    %v5139 = vpop.f32.mrf.mxu0
    %v5140 = vadd.f32 %v4934, %v5139
    %v5141 = vpop.f32.mrf.mxu0
    %5142 = vmatprep.mubr.f32.mxu0 0.0
    %v5143 = vand.u32 %v117, 4294901760
    %v5144 = vsub.f32 %v117, %v5143
    %v5145 = vand.u32 %v5144, 4294901760
    %5146 = vmatmul.mubr.f32.gmra.mxu0 %v5145
    %v5147 = vpop.f32.mrf.mxu0
    %v5148 = vadd.f32 %v4941, %v5147
    %v5149 = vpop.f32.mrf.mxu0
    %5150 = vmatprep.mubr.f32.mxu0 0.0
    %v5151 = vand.u32 %v118, 4294901760
    %v5152 = vsub.f32 %v118, %v5151
    %v5153 = vand.u32 %v5152, 4294901760
    %5154 = vmatmul.mubr.f32.gmra.mxu0 %v5153
    %v5155 = vpop.f32.mrf.mxu0
    %v5156 = vadd.f32 %v4948, %v5155
    %v5157 = vpop.f32.mrf.mxu0
    %5158 = vmatprep.mubr.f32.mxu0 0.0
    %v5159 = vand.u32 %v119, 4294901760
    %v5160 = vsub.f32 %v119, %v5159
    %v5161 = vand.u32 %v5160, 4294901760
    %5162 = vmatmul.mubr.f32.gmra.mxu0 %v5161
    %v5163 = vpop.f32.mrf.mxu0
    %v5164 = vadd.f32 %v4955, %v5163
    %v5165 = vpop.f32.mrf.mxu0
    %5166 = vdwg.mxu0
    %5167 = vmatprep.subr.mxu0 0.0
    %v5168 = vand.u32 %v3880, 4294901760
    %v5169 = vsub.f32 %v3880, %v5168
    %v5170 = vand.u32 %v5169, 4294901760
    %5171 = vmatpush1.msra.mxu0 %v5170
    %5172 = vmatprep.subr.mxu0 0.0
    %v5173 = vand.u32 %v3874, 4294901760
    %v5174 = vsub.f32 %v3874, %v5173
    %v5175 = vand.u32 %v5174, 4294901760
    %5176 = vmatpush1.msra.mxu0 %v5175
    %5177 = vmatprep.subr.mxu0 0.0
    %v5178 = vand.u32 %v3868, 4294901760
    %v5179 = vsub.f32 %v3868, %v5178
    %v5180 = vand.u32 %v5179, 4294901760
    %5181 = vmatpush1.msra.mxu0 %v5180
    %5182 = vmatprep.subr.mxu0 0.0
    %v5183 = vand.u32 %v3862, 4294901760
    %v5184 = vsub.f32 %v3862, %v5183
    %v5185 = vand.u32 %v5184, 4294901760
    %5186 = vmatpush1.msra.mxu0 %v5185
    %5187 = vmatprep.subr.mxu0 0.0
    %v5188 = vand.u32 %v3856, 4294901760
    %v5189 = vsub.f32 %v3856, %v5188
    %v5190 = vand.u32 %v5189, 4294901760
    %5191 = vmatpush1.msra.mxu0 %v5190
    %5192 = vmatprep.subr.mxu0 0.0
    %v5193 = vand.u32 %v3850, 4294901760
    %v5194 = vsub.f32 %v3850, %v5193
    %v5195 = vand.u32 %v5194, 4294901760
    %5196 = vmatpush1.msra.mxu0 %v5195
    %5197 = vmatprep.subr.mxu0 0.0
    %v5198 = vand.u32 %v3844, 4294901760
    %v5199 = vsub.f32 %v3844, %v5198
    %v5200 = vand.u32 %v5199, 4294901760
    %5201 = vmatpush1.msra.mxu0 %v5200
    %5202 = vmatprep.subr.mxu0 0.0
    %v5203 = vand.u32 %v3838, 4294901760
    %v5204 = vsub.f32 %v3838, %v5203
    %v5205 = vand.u32 %v5204, 4294901760
    %5206 = vmatpush1.msra.mxu0 %v5205
    %5207 = vmatprep.subr.mxu0 0.0
    %v5208 = vand.u32 %v3832, 4294901760
    %v5209 = vsub.f32 %v3832, %v5208
    %v5210 = vand.u32 %v5209, 4294901760
    %5211 = vmatpush1.msra.mxu0 %v5210
    %5212 = vmatprep.subr.mxu0 0.0
    %v5213 = vand.u32 %v3826, 4294901760
    %v5214 = vsub.f32 %v3826, %v5213
    %v5215 = vand.u32 %v5214, 4294901760
    %5216 = vmatpush1.msra.mxu0 %v5215
    %5217 = vmatprep.subr.mxu0 0.0
    %v5218 = vand.u32 %v3820, 4294901760
    %v5219 = vsub.f32 %v3820, %v5218
    %v5220 = vand.u32 %v5219, 4294901760
    %5221 = vmatpush1.msra.mxu0 %v5220
    %5222 = vmatprep.subr.mxu0 0.0
    %v5223 = vand.u32 %v3814, 4294901760
    %v5224 = vsub.f32 %v3814, %v5223
    %v5225 = vand.u32 %v5224, 4294901760
    %5226 = vmatpush1.msra.mxu0 %v5225
    %5227 = vmatprep.subr.mxu0 0.0
    %v5228 = vand.u32 %v3808, 4294901760
    %v5229 = vsub.f32 %v3808, %v5228
    %v5230 = vand.u32 %v5229, 4294901760
    %5231 = vmatpush1.msra.mxu0 %v5230
    %5232 = vmatprep.subr.mxu0 0.0
    %v5233 = vand.u32 %v3802, 4294901760
    %v5234 = vsub.f32 %v3802, %v5233
    %v5235 = vand.u32 %v5234, 4294901760
    %5236 = vmatpush1.msra.mxu0 %v5235
    %5237 = vmatprep.subr.mxu0 0.0
    %v5238 = vand.u32 %v3796, 4294901760
    %v5239 = vsub.f32 %v3796, %v5238
    %v5240 = vand.u32 %v5239, 4294901760
    %5241 = vmatpush1.msra.mxu0 %v5240
    %5242 = vmatprep.subr.mxu0 0.0
    %v5243 = vand.u32 %v3790, 4294901760
    %v5244 = vsub.f32 %v3790, %v5243
    %v5245 = vand.u32 %v5244, 4294901760
    %5246 = vmatpush1.msra.mxu0 %v5245
    %5247 = vmatprep.subr.mxu0 0.0
    %5248 = vmatpush2.msra.mxu0 0.0
    %5249 = vmatprep.subr.mxu0 0.0
    %5250 = vmatpush2.msra.mxu0 0.0
    %5251 = vmatprep.subr.mxu0 0.0
    %5252 = vmatpush2.msra.mxu0 0.0
    %5253 = vmatprep.subr.mxu0 0.0
    %5254 = vmatpush2.msra.mxu0 0.0
    %5255 = vmatprep.subr.mxu0 0.0
    %5256 = vmatpush2.msra.mxu0 0.0
    %5257 = vmatprep.subr.mxu0 0.0
    %5258 = vmatpush2.msra.mxu0 0.0
    %5259 = vmatprep.subr.mxu0 0.0
    %5260 = vmatpush2.msra.mxu0 0.0
    %5261 = vmatprep.subr.mxu0 0.0
    %5262 = vmatpush2.msra.mxu0 0.0
    %5263 = vmatprep.subr.mxu0 0.0
    %5264 = vmatpush2.msra.mxu0 0.0
    %5265 = vmatprep.subr.mxu0 0.0
    %5266 = vmatpush2.msra.mxu0 0.0
    %5267 = vmatprep.subr.mxu0 0.0
    %5268 = vmatpush2.msra.mxu0 0.0
    %5269 = vmatprep.subr.mxu0 0.0
    %5270 = vmatpush2.msra.mxu0 0.0
    %5271 = vmatprep.subr.mxu0 0.0
    %5272 = vmatpush2.msra.mxu0 0.0
    %5273 = vmatprep.subr.mxu0 0.0
    %5274 = vmatpush2.msra.mxu0 0.0
    %5275 = vmatprep.subr.mxu0 0.0
    %5276 = vmatpush2.msra.mxu0 0.0
    %5277 = vmatprep.subr.mxu0 0.0
    %5278 = vmatpush2.msra.mxu0 0.0
    %5279 = vmatprep.mubr.f32.mxu0 0.0
    %v5280 = vand.u32 %v104, 4294901760
    %5281 = vmatmul.mubr.f32.gmra.mxu0 %v5280
    %v5282 = vpop.f32.mrf.mxu0
    %v5283 = vadd.f32 %v5044, %v5282
    %v5284 = vpop.f32.mrf.mxu0
    %5285 = vmatprep.mubr.f32.mxu0 0.0
    %v5286 = vand.u32 %v105, 4294901760
    %5287 = vmatmul.mubr.f32.gmra.mxu0 %v5286
    %v5288 = vpop.f32.mrf.mxu0
    %v5289 = vadd.f32 %v5052, %v5288
    %v5290 = vpop.f32.mrf.mxu0
    %5291 = vmatprep.mubr.f32.mxu0 0.0
    %v5292 = vand.u32 %v106, 4294901760
    %5293 = vmatmul.mubr.f32.gmra.mxu0 %v5292
    %v5294 = vpop.f32.mrf.mxu0
    %v5295 = vadd.f32 %v5060, %v5294
    %v5296 = vpop.f32.mrf.mxu0
    %5297 = vmatprep.mubr.f32.mxu0 0.0
    %v5298 = vand.u32 %v107, 4294901760
    %5299 = vmatmul.mubr.f32.gmra.mxu0 %v5298
    %v5300 = vpop.f32.mrf.mxu0
    %v5301 = vadd.f32 %v5068, %v5300
    %v5302 = vpop.f32.mrf.mxu0
    %5303 = vmatprep.mubr.f32.mxu0 0.0
    %v5304 = vand.u32 %v108, 4294901760
    %5305 = vmatmul.mubr.f32.gmra.mxu0 %v5304
    %v5306 = vpop.f32.mrf.mxu0
    %v5307 = vadd.f32 %v5076, %v5306
    %v5308 = vpop.f32.mrf.mxu0
    %5309 = vmatprep.mubr.f32.mxu0 0.0
    %v5310 = vand.u32 %v109, 4294901760
    %5311 = vmatmul.mubr.f32.gmra.mxu0 %v5310
    %v5312 = vpop.f32.mrf.mxu0
    %v5313 = vadd.f32 %v5084, %v5312
    %v5314 = vpop.f32.mrf.mxu0
    %5315 = vmatprep.mubr.f32.mxu0 0.0
    %v5316 = vand.u32 %v110, 4294901760
    %5317 = vmatmul.mubr.f32.gmra.mxu0 %v5316
    %v5318 = vpop.f32.mrf.mxu0
    %v5319 = vadd.f32 %v5092, %v5318
    %v5320 = vpop.f32.mrf.mxu0
    %5321 = vmatprep.mubr.f32.mxu0 0.0
    %v5322 = vand.u32 %v111, 4294901760
    %5323 = vmatmul.mubr.f32.gmra.mxu0 %v5322
    %v5324 = vpop.f32.mrf.mxu0
    %v5325 = vadd.f32 %v5100, %v5324
    %v5326 = vpop.f32.mrf.mxu0
    %5327 = vmatprep.mubr.f32.mxu0 0.0
    %v5328 = vand.u32 %v112, 4294901760
    %5329 = vmatmul.mubr.f32.gmra.mxu0 %v5328
    %v5330 = vpop.f32.mrf.mxu0
    %v5331 = vadd.f32 %v5108, %v5330
    %v5332 = vpop.f32.mrf.mxu0
    %5333 = vmatprep.mubr.f32.mxu0 0.0
    %v5334 = vand.u32 %v113, 4294901760
    %5335 = vmatmul.mubr.f32.gmra.mxu0 %v5334
    %v5336 = vpop.f32.mrf.mxu0
    %v5337 = vadd.f32 %v5116, %v5336
    %v5338 = vpop.f32.mrf.mxu0
    %5339 = vmatprep.mubr.f32.mxu0 0.0
    %v5340 = vand.u32 %v114, 4294901760
    %5341 = vmatmul.mubr.f32.gmra.mxu0 %v5340
    %v5342 = vpop.f32.mrf.mxu0
    %v5343 = vadd.f32 %v5124, %v5342
    %v5344 = vpop.f32.mrf.mxu0
    %5345 = vmatprep.mubr.f32.mxu0 0.0
    %v5346 = vand.u32 %v115, 4294901760
    %5347 = vmatmul.mubr.f32.gmra.mxu0 %v5346
    %v5348 = vpop.f32.mrf.mxu0
    %v5349 = vadd.f32 %v5132, %v5348
    %v5350 = vpop.f32.mrf.mxu0
    %5351 = vmatprep.mubr.f32.mxu0 0.0
    %v5352 = vand.u32 %v116, 4294901760
    %5353 = vmatmul.mubr.f32.gmra.mxu0 %v5352
    %v5354 = vpop.f32.mrf.mxu0
    %v5355 = vadd.f32 %v5140, %v5354
    %v5356 = vpop.f32.mrf.mxu0
    %5357 = vmatprep.mubr.f32.mxu0 0.0
    %v5358 = vand.u32 %v117, 4294901760
    %5359 = vmatmul.mubr.f32.gmra.mxu0 %v5358
    %v5360 = vpop.f32.mrf.mxu0
    %v5361 = vadd.f32 %v5148, %v5360
    %v5362 = vpop.f32.mrf.mxu0
    %5363 = vmatprep.mubr.f32.mxu0 0.0
    %v5364 = vand.u32 %v118, 4294901760
    %5365 = vmatmul.mubr.f32.gmra.mxu0 %v5364
    %v5366 = vpop.f32.mrf.mxu0
    %v5367 = vadd.f32 %v5156, %v5366
    %v5368 = vpop.f32.mrf.mxu0
    %5369 = vmatprep.mubr.f32.mxu0 0.0
    %v5370 = vand.u32 %v119, 4294901760
    %5371 = vmatmul.mubr.f32.gmra.mxu0 %v5370
    %v5372 = vpop.f32.mrf.mxu0
    %v5373 = vadd.f32 %v5164, %v5372
    %v5374 = vpop.f32.mrf.mxu0
    %5375 = vdwg.mxu0
    %5376 = vmatprep.subr.mxu0 0.0
    %v5377 = vand.u32 %v3880, 4294901760
    %5378 = vmatpush1.msra.mxu0 %v5377
    %5379 = vmatprep.subr.mxu0 0.0
    %v5380 = vand.u32 %v3874, 4294901760
    %5381 = vmatpush1.msra.mxu0 %v5380
    %5382 = vmatprep.subr.mxu0 0.0
    %v5383 = vand.u32 %v3868, 4294901760
    %5384 = vmatpush1.msra.mxu0 %v5383
    %5385 = vmatprep.subr.mxu0 0.0
    %v5386 = vand.u32 %v3862, 4294901760
    %5387 = vmatpush1.msra.mxu0 %v5386
    %5388 = vmatprep.subr.mxu0 0.0
    %v5389 = vand.u32 %v3856, 4294901760
    %5390 = vmatpush1.msra.mxu0 %v5389
    %5391 = vmatprep.subr.mxu0 0.0
    %v5392 = vand.u32 %v3850, 4294901760
    %5393 = vmatpush1.msra.mxu0 %v5392
    %5394 = vmatprep.subr.mxu0 0.0
    %v5395 = vand.u32 %v3844, 4294901760
    %5396 = vmatpush1.msra.mxu0 %v5395
    %5397 = vmatprep.subr.mxu0 0.0
    %v5398 = vand.u32 %v3838, 4294901760
    %5399 = vmatpush1.msra.mxu0 %v5398
    %5400 = vmatprep.subr.mxu0 0.0
    %v5401 = vand.u32 %v3832, 4294901760
    %5402 = vmatpush1.msra.mxu0 %v5401
    %5403 = vmatprep.subr.mxu0 0.0
    %v5404 = vand.u32 %v3826, 4294901760
    %5405 = vmatpush1.msra.mxu0 %v5404
    %5406 = vmatprep.subr.mxu0 0.0
    %v5407 = vand.u32 %v3820, 4294901760
    %5408 = vmatpush1.msra.mxu0 %v5407
    %5409 = vmatprep.subr.mxu0 0.0
    %v5410 = vand.u32 %v3814, 4294901760
    %5411 = vmatpush1.msra.mxu0 %v5410
    %5412 = vmatprep.subr.mxu0 0.0
    %v5413 = vand.u32 %v3808, 4294901760
    %5414 = vmatpush1.msra.mxu0 %v5413
    %5415 = vmatprep.subr.mxu0 0.0
    %v5416 = vand.u32 %v3802, 4294901760
    %5417 = vmatpush1.msra.mxu0 %v5416
    %5418 = vmatprep.subr.mxu0 0.0
    %v5419 = vand.u32 %v3796, 4294901760
    %5420 = vmatpush1.msra.mxu0 %v5419
    %5421 = vmatprep.subr.mxu0 0.0
    %v5422 = vand.u32 %v3790, 4294901760
    %5423 = vmatpush1.msra.mxu0 %v5422
    %5424 = vmatprep.subr.mxu0 0.0
    %5425 = vmatpush2.msra.mxu0 0.0
    %5426 = vmatprep.subr.mxu0 0.0
    %5427 = vmatpush2.msra.mxu0 0.0
    %5428 = vmatprep.subr.mxu0 0.0
    %5429 = vmatpush2.msra.mxu0 0.0
    %5430 = vmatprep.subr.mxu0 0.0
    %5431 = vmatpush2.msra.mxu0 0.0
    %5432 = vmatprep.subr.mxu0 0.0
    %5433 = vmatpush2.msra.mxu0 0.0
    %5434 = vmatprep.subr.mxu0 0.0
    %5435 = vmatpush2.msra.mxu0 0.0
    %5436 = vmatprep.subr.mxu0 0.0
    %5437 = vmatpush2.msra.mxu0 0.0
    %5438 = vmatprep.subr.mxu0 0.0
    %5439 = vmatpush2.msra.mxu0 0.0
    %5440 = vmatprep.subr.mxu0 0.0
    %5441 = vmatpush2.msra.mxu0 0.0
    %5442 = vmatprep.subr.mxu0 0.0
    %5443 = vmatpush2.msra.mxu0 0.0
    %5444 = vmatprep.subr.mxu0 0.0
    %5445 = vmatpush2.msra.mxu0 0.0
    %5446 = vmatprep.subr.mxu0 0.0
    %5447 = vmatpush2.msra.mxu0 0.0
    %5448 = vmatprep.subr.mxu0 0.0
    %5449 = vmatpush2.msra.mxu0 0.0
    %5450 = vmatprep.subr.mxu0 0.0
    %5451 = vmatpush2.msra.mxu0 0.0
    %5452 = vmatprep.subr.mxu0 0.0
    %5453 = vmatpush2.msra.mxu0 0.0
    %5454 = vmatprep.subr.mxu0 0.0
    %5455 = vmatpush2.msra.mxu0 0.0
    %5456 = vmatprep.mubr.f32.mxu0 0.0
    %v5457 = vand.u32 %v104, 4294901760
    %5458 = vmatmul.mubr.f32.gmra.mxu0 %v5457
    %v5459 = vpop.f32.mrf.mxu0
    %v5460 = vadd.f32 %v5283, %v5459
    %v5461 = vpop.f32.mrf.mxu0
    %5462 = vmatprep.mubr.f32.mxu0 0.0
    %v5463 = vand.u32 %v105, 4294901760
    %5464 = vmatmul.mubr.f32.gmra.mxu0 %v5463
    %v5465 = vpop.f32.mrf.mxu0
    %v5466 = vadd.f32 %v5289, %v5465
    %v5467 = vpop.f32.mrf.mxu0
    %5468 = vmatprep.mubr.f32.mxu0 0.0
    %v5469 = vand.u32 %v106, 4294901760
    %5470 = vmatmul.mubr.f32.gmra.mxu0 %v5469
    %v5471 = vpop.f32.mrf.mxu0
    %v5472 = vadd.f32 %v5295, %v5471
    %v5473 = vpop.f32.mrf.mxu0
    %5474 = vmatprep.mubr.f32.mxu0 0.0
    %v5475 = vand.u32 %v107, 4294901760
    %5476 = vmatmul.mubr.f32.gmra.mxu0 %v5475
    %v5477 = vpop.f32.mrf.mxu0
    %v5478 = vadd.f32 %v5301, %v5477
    %v5479 = vpop.f32.mrf.mxu0
    %5480 = vmatprep.mubr.f32.mxu0 0.0
    %v5481 = vand.u32 %v108, 4294901760
    %5482 = vmatmul.mubr.f32.gmra.mxu0 %v5481
    %v5483 = vpop.f32.mrf.mxu0
    %v5484 = vadd.f32 %v5307, %v5483
    %v5485 = vpop.f32.mrf.mxu0
    %5486 = vmatprep.mubr.f32.mxu0 0.0
    %v5487 = vand.u32 %v109, 4294901760
    %5488 = vmatmul.mubr.f32.gmra.mxu0 %v5487
    %v5489 = vpop.f32.mrf.mxu0
    %v5490 = vadd.f32 %v5313, %v5489
    %v5491 = vpop.f32.mrf.mxu0
    %5492 = vmatprep.mubr.f32.mxu0 0.0
    %v5493 = vand.u32 %v110, 4294901760
    %5494 = vmatmul.mubr.f32.gmra.mxu0 %v5493
    %v5495 = vpop.f32.mrf.mxu0
    %v5496 = vadd.f32 %v5319, %v5495
    %v5497 = vpop.f32.mrf.mxu0
    %5498 = vmatprep.mubr.f32.mxu0 0.0
    %v5499 = vand.u32 %v111, 4294901760
    %5500 = vmatmul.mubr.f32.gmra.mxu0 %v5499
    %v5501 = vpop.f32.mrf.mxu0
    %v5502 = vadd.f32 %v5325, %v5501
    %v5503 = vpop.f32.mrf.mxu0
    %5504 = vmatprep.mubr.f32.mxu0 0.0
    %v5505 = vand.u32 %v112, 4294901760
    %5506 = vmatmul.mubr.f32.gmra.mxu0 %v5505
    %v5507 = vpop.f32.mrf.mxu0
    %v5508 = vadd.f32 %v5331, %v5507
    %v5509 = vpop.f32.mrf.mxu0
    %5510 = vmatprep.mubr.f32.mxu0 0.0
    %v5511 = vand.u32 %v113, 4294901760
    %5512 = vmatmul.mubr.f32.gmra.mxu0 %v5511
    %v5513 = vpop.f32.mrf.mxu0
    %v5514 = vadd.f32 %v5337, %v5513
    %v5515 = vpop.f32.mrf.mxu0
    %5516 = vmatprep.mubr.f32.mxu0 0.0
    %v5517 = vand.u32 %v114, 4294901760
    %5518 = vmatmul.mubr.f32.gmra.mxu0 %v5517
    %v5519 = vpop.f32.mrf.mxu0
    %v5520 = vadd.f32 %v5343, %v5519
    %v5521 = vpop.f32.mrf.mxu0
    %5522 = vmatprep.mubr.f32.mxu0 0.0
    %v5523 = vand.u32 %v115, 4294901760
    %5524 = vmatmul.mubr.f32.gmra.mxu0 %v5523
    %v5525 = vpop.f32.mrf.mxu0
    %v5526 = vadd.f32 %v5349, %v5525
    %v5527 = vpop.f32.mrf.mxu0
    %5528 = vmatprep.mubr.f32.mxu0 0.0
    %v5529 = vand.u32 %v116, 4294901760
    %5530 = vmatmul.mubr.f32.gmra.mxu0 %v5529
    %v5531 = vpop.f32.mrf.mxu0
    %v5532 = vadd.f32 %v5355, %v5531
    %v5533 = vpop.f32.mrf.mxu0
    %5534 = vmatprep.mubr.f32.mxu0 0.0
    %v5535 = vand.u32 %v117, 4294901760
    %5536 = vmatmul.mubr.f32.gmra.mxu0 %v5535
    %v5537 = vpop.f32.mrf.mxu0
    %v5538 = vadd.f32 %v5361, %v5537
    %v5539 = vpop.f32.mrf.mxu0
    %5540 = vmatprep.mubr.f32.mxu0 0.0
    %v5541 = vand.u32 %v118, 4294901760
    %5542 = vmatmul.mubr.f32.gmra.mxu0 %v5541
    %v5543 = vpop.f32.mrf.mxu0
    %v5544 = vadd.f32 %v5367, %v5543
    %v5545 = vpop.f32.mrf.mxu0
    %5546 = vmatprep.mubr.f32.mxu0 0.0
    %v5547 = vand.u32 %v119, 4294901760
    %5548 = vmatmul.mubr.f32.gmra.mxu0 %v5547
    %v5549 = vpop.f32.mrf.mxu0
    %v5550 = vadd.f32 %v5373, %v5549
    %v5551 = vpop.f32.mrf.mxu0
    %5552 = vdwg.mxu0
    %5553 = vmatprep.subr.mxu0 0.0
    %v5554 = vand.u32 %v3976, 4294901760
    %5555 = vmatpush1.msra.mxu0 %v5554
    %5556 = vmatprep.subr.mxu0 0.0
    %v5557 = vand.u32 %v3970, 4294901760
    %5558 = vmatpush1.msra.mxu0 %v5557
    %5559 = vmatprep.subr.mxu0 0.0
    %v5560 = vand.u32 %v3964, 4294901760
    %5561 = vmatpush1.msra.mxu0 %v5560
    %5562 = vmatprep.subr.mxu0 0.0
    %v5563 = vand.u32 %v3958, 4294901760
    %5564 = vmatpush1.msra.mxu0 %v5563
    %5565 = vmatprep.subr.mxu0 0.0
    %v5566 = vand.u32 %v3952, 4294901760
    %5567 = vmatpush1.msra.mxu0 %v5566
    %5568 = vmatprep.subr.mxu0 0.0
    %v5569 = vand.u32 %v3946, 4294901760
    %5570 = vmatpush1.msra.mxu0 %v5569
    %5571 = vmatprep.subr.mxu0 0.0
    %v5572 = vand.u32 %v3940, 4294901760
    %5573 = vmatpush1.msra.mxu0 %v5572
    %5574 = vmatprep.subr.mxu0 0.0
    %v5575 = vand.u32 %v3934, 4294901760
    %5576 = vmatpush1.msra.mxu0 %v5575
    %5577 = vmatprep.subr.mxu0 0.0
    %v5578 = vand.u32 %v3928, 4294901760
    %5579 = vmatpush1.msra.mxu0 %v5578
    %5580 = vmatprep.subr.mxu0 0.0
    %v5581 = vand.u32 %v3922, 4294901760
    %5582 = vmatpush1.msra.mxu0 %v5581
    %5583 = vmatprep.subr.mxu0 0.0
    %v5584 = vand.u32 %v3916, 4294901760
    %5585 = vmatpush1.msra.mxu0 %v5584
    %5586 = vmatprep.subr.mxu0 0.0
    %v5587 = vand.u32 %v3910, 4294901760
    %5588 = vmatpush1.msra.mxu0 %v5587
    %5589 = vmatprep.subr.mxu0 0.0
    %v5590 = vand.u32 %v3904, 4294901760
    %5591 = vmatpush1.msra.mxu0 %v5590
    %5592 = vmatprep.subr.mxu0 0.0
    %v5593 = vand.u32 %v3898, 4294901760
    %5594 = vmatpush1.msra.mxu0 %v5593
    %5595 = vmatprep.subr.mxu0 0.0
    %v5596 = vand.u32 %v3892, 4294901760
    %5597 = vmatpush1.msra.mxu0 %v5596
    %5598 = vmatprep.subr.mxu0 0.0
    %v5599 = vand.u32 %v3886, 4294901760
    %5600 = vmatpush1.msra.mxu0 %v5599
    %5601 = vmatprep.subr.mxu0 0.0
    %5602 = vmatpush2.msra.mxu0 0.0
    %5603 = vmatprep.subr.mxu0 0.0
    %5604 = vmatpush2.msra.mxu0 0.0
    %5605 = vmatprep.subr.mxu0 0.0
    %5606 = vmatpush2.msra.mxu0 0.0
    %5607 = vmatprep.subr.mxu0 0.0
    %5608 = vmatpush2.msra.mxu0 0.0
    %5609 = vmatprep.subr.mxu0 0.0
    %5610 = vmatpush2.msra.mxu0 0.0
    %5611 = vmatprep.subr.mxu0 0.0
    %5612 = vmatpush2.msra.mxu0 0.0
    %5613 = vmatprep.subr.mxu0 0.0
    %5614 = vmatpush2.msra.mxu0 0.0
    %5615 = vmatprep.subr.mxu0 0.0
    %5616 = vmatpush2.msra.mxu0 0.0
    %5617 = vmatprep.subr.mxu0 0.0
    %5618 = vmatpush2.msra.mxu0 0.0
    %5619 = vmatprep.subr.mxu0 0.0
    %5620 = vmatpush2.msra.mxu0 0.0
    %5621 = vmatprep.subr.mxu0 0.0
    %5622 = vmatpush2.msra.mxu0 0.0
    %5623 = vmatprep.subr.mxu0 0.0
    %5624 = vmatpush2.msra.mxu0 0.0
    %5625 = vmatprep.subr.mxu0 0.0
    %5626 = vmatpush2.msra.mxu0 0.0
    %5627 = vmatprep.subr.mxu0 0.0
    %5628 = vmatpush2.msra.mxu0 0.0
    %5629 = vmatprep.subr.mxu0 0.0
    %5630 = vmatpush2.msra.mxu0 0.0
    %5631 = vmatprep.subr.mxu0 0.0
    %5632 = vmatpush2.msra.mxu0 0.0
    %5633 = vmatprep.mubr.f32.mxu0 0.0
    %v5634 = vand.u32 %v104, 4294901760
    %v5635 = vsub.f32 %v104, %v5634
    %v5636 = vand.u32 %v5635, 4294901760
    %v5637 = vsub.f32 %v5635, %v5636
    %v5638 = vand.u32 %v5637, 4294901760
    %5639 = vmatmul.mubr.f32.gmra.mxu0 %v5638
    %v5640 = vpop.f32.mrf.mxu0
    %v5641 = vadd.f32 0.0, %v5640
    %v5642 = vpop.f32.mrf.mxu0
    %5643 = vmatprep.mubr.f32.mxu0 0.0
    %v5644 = vand.u32 %v105, 4294901760
    %v5645 = vsub.f32 %v105, %v5644
    %v5646 = vand.u32 %v5645, 4294901760
    %v5647 = vsub.f32 %v5645, %v5646
    %v5648 = vand.u32 %v5647, 4294901760
    %5649 = vmatmul.mubr.f32.gmra.mxu0 %v5648
    %v5650 = vpop.f32.mrf.mxu0
    %v5651 = vadd.f32 0.0, %v5650
    %v5652 = vpop.f32.mrf.mxu0
    %5653 = vmatprep.mubr.f32.mxu0 0.0
    %v5654 = vand.u32 %v106, 4294901760
    %v5655 = vsub.f32 %v106, %v5654
    %v5656 = vand.u32 %v5655, 4294901760
    %v5657 = vsub.f32 %v5655, %v5656
    %v5658 = vand.u32 %v5657, 4294901760
    %5659 = vmatmul.mubr.f32.gmra.mxu0 %v5658
    %v5660 = vpop.f32.mrf.mxu0
    %v5661 = vadd.f32 0.0, %v5660
    %v5662 = vpop.f32.mrf.mxu0
    %5663 = vmatprep.mubr.f32.mxu0 0.0
    %v5664 = vand.u32 %v107, 4294901760
    %v5665 = vsub.f32 %v107, %v5664
    %v5666 = vand.u32 %v5665, 4294901760
    %v5667 = vsub.f32 %v5665, %v5666
    %v5668 = vand.u32 %v5667, 4294901760
    %5669 = vmatmul.mubr.f32.gmra.mxu0 %v5668
    %v5670 = vpop.f32.mrf.mxu0
    %v5671 = vadd.f32 0.0, %v5670
    %v5672 = vpop.f32.mrf.mxu0
    %5673 = vmatprep.mubr.f32.mxu0 0.0
    %v5674 = vand.u32 %v108, 4294901760
    %v5675 = vsub.f32 %v108, %v5674
    %v5676 = vand.u32 %v5675, 4294901760
    %v5677 = vsub.f32 %v5675, %v5676
    %v5678 = vand.u32 %v5677, 4294901760
    %5679 = vmatmul.mubr.f32.gmra.mxu0 %v5678
    %v5680 = vpop.f32.mrf.mxu0
    %v5681 = vadd.f32 0.0, %v5680
    %v5682 = vpop.f32.mrf.mxu0
    %5683 = vmatprep.mubr.f32.mxu0 0.0
    %v5684 = vand.u32 %v109, 4294901760
    %v5685 = vsub.f32 %v109, %v5684
    %v5686 = vand.u32 %v5685, 4294901760
    %v5687 = vsub.f32 %v5685, %v5686
    %v5688 = vand.u32 %v5687, 4294901760
    %5689 = vmatmul.mubr.f32.gmra.mxu0 %v5688
    %v5690 = vpop.f32.mrf.mxu0
    %v5691 = vadd.f32 0.0, %v5690
    %v5692 = vpop.f32.mrf.mxu0
    %5693 = vmatprep.mubr.f32.mxu0 0.0
    %v5694 = vand.u32 %v110, 4294901760
    %v5695 = vsub.f32 %v110, %v5694
    %v5696 = vand.u32 %v5695, 4294901760
    %v5697 = vsub.f32 %v5695, %v5696
    %v5698 = vand.u32 %v5697, 4294901760
    %5699 = vmatmul.mubr.f32.gmra.mxu0 %v5698
    %v5700 = vpop.f32.mrf.mxu0
    %v5701 = vadd.f32 0.0, %v5700
    %v5702 = vpop.f32.mrf.mxu0
    %5703 = vmatprep.mubr.f32.mxu0 0.0
    %v5704 = vand.u32 %v111, 4294901760
    %v5705 = vsub.f32 %v111, %v5704
    %v5706 = vand.u32 %v5705, 4294901760
    %v5707 = vsub.f32 %v5705, %v5706
    %v5708 = vand.u32 %v5707, 4294901760
    %5709 = vmatmul.mubr.f32.gmra.mxu0 %v5708
    %v5710 = vpop.f32.mrf.mxu0
    %v5711 = vadd.f32 0.0, %v5710
    %v5712 = vpop.f32.mrf.mxu0
    %5713 = vmatprep.mubr.f32.mxu0 0.0
    %v5714 = vand.u32 %v112, 4294901760
    %v5715 = vsub.f32 %v112, %v5714
    %v5716 = vand.u32 %v5715, 4294901760
    %v5717 = vsub.f32 %v5715, %v5716
    %v5718 = vand.u32 %v5717, 4294901760
    %5719 = vmatmul.mubr.f32.gmra.mxu0 %v5718
    %v5720 = vpop.f32.mrf.mxu0
    %v5721 = vadd.f32 0.0, %v5720
    %v5722 = vpop.f32.mrf.mxu0
    %5723 = vmatprep.mubr.f32.mxu0 0.0
    %v5724 = vand.u32 %v113, 4294901760
    %v5725 = vsub.f32 %v113, %v5724
    %v5726 = vand.u32 %v5725, 4294901760
    %v5727 = vsub.f32 %v5725, %v5726
    %v5728 = vand.u32 %v5727, 4294901760
    %5729 = vmatmul.mubr.f32.gmra.mxu0 %v5728
    %v5730 = vpop.f32.mrf.mxu0
    %v5731 = vadd.f32 0.0, %v5730
    %v5732 = vpop.f32.mrf.mxu0
    %5733 = vmatprep.mubr.f32.mxu0 0.0
    %v5734 = vand.u32 %v114, 4294901760
    %v5735 = vsub.f32 %v114, %v5734
    %v5736 = vand.u32 %v5735, 4294901760
    %v5737 = vsub.f32 %v5735, %v5736
    %v5738 = vand.u32 %v5737, 4294901760
    %5739 = vmatmul.mubr.f32.gmra.mxu0 %v5738
    %v5740 = vpop.f32.mrf.mxu0
    %v5741 = vadd.f32 0.0, %v5740
    %v5742 = vpop.f32.mrf.mxu0
    %5743 = vmatprep.mubr.f32.mxu0 0.0
    %v5744 = vand.u32 %v115, 4294901760
    %v5745 = vsub.f32 %v115, %v5744
    %v5746 = vand.u32 %v5745, 4294901760
    %v5747 = vsub.f32 %v5745, %v5746
    %v5748 = vand.u32 %v5747, 4294901760
    %5749 = vmatmul.mubr.f32.gmra.mxu0 %v5748
    %v5750 = vpop.f32.mrf.mxu0
    %v5751 = vadd.f32 0.0, %v5750
    %v5752 = vpop.f32.mrf.mxu0
    %5753 = vmatprep.mubr.f32.mxu0 0.0
    %v5754 = vand.u32 %v116, 4294901760
    %v5755 = vsub.f32 %v116, %v5754
    %v5756 = vand.u32 %v5755, 4294901760
    %v5757 = vsub.f32 %v5755, %v5756
    %v5758 = vand.u32 %v5757, 4294901760
    %5759 = vmatmul.mubr.f32.gmra.mxu0 %v5758
    %v5760 = vpop.f32.mrf.mxu0
    %v5761 = vadd.f32 0.0, %v5760
    %v5762 = vpop.f32.mrf.mxu0
    %5763 = vmatprep.mubr.f32.mxu0 0.0
    %v5764 = vand.u32 %v117, 4294901760
    %v5765 = vsub.f32 %v117, %v5764
    %v5766 = vand.u32 %v5765, 4294901760
    %v5767 = vsub.f32 %v5765, %v5766
    %v5768 = vand.u32 %v5767, 4294901760
    %5769 = vmatmul.mubr.f32.gmra.mxu0 %v5768
    %v5770 = vpop.f32.mrf.mxu0
    %v5771 = vadd.f32 0.0, %v5770
    %v5772 = vpop.f32.mrf.mxu0
    %5773 = vmatprep.mubr.f32.mxu0 0.0
    %v5774 = vand.u32 %v118, 4294901760
    %v5775 = vsub.f32 %v118, %v5774
    %v5776 = vand.u32 %v5775, 4294901760
    %v5777 = vsub.f32 %v5775, %v5776
    %v5778 = vand.u32 %v5777, 4294901760
    %5779 = vmatmul.mubr.f32.gmra.mxu0 %v5778
    %v5780 = vpop.f32.mrf.mxu0
    %v5781 = vadd.f32 0.0, %v5780
    %v5782 = vpop.f32.mrf.mxu0
    %5783 = vmatprep.mubr.f32.mxu0 0.0
    %v5784 = vand.u32 %v119, 4294901760
    %v5785 = vsub.f32 %v119, %v5784
    %v5786 = vand.u32 %v5785, 4294901760
    %v5787 = vsub.f32 %v5785, %v5786
    %v5788 = vand.u32 %v5787, 4294901760
    %5789 = vmatmul.mubr.f32.gmra.mxu0 %v5788
    %v5790 = vpop.f32.mrf.mxu0
    %v5791 = vadd.f32 0.0, %v5790
    %v5792 = vpop.f32.mrf.mxu0
    %5793 = vdwg.mxu0
    %5794 = vmatprep.subr.mxu0 0.0
    %v5795 = vand.u32 %v3976, 4294901760
    %v5796 = vsub.f32 %v3976, %v5795
    %v5797 = vand.u32 %v5796, 4294901760
    %v5798 = vsub.f32 %v5796, %v5797
    %v5799 = vand.u32 %v5798, 4294901760
    %5800 = vmatpush1.msra.mxu0 %v5799
    %5801 = vmatprep.subr.mxu0 0.0
    %v5802 = vand.u32 %v3970, 4294901760
    %v5803 = vsub.f32 %v3970, %v5802
    %v5804 = vand.u32 %v5803, 4294901760
    %v5805 = vsub.f32 %v5803, %v5804
    %v5806 = vand.u32 %v5805, 4294901760
    %5807 = vmatpush1.msra.mxu0 %v5806
    %5808 = vmatprep.subr.mxu0 0.0
    %v5809 = vand.u32 %v3964, 4294901760
    %v5810 = vsub.f32 %v3964, %v5809
    %v5811 = vand.u32 %v5810, 4294901760
    %v5812 = vsub.f32 %v5810, %v5811
    %v5813 = vand.u32 %v5812, 4294901760
    %5814 = vmatpush1.msra.mxu0 %v5813
    %5815 = vmatprep.subr.mxu0 0.0
    %v5816 = vand.u32 %v3958, 4294901760
    %v5817 = vsub.f32 %v3958, %v5816
    %v5818 = vand.u32 %v5817, 4294901760
    %v5819 = vsub.f32 %v5817, %v5818
    %v5820 = vand.u32 %v5819, 4294901760
    %5821 = vmatpush1.msra.mxu0 %v5820
    %5822 = vmatprep.subr.mxu0 0.0
    %v5823 = vand.u32 %v3952, 4294901760
    %v5824 = vsub.f32 %v3952, %v5823
    %v5825 = vand.u32 %v5824, 4294901760
    %v5826 = vsub.f32 %v5824, %v5825
    %v5827 = vand.u32 %v5826, 4294901760
    %5828 = vmatpush1.msra.mxu0 %v5827
    %5829 = vmatprep.subr.mxu0 0.0
    %v5830 = vand.u32 %v3946, 4294901760
    %v5831 = vsub.f32 %v3946, %v5830
    %v5832 = vand.u32 %v5831, 4294901760
    %v5833 = vsub.f32 %v5831, %v5832
    %v5834 = vand.u32 %v5833, 4294901760
    %5835 = vmatpush1.msra.mxu0 %v5834
    %5836 = vmatprep.subr.mxu0 0.0
    %v5837 = vand.u32 %v3940, 4294901760
    %v5838 = vsub.f32 %v3940, %v5837
    %v5839 = vand.u32 %v5838, 4294901760
    %v5840 = vsub.f32 %v5838, %v5839
    %v5841 = vand.u32 %v5840, 4294901760
    %5842 = vmatpush1.msra.mxu0 %v5841
    %5843 = vmatprep.subr.mxu0 0.0
    %v5844 = vand.u32 %v3934, 4294901760
    %v5845 = vsub.f32 %v3934, %v5844
    %v5846 = vand.u32 %v5845, 4294901760
    %v5847 = vsub.f32 %v5845, %v5846
    %v5848 = vand.u32 %v5847, 4294901760
    %5849 = vmatpush1.msra.mxu0 %v5848
    %5850 = vmatprep.subr.mxu0 0.0
    %v5851 = vand.u32 %v3928, 4294901760
    %v5852 = vsub.f32 %v3928, %v5851
    %v5853 = vand.u32 %v5852, 4294901760
    %v5854 = vsub.f32 %v5852, %v5853
    %v5855 = vand.u32 %v5854, 4294901760
    %5856 = vmatpush1.msra.mxu0 %v5855
    %5857 = vmatprep.subr.mxu0 0.0
    %v5858 = vand.u32 %v3922, 4294901760
    %v5859 = vsub.f32 %v3922, %v5858
    %v5860 = vand.u32 %v5859, 4294901760
    %v5861 = vsub.f32 %v5859, %v5860
    %v5862 = vand.u32 %v5861, 4294901760
    %5863 = vmatpush1.msra.mxu0 %v5862
    %5864 = vmatprep.subr.mxu0 0.0
    %v5865 = vand.u32 %v3916, 4294901760
    %v5866 = vsub.f32 %v3916, %v5865
    %v5867 = vand.u32 %v5866, 4294901760
    %v5868 = vsub.f32 %v5866, %v5867
    %v5869 = vand.u32 %v5868, 4294901760
    %5870 = vmatpush1.msra.mxu0 %v5869
    %5871 = vmatprep.subr.mxu0 0.0
    %v5872 = vand.u32 %v3910, 4294901760
    %v5873 = vsub.f32 %v3910, %v5872
    %v5874 = vand.u32 %v5873, 4294901760
    %v5875 = vsub.f32 %v5873, %v5874
    %v5876 = vand.u32 %v5875, 4294901760
    %5877 = vmatpush1.msra.mxu0 %v5876
    %5878 = vmatprep.subr.mxu0 0.0
    %v5879 = vand.u32 %v3904, 4294901760
    %v5880 = vsub.f32 %v3904, %v5879
    %v5881 = vand.u32 %v5880, 4294901760
    %v5882 = vsub.f32 %v5880, %v5881
    %v5883 = vand.u32 %v5882, 4294901760
    %5884 = vmatpush1.msra.mxu0 %v5883
    %5885 = vmatprep.subr.mxu0 0.0
    %v5886 = vand.u32 %v3898, 4294901760
    %v5887 = vsub.f32 %v3898, %v5886
    %v5888 = vand.u32 %v5887, 4294901760
    %v5889 = vsub.f32 %v5887, %v5888
    %v5890 = vand.u32 %v5889, 4294901760
    %5891 = vmatpush1.msra.mxu0 %v5890
    %5892 = vmatprep.subr.mxu0 0.0
    %v5893 = vand.u32 %v3892, 4294901760
    %v5894 = vsub.f32 %v3892, %v5893
    %v5895 = vand.u32 %v5894, 4294901760
    %v5896 = vsub.f32 %v5894, %v5895
    %v5897 = vand.u32 %v5896, 4294901760
    %5898 = vmatpush1.msra.mxu0 %v5897
    %5899 = vmatprep.subr.mxu0 0.0
    %v5900 = vand.u32 %v3886, 4294901760
    %v5901 = vsub.f32 %v3886, %v5900
    %v5902 = vand.u32 %v5901, 4294901760
    %v5903 = vsub.f32 %v5901, %v5902
    %v5904 = vand.u32 %v5903, 4294901760
    %5905 = vmatpush1.msra.mxu0 %v5904
    %5906 = vmatprep.subr.mxu0 0.0
    %5907 = vmatpush2.msra.mxu0 0.0
    %5908 = vmatprep.subr.mxu0 0.0
    %5909 = vmatpush2.msra.mxu0 0.0
    %5910 = vmatprep.subr.mxu0 0.0
    %5911 = vmatpush2.msra.mxu0 0.0
    %5912 = vmatprep.subr.mxu0 0.0
    %5913 = vmatpush2.msra.mxu0 0.0
    %5914 = vmatprep.subr.mxu0 0.0
    %5915 = vmatpush2.msra.mxu0 0.0
    %5916 = vmatprep.subr.mxu0 0.0
    %5917 = vmatpush2.msra.mxu0 0.0
    %5918 = vmatprep.subr.mxu0 0.0
    %5919 = vmatpush2.msra.mxu0 0.0
    %5920 = vmatprep.subr.mxu0 0.0
    %5921 = vmatpush2.msra.mxu0 0.0
    %5922 = vmatprep.subr.mxu0 0.0
    %5923 = vmatpush2.msra.mxu0 0.0
    %5924 = vmatprep.subr.mxu0 0.0
    %5925 = vmatpush2.msra.mxu0 0.0
    %5926 = vmatprep.subr.mxu0 0.0
    %5927 = vmatpush2.msra.mxu0 0.0
    %5928 = vmatprep.subr.mxu0 0.0
    %5929 = vmatpush2.msra.mxu0 0.0
    %5930 = vmatprep.subr.mxu0 0.0
    %5931 = vmatpush2.msra.mxu0 0.0
    %5932 = vmatprep.subr.mxu0 0.0
    %5933 = vmatpush2.msra.mxu0 0.0
    %5934 = vmatprep.subr.mxu0 0.0
    %5935 = vmatpush2.msra.mxu0 0.0
    %5936 = vmatprep.subr.mxu0 0.0
    %5937 = vmatpush2.msra.mxu0 0.0
    %5938 = vmatprep.mubr.f32.mxu0 0.0
    %v5939 = vand.u32 %v104, 4294901760
    %5940 = vmatmul.mubr.f32.gmra.mxu0 %v5939
    %v5941 = vpop.f32.mrf.mxu0
    %v5942 = vadd.f32 %v5641, %v5941
    %v5943 = vpop.f32.mrf.mxu0
    %5944 = vmatprep.mubr.f32.mxu0 0.0
    %v5945 = vand.u32 %v105, 4294901760
    %5946 = vmatmul.mubr.f32.gmra.mxu0 %v5945
    %v5947 = vpop.f32.mrf.mxu0
    %v5948 = vadd.f32 %v5651, %v5947
    %v5949 = vpop.f32.mrf.mxu0
    %5950 = vmatprep.mubr.f32.mxu0 0.0
    %v5951 = vand.u32 %v106, 4294901760
    %5952 = vmatmul.mubr.f32.gmra.mxu0 %v5951
    %v5953 = vpop.f32.mrf.mxu0
    %v5954 = vadd.f32 %v5661, %v5953
    %v5955 = vpop.f32.mrf.mxu0
    %5956 = vmatprep.mubr.f32.mxu0 0.0
    %v5957 = vand.u32 %v107, 4294901760
    %5958 = vmatmul.mubr.f32.gmra.mxu0 %v5957
    %v5959 = vpop.f32.mrf.mxu0
    %v5960 = vadd.f32 %v5671, %v5959
    %v5961 = vpop.f32.mrf.mxu0
    %5962 = vmatprep.mubr.f32.mxu0 0.0
    %v5963 = vand.u32 %v108, 4294901760
    %5964 = vmatmul.mubr.f32.gmra.mxu0 %v5963
    %v5965 = vpop.f32.mrf.mxu0
    %v5966 = vadd.f32 %v5681, %v5965
    %v5967 = vpop.f32.mrf.mxu0
    %5968 = vmatprep.mubr.f32.mxu0 0.0
    %v5969 = vand.u32 %v109, 4294901760
    %5970 = vmatmul.mubr.f32.gmra.mxu0 %v5969
    %v5971 = vpop.f32.mrf.mxu0
    %v5972 = vadd.f32 %v5691, %v5971
    %v5973 = vpop.f32.mrf.mxu0
    %5974 = vmatprep.mubr.f32.mxu0 0.0
    %v5975 = vand.u32 %v110, 4294901760
    %5976 = vmatmul.mubr.f32.gmra.mxu0 %v5975
    %v5977 = vpop.f32.mrf.mxu0
    %v5978 = vadd.f32 %v5701, %v5977
    %v5979 = vpop.f32.mrf.mxu0
    %5980 = vmatprep.mubr.f32.mxu0 0.0
    %v5981 = vand.u32 %v111, 4294901760
    %5982 = vmatmul.mubr.f32.gmra.mxu0 %v5981
    %v5983 = vpop.f32.mrf.mxu0
    %v5984 = vadd.f32 %v5711, %v5983
    %v5985 = vpop.f32.mrf.mxu0
    %5986 = vmatprep.mubr.f32.mxu0 0.0
    %v5987 = vand.u32 %v112, 4294901760
    %5988 = vmatmul.mubr.f32.gmra.mxu0 %v5987
    %v5989 = vpop.f32.mrf.mxu0
    %v5990 = vadd.f32 %v5721, %v5989
    %v5991 = vpop.f32.mrf.mxu0
    %5992 = vmatprep.mubr.f32.mxu0 0.0
    %v5993 = vand.u32 %v113, 4294901760
    %5994 = vmatmul.mubr.f32.gmra.mxu0 %v5993
    %v5995 = vpop.f32.mrf.mxu0
    %v5996 = vadd.f32 %v5731, %v5995
    %v5997 = vpop.f32.mrf.mxu0
    %5998 = vmatprep.mubr.f32.mxu0 0.0
    %v5999 = vand.u32 %v114, 4294901760
    %6000 = vmatmul.mubr.f32.gmra.mxu0 %v5999
    %v6001 = vpop.f32.mrf.mxu0
    %v6002 = vadd.f32 %v5741, %v6001
    %v6003 = vpop.f32.mrf.mxu0
    %6004 = vmatprep.mubr.f32.mxu0 0.0
    %v6005 = vand.u32 %v115, 4294901760
    %6006 = vmatmul.mubr.f32.gmra.mxu0 %v6005
    %v6007 = vpop.f32.mrf.mxu0
    %v6008 = vadd.f32 %v5751, %v6007
    %v6009 = vpop.f32.mrf.mxu0
    %6010 = vmatprep.mubr.f32.mxu0 0.0
    %v6011 = vand.u32 %v116, 4294901760
    %6012 = vmatmul.mubr.f32.gmra.mxu0 %v6011
    %v6013 = vpop.f32.mrf.mxu0
    %v6014 = vadd.f32 %v5761, %v6013
    %v6015 = vpop.f32.mrf.mxu0
    %6016 = vmatprep.mubr.f32.mxu0 0.0
    %v6017 = vand.u32 %v117, 4294901760
    %6018 = vmatmul.mubr.f32.gmra.mxu0 %v6017
    %v6019 = vpop.f32.mrf.mxu0
    %v6020 = vadd.f32 %v5771, %v6019
    %v6021 = vpop.f32.mrf.mxu0
    %6022 = vmatprep.mubr.f32.mxu0 0.0
    %v6023 = vand.u32 %v118, 4294901760
    %6024 = vmatmul.mubr.f32.gmra.mxu0 %v6023
    %v6025 = vpop.f32.mrf.mxu0
    %v6026 = vadd.f32 %v5781, %v6025
    %v6027 = vpop.f32.mrf.mxu0
    %6028 = vmatprep.mubr.f32.mxu0 0.0
    %v6029 = vand.u32 %v119, 4294901760
    %6030 = vmatmul.mubr.f32.gmra.mxu0 %v6029
    %v6031 = vpop.f32.mrf.mxu0
    %v6032 = vadd.f32 %v5791, %v6031
    %v6033 = vpop.f32.mrf.mxu0
    %6034 = vdwg.mxu0
    %6035 = vmatprep.subr.mxu0 0.0
    %v6036 = vand.u32 %v3976, 4294901760
    %v6037 = vsub.f32 %v3976, %v6036
    %6038 = vmatpush1.msra.mxu0 %v6037
    %6039 = vmatprep.subr.mxu0 0.0
    %v6040 = vand.u32 %v3970, 4294901760
    %v6041 = vsub.f32 %v3970, %v6040
    %6042 = vmatpush1.msra.mxu0 %v6041
    %6043 = vmatprep.subr.mxu0 0.0
    %v6044 = vand.u32 %v3964, 4294901760
    %v6045 = vsub.f32 %v3964, %v6044
    %6046 = vmatpush1.msra.mxu0 %v6045
    %6047 = vmatprep.subr.mxu0 0.0
    %v6048 = vand.u32 %v3958, 4294901760
    %v6049 = vsub.f32 %v3958, %v6048
    %6050 = vmatpush1.msra.mxu0 %v6049
    %6051 = vmatprep.subr.mxu0 0.0
    %v6052 = vand.u32 %v3952, 4294901760
    %v6053 = vsub.f32 %v3952, %v6052
    %6054 = vmatpush1.msra.mxu0 %v6053
    %6055 = vmatprep.subr.mxu0 0.0
    %v6056 = vand.u32 %v3946, 4294901760
    %v6057 = vsub.f32 %v3946, %v6056
    %6058 = vmatpush1.msra.mxu0 %v6057
    %6059 = vmatprep.subr.mxu0 0.0
    %v6060 = vand.u32 %v3940, 4294901760
    %v6061 = vsub.f32 %v3940, %v6060
    %6062 = vmatpush1.msra.mxu0 %v6061
    %6063 = vmatprep.subr.mxu0 0.0
    %v6064 = vand.u32 %v3934, 4294901760
    %v6065 = vsub.f32 %v3934, %v6064
    %6066 = vmatpush1.msra.mxu0 %v6065
    %6067 = vmatprep.subr.mxu0 0.0
    %v6068 = vand.u32 %v3928, 4294901760
    %v6069 = vsub.f32 %v3928, %v6068
    %6070 = vmatpush1.msra.mxu0 %v6069
    %6071 = vmatprep.subr.mxu0 0.0
    %v6072 = vand.u32 %v3922, 4294901760
    %v6073 = vsub.f32 %v3922, %v6072
    %6074 = vmatpush1.msra.mxu0 %v6073
    %6075 = vmatprep.subr.mxu0 0.0
    %v6076 = vand.u32 %v3916, 4294901760
    %v6077 = vsub.f32 %v3916, %v6076
    %6078 = vmatpush1.msra.mxu0 %v6077
    %6079 = vmatprep.subr.mxu0 0.0
    %v6080 = vand.u32 %v3910, 4294901760
    %v6081 = vsub.f32 %v3910, %v6080
    %6082 = vmatpush1.msra.mxu0 %v6081
    %6083 = vmatprep.subr.mxu0 0.0
    %v6084 = vand.u32 %v3904, 4294901760
    %v6085 = vsub.f32 %v3904, %v6084
    %6086 = vmatpush1.msra.mxu0 %v6085
    %6087 = vmatprep.subr.mxu0 0.0
    %v6088 = vand.u32 %v3898, 4294901760
    %v6089 = vsub.f32 %v3898, %v6088
    %6090 = vmatpush1.msra.mxu0 %v6089
    %6091 = vmatprep.subr.mxu0 0.0
    %v6092 = vand.u32 %v3892, 4294901760
    %v6093 = vsub.f32 %v3892, %v6092
    %6094 = vmatpush1.msra.mxu0 %v6093
    %6095 = vmatprep.subr.mxu0 0.0
    %v6096 = vand.u32 %v3886, 4294901760
    %v6097 = vsub.f32 %v3886, %v6096
    %6098 = vmatpush1.msra.mxu0 %v6097
    %6099 = vmatprep.subr.mxu0 0.0
    %6100 = vmatpush2.msra.mxu0 0.0
    %6101 = vmatprep.subr.mxu0 0.0
    %6102 = vmatpush2.msra.mxu0 0.0
    %6103 = vmatprep.subr.mxu0 0.0
    %6104 = vmatpush2.msra.mxu0 0.0
    %6105 = vmatprep.subr.mxu0 0.0
    %6106 = vmatpush2.msra.mxu0 0.0
    %6107 = vmatprep.subr.mxu0 0.0
    %6108 = vmatpush2.msra.mxu0 0.0
    %6109 = vmatprep.subr.mxu0 0.0
    %6110 = vmatpush2.msra.mxu0 0.0
    %6111 = vmatprep.subr.mxu0 0.0
    %6112 = vmatpush2.msra.mxu0 0.0
    %6113 = vmatprep.subr.mxu0 0.0
    %6114 = vmatpush2.msra.mxu0 0.0
    %6115 = vmatprep.subr.mxu0 0.0
    %6116 = vmatpush2.msra.mxu0 0.0
    %6117 = vmatprep.subr.mxu0 0.0
    %6118 = vmatpush2.msra.mxu0 0.0
    %6119 = vmatprep.subr.mxu0 0.0
    %6120 = vmatpush2.msra.mxu0 0.0
    %6121 = vmatprep.subr.mxu0 0.0
    %6122 = vmatpush2.msra.mxu0 0.0
    %6123 = vmatprep.subr.mxu0 0.0
    %6124 = vmatpush2.msra.mxu0 0.0
    %6125 = vmatprep.subr.mxu0 0.0
    %6126 = vmatpush2.msra.mxu0 0.0
    %6127 = vmatprep.subr.mxu0 0.0
    %6128 = vmatpush2.msra.mxu0 0.0
    %6129 = vmatprep.subr.mxu0 0.0
    %6130 = vmatpush2.msra.mxu0 0.0
    %6131 = vmatprep.mubr.f32.mxu0 0.0
    %v6132 = vand.u32 %v104, 4294901760
    %v6133 = vsub.f32 %v104, %v6132
    %6134 = vmatmul.mubr.f32.gmra.mxu0 %v6133
    %v6135 = vpop.f32.mrf.mxu0
    %v6136 = vadd.f32 %v5942, %v6135
    %v6137 = vpop.f32.mrf.mxu0
    %6138 = vmatprep.mubr.f32.mxu0 0.0
    %v6139 = vand.u32 %v105, 4294901760
    %v6140 = vsub.f32 %v105, %v6139
    %6141 = vmatmul.mubr.f32.gmra.mxu0 %v6140
    %v6142 = vpop.f32.mrf.mxu0
    %v6143 = vadd.f32 %v5948, %v6142
    %v6144 = vpop.f32.mrf.mxu0
    %6145 = vmatprep.mubr.f32.mxu0 0.0
    %v6146 = vand.u32 %v106, 4294901760
    %v6147 = vsub.f32 %v106, %v6146
    %6148 = vmatmul.mubr.f32.gmra.mxu0 %v6147
    %v6149 = vpop.f32.mrf.mxu0
    %v6150 = vadd.f32 %v5954, %v6149
    %v6151 = vpop.f32.mrf.mxu0
    %6152 = vmatprep.mubr.f32.mxu0 0.0
    %v6153 = vand.u32 %v107, 4294901760
    %v6154 = vsub.f32 %v107, %v6153
    %6155 = vmatmul.mubr.f32.gmra.mxu0 %v6154
    %v6156 = vpop.f32.mrf.mxu0
    %v6157 = vadd.f32 %v5960, %v6156
    %v6158 = vpop.f32.mrf.mxu0
    %6159 = vmatprep.mubr.f32.mxu0 0.0
    %v6160 = vand.u32 %v108, 4294901760
    %v6161 = vsub.f32 %v108, %v6160
    %6162 = vmatmul.mubr.f32.gmra.mxu0 %v6161
    %v6163 = vpop.f32.mrf.mxu0
    %v6164 = vadd.f32 %v5966, %v6163
    %v6165 = vpop.f32.mrf.mxu0
    %6166 = vmatprep.mubr.f32.mxu0 0.0
    %v6167 = vand.u32 %v109, 4294901760
    %v6168 = vsub.f32 %v109, %v6167
    %6169 = vmatmul.mubr.f32.gmra.mxu0 %v6168
    %v6170 = vpop.f32.mrf.mxu0
    %v6171 = vadd.f32 %v5972, %v6170
    %v6172 = vpop.f32.mrf.mxu0
    %6173 = vmatprep.mubr.f32.mxu0 0.0
    %v6174 = vand.u32 %v110, 4294901760
    %v6175 = vsub.f32 %v110, %v6174
    %6176 = vmatmul.mubr.f32.gmra.mxu0 %v6175
    %v6177 = vpop.f32.mrf.mxu0
    %v6178 = vadd.f32 %v5978, %v6177
    %v6179 = vpop.f32.mrf.mxu0
    %6180 = vmatprep.mubr.f32.mxu0 0.0
    %v6181 = vand.u32 %v111, 4294901760
    %v6182 = vsub.f32 %v111, %v6181
    %6183 = vmatmul.mubr.f32.gmra.mxu0 %v6182
    %v6184 = vpop.f32.mrf.mxu0
    %v6185 = vadd.f32 %v5984, %v6184
    %v6186 = vpop.f32.mrf.mxu0
    %6187 = vmatprep.mubr.f32.mxu0 0.0
    %v6188 = vand.u32 %v112, 4294901760
    %v6189 = vsub.f32 %v112, %v6188
    %6190 = vmatmul.mubr.f32.gmra.mxu0 %v6189
    %v6191 = vpop.f32.mrf.mxu0
    %v6192 = vadd.f32 %v5990, %v6191
    %v6193 = vpop.f32.mrf.mxu0
    %6194 = vmatprep.mubr.f32.mxu0 0.0
    %v6195 = vand.u32 %v113, 4294901760
    %v6196 = vsub.f32 %v113, %v6195
    %6197 = vmatmul.mubr.f32.gmra.mxu0 %v6196
    %v6198 = vpop.f32.mrf.mxu0
    %v6199 = vadd.f32 %v5996, %v6198
    %v6200 = vpop.f32.mrf.mxu0
    %6201 = vmatprep.mubr.f32.mxu0 0.0
    %v6202 = vand.u32 %v114, 4294901760
    %v6203 = vsub.f32 %v114, %v6202
    %6204 = vmatmul.mubr.f32.gmra.mxu0 %v6203
    %v6205 = vpop.f32.mrf.mxu0
    %v6206 = vadd.f32 %v6002, %v6205
    %v6207 = vpop.f32.mrf.mxu0
    %6208 = vmatprep.mubr.f32.mxu0 0.0
    %v6209 = vand.u32 %v115, 4294901760
    %v6210 = vsub.f32 %v115, %v6209
    %6211 = vmatmul.mubr.f32.gmra.mxu0 %v6210
    %v6212 = vpop.f32.mrf.mxu0
    %v6213 = vadd.f32 %v6008, %v6212
    %v6214 = vpop.f32.mrf.mxu0
    %6215 = vmatprep.mubr.f32.mxu0 0.0
    %v6216 = vand.u32 %v116, 4294901760
    %v6217 = vsub.f32 %v116, %v6216
    %6218 = vmatmul.mubr.f32.gmra.mxu0 %v6217
    %v6219 = vpop.f32.mrf.mxu0
    %v6220 = vadd.f32 %v6014, %v6219
    %v6221 = vpop.f32.mrf.mxu0
    %6222 = vmatprep.mubr.f32.mxu0 0.0
    %v6223 = vand.u32 %v117, 4294901760
    %v6224 = vsub.f32 %v117, %v6223
    %6225 = vmatmul.mubr.f32.gmra.mxu0 %v6224
    %v6226 = vpop.f32.mrf.mxu0
    %v6227 = vadd.f32 %v6020, %v6226
    %v6228 = vpop.f32.mrf.mxu0
    %6229 = vmatprep.mubr.f32.mxu0 0.0
    %v6230 = vand.u32 %v118, 4294901760
    %v6231 = vsub.f32 %v118, %v6230
    %6232 = vmatmul.mubr.f32.gmra.mxu0 %v6231
    %v6233 = vpop.f32.mrf.mxu0
    %v6234 = vadd.f32 %v6026, %v6233
    %v6235 = vpop.f32.mrf.mxu0
    %6236 = vmatprep.mubr.f32.mxu0 0.0
    %v6237 = vand.u32 %v119, 4294901760
    %v6238 = vsub.f32 %v119, %v6237
    %6239 = vmatmul.mubr.f32.gmra.mxu0 %v6238
    %v6240 = vpop.f32.mrf.mxu0
    %v6241 = vadd.f32 %v6032, %v6240
    %v6242 = vpop.f32.mrf.mxu0
    %6243 = vdwg.mxu0
    %6244 = vmatprep.subr.mxu0 0.0
    %v6245 = vand.u32 %v3976, 4294901760
    %6246 = vmatpush1.msra.mxu0 %v6245
    %6247 = vmatprep.subr.mxu0 0.0
    %v6248 = vand.u32 %v3970, 4294901760
    %6249 = vmatpush1.msra.mxu0 %v6248
    %6250 = vmatprep.subr.mxu0 0.0
    %v6251 = vand.u32 %v3964, 4294901760
    %6252 = vmatpush1.msra.mxu0 %v6251
    %6253 = vmatprep.subr.mxu0 0.0
    %v6254 = vand.u32 %v3958, 4294901760
    %6255 = vmatpush1.msra.mxu0 %v6254
    %6256 = vmatprep.subr.mxu0 0.0
    %v6257 = vand.u32 %v3952, 4294901760
    %6258 = vmatpush1.msra.mxu0 %v6257
    %6259 = vmatprep.subr.mxu0 0.0
    %v6260 = vand.u32 %v3946, 4294901760
    %6261 = vmatpush1.msra.mxu0 %v6260
    %6262 = vmatprep.subr.mxu0 0.0
    %v6263 = vand.u32 %v3940, 4294901760
    %6264 = vmatpush1.msra.mxu0 %v6263
    %6265 = vmatprep.subr.mxu0 0.0
    %v6266 = vand.u32 %v3934, 4294901760
    %6267 = vmatpush1.msra.mxu0 %v6266
    %6268 = vmatprep.subr.mxu0 0.0
    %v6269 = vand.u32 %v3928, 4294901760
    %6270 = vmatpush1.msra.mxu0 %v6269
    %6271 = vmatprep.subr.mxu0 0.0
    %v6272 = vand.u32 %v3922, 4294901760
    %6273 = vmatpush1.msra.mxu0 %v6272
    %6274 = vmatprep.subr.mxu0 0.0
    %v6275 = vand.u32 %v3916, 4294901760
    %6276 = vmatpush1.msra.mxu0 %v6275
    %6277 = vmatprep.subr.mxu0 0.0
    %v6278 = vand.u32 %v3910, 4294901760
    %6279 = vmatpush1.msra.mxu0 %v6278
    %6280 = vmatprep.subr.mxu0 0.0
    %v6281 = vand.u32 %v3904, 4294901760
    %6282 = vmatpush1.msra.mxu0 %v6281
    %6283 = vmatprep.subr.mxu0 0.0
    %v6284 = vand.u32 %v3898, 4294901760
    %6285 = vmatpush1.msra.mxu0 %v6284
    %6286 = vmatprep.subr.mxu0 0.0
    %v6287 = vand.u32 %v3892, 4294901760
    %6288 = vmatpush1.msra.mxu0 %v6287
    %6289 = vmatprep.subr.mxu0 0.0
    %v6290 = vand.u32 %v3886, 4294901760
    %6291 = vmatpush1.msra.mxu0 %v6290
    %6292 = vmatprep.subr.mxu0 0.0
    %6293 = vmatpush2.msra.mxu0 0.0
    %6294 = vmatprep.subr.mxu0 0.0
    %6295 = vmatpush2.msra.mxu0 0.0
    %6296 = vmatprep.subr.mxu0 0.0
    %6297 = vmatpush2.msra.mxu0 0.0
    %6298 = vmatprep.subr.mxu0 0.0
    %6299 = vmatpush2.msra.mxu0 0.0
    %6300 = vmatprep.subr.mxu0 0.0
    %6301 = vmatpush2.msra.mxu0 0.0
    %6302 = vmatprep.subr.mxu0 0.0
    %6303 = vmatpush2.msra.mxu0 0.0
    %6304 = vmatprep.subr.mxu0 0.0
    %6305 = vmatpush2.msra.mxu0 0.0
    %6306 = vmatprep.subr.mxu0 0.0
    %6307 = vmatpush2.msra.mxu0 0.0
    %6308 = vmatprep.subr.mxu0 0.0
    %6309 = vmatpush2.msra.mxu0 0.0
    %6310 = vmatprep.subr.mxu0 0.0
    %6311 = vmatpush2.msra.mxu0 0.0
    %6312 = vmatprep.subr.mxu0 0.0
    %6313 = vmatpush2.msra.mxu0 0.0
    %6314 = vmatprep.subr.mxu0 0.0
    %6315 = vmatpush2.msra.mxu0 0.0
    %6316 = vmatprep.subr.mxu0 0.0
    %6317 = vmatpush2.msra.mxu0 0.0
    %6318 = vmatprep.subr.mxu0 0.0
    %6319 = vmatpush2.msra.mxu0 0.0
    %6320 = vmatprep.subr.mxu0 0.0
    %6321 = vmatpush2.msra.mxu0 0.0
    %6322 = vmatprep.subr.mxu0 0.0
    %6323 = vmatpush2.msra.mxu0 0.0
    %6324 = vmatprep.mubr.f32.mxu0 0.0
    %v6325 = vand.u32 %v104, 4294901760
    %v6326 = vsub.f32 %v104, %v6325
    %v6327 = vand.u32 %v6326, 4294901760
    %6328 = vmatmul.mubr.f32.gmra.mxu0 %v6327
    %v6329 = vpop.f32.mrf.mxu0
    %v6330 = vadd.f32 %v6136, %v6329
    %v6331 = vpop.f32.mrf.mxu0
    %6332 = vmatprep.mubr.f32.mxu0 0.0
    %v6333 = vand.u32 %v105, 4294901760
    %v6334 = vsub.f32 %v105, %v6333
    %v6335 = vand.u32 %v6334, 4294901760
    %6336 = vmatmul.mubr.f32.gmra.mxu0 %v6335
    %v6337 = vpop.f32.mrf.mxu0
    %v6338 = vadd.f32 %v6143, %v6337
    %v6339 = vpop.f32.mrf.mxu0
    %6340 = vmatprep.mubr.f32.mxu0 0.0
    %v6341 = vand.u32 %v106, 4294901760
    %v6342 = vsub.f32 %v106, %v6341
    %v6343 = vand.u32 %v6342, 4294901760
    %6344 = vmatmul.mubr.f32.gmra.mxu0 %v6343
    %v6345 = vpop.f32.mrf.mxu0
    %v6346 = vadd.f32 %v6150, %v6345
    %v6347 = vpop.f32.mrf.mxu0
    %6348 = vmatprep.mubr.f32.mxu0 0.0
    %v6349 = vand.u32 %v107, 4294901760
    %v6350 = vsub.f32 %v107, %v6349
    %v6351 = vand.u32 %v6350, 4294901760
    %6352 = vmatmul.mubr.f32.gmra.mxu0 %v6351
    %v6353 = vpop.f32.mrf.mxu0
    %v6354 = vadd.f32 %v6157, %v6353
    %v6355 = vpop.f32.mrf.mxu0
    %6356 = vmatprep.mubr.f32.mxu0 0.0
    %v6357 = vand.u32 %v108, 4294901760
    %v6358 = vsub.f32 %v108, %v6357
    %v6359 = vand.u32 %v6358, 4294901760
    %6360 = vmatmul.mubr.f32.gmra.mxu0 %v6359
    %v6361 = vpop.f32.mrf.mxu0
    %v6362 = vadd.f32 %v6164, %v6361
    %v6363 = vpop.f32.mrf.mxu0
    %6364 = vmatprep.mubr.f32.mxu0 0.0
    %v6365 = vand.u32 %v109, 4294901760
    %v6366 = vsub.f32 %v109, %v6365
    %v6367 = vand.u32 %v6366, 4294901760
    %6368 = vmatmul.mubr.f32.gmra.mxu0 %v6367
    %v6369 = vpop.f32.mrf.mxu0
    %v6370 = vadd.f32 %v6171, %v6369
    %v6371 = vpop.f32.mrf.mxu0
    %6372 = vmatprep.mubr.f32.mxu0 0.0
    %v6373 = vand.u32 %v110, 4294901760
    %v6374 = vsub.f32 %v110, %v6373
    %v6375 = vand.u32 %v6374, 4294901760
    %6376 = vmatmul.mubr.f32.gmra.mxu0 %v6375
    %v6377 = vpop.f32.mrf.mxu0
    %v6378 = vadd.f32 %v6178, %v6377
    %v6379 = vpop.f32.mrf.mxu0
    %6380 = vmatprep.mubr.f32.mxu0 0.0
    %v6381 = vand.u32 %v111, 4294901760
    %v6382 = vsub.f32 %v111, %v6381
    %v6383 = vand.u32 %v6382, 4294901760
    %6384 = vmatmul.mubr.f32.gmra.mxu0 %v6383
    %v6385 = vpop.f32.mrf.mxu0
    %v6386 = vadd.f32 %v6185, %v6385
    %v6387 = vpop.f32.mrf.mxu0
    %6388 = vmatprep.mubr.f32.mxu0 0.0
    %v6389 = vand.u32 %v112, 4294901760
    %v6390 = vsub.f32 %v112, %v6389
    %v6391 = vand.u32 %v6390, 4294901760
    %6392 = vmatmul.mubr.f32.gmra.mxu0 %v6391
    %v6393 = vpop.f32.mrf.mxu0
    %v6394 = vadd.f32 %v6192, %v6393
    %v6395 = vpop.f32.mrf.mxu0
    %6396 = vmatprep.mubr.f32.mxu0 0.0
    %v6397 = vand.u32 %v113, 4294901760
    %v6398 = vsub.f32 %v113, %v6397
    %v6399 = vand.u32 %v6398, 4294901760
    %6400 = vmatmul.mubr.f32.gmra.mxu0 %v6399
    %v6401 = vpop.f32.mrf.mxu0
    %v6402 = vadd.f32 %v6199, %v6401
    %v6403 = vpop.f32.mrf.mxu0
    %6404 = vmatprep.mubr.f32.mxu0 0.0
    %v6405 = vand.u32 %v114, 4294901760
    %v6406 = vsub.f32 %v114, %v6405
    %v6407 = vand.u32 %v6406, 4294901760
    %6408 = vmatmul.mubr.f32.gmra.mxu0 %v6407
    %v6409 = vpop.f32.mrf.mxu0
    %v6410 = vadd.f32 %v6206, %v6409
    %v6411 = vpop.f32.mrf.mxu0
    %6412 = vmatprep.mubr.f32.mxu0 0.0
    %v6413 = vand.u32 %v115, 4294901760
    %v6414 = vsub.f32 %v115, %v6413
    %v6415 = vand.u32 %v6414, 4294901760
    %6416 = vmatmul.mubr.f32.gmra.mxu0 %v6415
    %v6417 = vpop.f32.mrf.mxu0
    %v6418 = vadd.f32 %v6213, %v6417
    %v6419 = vpop.f32.mrf.mxu0
    %6420 = vmatprep.mubr.f32.mxu0 0.0
    %v6421 = vand.u32 %v116, 4294901760
    %v6422 = vsub.f32 %v116, %v6421
    %v6423 = vand.u32 %v6422, 4294901760
    %6424 = vmatmul.mubr.f32.gmra.mxu0 %v6423
    %v6425 = vpop.f32.mrf.mxu0
    %v6426 = vadd.f32 %v6220, %v6425
    %v6427 = vpop.f32.mrf.mxu0
    %6428 = vmatprep.mubr.f32.mxu0 0.0
    %v6429 = vand.u32 %v117, 4294901760
    %v6430 = vsub.f32 %v117, %v6429
    %v6431 = vand.u32 %v6430, 4294901760
    %6432 = vmatmul.mubr.f32.gmra.mxu0 %v6431
    %v6433 = vpop.f32.mrf.mxu0
    %v6434 = vadd.f32 %v6227, %v6433
    %v6435 = vpop.f32.mrf.mxu0
    %6436 = vmatprep.mubr.f32.mxu0 0.0
    %v6437 = vand.u32 %v118, 4294901760
    %v6438 = vsub.f32 %v118, %v6437
    %v6439 = vand.u32 %v6438, 4294901760
    %6440 = vmatmul.mubr.f32.gmra.mxu0 %v6439
    %v6441 = vpop.f32.mrf.mxu0
    %v6442 = vadd.f32 %v6234, %v6441
    %v6443 = vpop.f32.mrf.mxu0
    %6444 = vmatprep.mubr.f32.mxu0 0.0
    %v6445 = vand.u32 %v119, 4294901760
    %v6446 = vsub.f32 %v119, %v6445
    %v6447 = vand.u32 %v6446, 4294901760
    %6448 = vmatmul.mubr.f32.gmra.mxu0 %v6447
    %v6449 = vpop.f32.mrf.mxu0
    %v6450 = vadd.f32 %v6241, %v6449
    %v6451 = vpop.f32.mrf.mxu0
    %6452 = vdwg.mxu0
    %6453 = vmatprep.subr.mxu0 0.0
    %v6454 = vand.u32 %v3976, 4294901760
    %v6455 = vsub.f32 %v3976, %v6454
    %v6456 = vand.u32 %v6455, 4294901760
    %6457 = vmatpush1.msra.mxu0 %v6456
    %6458 = vmatprep.subr.mxu0 0.0
    %v6459 = vand.u32 %v3970, 4294901760
    %v6460 = vsub.f32 %v3970, %v6459
    %v6461 = vand.u32 %v6460, 4294901760
    %6462 = vmatpush1.msra.mxu0 %v6461
    %6463 = vmatprep.subr.mxu0 0.0
    %v6464 = vand.u32 %v3964, 4294901760
    %v6465 = vsub.f32 %v3964, %v6464
    %v6466 = vand.u32 %v6465, 4294901760
    %6467 = vmatpush1.msra.mxu0 %v6466
    %6468 = vmatprep.subr.mxu0 0.0
    %v6469 = vand.u32 %v3958, 4294901760
    %v6470 = vsub.f32 %v3958, %v6469
    %v6471 = vand.u32 %v6470, 4294901760
    %6472 = vmatpush1.msra.mxu0 %v6471
    %6473 = vmatprep.subr.mxu0 0.0
    %v6474 = vand.u32 %v3952, 4294901760
    %v6475 = vsub.f32 %v3952, %v6474
    %v6476 = vand.u32 %v6475, 4294901760
    %6477 = vmatpush1.msra.mxu0 %v6476
    %6478 = vmatprep.subr.mxu0 0.0
    %v6479 = vand.u32 %v3946, 4294901760
    %v6480 = vsub.f32 %v3946, %v6479
    %v6481 = vand.u32 %v6480, 4294901760
    %6482 = vmatpush1.msra.mxu0 %v6481
    %6483 = vmatprep.subr.mxu0 0.0
    %v6484 = vand.u32 %v3940, 4294901760
    %v6485 = vsub.f32 %v3940, %v6484
    %v6486 = vand.u32 %v6485, 4294901760
    %6487 = vmatpush1.msra.mxu0 %v6486
    %6488 = vmatprep.subr.mxu0 0.0
    %v6489 = vand.u32 %v3934, 4294901760
    %v6490 = vsub.f32 %v3934, %v6489
    %v6491 = vand.u32 %v6490, 4294901760
    %6492 = vmatpush1.msra.mxu0 %v6491
    %6493 = vmatprep.subr.mxu0 0.0
    %v6494 = vand.u32 %v3928, 4294901760
    %v6495 = vsub.f32 %v3928, %v6494
    %v6496 = vand.u32 %v6495, 4294901760
    %6497 = vmatpush1.msra.mxu0 %v6496
    %6498 = vmatprep.subr.mxu0 0.0
    %v6499 = vand.u32 %v3922, 4294901760
    %v6500 = vsub.f32 %v3922, %v6499
    %v6501 = vand.u32 %v6500, 4294901760
    %6502 = vmatpush1.msra.mxu0 %v6501
    %6503 = vmatprep.subr.mxu0 0.0
    %v6504 = vand.u32 %v3916, 4294901760
    %v6505 = vsub.f32 %v3916, %v6504
    %v6506 = vand.u32 %v6505, 4294901760
    %6507 = vmatpush1.msra.mxu0 %v6506
    %6508 = vmatprep.subr.mxu0 0.0
    %v6509 = vand.u32 %v3910, 4294901760
    %v6510 = vsub.f32 %v3910, %v6509
    %v6511 = vand.u32 %v6510, 4294901760
    %6512 = vmatpush1.msra.mxu0 %v6511
    %6513 = vmatprep.subr.mxu0 0.0
    %v6514 = vand.u32 %v3904, 4294901760
    %v6515 = vsub.f32 %v3904, %v6514
    %v6516 = vand.u32 %v6515, 4294901760
    %6517 = vmatpush1.msra.mxu0 %v6516
    %6518 = vmatprep.subr.mxu0 0.0
    %v6519 = vand.u32 %v3898, 4294901760
    %v6520 = vsub.f32 %v3898, %v6519
    %v6521 = vand.u32 %v6520, 4294901760
    %6522 = vmatpush1.msra.mxu0 %v6521
    %6523 = vmatprep.subr.mxu0 0.0
    %v6524 = vand.u32 %v3892, 4294901760
    %v6525 = vsub.f32 %v3892, %v6524
    %v6526 = vand.u32 %v6525, 4294901760
    %6527 = vmatpush1.msra.mxu0 %v6526
    %6528 = vmatprep.subr.mxu0 0.0
    %v6529 = vand.u32 %v3886, 4294901760
    %v6530 = vsub.f32 %v3886, %v6529
    %v6531 = vand.u32 %v6530, 4294901760
    %6532 = vmatpush1.msra.mxu0 %v6531
    %6533 = vmatprep.subr.mxu0 0.0
    %6534 = vmatpush2.msra.mxu0 0.0
    %6535 = vmatprep.subr.mxu0 0.0
    %6536 = vmatpush2.msra.mxu0 0.0
    %6537 = vmatprep.subr.mxu0 0.0
    %6538 = vmatpush2.msra.mxu0 0.0
    %6539 = vmatprep.subr.mxu0 0.0
    %6540 = vmatpush2.msra.mxu0 0.0
    %6541 = vmatprep.subr.mxu0 0.0
    %6542 = vmatpush2.msra.mxu0 0.0
    %6543 = vmatprep.subr.mxu0 0.0
    %6544 = vmatpush2.msra.mxu0 0.0
    %6545 = vmatprep.subr.mxu0 0.0
    %6546 = vmatpush2.msra.mxu0 0.0
    %6547 = vmatprep.subr.mxu0 0.0
    %6548 = vmatpush2.msra.mxu0 0.0
    %6549 = vmatprep.subr.mxu0 0.0
    %6550 = vmatpush2.msra.mxu0 0.0
    %6551 = vmatprep.subr.mxu0 0.0
    %6552 = vmatpush2.msra.mxu0 0.0
    %6553 = vmatprep.subr.mxu0 0.0
    %6554 = vmatpush2.msra.mxu0 0.0
    %6555 = vmatprep.subr.mxu0 0.0
    %6556 = vmatpush2.msra.mxu0 0.0
    %6557 = vmatprep.subr.mxu0 0.0
    %6558 = vmatpush2.msra.mxu0 0.0
    %6559 = vmatprep.subr.mxu0 0.0
    %6560 = vmatpush2.msra.mxu0 0.0
    %6561 = vmatprep.subr.mxu0 0.0
    %6562 = vmatpush2.msra.mxu0 0.0
    %6563 = vmatprep.subr.mxu0 0.0
    %6564 = vmatpush2.msra.mxu0 0.0
    %6565 = vmatprep.mubr.f32.mxu0 0.0
    %v6566 = vand.u32 %v104, 4294901760
    %6567 = vmatmul.mubr.f32.gmra.mxu0 %v6566
    %v6568 = vpop.f32.mrf.mxu0
    %v6569 = vadd.f32 %v6330, %v6568
    %v6570 = vpop.f32.mrf.mxu0
    %6571 = vmatprep.mubr.f32.mxu0 0.0
    %v6572 = vand.u32 %v105, 4294901760
    %6573 = vmatmul.mubr.f32.gmra.mxu0 %v6572
    %v6574 = vpop.f32.mrf.mxu0
    %v6575 = vadd.f32 %v6338, %v6574
    %v6576 = vpop.f32.mrf.mxu0
    %6577 = vmatprep.mubr.f32.mxu0 0.0
    %v6578 = vand.u32 %v106, 4294901760
    %6579 = vmatmul.mubr.f32.gmra.mxu0 %v6578
    %v6580 = vpop.f32.mrf.mxu0
    %v6581 = vadd.f32 %v6346, %v6580
    %v6582 = vpop.f32.mrf.mxu0
    %6583 = vmatprep.mubr.f32.mxu0 0.0
    %v6584 = vand.u32 %v107, 4294901760
    %6585 = vmatmul.mubr.f32.gmra.mxu0 %v6584
    %v6586 = vpop.f32.mrf.mxu0
    %v6587 = vadd.f32 %v6354, %v6586
    %v6588 = vpop.f32.mrf.mxu0
    %6589 = vmatprep.mubr.f32.mxu0 0.0
    %v6590 = vand.u32 %v108, 4294901760
    %6591 = vmatmul.mubr.f32.gmra.mxu0 %v6590
    %v6592 = vpop.f32.mrf.mxu0
    %v6593 = vadd.f32 %v6362, %v6592
    %v6594 = vpop.f32.mrf.mxu0
    %6595 = vmatprep.mubr.f32.mxu0 0.0
    %v6596 = vand.u32 %v109, 4294901760
    %6597 = vmatmul.mubr.f32.gmra.mxu0 %v6596
    %v6598 = vpop.f32.mrf.mxu0
    %v6599 = vadd.f32 %v6370, %v6598
    %v6600 = vpop.f32.mrf.mxu0
    %6601 = vmatprep.mubr.f32.mxu0 0.0
    %v6602 = vand.u32 %v110, 4294901760
    %6603 = vmatmul.mubr.f32.gmra.mxu0 %v6602
    %v6604 = vpop.f32.mrf.mxu0
    %v6605 = vadd.f32 %v6378, %v6604
    %v6606 = vpop.f32.mrf.mxu0
    %6607 = vmatprep.mubr.f32.mxu0 0.0
    %v6608 = vand.u32 %v111, 4294901760
    %6609 = vmatmul.mubr.f32.gmra.mxu0 %v6608
    %v6610 = vpop.f32.mrf.mxu0
    %v6611 = vadd.f32 %v6386, %v6610
    %v6612 = vpop.f32.mrf.mxu0
    %6613 = vmatprep.mubr.f32.mxu0 0.0
    %v6614 = vand.u32 %v112, 4294901760
    %6615 = vmatmul.mubr.f32.gmra.mxu0 %v6614
    %v6616 = vpop.f32.mrf.mxu0
    %v6617 = vadd.f32 %v6394, %v6616
    %v6618 = vpop.f32.mrf.mxu0
    %6619 = vmatprep.mubr.f32.mxu0 0.0
    %v6620 = vand.u32 %v113, 4294901760
    %6621 = vmatmul.mubr.f32.gmra.mxu0 %v6620
    %v6622 = vpop.f32.mrf.mxu0
    %v6623 = vadd.f32 %v6402, %v6622
    %v6624 = vpop.f32.mrf.mxu0
    %6625 = vmatprep.mubr.f32.mxu0 0.0
    %v6626 = vand.u32 %v114, 4294901760
    %6627 = vmatmul.mubr.f32.gmra.mxu0 %v6626
    %v6628 = vpop.f32.mrf.mxu0
    %v6629 = vadd.f32 %v6410, %v6628
    %v6630 = vpop.f32.mrf.mxu0
    %6631 = vmatprep.mubr.f32.mxu0 0.0
    %v6632 = vand.u32 %v115, 4294901760
    %6633 = vmatmul.mubr.f32.gmra.mxu0 %v6632
    %v6634 = vpop.f32.mrf.mxu0
    %v6635 = vadd.f32 %v6418, %v6634
    %v6636 = vpop.f32.mrf.mxu0
    %6637 = vmatprep.mubr.f32.mxu0 0.0
    %v6638 = vand.u32 %v116, 4294901760
    %6639 = vmatmul.mubr.f32.gmra.mxu0 %v6638
    %v6640 = vpop.f32.mrf.mxu0
    %v6641 = vadd.f32 %v6426, %v6640
    %v6642 = vpop.f32.mrf.mxu0
    %6643 = vmatprep.mubr.f32.mxu0 0.0
    %v6644 = vand.u32 %v117, 4294901760
    %6645 = vmatmul.mubr.f32.gmra.mxu0 %v6644
    %v6646 = vpop.f32.mrf.mxu0
    %v6647 = vadd.f32 %v6434, %v6646
    %v6648 = vpop.f32.mrf.mxu0
    %6649 = vmatprep.mubr.f32.mxu0 0.0
    %v6650 = vand.u32 %v118, 4294901760
    %6651 = vmatmul.mubr.f32.gmra.mxu0 %v6650
    %v6652 = vpop.f32.mrf.mxu0
    %v6653 = vadd.f32 %v6442, %v6652
    %v6654 = vpop.f32.mrf.mxu0
    %6655 = vmatprep.mubr.f32.mxu0 0.0
    %v6656 = vand.u32 %v119, 4294901760
    %6657 = vmatmul.mubr.f32.gmra.mxu0 %v6656
    %v6658 = vpop.f32.mrf.mxu0
    %v6659 = vadd.f32 %v6450, %v6658
    %v6660 = vpop.f32.mrf.mxu0
    %6661 = vdwg.mxu0
    %6662 = vmatprep.subr.mxu0 0.0
    %v6663 = vand.u32 %v3976, 4294901760
    %6664 = vmatpush1.msra.mxu0 %v6663
    %6665 = vmatprep.subr.mxu0 0.0
    %v6666 = vand.u32 %v3970, 4294901760
    %6667 = vmatpush1.msra.mxu0 %v6666
    %6668 = vmatprep.subr.mxu0 0.0
    %v6669 = vand.u32 %v3964, 4294901760
    %6670 = vmatpush1.msra.mxu0 %v6669
    %6671 = vmatprep.subr.mxu0 0.0
    %v6672 = vand.u32 %v3958, 4294901760
    %6673 = vmatpush1.msra.mxu0 %v6672
    %6674 = vmatprep.subr.mxu0 0.0
    %v6675 = vand.u32 %v3952, 4294901760
    %6676 = vmatpush1.msra.mxu0 %v6675
    %6677 = vmatprep.subr.mxu0 0.0
    %v6678 = vand.u32 %v3946, 4294901760
    %6679 = vmatpush1.msra.mxu0 %v6678
    %6680 = vmatprep.subr.mxu0 0.0
    %v6681 = vand.u32 %v3940, 4294901760
    %6682 = vmatpush1.msra.mxu0 %v6681
    %6683 = vmatprep.subr.mxu0 0.0
    %v6684 = vand.u32 %v3934, 4294901760
    %6685 = vmatpush1.msra.mxu0 %v6684
    %6686 = vmatprep.subr.mxu0 0.0
    %v6687 = vand.u32 %v3928, 4294901760
    %6688 = vmatpush1.msra.mxu0 %v6687
    %6689 = vmatprep.subr.mxu0 0.0
    %v6690 = vand.u32 %v3922, 4294901760
    %6691 = vmatpush1.msra.mxu0 %v6690
    %6692 = vmatprep.subr.mxu0 0.0
    %v6693 = vand.u32 %v3916, 4294901760
    %6694 = vmatpush1.msra.mxu0 %v6693
    %6695 = vmatprep.subr.mxu0 0.0
    %v6696 = vand.u32 %v3910, 4294901760
    %6697 = vmatpush1.msra.mxu0 %v6696
    %6698 = vmatprep.subr.mxu0 0.0
    %v6699 = vand.u32 %v3904, 4294901760
    %6700 = vmatpush1.msra.mxu0 %v6699
    %6701 = vmatprep.subr.mxu0 0.0
    %v6702 = vand.u32 %v3898, 4294901760
    %6703 = vmatpush1.msra.mxu0 %v6702
    %6704 = vmatprep.subr.mxu0 0.0
    %v6705 = vand.u32 %v3892, 4294901760
    %6706 = vmatpush1.msra.mxu0 %v6705
    %6707 = vmatprep.subr.mxu0 0.0
    %v6708 = vand.u32 %v3886, 4294901760
    %6709 = vmatpush1.msra.mxu0 %v6708
    %6710 = vmatprep.subr.mxu0 0.0
    %6711 = vmatpush2.msra.mxu0 0.0
    %6712 = vmatprep.subr.mxu0 0.0
    %6713 = vmatpush2.msra.mxu0 0.0
    %6714 = vmatprep.subr.mxu0 0.0
    %6715 = vmatpush2.msra.mxu0 0.0
    %6716 = vmatprep.subr.mxu0 0.0
    %6717 = vmatpush2.msra.mxu0 0.0
    %6718 = vmatprep.subr.mxu0 0.0
    %6719 = vmatpush2.msra.mxu0 0.0
    %6720 = vmatprep.subr.mxu0 0.0
    %6721 = vmatpush2.msra.mxu0 0.0
    %6722 = vmatprep.subr.mxu0 0.0
    %6723 = vmatpush2.msra.mxu0 0.0
    %6724 = vmatprep.subr.mxu0 0.0
    %6725 = vmatpush2.msra.mxu0 0.0
    %6726 = vmatprep.subr.mxu0 0.0
    %6727 = vmatpush2.msra.mxu0 0.0
    %6728 = vmatprep.subr.mxu0 0.0
    %6729 = vmatpush2.msra.mxu0 0.0
    %6730 = vmatprep.subr.mxu0 0.0
    %6731 = vmatpush2.msra.mxu0 0.0
    %6732 = vmatprep.subr.mxu0 0.0
    %6733 = vmatpush2.msra.mxu0 0.0
    %6734 = vmatprep.subr.mxu0 0.0
    %6735 = vmatpush2.msra.mxu0 0.0
    %6736 = vmatprep.subr.mxu0 0.0
    %6737 = vmatpush2.msra.mxu0 0.0
    %6738 = vmatprep.subr.mxu0 0.0
    %6739 = vmatpush2.msra.mxu0 0.0
    %6740 = vmatprep.subr.mxu0 0.0
    %6741 = vmatpush2.msra.mxu0 0.0
    %6742 = vmatprep.mubr.f32.mxu0 0.0
    %v6743 = vand.u32 %v104, 4294901760
    %6744 = vmatmul.mubr.f32.gmra.mxu0 %v6743
    %v6745 = vpop.f32.mrf.mxu0
    %v6746 = vadd.f32 %v6569, %v6745
    %v6747 = vpop.f32.mrf.mxu0
    %6748 = vmatprep.mubr.f32.mxu0 0.0
    %v6749 = vand.u32 %v105, 4294901760
    %6750 = vmatmul.mubr.f32.gmra.mxu0 %v6749
    %v6751 = vpop.f32.mrf.mxu0
    %v6752 = vadd.f32 %v6575, %v6751
    %v6753 = vpop.f32.mrf.mxu0
    %6754 = vmatprep.mubr.f32.mxu0 0.0
    %v6755 = vand.u32 %v106, 4294901760
    %6756 = vmatmul.mubr.f32.gmra.mxu0 %v6755
    %v6757 = vpop.f32.mrf.mxu0
    %v6758 = vadd.f32 %v6581, %v6757
    %v6759 = vpop.f32.mrf.mxu0
    %6760 = vmatprep.mubr.f32.mxu0 0.0
    %v6761 = vand.u32 %v107, 4294901760
    %6762 = vmatmul.mubr.f32.gmra.mxu0 %v6761
    %v6763 = vpop.f32.mrf.mxu0
    %v6764 = vadd.f32 %v6587, %v6763
    %v6765 = vpop.f32.mrf.mxu0
    %6766 = vmatprep.mubr.f32.mxu0 0.0
    %v6767 = vand.u32 %v108, 4294901760
    %6768 = vmatmul.mubr.f32.gmra.mxu0 %v6767
    %v6769 = vpop.f32.mrf.mxu0
    %v6770 = vadd.f32 %v6593, %v6769
    %v6771 = vpop.f32.mrf.mxu0
    %6772 = vmatprep.mubr.f32.mxu0 0.0
    %v6773 = vand.u32 %v109, 4294901760
    %6774 = vmatmul.mubr.f32.gmra.mxu0 %v6773
    %v6775 = vpop.f32.mrf.mxu0
    %v6776 = vadd.f32 %v6599, %v6775
    %v6777 = vpop.f32.mrf.mxu0
    %6778 = vmatprep.mubr.f32.mxu0 0.0
    %v6779 = vand.u32 %v110, 4294901760
    %6780 = vmatmul.mubr.f32.gmra.mxu0 %v6779
    %v6781 = vpop.f32.mrf.mxu0
    %v6782 = vadd.f32 %v6605, %v6781
    %v6783 = vpop.f32.mrf.mxu0
    %6784 = vmatprep.mubr.f32.mxu0 0.0
    %v6785 = vand.u32 %v111, 4294901760
    %6786 = vmatmul.mubr.f32.gmra.mxu0 %v6785
    %v6787 = vpop.f32.mrf.mxu0
    %v6788 = vadd.f32 %v6611, %v6787
    %v6789 = vpop.f32.mrf.mxu0
    %6790 = vmatprep.mubr.f32.mxu0 0.0
    %v6791 = vand.u32 %v112, 4294901760
    %6792 = vmatmul.mubr.f32.gmra.mxu0 %v6791
    %v6793 = vpop.f32.mrf.mxu0
    %v6794 = vadd.f32 %v6617, %v6793
    %v6795 = vpop.f32.mrf.mxu0
    %6796 = vmatprep.mubr.f32.mxu0 0.0
    %v6797 = vand.u32 %v113, 4294901760
    %6798 = vmatmul.mubr.f32.gmra.mxu0 %v6797
    %v6799 = vpop.f32.mrf.mxu0
    %v6800 = vadd.f32 %v6623, %v6799
    %v6801 = vpop.f32.mrf.mxu0
    %6802 = vmatprep.mubr.f32.mxu0 0.0
    %v6803 = vand.u32 %v114, 4294901760
    %6804 = vmatmul.mubr.f32.gmra.mxu0 %v6803
    %v6805 = vpop.f32.mrf.mxu0
    %v6806 = vadd.f32 %v6629, %v6805
    %v6807 = vpop.f32.mrf.mxu0
    %6808 = vmatprep.mubr.f32.mxu0 0.0
    %v6809 = vand.u32 %v115, 4294901760
    %6810 = vmatmul.mubr.f32.gmra.mxu0 %v6809
    %v6811 = vpop.f32.mrf.mxu0
    %v6812 = vadd.f32 %v6635, %v6811
    %v6813 = vpop.f32.mrf.mxu0
    %6814 = vmatprep.mubr.f32.mxu0 0.0
    %v6815 = vand.u32 %v116, 4294901760
    %6816 = vmatmul.mubr.f32.gmra.mxu0 %v6815
    %v6817 = vpop.f32.mrf.mxu0
    %v6818 = vadd.f32 %v6641, %v6817
    %v6819 = vpop.f32.mrf.mxu0
    %6820 = vmatprep.mubr.f32.mxu0 0.0
    %v6821 = vand.u32 %v117, 4294901760
    %6822 = vmatmul.mubr.f32.gmra.mxu0 %v6821
    %v6823 = vpop.f32.mrf.mxu0
    %v6824 = vadd.f32 %v6647, %v6823
    %v6825 = vpop.f32.mrf.mxu0
    %6826 = vmatprep.mubr.f32.mxu0 0.0
    %v6827 = vand.u32 %v118, 4294901760
    %6828 = vmatmul.mubr.f32.gmra.mxu0 %v6827
    %v6829 = vpop.f32.mrf.mxu0
    %v6830 = vadd.f32 %v6653, %v6829
    %v6831 = vpop.f32.mrf.mxu0
    %6832 = vmatprep.mubr.f32.mxu0 0.0
    %v6833 = vand.u32 %v119, 4294901760
    %6834 = vmatmul.mubr.f32.gmra.mxu0 %v6833
    %v6835 = vpop.f32.mrf.mxu0
    %v6836 = vadd.f32 %v6659, %v6835
    %v6837 = vpop.f32.mrf.mxu0
    %6838 = vdwg.mxu0
    %6839 = vmatprep.subr.mxu0 0.0
    %v6840 = vand.u32 %v4072, 4294901760
    %6841 = vmatpush1.msra.mxu0 %v6840
    %6842 = vmatprep.subr.mxu0 0.0
    %v6843 = vand.u32 %v4066, 4294901760
    %6844 = vmatpush1.msra.mxu0 %v6843
    %6845 = vmatprep.subr.mxu0 0.0
    %v6846 = vand.u32 %v4060, 4294901760
    %6847 = vmatpush1.msra.mxu0 %v6846
    %6848 = vmatprep.subr.mxu0 0.0
    %v6849 = vand.u32 %v4054, 4294901760
    %6850 = vmatpush1.msra.mxu0 %v6849
    %6851 = vmatprep.subr.mxu0 0.0
    %v6852 = vand.u32 %v4048, 4294901760
    %6853 = vmatpush1.msra.mxu0 %v6852
    %6854 = vmatprep.subr.mxu0 0.0
    %v6855 = vand.u32 %v4042, 4294901760
    %6856 = vmatpush1.msra.mxu0 %v6855
    %6857 = vmatprep.subr.mxu0 0.0
    %v6858 = vand.u32 %v4036, 4294901760
    %6859 = vmatpush1.msra.mxu0 %v6858
    %6860 = vmatprep.subr.mxu0 0.0
    %v6861 = vand.u32 %v4030, 4294901760
    %6862 = vmatpush1.msra.mxu0 %v6861
    %6863 = vmatprep.subr.mxu0 0.0
    %v6864 = vand.u32 %v4024, 4294901760
    %6865 = vmatpush1.msra.mxu0 %v6864
    %6866 = vmatprep.subr.mxu0 0.0
    %v6867 = vand.u32 %v4018, 4294901760
    %6868 = vmatpush1.msra.mxu0 %v6867
    %6869 = vmatprep.subr.mxu0 0.0
    %v6870 = vand.u32 %v4012, 4294901760
    %6871 = vmatpush1.msra.mxu0 %v6870
    %6872 = vmatprep.subr.mxu0 0.0
    %v6873 = vand.u32 %v4006, 4294901760
    %6874 = vmatpush1.msra.mxu0 %v6873
    %6875 = vmatprep.subr.mxu0 0.0
    %v6876 = vand.u32 %v4000, 4294901760
    %6877 = vmatpush1.msra.mxu0 %v6876
    %6878 = vmatprep.subr.mxu0 0.0
    %v6879 = vand.u32 %v3994, 4294901760
    %6880 = vmatpush1.msra.mxu0 %v6879
    %6881 = vmatprep.subr.mxu0 0.0
    %v6882 = vand.u32 %v3988, 4294901760
    %6883 = vmatpush1.msra.mxu0 %v6882
    %6884 = vmatprep.subr.mxu0 0.0
    %v6885 = vand.u32 %v3982, 4294901760
    %6886 = vmatpush1.msra.mxu0 %v6885
    %6887 = vmatprep.subr.mxu0 0.0
    %6888 = vmatpush2.msra.mxu0 0.0
    %6889 = vmatprep.subr.mxu0 0.0
    %6890 = vmatpush2.msra.mxu0 0.0
    %6891 = vmatprep.subr.mxu0 0.0
    %6892 = vmatpush2.msra.mxu0 0.0
    %6893 = vmatprep.subr.mxu0 0.0
    %6894 = vmatpush2.msra.mxu0 0.0
    %6895 = vmatprep.subr.mxu0 0.0
    %6896 = vmatpush2.msra.mxu0 0.0
    %6897 = vmatprep.subr.mxu0 0.0
    %6898 = vmatpush2.msra.mxu0 0.0
    %6899 = vmatprep.subr.mxu0 0.0
    %6900 = vmatpush2.msra.mxu0 0.0
    %6901 = vmatprep.subr.mxu0 0.0
    %6902 = vmatpush2.msra.mxu0 0.0
    %6903 = vmatprep.subr.mxu0 0.0
    %6904 = vmatpush2.msra.mxu0 0.0
    %6905 = vmatprep.subr.mxu0 0.0
    %6906 = vmatpush2.msra.mxu0 0.0
    %6907 = vmatprep.subr.mxu0 0.0
    %6908 = vmatpush2.msra.mxu0 0.0
    %6909 = vmatprep.subr.mxu0 0.0
    %6910 = vmatpush2.msra.mxu0 0.0
    %6911 = vmatprep.subr.mxu0 0.0
    %6912 = vmatpush2.msra.mxu0 0.0
    %6913 = vmatprep.subr.mxu0 0.0
    %6914 = vmatpush2.msra.mxu0 0.0
    %6915 = vmatprep.subr.mxu0 0.0
    %6916 = vmatpush2.msra.mxu0 0.0
    %6917 = vmatprep.subr.mxu0 0.0
    %6918 = vmatpush2.msra.mxu0 0.0
    %6919 = vmatprep.mubr.f32.mxu0 0.0
    %v6920 = vand.u32 %v104, 4294901760
    %v6921 = vsub.f32 %v104, %v6920
    %v6922 = vand.u32 %v6921, 4294901760
    %v6923 = vsub.f32 %v6921, %v6922
    %v6924 = vand.u32 %v6923, 4294901760
    %6925 = vmatmul.mubr.f32.gmra.mxu0 %v6924
    %v6926 = vpop.f32.mrf.mxu0
    %v6927 = vadd.f32 0.0, %v6926
    %v6928 = vpop.f32.mrf.mxu0
    %6929 = vmatprep.mubr.f32.mxu0 0.0
    %v6930 = vand.u32 %v105, 4294901760
    %v6931 = vsub.f32 %v105, %v6930
    %v6932 = vand.u32 %v6931, 4294901760
    %v6933 = vsub.f32 %v6931, %v6932
    %v6934 = vand.u32 %v6933, 4294901760
    %6935 = vmatmul.mubr.f32.gmra.mxu0 %v6934
    %v6936 = vpop.f32.mrf.mxu0
    %v6937 = vadd.f32 0.0, %v6936
    %v6938 = vpop.f32.mrf.mxu0
    %6939 = vmatprep.mubr.f32.mxu0 0.0
    %v6940 = vand.u32 %v106, 4294901760
    %v6941 = vsub.f32 %v106, %v6940
    %v6942 = vand.u32 %v6941, 4294901760
    %v6943 = vsub.f32 %v6941, %v6942
    %v6944 = vand.u32 %v6943, 4294901760
    %6945 = vmatmul.mubr.f32.gmra.mxu0 %v6944
    %v6946 = vpop.f32.mrf.mxu0
    %v6947 = vadd.f32 0.0, %v6946
    %v6948 = vpop.f32.mrf.mxu0
    %6949 = vmatprep.mubr.f32.mxu0 0.0
    %v6950 = vand.u32 %v107, 4294901760
    %v6951 = vsub.f32 %v107, %v6950
    %v6952 = vand.u32 %v6951, 4294901760
    %v6953 = vsub.f32 %v6951, %v6952
    %v6954 = vand.u32 %v6953, 4294901760
    %6955 = vmatmul.mubr.f32.gmra.mxu0 %v6954
    %v6956 = vpop.f32.mrf.mxu0
    %v6957 = vadd.f32 0.0, %v6956
    %v6958 = vpop.f32.mrf.mxu0
    %6959 = vmatprep.mubr.f32.mxu0 0.0
    %v6960 = vand.u32 %v108, 4294901760
    %v6961 = vsub.f32 %v108, %v6960
    %v6962 = vand.u32 %v6961, 4294901760
    %v6963 = vsub.f32 %v6961, %v6962
    %v6964 = vand.u32 %v6963, 4294901760
    %6965 = vmatmul.mubr.f32.gmra.mxu0 %v6964
    %v6966 = vpop.f32.mrf.mxu0
    %v6967 = vadd.f32 0.0, %v6966
    %v6968 = vpop.f32.mrf.mxu0
    %6969 = vmatprep.mubr.f32.mxu0 0.0
    %v6970 = vand.u32 %v109, 4294901760
    %v6971 = vsub.f32 %v109, %v6970
    %v6972 = vand.u32 %v6971, 4294901760
    %v6973 = vsub.f32 %v6971, %v6972
    %v6974 = vand.u32 %v6973, 4294901760
    %6975 = vmatmul.mubr.f32.gmra.mxu0 %v6974
    %v6976 = vpop.f32.mrf.mxu0
    %v6977 = vadd.f32 0.0, %v6976
    %v6978 = vpop.f32.mrf.mxu0
    %6979 = vmatprep.mubr.f32.mxu0 0.0
    %v6980 = vand.u32 %v110, 4294901760
    %v6981 = vsub.f32 %v110, %v6980
    %v6982 = vand.u32 %v6981, 4294901760
    %v6983 = vsub.f32 %v6981, %v6982
    %v6984 = vand.u32 %v6983, 4294901760
    %6985 = vmatmul.mubr.f32.gmra.mxu0 %v6984
    %v6986 = vpop.f32.mrf.mxu0
    %v6987 = vadd.f32 0.0, %v6986
    %v6988 = vpop.f32.mrf.mxu0
    %6989 = vmatprep.mubr.f32.mxu0 0.0
    %v6990 = vand.u32 %v111, 4294901760
    %v6991 = vsub.f32 %v111, %v6990
    %v6992 = vand.u32 %v6991, 4294901760
    %v6993 = vsub.f32 %v6991, %v6992
    %v6994 = vand.u32 %v6993, 4294901760
    %6995 = vmatmul.mubr.f32.gmra.mxu0 %v6994
    %v6996 = vpop.f32.mrf.mxu0
    %v6997 = vadd.f32 0.0, %v6996
    %v6998 = vpop.f32.mrf.mxu0
    %6999 = vmatprep.mubr.f32.mxu0 0.0
    %v7000 = vand.u32 %v112, 4294901760
    %v7001 = vsub.f32 %v112, %v7000
    %v7002 = vand.u32 %v7001, 4294901760
    %v7003 = vsub.f32 %v7001, %v7002
    %v7004 = vand.u32 %v7003, 4294901760
    %7005 = vmatmul.mubr.f32.gmra.mxu0 %v7004
    %v7006 = vpop.f32.mrf.mxu0
    %v7007 = vadd.f32 0.0, %v7006
    %v7008 = vpop.f32.mrf.mxu0
    %7009 = vmatprep.mubr.f32.mxu0 0.0
    %v7010 = vand.u32 %v113, 4294901760
    %v7011 = vsub.f32 %v113, %v7010
    %v7012 = vand.u32 %v7011, 4294901760
    %v7013 = vsub.f32 %v7011, %v7012
    %v7014 = vand.u32 %v7013, 4294901760
    %7015 = vmatmul.mubr.f32.gmra.mxu0 %v7014
    %v7016 = vpop.f32.mrf.mxu0
    %v7017 = vadd.f32 0.0, %v7016
    %v7018 = vpop.f32.mrf.mxu0
    %7019 = vmatprep.mubr.f32.mxu0 0.0
    %v7020 = vand.u32 %v114, 4294901760
    %v7021 = vsub.f32 %v114, %v7020
    %v7022 = vand.u32 %v7021, 4294901760
    %v7023 = vsub.f32 %v7021, %v7022
    %v7024 = vand.u32 %v7023, 4294901760
    %7025 = vmatmul.mubr.f32.gmra.mxu0 %v7024
    %v7026 = vpop.f32.mrf.mxu0
    %v7027 = vadd.f32 0.0, %v7026
    %v7028 = vpop.f32.mrf.mxu0
    %7029 = vmatprep.mubr.f32.mxu0 0.0
    %v7030 = vand.u32 %v115, 4294901760
    %v7031 = vsub.f32 %v115, %v7030
    %v7032 = vand.u32 %v7031, 4294901760
    %v7033 = vsub.f32 %v7031, %v7032
    %v7034 = vand.u32 %v7033, 4294901760
    %7035 = vmatmul.mubr.f32.gmra.mxu0 %v7034
    %v7036 = vpop.f32.mrf.mxu0
    %v7037 = vadd.f32 0.0, %v7036
    %v7038 = vpop.f32.mrf.mxu0
    %7039 = vmatprep.mubr.f32.mxu0 0.0
    %v7040 = vand.u32 %v116, 4294901760
    %v7041 = vsub.f32 %v116, %v7040
    %v7042 = vand.u32 %v7041, 4294901760
    %v7043 = vsub.f32 %v7041, %v7042
    %v7044 = vand.u32 %v7043, 4294901760
    %7045 = vmatmul.mubr.f32.gmra.mxu0 %v7044
    %v7046 = vpop.f32.mrf.mxu0
    %v7047 = vadd.f32 0.0, %v7046
    %v7048 = vpop.f32.mrf.mxu0
    %7049 = vmatprep.mubr.f32.mxu0 0.0
    %v7050 = vand.u32 %v117, 4294901760
    %v7051 = vsub.f32 %v117, %v7050
    %v7052 = vand.u32 %v7051, 4294901760
    %v7053 = vsub.f32 %v7051, %v7052
    %v7054 = vand.u32 %v7053, 4294901760
    %7055 = vmatmul.mubr.f32.gmra.mxu0 %v7054
    %v7056 = vpop.f32.mrf.mxu0
    %v7057 = vadd.f32 0.0, %v7056
    %v7058 = vpop.f32.mrf.mxu0
    %7059 = vmatprep.mubr.f32.mxu0 0.0
    %v7060 = vand.u32 %v118, 4294901760
    %v7061 = vsub.f32 %v118, %v7060
    %v7062 = vand.u32 %v7061, 4294901760
    %v7063 = vsub.f32 %v7061, %v7062
    %v7064 = vand.u32 %v7063, 4294901760
    %7065 = vmatmul.mubr.f32.gmra.mxu0 %v7064
    %v7066 = vpop.f32.mrf.mxu0
    %v7067 = vadd.f32 0.0, %v7066
    %v7068 = vpop.f32.mrf.mxu0
    %7069 = vmatprep.mubr.f32.mxu0 0.0
    %v7070 = vand.u32 %v119, 4294901760
    %v7071 = vsub.f32 %v119, %v7070
    %v7072 = vand.u32 %v7071, 4294901760
    %v7073 = vsub.f32 %v7071, %v7072
    %v7074 = vand.u32 %v7073, 4294901760
    %7075 = vmatmul.mubr.f32.gmra.mxu0 %v7074
    %v7076 = vpop.f32.mrf.mxu0
    %v7077 = vadd.f32 0.0, %v7076
    %v7078 = vpop.f32.mrf.mxu0
    %7079 = vdwg.mxu0
    %7080 = vmatprep.subr.mxu0 0.0
    %v7081 = vand.u32 %v4072, 4294901760
    %v7082 = vsub.f32 %v4072, %v7081
    %v7083 = vand.u32 %v7082, 4294901760
    %v7084 = vsub.f32 %v7082, %v7083
    %v7085 = vand.u32 %v7084, 4294901760
    %7086 = vmatpush1.msra.mxu0 %v7085
    %7087 = vmatprep.subr.mxu0 0.0
    %v7088 = vand.u32 %v4066, 4294901760
    %v7089 = vsub.f32 %v4066, %v7088
    %v7090 = vand.u32 %v7089, 4294901760
    %v7091 = vsub.f32 %v7089, %v7090
    %v7092 = vand.u32 %v7091, 4294901760
    %7093 = vmatpush1.msra.mxu0 %v7092
    %7094 = vmatprep.subr.mxu0 0.0
    %v7095 = vand.u32 %v4060, 4294901760
    %v7096 = vsub.f32 %v4060, %v7095
    %v7097 = vand.u32 %v7096, 4294901760
    %v7098 = vsub.f32 %v7096, %v7097
    %v7099 = vand.u32 %v7098, 4294901760
    %7100 = vmatpush1.msra.mxu0 %v7099
    %7101 = vmatprep.subr.mxu0 0.0
    %v7102 = vand.u32 %v4054, 4294901760
    %v7103 = vsub.f32 %v4054, %v7102
    %v7104 = vand.u32 %v7103, 4294901760
    %v7105 = vsub.f32 %v7103, %v7104
    %v7106 = vand.u32 %v7105, 4294901760
    %7107 = vmatpush1.msra.mxu0 %v7106
    %7108 = vmatprep.subr.mxu0 0.0
    %v7109 = vand.u32 %v4048, 4294901760
    %v7110 = vsub.f32 %v4048, %v7109
    %v7111 = vand.u32 %v7110, 4294901760
    %v7112 = vsub.f32 %v7110, %v7111
    %v7113 = vand.u32 %v7112, 4294901760
    %7114 = vmatpush1.msra.mxu0 %v7113
    %7115 = vmatprep.subr.mxu0 0.0
    %v7116 = vand.u32 %v4042, 4294901760
    %v7117 = vsub.f32 %v4042, %v7116
    %v7118 = vand.u32 %v7117, 4294901760
    %v7119 = vsub.f32 %v7117, %v7118
    %v7120 = vand.u32 %v7119, 4294901760
    %7121 = vmatpush1.msra.mxu0 %v7120
    %7122 = vmatprep.subr.mxu0 0.0
    %v7123 = vand.u32 %v4036, 4294901760
    %v7124 = vsub.f32 %v4036, %v7123
    %v7125 = vand.u32 %v7124, 4294901760
    %v7126 = vsub.f32 %v7124, %v7125
    %v7127 = vand.u32 %v7126, 4294901760
    %7128 = vmatpush1.msra.mxu0 %v7127
    %7129 = vmatprep.subr.mxu0 0.0
    %v7130 = vand.u32 %v4030, 4294901760
    %v7131 = vsub.f32 %v4030, %v7130
    %v7132 = vand.u32 %v7131, 4294901760
    %v7133 = vsub.f32 %v7131, %v7132
    %v7134 = vand.u32 %v7133, 4294901760
    %7135 = vmatpush1.msra.mxu0 %v7134
    %7136 = vmatprep.subr.mxu0 0.0
    %v7137 = vand.u32 %v4024, 4294901760
    %v7138 = vsub.f32 %v4024, %v7137
    %v7139 = vand.u32 %v7138, 4294901760
    %v7140 = vsub.f32 %v7138, %v7139
    %v7141 = vand.u32 %v7140, 4294901760
    %7142 = vmatpush1.msra.mxu0 %v7141
    %7143 = vmatprep.subr.mxu0 0.0
    %v7144 = vand.u32 %v4018, 4294901760
    %v7145 = vsub.f32 %v4018, %v7144
    %v7146 = vand.u32 %v7145, 4294901760
    %v7147 = vsub.f32 %v7145, %v7146
    %v7148 = vand.u32 %v7147, 4294901760
    %7149 = vmatpush1.msra.mxu0 %v7148
    %7150 = vmatprep.subr.mxu0 0.0
    %v7151 = vand.u32 %v4012, 4294901760
    %v7152 = vsub.f32 %v4012, %v7151
    %v7153 = vand.u32 %v7152, 4294901760
    %v7154 = vsub.f32 %v7152, %v7153
    %v7155 = vand.u32 %v7154, 4294901760
    %7156 = vmatpush1.msra.mxu0 %v7155
    %7157 = vmatprep.subr.mxu0 0.0
    %v7158 = vand.u32 %v4006, 4294901760
    %v7159 = vsub.f32 %v4006, %v7158
    %v7160 = vand.u32 %v7159, 4294901760
    %v7161 = vsub.f32 %v7159, %v7160
    %v7162 = vand.u32 %v7161, 4294901760
    %7163 = vmatpush1.msra.mxu0 %v7162
    %7164 = vmatprep.subr.mxu0 0.0
    %v7165 = vand.u32 %v4000, 4294901760
    %v7166 = vsub.f32 %v4000, %v7165
    %v7167 = vand.u32 %v7166, 4294901760
    %v7168 = vsub.f32 %v7166, %v7167
    %v7169 = vand.u32 %v7168, 4294901760
    %7170 = vmatpush1.msra.mxu0 %v7169
    %7171 = vmatprep.subr.mxu0 0.0
    %v7172 = vand.u32 %v3994, 4294901760
    %v7173 = vsub.f32 %v3994, %v7172
    %v7174 = vand.u32 %v7173, 4294901760
    %v7175 = vsub.f32 %v7173, %v7174
    %v7176 = vand.u32 %v7175, 4294901760
    %7177 = vmatpush1.msra.mxu0 %v7176
    %7178 = vmatprep.subr.mxu0 0.0
    %v7179 = vand.u32 %v3988, 4294901760
    %v7180 = vsub.f32 %v3988, %v7179
    %v7181 = vand.u32 %v7180, 4294901760
    %v7182 = vsub.f32 %v7180, %v7181
    %v7183 = vand.u32 %v7182, 4294901760
    %7184 = vmatpush1.msra.mxu0 %v7183
    %7185 = vmatprep.subr.mxu0 0.0
    %v7186 = vand.u32 %v3982, 4294901760
    %v7187 = vsub.f32 %v3982, %v7186
    %v7188 = vand.u32 %v7187, 4294901760
    %v7189 = vsub.f32 %v7187, %v7188
    %v7190 = vand.u32 %v7189, 4294901760
    %7191 = vmatpush1.msra.mxu0 %v7190
    %7192 = vmatprep.subr.mxu0 0.0
    %7193 = vmatpush2.msra.mxu0 0.0
    %7194 = vmatprep.subr.mxu0 0.0
    %7195 = vmatpush2.msra.mxu0 0.0
    %7196 = vmatprep.subr.mxu0 0.0
    %7197 = vmatpush2.msra.mxu0 0.0
    %7198 = vmatprep.subr.mxu0 0.0
    %7199 = vmatpush2.msra.mxu0 0.0
    %7200 = vmatprep.subr.mxu0 0.0
    %7201 = vmatpush2.msra.mxu0 0.0
    %7202 = vmatprep.subr.mxu0 0.0
    %7203 = vmatpush2.msra.mxu0 0.0
    %7204 = vmatprep.subr.mxu0 0.0
    %7205 = vmatpush2.msra.mxu0 0.0
    %7206 = vmatprep.subr.mxu0 0.0
    %7207 = vmatpush2.msra.mxu0 0.0
    %7208 = vmatprep.subr.mxu0 0.0
    %7209 = vmatpush2.msra.mxu0 0.0
    %7210 = vmatprep.subr.mxu0 0.0
    %7211 = vmatpush2.msra.mxu0 0.0
    %7212 = vmatprep.subr.mxu0 0.0
    %7213 = vmatpush2.msra.mxu0 0.0
    %7214 = vmatprep.subr.mxu0 0.0
    %7215 = vmatpush2.msra.mxu0 0.0
    %7216 = vmatprep.subr.mxu0 0.0
    %7217 = vmatpush2.msra.mxu0 0.0
    %7218 = vmatprep.subr.mxu0 0.0
    %7219 = vmatpush2.msra.mxu0 0.0
    %7220 = vmatprep.subr.mxu0 0.0
    %7221 = vmatpush2.msra.mxu0 0.0
    %7222 = vmatprep.subr.mxu0 0.0
    %7223 = vmatpush2.msra.mxu0 0.0
    %7224 = vmatprep.mubr.f32.mxu0 0.0
    %v7225 = vand.u32 %v104, 4294901760
    %7226 = vmatmul.mubr.f32.gmra.mxu0 %v7225
    %v7227 = vpop.f32.mrf.mxu0
    %v7228 = vadd.f32 %v6927, %v7227
    %v7229 = vpop.f32.mrf.mxu0
    %7230 = vmatprep.mubr.f32.mxu0 0.0
    %v7231 = vand.u32 %v105, 4294901760
    %7232 = vmatmul.mubr.f32.gmra.mxu0 %v7231
    %v7233 = vpop.f32.mrf.mxu0
    %v7234 = vadd.f32 %v6937, %v7233
    %v7235 = vpop.f32.mrf.mxu0
    %7236 = vmatprep.mubr.f32.mxu0 0.0
    %v7237 = vand.u32 %v106, 4294901760
    %7238 = vmatmul.mubr.f32.gmra.mxu0 %v7237
    %v7239 = vpop.f32.mrf.mxu0
    %v7240 = vadd.f32 %v6947, %v7239
    %v7241 = vpop.f32.mrf.mxu0
    %7242 = vmatprep.mubr.f32.mxu0 0.0
    %v7243 = vand.u32 %v107, 4294901760
    %7244 = vmatmul.mubr.f32.gmra.mxu0 %v7243
    %v7245 = vpop.f32.mrf.mxu0
    %v7246 = vadd.f32 %v6957, %v7245
    %v7247 = vpop.f32.mrf.mxu0
    %7248 = vmatprep.mubr.f32.mxu0 0.0
    %v7249 = vand.u32 %v108, 4294901760
    %7250 = vmatmul.mubr.f32.gmra.mxu0 %v7249
    %v7251 = vpop.f32.mrf.mxu0
    %v7252 = vadd.f32 %v6967, %v7251
    %v7253 = vpop.f32.mrf.mxu0
    %7254 = vmatprep.mubr.f32.mxu0 0.0
    %v7255 = vand.u32 %v109, 4294901760
    %7256 = vmatmul.mubr.f32.gmra.mxu0 %v7255
    %v7257 = vpop.f32.mrf.mxu0
    %v7258 = vadd.f32 %v6977, %v7257
    %v7259 = vpop.f32.mrf.mxu0
    %7260 = vmatprep.mubr.f32.mxu0 0.0
    %v7261 = vand.u32 %v110, 4294901760
    %7262 = vmatmul.mubr.f32.gmra.mxu0 %v7261
    %v7263 = vpop.f32.mrf.mxu0
    %v7264 = vadd.f32 %v6987, %v7263
    %v7265 = vpop.f32.mrf.mxu0
    %7266 = vmatprep.mubr.f32.mxu0 0.0
    %v7267 = vand.u32 %v111, 4294901760
    %7268 = vmatmul.mubr.f32.gmra.mxu0 %v7267
    %v7269 = vpop.f32.mrf.mxu0
    %v7270 = vadd.f32 %v6997, %v7269
    %v7271 = vpop.f32.mrf.mxu0
    %7272 = vmatprep.mubr.f32.mxu0 0.0
    %v7273 = vand.u32 %v112, 4294901760
    %7274 = vmatmul.mubr.f32.gmra.mxu0 %v7273
    %v7275 = vpop.f32.mrf.mxu0
    %v7276 = vadd.f32 %v7007, %v7275
    %v7277 = vpop.f32.mrf.mxu0
    %7278 = vmatprep.mubr.f32.mxu0 0.0
    %v7279 = vand.u32 %v113, 4294901760
    %7280 = vmatmul.mubr.f32.gmra.mxu0 %v7279
    %v7281 = vpop.f32.mrf.mxu0
    %v7282 = vadd.f32 %v7017, %v7281
    %v7283 = vpop.f32.mrf.mxu0
    %7284 = vmatprep.mubr.f32.mxu0 0.0
    %v7285 = vand.u32 %v114, 4294901760
    %7286 = vmatmul.mubr.f32.gmra.mxu0 %v7285
    %v7287 = vpop.f32.mrf.mxu0
    %v7288 = vadd.f32 %v7027, %v7287
    %v7289 = vpop.f32.mrf.mxu0
    %7290 = vmatprep.mubr.f32.mxu0 0.0
    %v7291 = vand.u32 %v115, 4294901760
    %7292 = vmatmul.mubr.f32.gmra.mxu0 %v7291
    %v7293 = vpop.f32.mrf.mxu0
    %v7294 = vadd.f32 %v7037, %v7293
    %v7295 = vpop.f32.mrf.mxu0
    %7296 = vmatprep.mubr.f32.mxu0 0.0
    %v7297 = vand.u32 %v116, 4294901760
    %7298 = vmatmul.mubr.f32.gmra.mxu0 %v7297
    %v7299 = vpop.f32.mrf.mxu0
    %v7300 = vadd.f32 %v7047, %v7299
    %v7301 = vpop.f32.mrf.mxu0
    %7302 = vmatprep.mubr.f32.mxu0 0.0
    %v7303 = vand.u32 %v117, 4294901760
    %7304 = vmatmul.mubr.f32.gmra.mxu0 %v7303
    %v7305 = vpop.f32.mrf.mxu0
    %v7306 = vadd.f32 %v7057, %v7305
    %v7307 = vpop.f32.mrf.mxu0
    %7308 = vmatprep.mubr.f32.mxu0 0.0
    %v7309 = vand.u32 %v118, 4294901760
    %7310 = vmatmul.mubr.f32.gmra.mxu0 %v7309
    %v7311 = vpop.f32.mrf.mxu0
    %v7312 = vadd.f32 %v7067, %v7311
    %v7313 = vpop.f32.mrf.mxu0
    %7314 = vmatprep.mubr.f32.mxu0 0.0
    %v7315 = vand.u32 %v119, 4294901760
    %7316 = vmatmul.mubr.f32.gmra.mxu0 %v7315
    %v7317 = vpop.f32.mrf.mxu0
    %v7318 = vadd.f32 %v7077, %v7317
    %v7319 = vpop.f32.mrf.mxu0
    %7320 = vdwg.mxu0
    %7321 = vmatprep.subr.mxu0 0.0
    %v7322 = vand.u32 %v4072, 4294901760
    %v7323 = vsub.f32 %v4072, %v7322
    %7324 = vmatpush1.msra.mxu0 %v7323
    %7325 = vmatprep.subr.mxu0 0.0
    %v7326 = vand.u32 %v4066, 4294901760
    %v7327 = vsub.f32 %v4066, %v7326
    %7328 = vmatpush1.msra.mxu0 %v7327
    %7329 = vmatprep.subr.mxu0 0.0
    %v7330 = vand.u32 %v4060, 4294901760
    %v7331 = vsub.f32 %v4060, %v7330
    %7332 = vmatpush1.msra.mxu0 %v7331
    %7333 = vmatprep.subr.mxu0 0.0
    %v7334 = vand.u32 %v4054, 4294901760
    %v7335 = vsub.f32 %v4054, %v7334
    %7336 = vmatpush1.msra.mxu0 %v7335
    %7337 = vmatprep.subr.mxu0 0.0
    %v7338 = vand.u32 %v4048, 4294901760
    %v7339 = vsub.f32 %v4048, %v7338
    %7340 = vmatpush1.msra.mxu0 %v7339
    %7341 = vmatprep.subr.mxu0 0.0
    %v7342 = vand.u32 %v4042, 4294901760
    %v7343 = vsub.f32 %v4042, %v7342
    %7344 = vmatpush1.msra.mxu0 %v7343
    %7345 = vmatprep.subr.mxu0 0.0
    %v7346 = vand.u32 %v4036, 4294901760
    %v7347 = vsub.f32 %v4036, %v7346
    %7348 = vmatpush1.msra.mxu0 %v7347
    %7349 = vmatprep.subr.mxu0 0.0
    %v7350 = vand.u32 %v4030, 4294901760
    %v7351 = vsub.f32 %v4030, %v7350
    %7352 = vmatpush1.msra.mxu0 %v7351
    %7353 = vmatprep.subr.mxu0 0.0
    %v7354 = vand.u32 %v4024, 4294901760
    %v7355 = vsub.f32 %v4024, %v7354
    %7356 = vmatpush1.msra.mxu0 %v7355
    %7357 = vmatprep.subr.mxu0 0.0
    %v7358 = vand.u32 %v4018, 4294901760
    %v7359 = vsub.f32 %v4018, %v7358
    %7360 = vmatpush1.msra.mxu0 %v7359
    %7361 = vmatprep.subr.mxu0 0.0
    %v7362 = vand.u32 %v4012, 4294901760
    %v7363 = vsub.f32 %v4012, %v7362
    %7364 = vmatpush1.msra.mxu0 %v7363
    %7365 = vmatprep.subr.mxu0 0.0
    %v7366 = vand.u32 %v4006, 4294901760
    %v7367 = vsub.f32 %v4006, %v7366
    %7368 = vmatpush1.msra.mxu0 %v7367
    %7369 = vmatprep.subr.mxu0 0.0
    %v7370 = vand.u32 %v4000, 4294901760
    %v7371 = vsub.f32 %v4000, %v7370
    %7372 = vmatpush1.msra.mxu0 %v7371
    %7373 = vmatprep.subr.mxu0 0.0
    %v7374 = vand.u32 %v3994, 4294901760
    %v7375 = vsub.f32 %v3994, %v7374
    %7376 = vmatpush1.msra.mxu0 %v7375
    %7377 = vmatprep.subr.mxu0 0.0
    %v7378 = vand.u32 %v3988, 4294901760
    %v7379 = vsub.f32 %v3988, %v7378
    %7380 = vmatpush1.msra.mxu0 %v7379
    %7381 = vmatprep.subr.mxu0 0.0
    %v7382 = vand.u32 %v3982, 4294901760
    %v7383 = vsub.f32 %v3982, %v7382
    %7384 = vmatpush1.msra.mxu0 %v7383
    %7385 = vmatprep.subr.mxu0 0.0
    %7386 = vmatpush2.msra.mxu0 0.0
    %7387 = vmatprep.subr.mxu0 0.0
    %7388 = vmatpush2.msra.mxu0 0.0
    %7389 = vmatprep.subr.mxu0 0.0
    %7390 = vmatpush2.msra.mxu0 0.0
    %7391 = vmatprep.subr.mxu0 0.0
    %7392 = vmatpush2.msra.mxu0 0.0
    %7393 = vmatprep.subr.mxu0 0.0
    %7394 = vmatpush2.msra.mxu0 0.0
    %7395 = vmatprep.subr.mxu0 0.0
    %7396 = vmatpush2.msra.mxu0 0.0
    %7397 = vmatprep.subr.mxu0 0.0
    %7398 = vmatpush2.msra.mxu0 0.0
    %7399 = vmatprep.subr.mxu0 0.0
    %7400 = vmatpush2.msra.mxu0 0.0
    %7401 = vmatprep.subr.mxu0 0.0
    %7402 = vmatpush2.msra.mxu0 0.0
    %7403 = vmatprep.subr.mxu0 0.0
    %7404 = vmatpush2.msra.mxu0 0.0
    %7405 = vmatprep.subr.mxu0 0.0
    %7406 = vmatpush2.msra.mxu0 0.0
    %7407 = vmatprep.subr.mxu0 0.0
    %7408 = vmatpush2.msra.mxu0 0.0
    %7409 = vmatprep.subr.mxu0 0.0
    %7410 = vmatpush2.msra.mxu0 0.0
    %7411 = vmatprep.subr.mxu0 0.0
    %7412 = vmatpush2.msra.mxu0 0.0
    %7413 = vmatprep.subr.mxu0 0.0
    %7414 = vmatpush2.msra.mxu0 0.0
    %7415 = vmatprep.subr.mxu0 0.0
    %7416 = vmatpush2.msra.mxu0 0.0
    %7417 = vmatprep.mubr.f32.mxu0 0.0
    %v7418 = vand.u32 %v104, 4294901760
    %v7419 = vsub.f32 %v104, %v7418
    %7420 = vmatmul.mubr.f32.gmra.mxu0 %v7419
    %v7421 = vpop.f32.mrf.mxu0
    %v7422 = vadd.f32 %v7228, %v7421
    %v7423 = vpop.f32.mrf.mxu0
    %7424 = vmatprep.mubr.f32.mxu0 0.0
    %v7425 = vand.u32 %v105, 4294901760
    %v7426 = vsub.f32 %v105, %v7425
    %7427 = vmatmul.mubr.f32.gmra.mxu0 %v7426
    %v7428 = vpop.f32.mrf.mxu0
    %v7429 = vadd.f32 %v7234, %v7428
    %v7430 = vpop.f32.mrf.mxu0
    %7431 = vmatprep.mubr.f32.mxu0 0.0
    %v7432 = vand.u32 %v106, 4294901760
    %v7433 = vsub.f32 %v106, %v7432
    %7434 = vmatmul.mubr.f32.gmra.mxu0 %v7433
    %v7435 = vpop.f32.mrf.mxu0
    %v7436 = vadd.f32 %v7240, %v7435
    %v7437 = vpop.f32.mrf.mxu0
    %7438 = vmatprep.mubr.f32.mxu0 0.0
    %v7439 = vand.u32 %v107, 4294901760
    %v7440 = vsub.f32 %v107, %v7439
    %7441 = vmatmul.mubr.f32.gmra.mxu0 %v7440
    %v7442 = vpop.f32.mrf.mxu0
    %v7443 = vadd.f32 %v7246, %v7442
    %v7444 = vpop.f32.mrf.mxu0
    %7445 = vmatprep.mubr.f32.mxu0 0.0
    %v7446 = vand.u32 %v108, 4294901760
    %v7447 = vsub.f32 %v108, %v7446
    %7448 = vmatmul.mubr.f32.gmra.mxu0 %v7447
    %v7449 = vpop.f32.mrf.mxu0
    %v7450 = vadd.f32 %v7252, %v7449
    %v7451 = vpop.f32.mrf.mxu0
    %7452 = vmatprep.mubr.f32.mxu0 0.0
    %v7453 = vand.u32 %v109, 4294901760
    %v7454 = vsub.f32 %v109, %v7453
    %7455 = vmatmul.mubr.f32.gmra.mxu0 %v7454
    %v7456 = vpop.f32.mrf.mxu0
    %v7457 = vadd.f32 %v7258, %v7456
    %v7458 = vpop.f32.mrf.mxu0
    %7459 = vmatprep.mubr.f32.mxu0 0.0
    %v7460 = vand.u32 %v110, 4294901760
    %v7461 = vsub.f32 %v110, %v7460
    %7462 = vmatmul.mubr.f32.gmra.mxu0 %v7461
    %v7463 = vpop.f32.mrf.mxu0
    %v7464 = vadd.f32 %v7264, %v7463
    %v7465 = vpop.f32.mrf.mxu0
    %7466 = vmatprep.mubr.f32.mxu0 0.0
    %v7467 = vand.u32 %v111, 4294901760
    %v7468 = vsub.f32 %v111, %v7467
    %7469 = vmatmul.mubr.f32.gmra.mxu0 %v7468
    %v7470 = vpop.f32.mrf.mxu0
    %v7471 = vadd.f32 %v7270, %v7470
    %v7472 = vpop.f32.mrf.mxu0
    %7473 = vmatprep.mubr.f32.mxu0 0.0
    %v7474 = vand.u32 %v112, 4294901760
    %v7475 = vsub.f32 %v112, %v7474
    %7476 = vmatmul.mubr.f32.gmra.mxu0 %v7475
    %v7477 = vpop.f32.mrf.mxu0
    %v7478 = vadd.f32 %v7276, %v7477
    %v7479 = vpop.f32.mrf.mxu0
    %7480 = vmatprep.mubr.f32.mxu0 0.0
    %v7481 = vand.u32 %v113, 4294901760
    %v7482 = vsub.f32 %v113, %v7481
    %7483 = vmatmul.mubr.f32.gmra.mxu0 %v7482
    %v7484 = vpop.f32.mrf.mxu0
    %v7485 = vadd.f32 %v7282, %v7484
    %v7486 = vpop.f32.mrf.mxu0
    %7487 = vmatprep.mubr.f32.mxu0 0.0
    %v7488 = vand.u32 %v114, 4294901760
    %v7489 = vsub.f32 %v114, %v7488
    %7490 = vmatmul.mubr.f32.gmra.mxu0 %v7489
    %v7491 = vpop.f32.mrf.mxu0
    %v7492 = vadd.f32 %v7288, %v7491
    %v7493 = vpop.f32.mrf.mxu0
    %7494 = vmatprep.mubr.f32.mxu0 0.0
    %v7495 = vand.u32 %v115, 4294901760
    %v7496 = vsub.f32 %v115, %v7495
    %7497 = vmatmul.mubr.f32.gmra.mxu0 %v7496
    %v7498 = vpop.f32.mrf.mxu0
    %v7499 = vadd.f32 %v7294, %v7498
    %v7500 = vpop.f32.mrf.mxu0
    %7501 = vmatprep.mubr.f32.mxu0 0.0
    %v7502 = vand.u32 %v116, 4294901760
    %v7503 = vsub.f32 %v116, %v7502
    %7504 = vmatmul.mubr.f32.gmra.mxu0 %v7503
    %v7505 = vpop.f32.mrf.mxu0
    %v7506 = vadd.f32 %v7300, %v7505
    %v7507 = vpop.f32.mrf.mxu0
    %7508 = vmatprep.mubr.f32.mxu0 0.0
    %v7509 = vand.u32 %v117, 4294901760
    %v7510 = vsub.f32 %v117, %v7509
    %7511 = vmatmul.mubr.f32.gmra.mxu0 %v7510
    %v7512 = vpop.f32.mrf.mxu0
    %v7513 = vadd.f32 %v7306, %v7512
    %v7514 = vpop.f32.mrf.mxu0
    %7515 = vmatprep.mubr.f32.mxu0 0.0
    %v7516 = vand.u32 %v118, 4294901760
    %v7517 = vsub.f32 %v118, %v7516
    %7518 = vmatmul.mubr.f32.gmra.mxu0 %v7517
    %v7519 = vpop.f32.mrf.mxu0
    %v7520 = vadd.f32 %v7312, %v7519
    %v7521 = vpop.f32.mrf.mxu0
    %7522 = vmatprep.mubr.f32.mxu0 0.0
    %v7523 = vand.u32 %v119, 4294901760
    %v7524 = vsub.f32 %v119, %v7523
    %7525 = vmatmul.mubr.f32.gmra.mxu0 %v7524
    %v7526 = vpop.f32.mrf.mxu0
    %v7527 = vadd.f32 %v7318, %v7526
    %v7528 = vpop.f32.mrf.mxu0
    %7529 = vdwg.mxu0
    %7530 = vmatprep.subr.mxu0 0.0
    %v7531 = vand.u32 %v4072, 4294901760
    %7532 = vmatpush1.msra.mxu0 %v7531
    %7533 = vmatprep.subr.mxu0 0.0
    %v7534 = vand.u32 %v4066, 4294901760
    %7535 = vmatpush1.msra.mxu0 %v7534
    %7536 = vmatprep.subr.mxu0 0.0
    %v7537 = vand.u32 %v4060, 4294901760
    %7538 = vmatpush1.msra.mxu0 %v7537
    %7539 = vmatprep.subr.mxu0 0.0
    %v7540 = vand.u32 %v4054, 4294901760
    %7541 = vmatpush1.msra.mxu0 %v7540
    %7542 = vmatprep.subr.mxu0 0.0
    %v7543 = vand.u32 %v4048, 4294901760
    %7544 = vmatpush1.msra.mxu0 %v7543
    %7545 = vmatprep.subr.mxu0 0.0
    %v7546 = vand.u32 %v4042, 4294901760
    %7547 = vmatpush1.msra.mxu0 %v7546
    %7548 = vmatprep.subr.mxu0 0.0
    %v7549 = vand.u32 %v4036, 4294901760
    %7550 = vmatpush1.msra.mxu0 %v7549
    %7551 = vmatprep.subr.mxu0 0.0
    %v7552 = vand.u32 %v4030, 4294901760
    %7553 = vmatpush1.msra.mxu0 %v7552
    %7554 = vmatprep.subr.mxu0 0.0
    %v7555 = vand.u32 %v4024, 4294901760
    %7556 = vmatpush1.msra.mxu0 %v7555
    %7557 = vmatprep.subr.mxu0 0.0
    %v7558 = vand.u32 %v4018, 4294901760
    %7559 = vmatpush1.msra.mxu0 %v7558
    %7560 = vmatprep.subr.mxu0 0.0
    %v7561 = vand.u32 %v4012, 4294901760
    %7562 = vmatpush1.msra.mxu0 %v7561
    %7563 = vmatprep.subr.mxu0 0.0
    %v7564 = vand.u32 %v4006, 4294901760
    %7565 = vmatpush1.msra.mxu0 %v7564
    %7566 = vmatprep.subr.mxu0 0.0
    %v7567 = vand.u32 %v4000, 4294901760
    %7568 = vmatpush1.msra.mxu0 %v7567
    %7569 = vmatprep.subr.mxu0 0.0
    %v7570 = vand.u32 %v3994, 4294901760
    %7571 = vmatpush1.msra.mxu0 %v7570
    %7572 = vmatprep.subr.mxu0 0.0
    %v7573 = vand.u32 %v3988, 4294901760
    %7574 = vmatpush1.msra.mxu0 %v7573
    %7575 = vmatprep.subr.mxu0 0.0
    %v7576 = vand.u32 %v3982, 4294901760
    %7577 = vmatpush1.msra.mxu0 %v7576
    %7578 = vmatprep.subr.mxu0 0.0
    %7579 = vmatpush2.msra.mxu0 0.0
    %7580 = vmatprep.subr.mxu0 0.0
    %7581 = vmatpush2.msra.mxu0 0.0
    %7582 = vmatprep.subr.mxu0 0.0
    %7583 = vmatpush2.msra.mxu0 0.0
    %7584 = vmatprep.subr.mxu0 0.0
    %7585 = vmatpush2.msra.mxu0 0.0
    %7586 = vmatprep.subr.mxu0 0.0
    %7587 = vmatpush2.msra.mxu0 0.0
    %7588 = vmatprep.subr.mxu0 0.0
    %7589 = vmatpush2.msra.mxu0 0.0
    %7590 = vmatprep.subr.mxu0 0.0
    %7591 = vmatpush2.msra.mxu0 0.0
    %7592 = vmatprep.subr.mxu0 0.0
    %7593 = vmatpush2.msra.mxu0 0.0
    %7594 = vmatprep.subr.mxu0 0.0
    %7595 = vmatpush2.msra.mxu0 0.0
    %7596 = vmatprep.subr.mxu0 0.0
    %7597 = vmatpush2.msra.mxu0 0.0
    %7598 = vmatprep.subr.mxu0 0.0
    %7599 = vmatpush2.msra.mxu0 0.0
    %7600 = vmatprep.subr.mxu0 0.0
    %7601 = vmatpush2.msra.mxu0 0.0
    %7602 = vmatprep.subr.mxu0 0.0
    %7603 = vmatpush2.msra.mxu0 0.0
    %7604 = vmatprep.subr.mxu0 0.0
    %7605 = vmatpush2.msra.mxu0 0.0
    %7606 = vmatprep.subr.mxu0 0.0
    %7607 = vmatpush2.msra.mxu0 0.0
    %7608 = vmatprep.subr.mxu0 0.0
    %7609 = vmatpush2.msra.mxu0 0.0
    %7610 = vmatprep.mubr.f32.mxu0 0.0
    %v7611 = vand.u32 %v104, 4294901760
    %v7612 = vsub.f32 %v104, %v7611
    %v7613 = vand.u32 %v7612, 4294901760
    %7614 = vmatmul.mubr.f32.gmra.mxu0 %v7613
    %v7615 = vpop.f32.mrf.mxu0
    %v7616 = vadd.f32 %v7422, %v7615
    %v7617 = vpop.f32.mrf.mxu0
    %7618 = vmatprep.mubr.f32.mxu0 0.0
    %v7619 = vand.u32 %v105, 4294901760
    %v7620 = vsub.f32 %v105, %v7619
    %v7621 = vand.u32 %v7620, 4294901760
    %7622 = vmatmul.mubr.f32.gmra.mxu0 %v7621
    %v7623 = vpop.f32.mrf.mxu0
    %v7624 = vadd.f32 %v7429, %v7623
    %v7625 = vpop.f32.mrf.mxu0
    %7626 = vmatprep.mubr.f32.mxu0 0.0
    %v7627 = vand.u32 %v106, 4294901760
    %v7628 = vsub.f32 %v106, %v7627
    %v7629 = vand.u32 %v7628, 4294901760
    %7630 = vmatmul.mubr.f32.gmra.mxu0 %v7629
    %v7631 = vpop.f32.mrf.mxu0
    %v7632 = vadd.f32 %v7436, %v7631
    %v7633 = vpop.f32.mrf.mxu0
    %7634 = vmatprep.mubr.f32.mxu0 0.0
    %v7635 = vand.u32 %v107, 4294901760
    %v7636 = vsub.f32 %v107, %v7635
    %v7637 = vand.u32 %v7636, 4294901760
    %7638 = vmatmul.mubr.f32.gmra.mxu0 %v7637
    %v7639 = vpop.f32.mrf.mxu0
    %v7640 = vadd.f32 %v7443, %v7639
    %v7641 = vpop.f32.mrf.mxu0
    %7642 = vmatprep.mubr.f32.mxu0 0.0
    %v7643 = vand.u32 %v108, 4294901760
    %v7644 = vsub.f32 %v108, %v7643
    %v7645 = vand.u32 %v7644, 4294901760
    %7646 = vmatmul.mubr.f32.gmra.mxu0 %v7645
    %v7647 = vpop.f32.mrf.mxu0
    %v7648 = vadd.f32 %v7450, %v7647
    %v7649 = vpop.f32.mrf.mxu0
    %7650 = vmatprep.mubr.f32.mxu0 0.0
    %v7651 = vand.u32 %v109, 4294901760
    %v7652 = vsub.f32 %v109, %v7651
    %v7653 = vand.u32 %v7652, 4294901760
    %7654 = vmatmul.mubr.f32.gmra.mxu0 %v7653
    %v7655 = vpop.f32.mrf.mxu0
    %v7656 = vadd.f32 %v7457, %v7655
    %v7657 = vpop.f32.mrf.mxu0
    %7658 = vmatprep.mubr.f32.mxu0 0.0
    %v7659 = vand.u32 %v110, 4294901760
    %v7660 = vsub.f32 %v110, %v7659
    %v7661 = vand.u32 %v7660, 4294901760
    %7662 = vmatmul.mubr.f32.gmra.mxu0 %v7661
    %v7663 = vpop.f32.mrf.mxu0
    %v7664 = vadd.f32 %v7464, %v7663
    %v7665 = vpop.f32.mrf.mxu0
    %7666 = vmatprep.mubr.f32.mxu0 0.0
    %v7667 = vand.u32 %v111, 4294901760
    %v7668 = vsub.f32 %v111, %v7667
    %v7669 = vand.u32 %v7668, 4294901760
    %7670 = vmatmul.mubr.f32.gmra.mxu0 %v7669
    %v7671 = vpop.f32.mrf.mxu0
    %v7672 = vadd.f32 %v7471, %v7671
    %v7673 = vpop.f32.mrf.mxu0
    %7674 = vmatprep.mubr.f32.mxu0 0.0
    %v7675 = vand.u32 %v112, 4294901760
    %v7676 = vsub.f32 %v112, %v7675
    %v7677 = vand.u32 %v7676, 4294901760
    %7678 = vmatmul.mubr.f32.gmra.mxu0 %v7677
    %v7679 = vpop.f32.mrf.mxu0
    %v7680 = vadd.f32 %v7478, %v7679
    %v7681 = vpop.f32.mrf.mxu0
    %7682 = vmatprep.mubr.f32.mxu0 0.0
    %v7683 = vand.u32 %v113, 4294901760
    %v7684 = vsub.f32 %v113, %v7683
    %v7685 = vand.u32 %v7684, 4294901760
    %7686 = vmatmul.mubr.f32.gmra.mxu0 %v7685
    %v7687 = vpop.f32.mrf.mxu0
    %v7688 = vadd.f32 %v7485, %v7687
    %v7689 = vpop.f32.mrf.mxu0
    %7690 = vmatprep.mubr.f32.mxu0 0.0
    %v7691 = vand.u32 %v114, 4294901760
    %v7692 = vsub.f32 %v114, %v7691
    %v7693 = vand.u32 %v7692, 4294901760
    %7694 = vmatmul.mubr.f32.gmra.mxu0 %v7693
    %v7695 = vpop.f32.mrf.mxu0
    %v7696 = vadd.f32 %v7492, %v7695
    %v7697 = vpop.f32.mrf.mxu0
    %7698 = vmatprep.mubr.f32.mxu0 0.0
    %v7699 = vand.u32 %v115, 4294901760
    %v7700 = vsub.f32 %v115, %v7699
    %v7701 = vand.u32 %v7700, 4294901760
    %7702 = vmatmul.mubr.f32.gmra.mxu0 %v7701
    %v7703 = vpop.f32.mrf.mxu0
    %v7704 = vadd.f32 %v7499, %v7703
    %v7705 = vpop.f32.mrf.mxu0
    %7706 = vmatprep.mubr.f32.mxu0 0.0
    %v7707 = vand.u32 %v116, 4294901760
    %v7708 = vsub.f32 %v116, %v7707
    %v7709 = vand.u32 %v7708, 4294901760
    %7710 = vmatmul.mubr.f32.gmra.mxu0 %v7709
    %v7711 = vpop.f32.mrf.mxu0
    %v7712 = vadd.f32 %v7506, %v7711
    %v7713 = vpop.f32.mrf.mxu0
    %7714 = vmatprep.mubr.f32.mxu0 0.0
    %v7715 = vand.u32 %v117, 4294901760
    %v7716 = vsub.f32 %v117, %v7715
    %v7717 = vand.u32 %v7716, 4294901760
    %7718 = vmatmul.mubr.f32.gmra.mxu0 %v7717
    %v7719 = vpop.f32.mrf.mxu0
    %v7720 = vadd.f32 %v7513, %v7719
    %v7721 = vpop.f32.mrf.mxu0
    %7722 = vmatprep.mubr.f32.mxu0 0.0
    %v7723 = vand.u32 %v118, 4294901760
    %v7724 = vsub.f32 %v118, %v7723
    %v7725 = vand.u32 %v7724, 4294901760
    %7726 = vmatmul.mubr.f32.gmra.mxu0 %v7725
    %v7727 = vpop.f32.mrf.mxu0
    %v7728 = vadd.f32 %v7520, %v7727
    %v7729 = vpop.f32.mrf.mxu0
    %7730 = vmatprep.mubr.f32.mxu0 0.0
    %v7731 = vand.u32 %v119, 4294901760
    %v7732 = vsub.f32 %v119, %v7731
    %v7733 = vand.u32 %v7732, 4294901760
    %7734 = vmatmul.mubr.f32.gmra.mxu0 %v7733
    %v7735 = vpop.f32.mrf.mxu0
    %v7736 = vadd.f32 %v7527, %v7735
    %v7737 = vpop.f32.mrf.mxu0
    %7738 = vdwg.mxu0
    %7739 = vmatprep.subr.mxu0 0.0
    %v7740 = vand.u32 %v4072, 4294901760
    %v7741 = vsub.f32 %v4072, %v7740
    %v7742 = vand.u32 %v7741, 4294901760
    %7743 = vmatpush1.msra.mxu0 %v7742
    %7744 = vmatprep.subr.mxu0 0.0
    %v7745 = vand.u32 %v4066, 4294901760
    %v7746 = vsub.f32 %v4066, %v7745
    %v7747 = vand.u32 %v7746, 4294901760
    %7748 = vmatpush1.msra.mxu0 %v7747
    %7749 = vmatprep.subr.mxu0 0.0
    %v7750 = vand.u32 %v4060, 4294901760
    %v7751 = vsub.f32 %v4060, %v7750
    %v7752 = vand.u32 %v7751, 4294901760
    %7753 = vmatpush1.msra.mxu0 %v7752
    %7754 = vmatprep.subr.mxu0 0.0
    %v7755 = vand.u32 %v4054, 4294901760
    %v7756 = vsub.f32 %v4054, %v7755
    %v7757 = vand.u32 %v7756, 4294901760
    %7758 = vmatpush1.msra.mxu0 %v7757
    %7759 = vmatprep.subr.mxu0 0.0
    %v7760 = vand.u32 %v4048, 4294901760
    %v7761 = vsub.f32 %v4048, %v7760
    %v7762 = vand.u32 %v7761, 4294901760
    %7763 = vmatpush1.msra.mxu0 %v7762
    %7764 = vmatprep.subr.mxu0 0.0
    %v7765 = vand.u32 %v4042, 4294901760
    %v7766 = vsub.f32 %v4042, %v7765
    %v7767 = vand.u32 %v7766, 4294901760
    %7768 = vmatpush1.msra.mxu0 %v7767
    %7769 = vmatprep.subr.mxu0 0.0
    %v7770 = vand.u32 %v4036, 4294901760
    %v7771 = vsub.f32 %v4036, %v7770
    %v7772 = vand.u32 %v7771, 4294901760
    %7773 = vmatpush1.msra.mxu0 %v7772
    %7774 = vmatprep.subr.mxu0 0.0
    %v7775 = vand.u32 %v4030, 4294901760
    %v7776 = vsub.f32 %v4030, %v7775
    %v7777 = vand.u32 %v7776, 4294901760
    %7778 = vmatpush1.msra.mxu0 %v7777
    %7779 = vmatprep.subr.mxu0 0.0
    %v7780 = vand.u32 %v4024, 4294901760
    %v7781 = vsub.f32 %v4024, %v7780
    %v7782 = vand.u32 %v7781, 4294901760
    %7783 = vmatpush1.msra.mxu0 %v7782
    %7784 = vmatprep.subr.mxu0 0.0
    %v7785 = vand.u32 %v4018, 4294901760
    %v7786 = vsub.f32 %v4018, %v7785
    %v7787 = vand.u32 %v7786, 4294901760
    %7788 = vmatpush1.msra.mxu0 %v7787
    %7789 = vmatprep.subr.mxu0 0.0
    %v7790 = vand.u32 %v4012, 4294901760
    %v7791 = vsub.f32 %v4012, %v7790
    %v7792 = vand.u32 %v7791, 4294901760
    %7793 = vmatpush1.msra.mxu0 %v7792
    %7794 = vmatprep.subr.mxu0 0.0
    %v7795 = vand.u32 %v4006, 4294901760
    %v7796 = vsub.f32 %v4006, %v7795
    %v7797 = vand.u32 %v7796, 4294901760
    %7798 = vmatpush1.msra.mxu0 %v7797
    %7799 = vmatprep.subr.mxu0 0.0
    %v7800 = vand.u32 %v4000, 4294901760
    %v7801 = vsub.f32 %v4000, %v7800
    %v7802 = vand.u32 %v7801, 4294901760
    %7803 = vmatpush1.msra.mxu0 %v7802
    %7804 = vmatprep.subr.mxu0 0.0
    %v7805 = vand.u32 %v3994, 4294901760
    %v7806 = vsub.f32 %v3994, %v7805
    %v7807 = vand.u32 %v7806, 4294901760
    %7808 = vmatpush1.msra.mxu0 %v7807
    %7809 = vmatprep.subr.mxu0 0.0
    %v7810 = vand.u32 %v3988, 4294901760
    %v7811 = vsub.f32 %v3988, %v7810
    %v7812 = vand.u32 %v7811, 4294901760
    %7813 = vmatpush1.msra.mxu0 %v7812
    %7814 = vmatprep.subr.mxu0 0.0
    %v7815 = vand.u32 %v3982, 4294901760
    %v7816 = vsub.f32 %v3982, %v7815
    %v7817 = vand.u32 %v7816, 4294901760
    %7818 = vmatpush1.msra.mxu0 %v7817
    %7819 = vmatprep.subr.mxu0 0.0
    %7820 = vmatpush2.msra.mxu0 0.0
    %7821 = vmatprep.subr.mxu0 0.0
    %7822 = vmatpush2.msra.mxu0 0.0
    %7823 = vmatprep.subr.mxu0 0.0
    %7824 = vmatpush2.msra.mxu0 0.0
    %7825 = vmatprep.subr.mxu0 0.0
    %7826 = vmatpush2.msra.mxu0 0.0
    %7827 = vmatprep.subr.mxu0 0.0
    %7828 = vmatpush2.msra.mxu0 0.0
    %7829 = vmatprep.subr.mxu0 0.0
    %7830 = vmatpush2.msra.mxu0 0.0
    %7831 = vmatprep.subr.mxu0 0.0
    %7832 = vmatpush2.msra.mxu0 0.0
    %7833 = vmatprep.subr.mxu0 0.0
    %7834 = vmatpush2.msra.mxu0 0.0
    %7835 = vmatprep.subr.mxu0 0.0
    %7836 = vmatpush2.msra.mxu0 0.0
    %7837 = vmatprep.subr.mxu0 0.0
    %7838 = vmatpush2.msra.mxu0 0.0
    %7839 = vmatprep.subr.mxu0 0.0
    %7840 = vmatpush2.msra.mxu0 0.0
    %7841 = vmatprep.subr.mxu0 0.0
    %7842 = vmatpush2.msra.mxu0 0.0
    %7843 = vmatprep.subr.mxu0 0.0
    %7844 = vmatpush2.msra.mxu0 0.0
    %7845 = vmatprep.subr.mxu0 0.0
    %7846 = vmatpush2.msra.mxu0 0.0
    %7847 = vmatprep.subr.mxu0 0.0
    %7848 = vmatpush2.msra.mxu0 0.0
    %7849 = vmatprep.subr.mxu0 0.0
    %7850 = vmatpush2.msra.mxu0 0.0
    %7851 = vmatprep.mubr.f32.mxu0 0.0
    %v7852 = vand.u32 %v104, 4294901760
    %7853 = vmatmul.mubr.f32.gmra.mxu0 %v7852
    %v7854 = vpop.f32.mrf.mxu0
    %v7855 = vadd.f32 %v7616, %v7854
    %v7856 = vpop.f32.mrf.mxu0
    %7857 = vmatprep.mubr.f32.mxu0 0.0
    %v7858 = vand.u32 %v105, 4294901760
    %7859 = vmatmul.mubr.f32.gmra.mxu0 %v7858
    %v7860 = vpop.f32.mrf.mxu0
    %v7861 = vadd.f32 %v7624, %v7860
    %v7862 = vpop.f32.mrf.mxu0
    %7863 = vmatprep.mubr.f32.mxu0 0.0
    %v7864 = vand.u32 %v106, 4294901760
    %7865 = vmatmul.mubr.f32.gmra.mxu0 %v7864
    %v7866 = vpop.f32.mrf.mxu0
    %v7867 = vadd.f32 %v7632, %v7866
    %v7868 = vpop.f32.mrf.mxu0
    %7869 = vmatprep.mubr.f32.mxu0 0.0
    %v7870 = vand.u32 %v107, 4294901760
    %7871 = vmatmul.mubr.f32.gmra.mxu0 %v7870
    %v7872 = vpop.f32.mrf.mxu0
    %v7873 = vadd.f32 %v7640, %v7872
    %v7874 = vpop.f32.mrf.mxu0
    %7875 = vmatprep.mubr.f32.mxu0 0.0
    %v7876 = vand.u32 %v108, 4294901760
    %7877 = vmatmul.mubr.f32.gmra.mxu0 %v7876
    %v7878 = vpop.f32.mrf.mxu0
    %v7879 = vadd.f32 %v7648, %v7878
    %v7880 = vpop.f32.mrf.mxu0
    %7881 = vmatprep.mubr.f32.mxu0 0.0
    %v7882 = vand.u32 %v109, 4294901760
    %7883 = vmatmul.mubr.f32.gmra.mxu0 %v7882
    %v7884 = vpop.f32.mrf.mxu0
    %v7885 = vadd.f32 %v7656, %v7884
    %v7886 = vpop.f32.mrf.mxu0
    %7887 = vmatprep.mubr.f32.mxu0 0.0
    %v7888 = vand.u32 %v110, 4294901760
    %7889 = vmatmul.mubr.f32.gmra.mxu0 %v7888
    %v7890 = vpop.f32.mrf.mxu0
    %v7891 = vadd.f32 %v7664, %v7890
    %v7892 = vpop.f32.mrf.mxu0
    %7893 = vmatprep.mubr.f32.mxu0 0.0
    %v7894 = vand.u32 %v111, 4294901760
    %7895 = vmatmul.mubr.f32.gmra.mxu0 %v7894
    %v7896 = vpop.f32.mrf.mxu0
    %v7897 = vadd.f32 %v7672, %v7896
    %v7898 = vpop.f32.mrf.mxu0
    %7899 = vmatprep.mubr.f32.mxu0 0.0
    %v7900 = vand.u32 %v112, 4294901760
    %7901 = vmatmul.mubr.f32.gmra.mxu0 %v7900
    %v7902 = vpop.f32.mrf.mxu0
    %v7903 = vadd.f32 %v7680, %v7902
    %v7904 = vpop.f32.mrf.mxu0
    %7905 = vmatprep.mubr.f32.mxu0 0.0
    %v7906 = vand.u32 %v113, 4294901760
    %7907 = vmatmul.mubr.f32.gmra.mxu0 %v7906
    %v7908 = vpop.f32.mrf.mxu0
    %v7909 = vadd.f32 %v7688, %v7908
    %v7910 = vpop.f32.mrf.mxu0
    %7911 = vmatprep.mubr.f32.mxu0 0.0
    %v7912 = vand.u32 %v114, 4294901760
    %7913 = vmatmul.mubr.f32.gmra.mxu0 %v7912
    %v7914 = vpop.f32.mrf.mxu0
    %v7915 = vadd.f32 %v7696, %v7914
    %v7916 = vpop.f32.mrf.mxu0
    %7917 = vmatprep.mubr.f32.mxu0 0.0
    %v7918 = vand.u32 %v115, 4294901760
    %7919 = vmatmul.mubr.f32.gmra.mxu0 %v7918
    %v7920 = vpop.f32.mrf.mxu0
    %v7921 = vadd.f32 %v7704, %v7920
    %v7922 = vpop.f32.mrf.mxu0
    %7923 = vmatprep.mubr.f32.mxu0 0.0
    %v7924 = vand.u32 %v116, 4294901760
    %7925 = vmatmul.mubr.f32.gmra.mxu0 %v7924
    %v7926 = vpop.f32.mrf.mxu0
    %v7927 = vadd.f32 %v7712, %v7926
    %v7928 = vpop.f32.mrf.mxu0
    %7929 = vmatprep.mubr.f32.mxu0 0.0
    %v7930 = vand.u32 %v117, 4294901760
    %7931 = vmatmul.mubr.f32.gmra.mxu0 %v7930
    %v7932 = vpop.f32.mrf.mxu0
    %v7933 = vadd.f32 %v7720, %v7932
    %v7934 = vpop.f32.mrf.mxu0
    %7935 = vmatprep.mubr.f32.mxu0 0.0
    %v7936 = vand.u32 %v118, 4294901760
    %7937 = vmatmul.mubr.f32.gmra.mxu0 %v7936
    %v7938 = vpop.f32.mrf.mxu0
    %v7939 = vadd.f32 %v7728, %v7938
    %v7940 = vpop.f32.mrf.mxu0
    %7941 = vmatprep.mubr.f32.mxu0 0.0
    %v7942 = vand.u32 %v119, 4294901760
    %7943 = vmatmul.mubr.f32.gmra.mxu0 %v7942
    %v7944 = vpop.f32.mrf.mxu0
    %v7945 = vadd.f32 %v7736, %v7944
    %v7946 = vpop.f32.mrf.mxu0
    %7947 = vdwg.mxu0
    %7948 = vmatprep.subr.mxu0 0.0
    %v7949 = vand.u32 %v4072, 4294901760
    %7950 = vmatpush1.msra.mxu0 %v7949
    %7951 = vmatprep.subr.mxu0 0.0
    %v7952 = vand.u32 %v4066, 4294901760
    %7953 = vmatpush1.msra.mxu0 %v7952
    %7954 = vmatprep.subr.mxu0 0.0
    %v7955 = vand.u32 %v4060, 4294901760
    %7956 = vmatpush1.msra.mxu0 %v7955
    %7957 = vmatprep.subr.mxu0 0.0
    %v7958 = vand.u32 %v4054, 4294901760
    %7959 = vmatpush1.msra.mxu0 %v7958
    %7960 = vmatprep.subr.mxu0 0.0
    %v7961 = vand.u32 %v4048, 4294901760
    %7962 = vmatpush1.msra.mxu0 %v7961
    %7963 = vmatprep.subr.mxu0 0.0
    %v7964 = vand.u32 %v4042, 4294901760
    %7965 = vmatpush1.msra.mxu0 %v7964
    %7966 = vmatprep.subr.mxu0 0.0
    %v7967 = vand.u32 %v4036, 4294901760
    %7968 = vmatpush1.msra.mxu0 %v7967
    %7969 = vmatprep.subr.mxu0 0.0
    %v7970 = vand.u32 %v4030, 4294901760
    %7971 = vmatpush1.msra.mxu0 %v7970
    %7972 = vmatprep.subr.mxu0 0.0
    %v7973 = vand.u32 %v4024, 4294901760
    %7974 = vmatpush1.msra.mxu0 %v7973
    %7975 = vmatprep.subr.mxu0 0.0
    %v7976 = vand.u32 %v4018, 4294901760
    %7977 = vmatpush1.msra.mxu0 %v7976
    %7978 = vmatprep.subr.mxu0 0.0
    %v7979 = vand.u32 %v4012, 4294901760
    %7980 = vmatpush1.msra.mxu0 %v7979
    %7981 = vmatprep.subr.mxu0 0.0
    %v7982 = vand.u32 %v4006, 4294901760
    %7983 = vmatpush1.msra.mxu0 %v7982
    %7984 = vmatprep.subr.mxu0 0.0
    %v7985 = vand.u32 %v4000, 4294901760
    %7986 = vmatpush1.msra.mxu0 %v7985
    %7987 = vmatprep.subr.mxu0 0.0
    %v7988 = vand.u32 %v3994, 4294901760
    %7989 = vmatpush1.msra.mxu0 %v7988
    %7990 = vmatprep.subr.mxu0 0.0
    %v7991 = vand.u32 %v3988, 4294901760
    %7992 = vmatpush1.msra.mxu0 %v7991
    %7993 = vmatprep.subr.mxu0 0.0
    %v7994 = vand.u32 %v3982, 4294901760
    %7995 = vmatpush1.msra.mxu0 %v7994
    %7996 = vmatprep.subr.mxu0 0.0
    %7997 = vmatpush2.msra.mxu0 0.0
    %7998 = vmatprep.subr.mxu0 0.0
    %7999 = vmatpush2.msra.mxu0 0.0
    %8000 = vmatprep.subr.mxu0 0.0
    %8001 = vmatpush2.msra.mxu0 0.0
    %8002 = vmatprep.subr.mxu0 0.0
    %8003 = vmatpush2.msra.mxu0 0.0
    %8004 = vmatprep.subr.mxu0 0.0
    %8005 = vmatpush2.msra.mxu0 0.0
    %8006 = vmatprep.subr.mxu0 0.0
    %8007 = vmatpush2.msra.mxu0 0.0
    %8008 = vmatprep.subr.mxu0 0.0
    %8009 = vmatpush2.msra.mxu0 0.0
    %8010 = vmatprep.subr.mxu0 0.0
    %8011 = vmatpush2.msra.mxu0 0.0
    %8012 = vmatprep.subr.mxu0 0.0
    %8013 = vmatpush2.msra.mxu0 0.0
    %8014 = vmatprep.subr.mxu0 0.0
    %8015 = vmatpush2.msra.mxu0 0.0
    %8016 = vmatprep.subr.mxu0 0.0
    %8017 = vmatpush2.msra.mxu0 0.0
    %8018 = vmatprep.subr.mxu0 0.0
    %8019 = vmatpush2.msra.mxu0 0.0
    %8020 = vmatprep.subr.mxu0 0.0
    %8021 = vmatpush2.msra.mxu0 0.0
    %8022 = vmatprep.subr.mxu0 0.0
    %8023 = vmatpush2.msra.mxu0 0.0
    %8024 = vmatprep.subr.mxu0 0.0
    %8025 = vmatpush2.msra.mxu0 0.0
    %8026 = vmatprep.subr.mxu0 0.0
    %8027 = vmatpush2.msra.mxu0 0.0
    %8028 = vmatprep.mubr.f32.mxu0 0.0
    %v8029 = vand.u32 %v104, 4294901760
    %8030 = vmatmul.mubr.f32.gmra.mxu0 %v8029
    %v8031 = vpop.f32.mrf.mxu0
    %v8032 = vadd.f32 %v7855, %v8031
    %v8033 = vpop.f32.mrf.mxu0
    %8034 = vmatprep.mubr.f32.mxu0 0.0
    %v8035 = vand.u32 %v105, 4294901760
    %8036 = vmatmul.mubr.f32.gmra.mxu0 %v8035
    %v8037 = vpop.f32.mrf.mxu0
    %v8038 = vadd.f32 %v7861, %v8037
    %v8039 = vpop.f32.mrf.mxu0
    %8040 = vmatprep.mubr.f32.mxu0 0.0
    %v8041 = vand.u32 %v106, 4294901760
    %8042 = vmatmul.mubr.f32.gmra.mxu0 %v8041
    %v8043 = vpop.f32.mrf.mxu0
    %v8044 = vadd.f32 %v7867, %v8043
    %v8045 = vpop.f32.mrf.mxu0
    %8046 = vmatprep.mubr.f32.mxu0 0.0
    %v8047 = vand.u32 %v107, 4294901760
    %8048 = vmatmul.mubr.f32.gmra.mxu0 %v8047
    %v8049 = vpop.f32.mrf.mxu0
    %v8050 = vadd.f32 %v7873, %v8049
    %v8051 = vpop.f32.mrf.mxu0
    %8052 = vmatprep.mubr.f32.mxu0 0.0
    %v8053 = vand.u32 %v108, 4294901760
    %8054 = vmatmul.mubr.f32.gmra.mxu0 %v8053
    %v8055 = vpop.f32.mrf.mxu0
    %v8056 = vadd.f32 %v7879, %v8055
    %v8057 = vpop.f32.mrf.mxu0
    %8058 = vmatprep.mubr.f32.mxu0 0.0
    %v8059 = vand.u32 %v109, 4294901760
    %8060 = vmatmul.mubr.f32.gmra.mxu0 %v8059
    %v8061 = vpop.f32.mrf.mxu0
    %v8062 = vadd.f32 %v7885, %v8061
    %v8063 = vpop.f32.mrf.mxu0
    %8064 = vmatprep.mubr.f32.mxu0 0.0
    %v8065 = vand.u32 %v110, 4294901760
    %8066 = vmatmul.mubr.f32.gmra.mxu0 %v8065
    %v8067 = vpop.f32.mrf.mxu0
    %v8068 = vadd.f32 %v7891, %v8067
    %v8069 = vpop.f32.mrf.mxu0
    %8070 = vmatprep.mubr.f32.mxu0 0.0
    %v8071 = vand.u32 %v111, 4294901760
    %8072 = vmatmul.mubr.f32.gmra.mxu0 %v8071
    %v8073 = vpop.f32.mrf.mxu0
    %v8074 = vadd.f32 %v7897, %v8073
    %v8075 = vpop.f32.mrf.mxu0
    %8076 = vmatprep.mubr.f32.mxu0 0.0
    %v8077 = vand.u32 %v112, 4294901760
    %8078 = vmatmul.mubr.f32.gmra.mxu0 %v8077
    %v8079 = vpop.f32.mrf.mxu0
    %v8080 = vadd.f32 %v7903, %v8079
    %v8081 = vpop.f32.mrf.mxu0
    %8082 = vmatprep.mubr.f32.mxu0 0.0
    %v8083 = vand.u32 %v113, 4294901760
    %8084 = vmatmul.mubr.f32.gmra.mxu0 %v8083
    %v8085 = vpop.f32.mrf.mxu0
    %v8086 = vadd.f32 %v7909, %v8085
    %v8087 = vpop.f32.mrf.mxu0
    %8088 = vmatprep.mubr.f32.mxu0 0.0
    %v8089 = vand.u32 %v114, 4294901760
    %8090 = vmatmul.mubr.f32.gmra.mxu0 %v8089
    %v8091 = vpop.f32.mrf.mxu0
    %v8092 = vadd.f32 %v7915, %v8091
    %v8093 = vpop.f32.mrf.mxu0
    %8094 = vmatprep.mubr.f32.mxu0 0.0
    %v8095 = vand.u32 %v115, 4294901760
    %8096 = vmatmul.mubr.f32.gmra.mxu0 %v8095
    %v8097 = vpop.f32.mrf.mxu0
    %v8098 = vadd.f32 %v7921, %v8097
    %v8099 = vpop.f32.mrf.mxu0
    %8100 = vmatprep.mubr.f32.mxu0 0.0
    %v8101 = vand.u32 %v116, 4294901760
    %8102 = vmatmul.mubr.f32.gmra.mxu0 %v8101
    %v8103 = vpop.f32.mrf.mxu0
    %v8104 = vadd.f32 %v7927, %v8103
    %v8105 = vpop.f32.mrf.mxu0
    %8106 = vmatprep.mubr.f32.mxu0 0.0
    %v8107 = vand.u32 %v117, 4294901760
    %8108 = vmatmul.mubr.f32.gmra.mxu0 %v8107
    %v8109 = vpop.f32.mrf.mxu0
    %v8110 = vadd.f32 %v7933, %v8109
    %v8111 = vpop.f32.mrf.mxu0
    %8112 = vmatprep.mubr.f32.mxu0 0.0
    %v8113 = vand.u32 %v118, 4294901760
    %8114 = vmatmul.mubr.f32.gmra.mxu0 %v8113
    %v8115 = vpop.f32.mrf.mxu0
    %v8116 = vadd.f32 %v7939, %v8115
    %v8117 = vpop.f32.mrf.mxu0
    %8118 = vmatprep.mubr.f32.mxu0 0.0
    %v8119 = vand.u32 %v119, 4294901760
    %8120 = vmatmul.mubr.f32.gmra.mxu0 %v8119
    %v8121 = vpop.f32.mrf.mxu0
    %v8122 = vadd.f32 %v7945, %v8121
    %v8123 = vpop.f32.mrf.mxu0
    %8124 = vdwg.mxu0
    %8125 = vmatprep.subr.mxu0 0.0
    %v8126 = vand.u32 %v4168, 4294901760
    %8127 = vmatpush1.msra.mxu0 %v8126
    %8128 = vmatprep.subr.mxu0 0.0
    %v8129 = vand.u32 %v4162, 4294901760
    %8130 = vmatpush1.msra.mxu0 %v8129
    %8131 = vmatprep.subr.mxu0 0.0
    %v8132 = vand.u32 %v4156, 4294901760
    %8133 = vmatpush1.msra.mxu0 %v8132
    %8134 = vmatprep.subr.mxu0 0.0
    %v8135 = vand.u32 %v4150, 4294901760
    %8136 = vmatpush1.msra.mxu0 %v8135
    %8137 = vmatprep.subr.mxu0 0.0
    %v8138 = vand.u32 %v4144, 4294901760
    %8139 = vmatpush1.msra.mxu0 %v8138
    %8140 = vmatprep.subr.mxu0 0.0
    %v8141 = vand.u32 %v4138, 4294901760
    %8142 = vmatpush1.msra.mxu0 %v8141
    %8143 = vmatprep.subr.mxu0 0.0
    %v8144 = vand.u32 %v4132, 4294901760
    %8145 = vmatpush1.msra.mxu0 %v8144
    %8146 = vmatprep.subr.mxu0 0.0
    %v8147 = vand.u32 %v4126, 4294901760
    %8148 = vmatpush1.msra.mxu0 %v8147
    %8149 = vmatprep.subr.mxu0 0.0
    %v8150 = vand.u32 %v4120, 4294901760
    %8151 = vmatpush1.msra.mxu0 %v8150
    %8152 = vmatprep.subr.mxu0 0.0
    %v8153 = vand.u32 %v4114, 4294901760
    %8154 = vmatpush1.msra.mxu0 %v8153
    %8155 = vmatprep.subr.mxu0 0.0
    %v8156 = vand.u32 %v4108, 4294901760
    %8157 = vmatpush1.msra.mxu0 %v8156
    %8158 = vmatprep.subr.mxu0 0.0
    %v8159 = vand.u32 %v4102, 4294901760
    %8160 = vmatpush1.msra.mxu0 %v8159
    %8161 = vmatprep.subr.mxu0 0.0
    %v8162 = vand.u32 %v4096, 4294901760
    %8163 = vmatpush1.msra.mxu0 %v8162
    %8164 = vmatprep.subr.mxu0 0.0
    %v8165 = vand.u32 %v4090, 4294901760
    %8166 = vmatpush1.msra.mxu0 %v8165
    %8167 = vmatprep.subr.mxu0 0.0
    %v8168 = vand.u32 %v4084, 4294901760
    %8169 = vmatpush1.msra.mxu0 %v8168
    %8170 = vmatprep.subr.mxu0 0.0
    %v8171 = vand.u32 %v4078, 4294901760
    %8172 = vmatpush1.msra.mxu0 %v8171
    %8173 = vmatprep.subr.mxu0 0.0
    %8174 = vmatpush2.msra.mxu0 0.0
    %8175 = vmatprep.subr.mxu0 0.0
    %8176 = vmatpush2.msra.mxu0 0.0
    %8177 = vmatprep.subr.mxu0 0.0
    %8178 = vmatpush2.msra.mxu0 0.0
    %8179 = vmatprep.subr.mxu0 0.0
    %8180 = vmatpush2.msra.mxu0 0.0
    %8181 = vmatprep.subr.mxu0 0.0
    %8182 = vmatpush2.msra.mxu0 0.0
    %8183 = vmatprep.subr.mxu0 0.0
    %8184 = vmatpush2.msra.mxu0 0.0
    %8185 = vmatprep.subr.mxu0 0.0
    %8186 = vmatpush2.msra.mxu0 0.0
    %8187 = vmatprep.subr.mxu0 0.0
    %8188 = vmatpush2.msra.mxu0 0.0
    %8189 = vmatprep.subr.mxu0 0.0
    %8190 = vmatpush2.msra.mxu0 0.0
    %8191 = vmatprep.subr.mxu0 0.0
    %8192 = vmatpush2.msra.mxu0 0.0
    %8193 = vmatprep.subr.mxu0 0.0
    %8194 = vmatpush2.msra.mxu0 0.0
    %8195 = vmatprep.subr.mxu0 0.0
    %8196 = vmatpush2.msra.mxu0 0.0
    %8197 = vmatprep.subr.mxu0 0.0
    %8198 = vmatpush2.msra.mxu0 0.0
    %8199 = vmatprep.subr.mxu0 0.0
    %8200 = vmatpush2.msra.mxu0 0.0
    %8201 = vmatprep.subr.mxu0 0.0
    %8202 = vmatpush2.msra.mxu0 0.0
    %8203 = vmatprep.subr.mxu0 0.0
    %8204 = vmatpush2.msra.mxu0 0.0
    %8205 = vmatprep.mubr.f32.mxu0 0.0
    %v8206 = vand.u32 %v104, 4294901760
    %v8207 = vsub.f32 %v104, %v8206
    %v8208 = vand.u32 %v8207, 4294901760
    %v8209 = vsub.f32 %v8207, %v8208
    %v8210 = vand.u32 %v8209, 4294901760
    %8211 = vmatmul.mubr.f32.gmra.mxu0 %v8210
    %v8212 = vpop.f32.mrf.mxu0
    %v8213 = vadd.f32 0.0, %v8212
    %v8214 = vpop.f32.mrf.mxu0
    %8215 = vmatprep.mubr.f32.mxu0 0.0
    %v8216 = vand.u32 %v105, 4294901760
    %v8217 = vsub.f32 %v105, %v8216
    %v8218 = vand.u32 %v8217, 4294901760
    %v8219 = vsub.f32 %v8217, %v8218
    %v8220 = vand.u32 %v8219, 4294901760
    %8221 = vmatmul.mubr.f32.gmra.mxu0 %v8220
    %v8222 = vpop.f32.mrf.mxu0
    %v8223 = vadd.f32 0.0, %v8222
    %v8224 = vpop.f32.mrf.mxu0
    %8225 = vmatprep.mubr.f32.mxu0 0.0
    %v8226 = vand.u32 %v106, 4294901760
    %v8227 = vsub.f32 %v106, %v8226
    %v8228 = vand.u32 %v8227, 4294901760
    %v8229 = vsub.f32 %v8227, %v8228
    %v8230 = vand.u32 %v8229, 4294901760
    %8231 = vmatmul.mubr.f32.gmra.mxu0 %v8230
    %v8232 = vpop.f32.mrf.mxu0
    %v8233 = vadd.f32 0.0, %v8232
    %v8234 = vpop.f32.mrf.mxu0
    %8235 = vmatprep.mubr.f32.mxu0 0.0
    %v8236 = vand.u32 %v107, 4294901760
    %v8237 = vsub.f32 %v107, %v8236
    %v8238 = vand.u32 %v8237, 4294901760
    %v8239 = vsub.f32 %v8237, %v8238
    %v8240 = vand.u32 %v8239, 4294901760
    %8241 = vmatmul.mubr.f32.gmra.mxu0 %v8240
    %v8242 = vpop.f32.mrf.mxu0
    %v8243 = vadd.f32 0.0, %v8242
    %v8244 = vpop.f32.mrf.mxu0
    %8245 = vmatprep.mubr.f32.mxu0 0.0
    %v8246 = vand.u32 %v108, 4294901760
    %v8247 = vsub.f32 %v108, %v8246
    %v8248 = vand.u32 %v8247, 4294901760
    %v8249 = vsub.f32 %v8247, %v8248
    %v8250 = vand.u32 %v8249, 4294901760
    %8251 = vmatmul.mubr.f32.gmra.mxu0 %v8250
    %v8252 = vpop.f32.mrf.mxu0
    %v8253 = vadd.f32 0.0, %v8252
    %v8254 = vpop.f32.mrf.mxu0
    %8255 = vmatprep.mubr.f32.mxu0 0.0
    %v8256 = vand.u32 %v109, 4294901760
    %v8257 = vsub.f32 %v109, %v8256
    %v8258 = vand.u32 %v8257, 4294901760
    %v8259 = vsub.f32 %v8257, %v8258
    %v8260 = vand.u32 %v8259, 4294901760
    %8261 = vmatmul.mubr.f32.gmra.mxu0 %v8260
    %v8262 = vpop.f32.mrf.mxu0
    %v8263 = vadd.f32 0.0, %v8262
    %v8264 = vpop.f32.mrf.mxu0
    %8265 = vmatprep.mubr.f32.mxu0 0.0
    %v8266 = vand.u32 %v110, 4294901760
    %v8267 = vsub.f32 %v110, %v8266
    %v8268 = vand.u32 %v8267, 4294901760
    %v8269 = vsub.f32 %v8267, %v8268
    %v8270 = vand.u32 %v8269, 4294901760
    %8271 = vmatmul.mubr.f32.gmra.mxu0 %v8270
    %v8272 = vpop.f32.mrf.mxu0
    %v8273 = vadd.f32 0.0, %v8272
    %v8274 = vpop.f32.mrf.mxu0
    %8275 = vmatprep.mubr.f32.mxu0 0.0
    %v8276 = vand.u32 %v111, 4294901760
    %v8277 = vsub.f32 %v111, %v8276
    %v8278 = vand.u32 %v8277, 4294901760
    %v8279 = vsub.f32 %v8277, %v8278
    %v8280 = vand.u32 %v8279, 4294901760
    %8281 = vmatmul.mubr.f32.gmra.mxu0 %v8280
    %v8282 = vpop.f32.mrf.mxu0
    %v8283 = vadd.f32 0.0, %v8282
    %v8284 = vpop.f32.mrf.mxu0
    %8285 = vmatprep.mubr.f32.mxu0 0.0
    %v8286 = vand.u32 %v112, 4294901760
    %v8287 = vsub.f32 %v112, %v8286
    %v8288 = vand.u32 %v8287, 4294901760
    %v8289 = vsub.f32 %v8287, %v8288
    %v8290 = vand.u32 %v8289, 4294901760
    %8291 = vmatmul.mubr.f32.gmra.mxu0 %v8290
    %v8292 = vpop.f32.mrf.mxu0
    %v8293 = vadd.f32 0.0, %v8292
    %v8294 = vpop.f32.mrf.mxu0
    %8295 = vmatprep.mubr.f32.mxu0 0.0
    %v8296 = vand.u32 %v113, 4294901760
    %v8297 = vsub.f32 %v113, %v8296
    %v8298 = vand.u32 %v8297, 4294901760
    %v8299 = vsub.f32 %v8297, %v8298
    %v8300 = vand.u32 %v8299, 4294901760
    %8301 = vmatmul.mubr.f32.gmra.mxu0 %v8300
    %v8302 = vpop.f32.mrf.mxu0
    %v8303 = vadd.f32 0.0, %v8302
    %v8304 = vpop.f32.mrf.mxu0
    %8305 = vmatprep.mubr.f32.mxu0 0.0
    %v8306 = vand.u32 %v114, 4294901760
    %v8307 = vsub.f32 %v114, %v8306
    %v8308 = vand.u32 %v8307, 4294901760
    %v8309 = vsub.f32 %v8307, %v8308
    %v8310 = vand.u32 %v8309, 4294901760
    %8311 = vmatmul.mubr.f32.gmra.mxu0 %v8310
    %v8312 = vpop.f32.mrf.mxu0
    %v8313 = vadd.f32 0.0, %v8312
    %v8314 = vpop.f32.mrf.mxu0
    %8315 = vmatprep.mubr.f32.mxu0 0.0
    %v8316 = vand.u32 %v115, 4294901760
    %v8317 = vsub.f32 %v115, %v8316
    %v8318 = vand.u32 %v8317, 4294901760
    %v8319 = vsub.f32 %v8317, %v8318
    %v8320 = vand.u32 %v8319, 4294901760
    %8321 = vmatmul.mubr.f32.gmra.mxu0 %v8320
    %v8322 = vpop.f32.mrf.mxu0
    %v8323 = vadd.f32 0.0, %v8322
    %v8324 = vpop.f32.mrf.mxu0
    %8325 = vmatprep.mubr.f32.mxu0 0.0
    %v8326 = vand.u32 %v116, 4294901760
    %v8327 = vsub.f32 %v116, %v8326
    %v8328 = vand.u32 %v8327, 4294901760
    %v8329 = vsub.f32 %v8327, %v8328
    %v8330 = vand.u32 %v8329, 4294901760
    %8331 = vmatmul.mubr.f32.gmra.mxu0 %v8330
    %v8332 = vpop.f32.mrf.mxu0
    %v8333 = vadd.f32 0.0, %v8332
    %v8334 = vpop.f32.mrf.mxu0
    %8335 = vmatprep.mubr.f32.mxu0 0.0
    %v8336 = vand.u32 %v117, 4294901760
    %v8337 = vsub.f32 %v117, %v8336
    %v8338 = vand.u32 %v8337, 4294901760
    %v8339 = vsub.f32 %v8337, %v8338
    %v8340 = vand.u32 %v8339, 4294901760
    %8341 = vmatmul.mubr.f32.gmra.mxu0 %v8340
    %v8342 = vpop.f32.mrf.mxu0
    %v8343 = vadd.f32 0.0, %v8342
    %v8344 = vpop.f32.mrf.mxu0
    %8345 = vmatprep.mubr.f32.mxu0 0.0
    %v8346 = vand.u32 %v118, 4294901760
    %v8347 = vsub.f32 %v118, %v8346
    %v8348 = vand.u32 %v8347, 4294901760
    %v8349 = vsub.f32 %v8347, %v8348
    %v8350 = vand.u32 %v8349, 4294901760
    %8351 = vmatmul.mubr.f32.gmra.mxu0 %v8350
    %v8352 = vpop.f32.mrf.mxu0
    %v8353 = vadd.f32 0.0, %v8352
    %v8354 = vpop.f32.mrf.mxu0
    %8355 = vmatprep.mubr.f32.mxu0 0.0
    %v8356 = vand.u32 %v119, 4294901760
    %v8357 = vsub.f32 %v119, %v8356
    %v8358 = vand.u32 %v8357, 4294901760
    %v8359 = vsub.f32 %v8357, %v8358
    %v8360 = vand.u32 %v8359, 4294901760
    %8361 = vmatmul.mubr.f32.gmra.mxu0 %v8360
    %v8362 = vpop.f32.mrf.mxu0
    %v8363 = vadd.f32 0.0, %v8362
    %v8364 = vpop.f32.mrf.mxu0
    %8365 = vdwg.mxu0
    %8366 = vmatprep.subr.mxu0 0.0
    %v8367 = vand.u32 %v4168, 4294901760
    %v8368 = vsub.f32 %v4168, %v8367
    %v8369 = vand.u32 %v8368, 4294901760
    %v8370 = vsub.f32 %v8368, %v8369
    %v8371 = vand.u32 %v8370, 4294901760
    %8372 = vmatpush1.msra.mxu0 %v8371
    %8373 = vmatprep.subr.mxu0 0.0
    %v8374 = vand.u32 %v4162, 4294901760
    %v8375 = vsub.f32 %v4162, %v8374
    %v8376 = vand.u32 %v8375, 4294901760
    %v8377 = vsub.f32 %v8375, %v8376
    %v8378 = vand.u32 %v8377, 4294901760
    %8379 = vmatpush1.msra.mxu0 %v8378
    %8380 = vmatprep.subr.mxu0 0.0
    %v8381 = vand.u32 %v4156, 4294901760
    %v8382 = vsub.f32 %v4156, %v8381
    %v8383 = vand.u32 %v8382, 4294901760
    %v8384 = vsub.f32 %v8382, %v8383
    %v8385 = vand.u32 %v8384, 4294901760
    %8386 = vmatpush1.msra.mxu0 %v8385
    %8387 = vmatprep.subr.mxu0 0.0
    %v8388 = vand.u32 %v4150, 4294901760
    %v8389 = vsub.f32 %v4150, %v8388
    %v8390 = vand.u32 %v8389, 4294901760
    %v8391 = vsub.f32 %v8389, %v8390
    %v8392 = vand.u32 %v8391, 4294901760
    %8393 = vmatpush1.msra.mxu0 %v8392
    %8394 = vmatprep.subr.mxu0 0.0
    %v8395 = vand.u32 %v4144, 4294901760
    %v8396 = vsub.f32 %v4144, %v8395
    %v8397 = vand.u32 %v8396, 4294901760
    %v8398 = vsub.f32 %v8396, %v8397
    %v8399 = vand.u32 %v8398, 4294901760
    %8400 = vmatpush1.msra.mxu0 %v8399
    %8401 = vmatprep.subr.mxu0 0.0
    %v8402 = vand.u32 %v4138, 4294901760
    %v8403 = vsub.f32 %v4138, %v8402
    %v8404 = vand.u32 %v8403, 4294901760
    %v8405 = vsub.f32 %v8403, %v8404
    %v8406 = vand.u32 %v8405, 4294901760
    %8407 = vmatpush1.msra.mxu0 %v8406
    %8408 = vmatprep.subr.mxu0 0.0
    %v8409 = vand.u32 %v4132, 4294901760
    %v8410 = vsub.f32 %v4132, %v8409
    %v8411 = vand.u32 %v8410, 4294901760
    %v8412 = vsub.f32 %v8410, %v8411
    %v8413 = vand.u32 %v8412, 4294901760
    %8414 = vmatpush1.msra.mxu0 %v8413
    %8415 = vmatprep.subr.mxu0 0.0
    %v8416 = vand.u32 %v4126, 4294901760
    %v8417 = vsub.f32 %v4126, %v8416
    %v8418 = vand.u32 %v8417, 4294901760
    %v8419 = vsub.f32 %v8417, %v8418
    %v8420 = vand.u32 %v8419, 4294901760
    %8421 = vmatpush1.msra.mxu0 %v8420
    %8422 = vmatprep.subr.mxu0 0.0
    %v8423 = vand.u32 %v4120, 4294901760
    %v8424 = vsub.f32 %v4120, %v8423
    %v8425 = vand.u32 %v8424, 4294901760
    %v8426 = vsub.f32 %v8424, %v8425
    %v8427 = vand.u32 %v8426, 4294901760
    %8428 = vmatpush1.msra.mxu0 %v8427
    %8429 = vmatprep.subr.mxu0 0.0
    %v8430 = vand.u32 %v4114, 4294901760
    %v8431 = vsub.f32 %v4114, %v8430
    %v8432 = vand.u32 %v8431, 4294901760
    %v8433 = vsub.f32 %v8431, %v8432
    %v8434 = vand.u32 %v8433, 4294901760
    %8435 = vmatpush1.msra.mxu0 %v8434
    %8436 = vmatprep.subr.mxu0 0.0
    %v8437 = vand.u32 %v4108, 4294901760
    %v8438 = vsub.f32 %v4108, %v8437
    %v8439 = vand.u32 %v8438, 4294901760
    %v8440 = vsub.f32 %v8438, %v8439
    %v8441 = vand.u32 %v8440, 4294901760
    %8442 = vmatpush1.msra.mxu0 %v8441
    %8443 = vmatprep.subr.mxu0 0.0
    %v8444 = vand.u32 %v4102, 4294901760
    %v8445 = vsub.f32 %v4102, %v8444
    %v8446 = vand.u32 %v8445, 4294901760
    %v8447 = vsub.f32 %v8445, %v8446
    %v8448 = vand.u32 %v8447, 4294901760
    %8449 = vmatpush1.msra.mxu0 %v8448
    %8450 = vmatprep.subr.mxu0 0.0
    %v8451 = vand.u32 %v4096, 4294901760
    %v8452 = vsub.f32 %v4096, %v8451
    %v8453 = vand.u32 %v8452, 4294901760
    %v8454 = vsub.f32 %v8452, %v8453
    %v8455 = vand.u32 %v8454, 4294901760
    %8456 = vmatpush1.msra.mxu0 %v8455
    %8457 = vmatprep.subr.mxu0 0.0
    %v8458 = vand.u32 %v4090, 4294901760
    %v8459 = vsub.f32 %v4090, %v8458
    %v8460 = vand.u32 %v8459, 4294901760
    %v8461 = vsub.f32 %v8459, %v8460
    %v8462 = vand.u32 %v8461, 4294901760
    %8463 = vmatpush1.msra.mxu0 %v8462
    %8464 = vmatprep.subr.mxu0 0.0
    %v8465 = vand.u32 %v4084, 4294901760
    %v8466 = vsub.f32 %v4084, %v8465
    %v8467 = vand.u32 %v8466, 4294901760
    %v8468 = vsub.f32 %v8466, %v8467
    %v8469 = vand.u32 %v8468, 4294901760
    %8470 = vmatpush1.msra.mxu0 %v8469
    %8471 = vmatprep.subr.mxu0 0.0
    %v8472 = vand.u32 %v4078, 4294901760
    %v8473 = vsub.f32 %v4078, %v8472
    %v8474 = vand.u32 %v8473, 4294901760
    %v8475 = vsub.f32 %v8473, %v8474
    %v8476 = vand.u32 %v8475, 4294901760
    %8477 = vmatpush1.msra.mxu0 %v8476
    %8478 = vmatprep.subr.mxu0 0.0
    %8479 = vmatpush2.msra.mxu0 0.0
    %8480 = vmatprep.subr.mxu0 0.0
    %8481 = vmatpush2.msra.mxu0 0.0
    %8482 = vmatprep.subr.mxu0 0.0
    %8483 = vmatpush2.msra.mxu0 0.0
    %8484 = vmatprep.subr.mxu0 0.0
    %8485 = vmatpush2.msra.mxu0 0.0
    %8486 = vmatprep.subr.mxu0 0.0
    %8487 = vmatpush2.msra.mxu0 0.0
    %8488 = vmatprep.subr.mxu0 0.0
    %8489 = vmatpush2.msra.mxu0 0.0
    %8490 = vmatprep.subr.mxu0 0.0
    %8491 = vmatpush2.msra.mxu0 0.0
    %8492 = vmatprep.subr.mxu0 0.0
    %8493 = vmatpush2.msra.mxu0 0.0
    %8494 = vmatprep.subr.mxu0 0.0
    %8495 = vmatpush2.msra.mxu0 0.0
    %8496 = vmatprep.subr.mxu0 0.0
    %8497 = vmatpush2.msra.mxu0 0.0
    %8498 = vmatprep.subr.mxu0 0.0
    %8499 = vmatpush2.msra.mxu0 0.0
    %8500 = vmatprep.subr.mxu0 0.0
    %8501 = vmatpush2.msra.mxu0 0.0
    %8502 = vmatprep.subr.mxu0 0.0
    %8503 = vmatpush2.msra.mxu0 0.0
    %8504 = vmatprep.subr.mxu0 0.0
    %8505 = vmatpush2.msra.mxu0 0.0
    %8506 = vmatprep.subr.mxu0 0.0
    %8507 = vmatpush2.msra.mxu0 0.0
    %8508 = vmatprep.subr.mxu0 0.0
    %8509 = vmatpush2.msra.mxu0 0.0
    %8510 = vmatprep.mubr.f32.mxu0 0.0
    %v8511 = vand.u32 %v104, 4294901760
    %8512 = vmatmul.mubr.f32.gmra.mxu0 %v8511
    %v8513 = vpop.f32.mrf.mxu0
    %v8514 = vadd.f32 %v8213, %v8513
    %v8515 = vpop.f32.mrf.mxu0
    %8516 = vmatprep.mubr.f32.mxu0 0.0
    %v8517 = vand.u32 %v105, 4294901760
    %8518 = vmatmul.mubr.f32.gmra.mxu0 %v8517
    %v8519 = vpop.f32.mrf.mxu0
    %v8520 = vadd.f32 %v8223, %v8519
    %v8521 = vpop.f32.mrf.mxu0
    %8522 = vmatprep.mubr.f32.mxu0 0.0
    %v8523 = vand.u32 %v106, 4294901760
    %8524 = vmatmul.mubr.f32.gmra.mxu0 %v8523
    %v8525 = vpop.f32.mrf.mxu0
    %v8526 = vadd.f32 %v8233, %v8525
    %v8527 = vpop.f32.mrf.mxu0
    %8528 = vmatprep.mubr.f32.mxu0 0.0
    %v8529 = vand.u32 %v107, 4294901760
    %8530 = vmatmul.mubr.f32.gmra.mxu0 %v8529
    %v8531 = vpop.f32.mrf.mxu0
    %v8532 = vadd.f32 %v8243, %v8531
    %v8533 = vpop.f32.mrf.mxu0
    %8534 = vmatprep.mubr.f32.mxu0 0.0
    %v8535 = vand.u32 %v108, 4294901760
    %8536 = vmatmul.mubr.f32.gmra.mxu0 %v8535
    %v8537 = vpop.f32.mrf.mxu0
    %v8538 = vadd.f32 %v8253, %v8537
    %v8539 = vpop.f32.mrf.mxu0
    %8540 = vmatprep.mubr.f32.mxu0 0.0
    %v8541 = vand.u32 %v109, 4294901760
    %8542 = vmatmul.mubr.f32.gmra.mxu0 %v8541
    %v8543 = vpop.f32.mrf.mxu0
    %v8544 = vadd.f32 %v8263, %v8543
    %v8545 = vpop.f32.mrf.mxu0
    %8546 = vmatprep.mubr.f32.mxu0 0.0
    %v8547 = vand.u32 %v110, 4294901760
    %8548 = vmatmul.mubr.f32.gmra.mxu0 %v8547
    %v8549 = vpop.f32.mrf.mxu0
    %v8550 = vadd.f32 %v8273, %v8549
    %v8551 = vpop.f32.mrf.mxu0
    %8552 = vmatprep.mubr.f32.mxu0 0.0
    %v8553 = vand.u32 %v111, 4294901760
    %8554 = vmatmul.mubr.f32.gmra.mxu0 %v8553
    %v8555 = vpop.f32.mrf.mxu0
    %v8556 = vadd.f32 %v8283, %v8555
    %v8557 = vpop.f32.mrf.mxu0
    %8558 = vmatprep.mubr.f32.mxu0 0.0
    %v8559 = vand.u32 %v112, 4294901760
    %8560 = vmatmul.mubr.f32.gmra.mxu0 %v8559
    %v8561 = vpop.f32.mrf.mxu0
    %v8562 = vadd.f32 %v8293, %v8561
    %v8563 = vpop.f32.mrf.mxu0
    %8564 = vmatprep.mubr.f32.mxu0 0.0
    %v8565 = vand.u32 %v113, 4294901760
    %8566 = vmatmul.mubr.f32.gmra.mxu0 %v8565
    %v8567 = vpop.f32.mrf.mxu0
    %v8568 = vadd.f32 %v8303, %v8567
    %v8569 = vpop.f32.mrf.mxu0
    %8570 = vmatprep.mubr.f32.mxu0 0.0
    %v8571 = vand.u32 %v114, 4294901760
    %8572 = vmatmul.mubr.f32.gmra.mxu0 %v8571
    %v8573 = vpop.f32.mrf.mxu0
    %v8574 = vadd.f32 %v8313, %v8573
    %v8575 = vpop.f32.mrf.mxu0
    %8576 = vmatprep.mubr.f32.mxu0 0.0
    %v8577 = vand.u32 %v115, 4294901760
    %8578 = vmatmul.mubr.f32.gmra.mxu0 %v8577
    %v8579 = vpop.f32.mrf.mxu0
    %v8580 = vadd.f32 %v8323, %v8579
    %v8581 = vpop.f32.mrf.mxu0
    %8582 = vmatprep.mubr.f32.mxu0 0.0
    %v8583 = vand.u32 %v116, 4294901760
    %8584 = vmatmul.mubr.f32.gmra.mxu0 %v8583
    %v8585 = vpop.f32.mrf.mxu0
    %v8586 = vadd.f32 %v8333, %v8585
    %v8587 = vpop.f32.mrf.mxu0
    %8588 = vmatprep.mubr.f32.mxu0 0.0
    %v8589 = vand.u32 %v117, 4294901760
    %8590 = vmatmul.mubr.f32.gmra.mxu0 %v8589
    %v8591 = vpop.f32.mrf.mxu0
    %v8592 = vadd.f32 %v8343, %v8591
    %v8593 = vpop.f32.mrf.mxu0
    %8594 = vmatprep.mubr.f32.mxu0 0.0
    %v8595 = vand.u32 %v118, 4294901760
    %8596 = vmatmul.mubr.f32.gmra.mxu0 %v8595
    %v8597 = vpop.f32.mrf.mxu0
    %v8598 = vadd.f32 %v8353, %v8597
    %v8599 = vpop.f32.mrf.mxu0
    %8600 = vmatprep.mubr.f32.mxu0 0.0
    %v8601 = vand.u32 %v119, 4294901760
    %8602 = vmatmul.mubr.f32.gmra.mxu0 %v8601
    %v8603 = vpop.f32.mrf.mxu0
    %v8604 = vadd.f32 %v8363, %v8603
    %v8605 = vpop.f32.mrf.mxu0
    %8606 = vdwg.mxu0
    %8607 = vmatprep.subr.mxu0 0.0
    %v8608 = vand.u32 %v4168, 4294901760
    %v8609 = vsub.f32 %v4168, %v8608
    %8610 = vmatpush1.msra.mxu0 %v8609
    %8611 = vmatprep.subr.mxu0 0.0
    %v8612 = vand.u32 %v4162, 4294901760
    %v8613 = vsub.f32 %v4162, %v8612
    %8614 = vmatpush1.msra.mxu0 %v8613
    %8615 = vmatprep.subr.mxu0 0.0
    %v8616 = vand.u32 %v4156, 4294901760
    %v8617 = vsub.f32 %v4156, %v8616
    %8618 = vmatpush1.msra.mxu0 %v8617
    %8619 = vmatprep.subr.mxu0 0.0
    %v8620 = vand.u32 %v4150, 4294901760
    %v8621 = vsub.f32 %v4150, %v8620
    %8622 = vmatpush1.msra.mxu0 %v8621
    %8623 = vmatprep.subr.mxu0 0.0
    %v8624 = vand.u32 %v4144, 4294901760
    %v8625 = vsub.f32 %v4144, %v8624
    %8626 = vmatpush1.msra.mxu0 %v8625
    %8627 = vmatprep.subr.mxu0 0.0
    %v8628 = vand.u32 %v4138, 4294901760
    %v8629 = vsub.f32 %v4138, %v8628
    %8630 = vmatpush1.msra.mxu0 %v8629
    %8631 = vmatprep.subr.mxu0 0.0
    %v8632 = vand.u32 %v4132, 4294901760
    %v8633 = vsub.f32 %v4132, %v8632
    %8634 = vmatpush1.msra.mxu0 %v8633
    %8635 = vmatprep.subr.mxu0 0.0
    %v8636 = vand.u32 %v4126, 4294901760
    %v8637 = vsub.f32 %v4126, %v8636
    %8638 = vmatpush1.msra.mxu0 %v8637
    %8639 = vmatprep.subr.mxu0 0.0
    %v8640 = vand.u32 %v4120, 4294901760
    %v8641 = vsub.f32 %v4120, %v8640
    %8642 = vmatpush1.msra.mxu0 %v8641
    %8643 = vmatprep.subr.mxu0 0.0
    %v8644 = vand.u32 %v4114, 4294901760
    %v8645 = vsub.f32 %v4114, %v8644
    %8646 = vmatpush1.msra.mxu0 %v8645
    %8647 = vmatprep.subr.mxu0 0.0
    %v8648 = vand.u32 %v4108, 4294901760
    %v8649 = vsub.f32 %v4108, %v8648
    %8650 = vmatpush1.msra.mxu0 %v8649
    %8651 = vmatprep.subr.mxu0 0.0
    %v8652 = vand.u32 %v4102, 4294901760
    %v8653 = vsub.f32 %v4102, %v8652
    %8654 = vmatpush1.msra.mxu0 %v8653
    %8655 = vmatprep.subr.mxu0 0.0
    %v8656 = vand.u32 %v4096, 4294901760
    %v8657 = vsub.f32 %v4096, %v8656
    %8658 = vmatpush1.msra.mxu0 %v8657
    %8659 = vmatprep.subr.mxu0 0.0
    %v8660 = vand.u32 %v4090, 4294901760
    %v8661 = vsub.f32 %v4090, %v8660
    %8662 = vmatpush1.msra.mxu0 %v8661
    %8663 = vmatprep.subr.mxu0 0.0
    %v8664 = vand.u32 %v4084, 4294901760
    %v8665 = vsub.f32 %v4084, %v8664
    %8666 = vmatpush1.msra.mxu0 %v8665
    %8667 = vmatprep.subr.mxu0 0.0
    %v8668 = vand.u32 %v4078, 4294901760
    %v8669 = vsub.f32 %v4078, %v8668
    %8670 = vmatpush1.msra.mxu0 %v8669
    %8671 = vmatprep.subr.mxu0 0.0
    %8672 = vmatpush2.msra.mxu0 0.0
    %8673 = vmatprep.subr.mxu0 0.0
    %8674 = vmatpush2.msra.mxu0 0.0
    %8675 = vmatprep.subr.mxu0 0.0
    %8676 = vmatpush2.msra.mxu0 0.0
    %8677 = vmatprep.subr.mxu0 0.0
    %8678 = vmatpush2.msra.mxu0 0.0
    %8679 = vmatprep.subr.mxu0 0.0
    %8680 = vmatpush2.msra.mxu0 0.0
    %8681 = vmatprep.subr.mxu0 0.0
    %8682 = vmatpush2.msra.mxu0 0.0
    %8683 = vmatprep.subr.mxu0 0.0
    %8684 = vmatpush2.msra.mxu0 0.0
    %8685 = vmatprep.subr.mxu0 0.0
    %8686 = vmatpush2.msra.mxu0 0.0
    %8687 = vmatprep.subr.mxu0 0.0
    %8688 = vmatpush2.msra.mxu0 0.0
    %8689 = vmatprep.subr.mxu0 0.0
    %8690 = vmatpush2.msra.mxu0 0.0
    %8691 = vmatprep.subr.mxu0 0.0
    %8692 = vmatpush2.msra.mxu0 0.0
    %8693 = vmatprep.subr.mxu0 0.0
    %8694 = vmatpush2.msra.mxu0 0.0
    %8695 = vmatprep.subr.mxu0 0.0
    %8696 = vmatpush2.msra.mxu0 0.0
    %8697 = vmatprep.subr.mxu0 0.0
    %8698 = vmatpush2.msra.mxu0 0.0
    %8699 = vmatprep.subr.mxu0 0.0
    %8700 = vmatpush2.msra.mxu0 0.0
    %8701 = vmatprep.subr.mxu0 0.0
    %8702 = vmatpush2.msra.mxu0 0.0
    %8703 = vmatprep.mubr.f32.mxu0 0.0
    %v8704 = vand.u32 %v104, 4294901760
    %v8705 = vsub.f32 %v104, %v8704
    %8706 = vmatmul.mubr.f32.gmra.mxu0 %v8705
    %v8707 = vpop.f32.mrf.mxu0
    %v8708 = vadd.f32 %v8514, %v8707
    %v8709 = vpop.f32.mrf.mxu0
    %8710 = vmatprep.mubr.f32.mxu0 0.0
    %v8711 = vand.u32 %v105, 4294901760
    %v8712 = vsub.f32 %v105, %v8711
    %8713 = vmatmul.mubr.f32.gmra.mxu0 %v8712
    %v8714 = vpop.f32.mrf.mxu0
    %v8715 = vadd.f32 %v8520, %v8714
    %v8716 = vpop.f32.mrf.mxu0
    %8717 = vmatprep.mubr.f32.mxu0 0.0
    %v8718 = vand.u32 %v106, 4294901760
    %v8719 = vsub.f32 %v106, %v8718
    %8720 = vmatmul.mubr.f32.gmra.mxu0 %v8719
    %v8721 = vpop.f32.mrf.mxu0
    %v8722 = vadd.f32 %v8526, %v8721
    %v8723 = vpop.f32.mrf.mxu0
    %8724 = vmatprep.mubr.f32.mxu0 0.0
    %v8725 = vand.u32 %v107, 4294901760
    %v8726 = vsub.f32 %v107, %v8725
    %8727 = vmatmul.mubr.f32.gmra.mxu0 %v8726
    %v8728 = vpop.f32.mrf.mxu0
    %v8729 = vadd.f32 %v8532, %v8728
    %v8730 = vpop.f32.mrf.mxu0
    %8731 = vmatprep.mubr.f32.mxu0 0.0
    %v8732 = vand.u32 %v108, 4294901760
    %v8733 = vsub.f32 %v108, %v8732
    %8734 = vmatmul.mubr.f32.gmra.mxu0 %v8733
    %v8735 = vpop.f32.mrf.mxu0
    %v8736 = vadd.f32 %v8538, %v8735
    %v8737 = vpop.f32.mrf.mxu0
    %8738 = vmatprep.mubr.f32.mxu0 0.0
    %v8739 = vand.u32 %v109, 4294901760
    %v8740 = vsub.f32 %v109, %v8739
    %8741 = vmatmul.mubr.f32.gmra.mxu0 %v8740
    %v8742 = vpop.f32.mrf.mxu0
    %v8743 = vadd.f32 %v8544, %v8742
    %v8744 = vpop.f32.mrf.mxu0
    %8745 = vmatprep.mubr.f32.mxu0 0.0
    %v8746 = vand.u32 %v110, 4294901760
    %v8747 = vsub.f32 %v110, %v8746
    %8748 = vmatmul.mubr.f32.gmra.mxu0 %v8747
    %v8749 = vpop.f32.mrf.mxu0
    %v8750 = vadd.f32 %v8550, %v8749
    %v8751 = vpop.f32.mrf.mxu0
    %8752 = vmatprep.mubr.f32.mxu0 0.0
    %v8753 = vand.u32 %v111, 4294901760
    %v8754 = vsub.f32 %v111, %v8753
    %8755 = vmatmul.mubr.f32.gmra.mxu0 %v8754
    %v8756 = vpop.f32.mrf.mxu0
    %v8757 = vadd.f32 %v8556, %v8756
    %v8758 = vpop.f32.mrf.mxu0
    %8759 = vmatprep.mubr.f32.mxu0 0.0
    %v8760 = vand.u32 %v112, 4294901760
    %v8761 = vsub.f32 %v112, %v8760
    %8762 = vmatmul.mubr.f32.gmra.mxu0 %v8761
    %v8763 = vpop.f32.mrf.mxu0
    %v8764 = vadd.f32 %v8562, %v8763
    %v8765 = vpop.f32.mrf.mxu0
    %8766 = vmatprep.mubr.f32.mxu0 0.0
    %v8767 = vand.u32 %v113, 4294901760
    %v8768 = vsub.f32 %v113, %v8767
    %8769 = vmatmul.mubr.f32.gmra.mxu0 %v8768
    %v8770 = vpop.f32.mrf.mxu0
    %v8771 = vadd.f32 %v8568, %v8770
    %v8772 = vpop.f32.mrf.mxu0
    %8773 = vmatprep.mubr.f32.mxu0 0.0
    %v8774 = vand.u32 %v114, 4294901760
    %v8775 = vsub.f32 %v114, %v8774
    %8776 = vmatmul.mubr.f32.gmra.mxu0 %v8775
    %v8777 = vpop.f32.mrf.mxu0
    %v8778 = vadd.f32 %v8574, %v8777
    %v8779 = vpop.f32.mrf.mxu0
    %8780 = vmatprep.mubr.f32.mxu0 0.0
    %v8781 = vand.u32 %v115, 4294901760
    %v8782 = vsub.f32 %v115, %v8781
    %8783 = vmatmul.mubr.f32.gmra.mxu0 %v8782
    %v8784 = vpop.f32.mrf.mxu0
    %v8785 = vadd.f32 %v8580, %v8784
    %v8786 = vpop.f32.mrf.mxu0
    %8787 = vmatprep.mubr.f32.mxu0 0.0
    %v8788 = vand.u32 %v116, 4294901760
    %v8789 = vsub.f32 %v116, %v8788
    %8790 = vmatmul.mubr.f32.gmra.mxu0 %v8789
    %v8791 = vpop.f32.mrf.mxu0
    %v8792 = vadd.f32 %v8586, %v8791
    %v8793 = vpop.f32.mrf.mxu0
    %8794 = vmatprep.mubr.f32.mxu0 0.0
    %v8795 = vand.u32 %v117, 4294901760
    %v8796 = vsub.f32 %v117, %v8795
    %8797 = vmatmul.mubr.f32.gmra.mxu0 %v8796
    %v8798 = vpop.f32.mrf.mxu0
    %v8799 = vadd.f32 %v8592, %v8798
    %v8800 = vpop.f32.mrf.mxu0
    %8801 = vmatprep.mubr.f32.mxu0 0.0
    %v8802 = vand.u32 %v118, 4294901760
    %v8803 = vsub.f32 %v118, %v8802
    %8804 = vmatmul.mubr.f32.gmra.mxu0 %v8803
    %v8805 = vpop.f32.mrf.mxu0
    %v8806 = vadd.f32 %v8598, %v8805
    %v8807 = vpop.f32.mrf.mxu0
    %8808 = vmatprep.mubr.f32.mxu0 0.0
    %v8809 = vand.u32 %v119, 4294901760
    %v8810 = vsub.f32 %v119, %v8809
    %8811 = vmatmul.mubr.f32.gmra.mxu0 %v8810
    %v8812 = vpop.f32.mrf.mxu0
    %v8813 = vadd.f32 %v8604, %v8812
    %v8814 = vpop.f32.mrf.mxu0
    %8815 = vdwg.mxu0
    %8816 = vmatprep.subr.mxu0 0.0
    %v8817 = vand.u32 %v4168, 4294901760
    %8818 = vmatpush1.msra.mxu0 %v8817
    %8819 = vmatprep.subr.mxu0 0.0
    %v8820 = vand.u32 %v4162, 4294901760
    %8821 = vmatpush1.msra.mxu0 %v8820
    %8822 = vmatprep.subr.mxu0 0.0
    %v8823 = vand.u32 %v4156, 4294901760
    %8824 = vmatpush1.msra.mxu0 %v8823
    %8825 = vmatprep.subr.mxu0 0.0
    %v8826 = vand.u32 %v4150, 4294901760
    %8827 = vmatpush1.msra.mxu0 %v8826
    %8828 = vmatprep.subr.mxu0 0.0
    %v8829 = vand.u32 %v4144, 4294901760
    %8830 = vmatpush1.msra.mxu0 %v8829
    %8831 = vmatprep.subr.mxu0 0.0
    %v8832 = vand.u32 %v4138, 4294901760
    %8833 = vmatpush1.msra.mxu0 %v8832
    %8834 = vmatprep.subr.mxu0 0.0
    %v8835 = vand.u32 %v4132, 4294901760
    %8836 = vmatpush1.msra.mxu0 %v8835
    %8837 = vmatprep.subr.mxu0 0.0
    %v8838 = vand.u32 %v4126, 4294901760
    %8839 = vmatpush1.msra.mxu0 %v8838
    %8840 = vmatprep.subr.mxu0 0.0
    %v8841 = vand.u32 %v4120, 4294901760
    %8842 = vmatpush1.msra.mxu0 %v8841
    %8843 = vmatprep.subr.mxu0 0.0
    %v8844 = vand.u32 %v4114, 4294901760
    %8845 = vmatpush1.msra.mxu0 %v8844
    %8846 = vmatprep.subr.mxu0 0.0
    %v8847 = vand.u32 %v4108, 4294901760
    %8848 = vmatpush1.msra.mxu0 %v8847
    %8849 = vmatprep.subr.mxu0 0.0
    %v8850 = vand.u32 %v4102, 4294901760
    %8851 = vmatpush1.msra.mxu0 %v8850
    %8852 = vmatprep.subr.mxu0 0.0
    %v8853 = vand.u32 %v4096, 4294901760
    %8854 = vmatpush1.msra.mxu0 %v8853
    %8855 = vmatprep.subr.mxu0 0.0
    %v8856 = vand.u32 %v4090, 4294901760
    %8857 = vmatpush1.msra.mxu0 %v8856
    %8858 = vmatprep.subr.mxu0 0.0
    %v8859 = vand.u32 %v4084, 4294901760
    %8860 = vmatpush1.msra.mxu0 %v8859
    %8861 = vmatprep.subr.mxu0 0.0
    %v8862 = vand.u32 %v4078, 4294901760
    %8863 = vmatpush1.msra.mxu0 %v8862
    %8864 = vmatprep.subr.mxu0 0.0
    %8865 = vmatpush2.msra.mxu0 0.0
    %8866 = vmatprep.subr.mxu0 0.0
    %8867 = vmatpush2.msra.mxu0 0.0
    %8868 = vmatprep.subr.mxu0 0.0
    %8869 = vmatpush2.msra.mxu0 0.0
    %8870 = vmatprep.subr.mxu0 0.0
    %8871 = vmatpush2.msra.mxu0 0.0
    %8872 = vmatprep.subr.mxu0 0.0
    %8873 = vmatpush2.msra.mxu0 0.0
    %8874 = vmatprep.subr.mxu0 0.0
    %8875 = vmatpush2.msra.mxu0 0.0
    %8876 = vmatprep.subr.mxu0 0.0
    %8877 = vmatpush2.msra.mxu0 0.0
    %8878 = vmatprep.subr.mxu0 0.0
    %8879 = vmatpush2.msra.mxu0 0.0
    %8880 = vmatprep.subr.mxu0 0.0
    %8881 = vmatpush2.msra.mxu0 0.0
    %8882 = vmatprep.subr.mxu0 0.0
    %8883 = vmatpush2.msra.mxu0 0.0
    %8884 = vmatprep.subr.mxu0 0.0
    %8885 = vmatpush2.msra.mxu0 0.0
    %8886 = vmatprep.subr.mxu0 0.0
    %8887 = vmatpush2.msra.mxu0 0.0
    %8888 = vmatprep.subr.mxu0 0.0
    %8889 = vmatpush2.msra.mxu0 0.0
    %8890 = vmatprep.subr.mxu0 0.0
    %8891 = vmatpush2.msra.mxu0 0.0
    %8892 = vmatprep.subr.mxu0 0.0
    %8893 = vmatpush2.msra.mxu0 0.0
    %8894 = vmatprep.subr.mxu0 0.0
    %8895 = vmatpush2.msra.mxu0 0.0
    %8896 = vmatprep.mubr.f32.mxu0 0.0
    %v8897 = vand.u32 %v104, 4294901760
    %v8898 = vsub.f32 %v104, %v8897
    %v8899 = vand.u32 %v8898, 4294901760
    %8900 = vmatmul.mubr.f32.gmra.mxu0 %v8899
    %v8901 = vpop.f32.mrf.mxu0
    %v8902 = vadd.f32 %v8708, %v8901
    %v8903 = vpop.f32.mrf.mxu0
    %8904 = vmatprep.mubr.f32.mxu0 0.0
    %v8905 = vand.u32 %v105, 4294901760
    %v8906 = vsub.f32 %v105, %v8905
    %v8907 = vand.u32 %v8906, 4294901760
    %8908 = vmatmul.mubr.f32.gmra.mxu0 %v8907
    %v8909 = vpop.f32.mrf.mxu0
    %v8910 = vadd.f32 %v8715, %v8909
    %v8911 = vpop.f32.mrf.mxu0
    %8912 = vmatprep.mubr.f32.mxu0 0.0
    %v8913 = vand.u32 %v106, 4294901760
    %v8914 = vsub.f32 %v106, %v8913
    %v8915 = vand.u32 %v8914, 4294901760
    %8916 = vmatmul.mubr.f32.gmra.mxu0 %v8915
    %v8917 = vpop.f32.mrf.mxu0
    %v8918 = vadd.f32 %v8722, %v8917
    %v8919 = vpop.f32.mrf.mxu0
    %8920 = vmatprep.mubr.f32.mxu0 0.0
    %v8921 = vand.u32 %v107, 4294901760
    %v8922 = vsub.f32 %v107, %v8921
    %v8923 = vand.u32 %v8922, 4294901760
    %8924 = vmatmul.mubr.f32.gmra.mxu0 %v8923
    %v8925 = vpop.f32.mrf.mxu0
    %v8926 = vadd.f32 %v8729, %v8925
    %v8927 = vpop.f32.mrf.mxu0
    %8928 = vmatprep.mubr.f32.mxu0 0.0
    %v8929 = vand.u32 %v108, 4294901760
    %v8930 = vsub.f32 %v108, %v8929
    %v8931 = vand.u32 %v8930, 4294901760
    %8932 = vmatmul.mubr.f32.gmra.mxu0 %v8931
    %v8933 = vpop.f32.mrf.mxu0
    %v8934 = vadd.f32 %v8736, %v8933
    %v8935 = vpop.f32.mrf.mxu0
    %8936 = vmatprep.mubr.f32.mxu0 0.0
    %v8937 = vand.u32 %v109, 4294901760
    %v8938 = vsub.f32 %v109, %v8937
    %v8939 = vand.u32 %v8938, 4294901760
    %8940 = vmatmul.mubr.f32.gmra.mxu0 %v8939
    %v8941 = vpop.f32.mrf.mxu0
    %v8942 = vadd.f32 %v8743, %v8941
    %v8943 = vpop.f32.mrf.mxu0
    %8944 = vmatprep.mubr.f32.mxu0 0.0
    %v8945 = vand.u32 %v110, 4294901760
    %v8946 = vsub.f32 %v110, %v8945
    %v8947 = vand.u32 %v8946, 4294901760
    %8948 = vmatmul.mubr.f32.gmra.mxu0 %v8947
    %v8949 = vpop.f32.mrf.mxu0
    %v8950 = vadd.f32 %v8750, %v8949
    %v8951 = vpop.f32.mrf.mxu0
    %8952 = vmatprep.mubr.f32.mxu0 0.0
    %v8953 = vand.u32 %v111, 4294901760
    %v8954 = vsub.f32 %v111, %v8953
    %v8955 = vand.u32 %v8954, 4294901760
    %8956 = vmatmul.mubr.f32.gmra.mxu0 %v8955
    %v8957 = vpop.f32.mrf.mxu0
    %v8958 = vadd.f32 %v8757, %v8957
    %v8959 = vpop.f32.mrf.mxu0
    %8960 = vmatprep.mubr.f32.mxu0 0.0
    %v8961 = vand.u32 %v112, 4294901760
    %v8962 = vsub.f32 %v112, %v8961
    %v8963 = vand.u32 %v8962, 4294901760
    %8964 = vmatmul.mubr.f32.gmra.mxu0 %v8963
    %v8965 = vpop.f32.mrf.mxu0
    %v8966 = vadd.f32 %v8764, %v8965
    %v8967 = vpop.f32.mrf.mxu0
    %8968 = vmatprep.mubr.f32.mxu0 0.0
    %v8969 = vand.u32 %v113, 4294901760
    %v8970 = vsub.f32 %v113, %v8969
    %v8971 = vand.u32 %v8970, 4294901760
    %8972 = vmatmul.mubr.f32.gmra.mxu0 %v8971
    %v8973 = vpop.f32.mrf.mxu0
    %v8974 = vadd.f32 %v8771, %v8973
    %v8975 = vpop.f32.mrf.mxu0
    %8976 = vmatprep.mubr.f32.mxu0 0.0
    %v8977 = vand.u32 %v114, 4294901760
    %v8978 = vsub.f32 %v114, %v8977
    %v8979 = vand.u32 %v8978, 4294901760
    %8980 = vmatmul.mubr.f32.gmra.mxu0 %v8979
    %v8981 = vpop.f32.mrf.mxu0
    %v8982 = vadd.f32 %v8778, %v8981
    %v8983 = vpop.f32.mrf.mxu0
    %8984 = vmatprep.mubr.f32.mxu0 0.0
    %v8985 = vand.u32 %v115, 4294901760
    %v8986 = vsub.f32 %v115, %v8985
    %v8987 = vand.u32 %v8986, 4294901760
    %8988 = vmatmul.mubr.f32.gmra.mxu0 %v8987
    %v8989 = vpop.f32.mrf.mxu0
    %v8990 = vadd.f32 %v8785, %v8989
    %v8991 = vpop.f32.mrf.mxu0
    %8992 = vmatprep.mubr.f32.mxu0 0.0
    %v8993 = vand.u32 %v116, 4294901760
    %v8994 = vsub.f32 %v116, %v8993
    %v8995 = vand.u32 %v8994, 4294901760
    %8996 = vmatmul.mubr.f32.gmra.mxu0 %v8995
    %v8997 = vpop.f32.mrf.mxu0
    %v8998 = vadd.f32 %v8792, %v8997
    %v8999 = vpop.f32.mrf.mxu0
    %9000 = vmatprep.mubr.f32.mxu0 0.0
    %v9001 = vand.u32 %v117, 4294901760
    %v9002 = vsub.f32 %v117, %v9001
    %v9003 = vand.u32 %v9002, 4294901760
    %9004 = vmatmul.mubr.f32.gmra.mxu0 %v9003
    %v9005 = vpop.f32.mrf.mxu0
    %v9006 = vadd.f32 %v8799, %v9005
    %v9007 = vpop.f32.mrf.mxu0
    %9008 = vmatprep.mubr.f32.mxu0 0.0
    %v9009 = vand.u32 %v118, 4294901760
    %v9010 = vsub.f32 %v118, %v9009
    %v9011 = vand.u32 %v9010, 4294901760
    %9012 = vmatmul.mubr.f32.gmra.mxu0 %v9011
    %v9013 = vpop.f32.mrf.mxu0
    %v9014 = vadd.f32 %v8806, %v9013
    %v9015 = vpop.f32.mrf.mxu0
    %9016 = vmatprep.mubr.f32.mxu0 0.0
    %v9017 = vand.u32 %v119, 4294901760
    %v9018 = vsub.f32 %v119, %v9017
    %v9019 = vand.u32 %v9018, 4294901760
    %9020 = vmatmul.mubr.f32.gmra.mxu0 %v9019
    %v9021 = vpop.f32.mrf.mxu0
    %v9022 = vadd.f32 %v8813, %v9021
    %v9023 = vpop.f32.mrf.mxu0
    %9024 = vdwg.mxu0
    %9025 = vmatprep.subr.mxu0 0.0
    %v9026 = vand.u32 %v4168, 4294901760
    %v9027 = vsub.f32 %v4168, %v9026
    %v9028 = vand.u32 %v9027, 4294901760
    %9029 = vmatpush1.msra.mxu0 %v9028
    %9030 = vmatprep.subr.mxu0 0.0
    %v9031 = vand.u32 %v4162, 4294901760
    %v9032 = vsub.f32 %v4162, %v9031
    %v9033 = vand.u32 %v9032, 4294901760
    %9034 = vmatpush1.msra.mxu0 %v9033
    %9035 = vmatprep.subr.mxu0 0.0
    %v9036 = vand.u32 %v4156, 4294901760
    %v9037 = vsub.f32 %v4156, %v9036
    %v9038 = vand.u32 %v9037, 4294901760
    %9039 = vmatpush1.msra.mxu0 %v9038
    %9040 = vmatprep.subr.mxu0 0.0
    %v9041 = vand.u32 %v4150, 4294901760
    %v9042 = vsub.f32 %v4150, %v9041
    %v9043 = vand.u32 %v9042, 4294901760
    %9044 = vmatpush1.msra.mxu0 %v9043
    %9045 = vmatprep.subr.mxu0 0.0
    %v9046 = vand.u32 %v4144, 4294901760
    %v9047 = vsub.f32 %v4144, %v9046
    %v9048 = vand.u32 %v9047, 4294901760
    %9049 = vmatpush1.msra.mxu0 %v9048
    %9050 = vmatprep.subr.mxu0 0.0
    %v9051 = vand.u32 %v4138, 4294901760
    %v9052 = vsub.f32 %v4138, %v9051
    %v9053 = vand.u32 %v9052, 4294901760
    %9054 = vmatpush1.msra.mxu0 %v9053
    %9055 = vmatprep.subr.mxu0 0.0
    %v9056 = vand.u32 %v4132, 4294901760
    %v9057 = vsub.f32 %v4132, %v9056
    %v9058 = vand.u32 %v9057, 4294901760
    %9059 = vmatpush1.msra.mxu0 %v9058
    %9060 = vmatprep.subr.mxu0 0.0
    %v9061 = vand.u32 %v4126, 4294901760
    %v9062 = vsub.f32 %v4126, %v9061
    %v9063 = vand.u32 %v9062, 4294901760
    %9064 = vmatpush1.msra.mxu0 %v9063
    %9065 = vmatprep.subr.mxu0 0.0
    %v9066 = vand.u32 %v4120, 4294901760
    %v9067 = vsub.f32 %v4120, %v9066
    %v9068 = vand.u32 %v9067, 4294901760
    %9069 = vmatpush1.msra.mxu0 %v9068
    %9070 = vmatprep.subr.mxu0 0.0
    %v9071 = vand.u32 %v4114, 4294901760
    %v9072 = vsub.f32 %v4114, %v9071
    %v9073 = vand.u32 %v9072, 4294901760
    %9074 = vmatpush1.msra.mxu0 %v9073
    %9075 = vmatprep.subr.mxu0 0.0
    %v9076 = vand.u32 %v4108, 4294901760
    %v9077 = vsub.f32 %v4108, %v9076
    %v9078 = vand.u32 %v9077, 4294901760
    %9079 = vmatpush1.msra.mxu0 %v9078
    %9080 = vmatprep.subr.mxu0 0.0
    %v9081 = vand.u32 %v4102, 4294901760
    %v9082 = vsub.f32 %v4102, %v9081
    %v9083 = vand.u32 %v9082, 4294901760
    %9084 = vmatpush1.msra.mxu0 %v9083
    %9085 = vmatprep.subr.mxu0 0.0
    %v9086 = vand.u32 %v4096, 4294901760
    %v9087 = vsub.f32 %v4096, %v9086
    %v9088 = vand.u32 %v9087, 4294901760
    %9089 = vmatpush1.msra.mxu0 %v9088
    %9090 = vmatprep.subr.mxu0 0.0
    %v9091 = vand.u32 %v4090, 4294901760
    %v9092 = vsub.f32 %v4090, %v9091
    %v9093 = vand.u32 %v9092, 4294901760
    %9094 = vmatpush1.msra.mxu0 %v9093
    %9095 = vmatprep.subr.mxu0 0.0
    %v9096 = vand.u32 %v4084, 4294901760
    %v9097 = vsub.f32 %v4084, %v9096
    %v9098 = vand.u32 %v9097, 4294901760
    %9099 = vmatpush1.msra.mxu0 %v9098
    %9100 = vmatprep.subr.mxu0 0.0
    %v9101 = vand.u32 %v4078, 4294901760
    %v9102 = vsub.f32 %v4078, %v9101
    %v9103 = vand.u32 %v9102, 4294901760
    %9104 = vmatpush1.msra.mxu0 %v9103
    %9105 = vmatprep.subr.mxu0 0.0
    %9106 = vmatpush2.msra.mxu0 0.0
    %9107 = vmatprep.subr.mxu0 0.0
    %9108 = vmatpush2.msra.mxu0 0.0
    %9109 = vmatprep.subr.mxu0 0.0
    %9110 = vmatpush2.msra.mxu0 0.0
    %9111 = vmatprep.subr.mxu0 0.0
    %9112 = vmatpush2.msra.mxu0 0.0
    %9113 = vmatprep.subr.mxu0 0.0
    %9114 = vmatpush2.msra.mxu0 0.0
    %9115 = vmatprep.subr.mxu0 0.0
    %9116 = vmatpush2.msra.mxu0 0.0
    %9117 = vmatprep.subr.mxu0 0.0
    %9118 = vmatpush2.msra.mxu0 0.0
    %9119 = vmatprep.subr.mxu0 0.0
    %9120 = vmatpush2.msra.mxu0 0.0
    %9121 = vmatprep.subr.mxu0 0.0
    %9122 = vmatpush2.msra.mxu0 0.0
    %9123 = vmatprep.subr.mxu0 0.0
    %9124 = vmatpush2.msra.mxu0 0.0
    %9125 = vmatprep.subr.mxu0 0.0
    %9126 = vmatpush2.msra.mxu0 0.0
    %9127 = vmatprep.subr.mxu0 0.0
    %9128 = vmatpush2.msra.mxu0 0.0
    %9129 = vmatprep.subr.mxu0 0.0
    %9130 = vmatpush2.msra.mxu0 0.0
    %9131 = vmatprep.subr.mxu0 0.0
    %9132 = vmatpush2.msra.mxu0 0.0
    %9133 = vmatprep.subr.mxu0 0.0
    %9134 = vmatpush2.msra.mxu0 0.0
    %9135 = vmatprep.subr.mxu0 0.0
    %9136 = vmatpush2.msra.mxu0 0.0
    %9137 = vmatprep.mubr.f32.mxu0 0.0
    %v9138 = vand.u32 %v104, 4294901760
    %9139 = vmatmul.mubr.f32.gmra.mxu0 %v9138
    %v9140 = vpop.f32.mrf.mxu0
    %v9141 = vadd.f32 %v8902, %v9140
    %v9142 = vpop.f32.mrf.mxu0
    %9143 = vmatprep.mubr.f32.mxu0 0.0
    %v9144 = vand.u32 %v105, 4294901760
    %9145 = vmatmul.mubr.f32.gmra.mxu0 %v9144
    %v9146 = vpop.f32.mrf.mxu0
    %v9147 = vadd.f32 %v8910, %v9146
    %v9148 = vpop.f32.mrf.mxu0
    %9149 = vmatprep.mubr.f32.mxu0 0.0
    %v9150 = vand.u32 %v106, 4294901760
    %9151 = vmatmul.mubr.f32.gmra.mxu0 %v9150
    %v9152 = vpop.f32.mrf.mxu0
    %v9153 = vadd.f32 %v8918, %v9152
    %v9154 = vpop.f32.mrf.mxu0
    %9155 = vmatprep.mubr.f32.mxu0 0.0
    %v9156 = vand.u32 %v107, 4294901760
    %9157 = vmatmul.mubr.f32.gmra.mxu0 %v9156
    %v9158 = vpop.f32.mrf.mxu0
    %v9159 = vadd.f32 %v8926, %v9158
    %v9160 = vpop.f32.mrf.mxu0
    %9161 = vmatprep.mubr.f32.mxu0 0.0
    %v9162 = vand.u32 %v108, 4294901760
    %9163 = vmatmul.mubr.f32.gmra.mxu0 %v9162
    %v9164 = vpop.f32.mrf.mxu0
    %v9165 = vadd.f32 %v8934, %v9164
    %v9166 = vpop.f32.mrf.mxu0
    %9167 = vmatprep.mubr.f32.mxu0 0.0
    %v9168 = vand.u32 %v109, 4294901760
    %9169 = vmatmul.mubr.f32.gmra.mxu0 %v9168
    %v9170 = vpop.f32.mrf.mxu0
    %v9171 = vadd.f32 %v8942, %v9170
    %v9172 = vpop.f32.mrf.mxu0
    %9173 = vmatprep.mubr.f32.mxu0 0.0
    %v9174 = vand.u32 %v110, 4294901760
    %9175 = vmatmul.mubr.f32.gmra.mxu0 %v9174
    %v9176 = vpop.f32.mrf.mxu0
    %v9177 = vadd.f32 %v8950, %v9176
    %v9178 = vpop.f32.mrf.mxu0
    %9179 = vmatprep.mubr.f32.mxu0 0.0
    %v9180 = vand.u32 %v111, 4294901760
    %9181 = vmatmul.mubr.f32.gmra.mxu0 %v9180
    %v9182 = vpop.f32.mrf.mxu0
    %v9183 = vadd.f32 %v8958, %v9182
    %v9184 = vpop.f32.mrf.mxu0
    %9185 = vmatprep.mubr.f32.mxu0 0.0
    %v9186 = vand.u32 %v112, 4294901760
    %9187 = vmatmul.mubr.f32.gmra.mxu0 %v9186
    %v9188 = vpop.f32.mrf.mxu0
    %v9189 = vadd.f32 %v8966, %v9188
    %v9190 = vpop.f32.mrf.mxu0
    %9191 = vmatprep.mubr.f32.mxu0 0.0
    %v9192 = vand.u32 %v113, 4294901760
    %9193 = vmatmul.mubr.f32.gmra.mxu0 %v9192
    %v9194 = vpop.f32.mrf.mxu0
    %v9195 = vadd.f32 %v8974, %v9194
    %v9196 = vpop.f32.mrf.mxu0
    %9197 = vmatprep.mubr.f32.mxu0 0.0
    %v9198 = vand.u32 %v114, 4294901760
    %9199 = vmatmul.mubr.f32.gmra.mxu0 %v9198
    %v9200 = vpop.f32.mrf.mxu0
    %v9201 = vadd.f32 %v8982, %v9200
    %v9202 = vpop.f32.mrf.mxu0
    %9203 = vmatprep.mubr.f32.mxu0 0.0
    %v9204 = vand.u32 %v115, 4294901760
    %9205 = vmatmul.mubr.f32.gmra.mxu0 %v9204
    %v9206 = vpop.f32.mrf.mxu0
    %v9207 = vadd.f32 %v8990, %v9206
    %v9208 = vpop.f32.mrf.mxu0
    %9209 = vmatprep.mubr.f32.mxu0 0.0
    %v9210 = vand.u32 %v116, 4294901760
    %9211 = vmatmul.mubr.f32.gmra.mxu0 %v9210
    %v9212 = vpop.f32.mrf.mxu0
    %v9213 = vadd.f32 %v8998, %v9212
    %v9214 = vpop.f32.mrf.mxu0
    %9215 = vmatprep.mubr.f32.mxu0 0.0
    %v9216 = vand.u32 %v117, 4294901760
    %9217 = vmatmul.mubr.f32.gmra.mxu0 %v9216
    %v9218 = vpop.f32.mrf.mxu0
    %v9219 = vadd.f32 %v9006, %v9218
    %v9220 = vpop.f32.mrf.mxu0
    %9221 = vmatprep.mubr.f32.mxu0 0.0
    %v9222 = vand.u32 %v118, 4294901760
    %9223 = vmatmul.mubr.f32.gmra.mxu0 %v9222
    %v9224 = vpop.f32.mrf.mxu0
    %v9225 = vadd.f32 %v9014, %v9224
    %v9226 = vpop.f32.mrf.mxu0
    %9227 = vmatprep.mubr.f32.mxu0 0.0
    %v9228 = vand.u32 %v119, 4294901760
    %9229 = vmatmul.mubr.f32.gmra.mxu0 %v9228
    %v9230 = vpop.f32.mrf.mxu0
    %v9231 = vadd.f32 %v9022, %v9230
    %v9232 = vpop.f32.mrf.mxu0
    %9233 = vdwg.mxu0
    %9234 = vmatprep.subr.mxu0 0.0
    %v9235 = vand.u32 %v4168, 4294901760
    %9236 = vmatpush1.msra.mxu0 %v9235
    %9237 = vmatprep.subr.mxu0 0.0
    %v9238 = vand.u32 %v4162, 4294901760
    %9239 = vmatpush1.msra.mxu0 %v9238
    %9240 = vmatprep.subr.mxu0 0.0
    %v9241 = vand.u32 %v4156, 4294901760
    %9242 = vmatpush1.msra.mxu0 %v9241
    %9243 = vmatprep.subr.mxu0 0.0
    %v9244 = vand.u32 %v4150, 4294901760
    %9245 = vmatpush1.msra.mxu0 %v9244
    %9246 = vmatprep.subr.mxu0 0.0
    %v9247 = vand.u32 %v4144, 4294901760
    %9248 = vmatpush1.msra.mxu0 %v9247
    %9249 = vmatprep.subr.mxu0 0.0
    %v9250 = vand.u32 %v4138, 4294901760
    %9251 = vmatpush1.msra.mxu0 %v9250
    %9252 = vmatprep.subr.mxu0 0.0
    %v9253 = vand.u32 %v4132, 4294901760
    %9254 = vmatpush1.msra.mxu0 %v9253
    %9255 = vmatprep.subr.mxu0 0.0
    %v9256 = vand.u32 %v4126, 4294901760
    %9257 = vmatpush1.msra.mxu0 %v9256
    %9258 = vmatprep.subr.mxu0 0.0
    %v9259 = vand.u32 %v4120, 4294901760
    %9260 = vmatpush1.msra.mxu0 %v9259
    %9261 = vmatprep.subr.mxu0 0.0
    %v9262 = vand.u32 %v4114, 4294901760
    %9263 = vmatpush1.msra.mxu0 %v9262
    %9264 = vmatprep.subr.mxu0 0.0
    %v9265 = vand.u32 %v4108, 4294901760
    %9266 = vmatpush1.msra.mxu0 %v9265
    %9267 = vmatprep.subr.mxu0 0.0
    %v9268 = vand.u32 %v4102, 4294901760
    %9269 = vmatpush1.msra.mxu0 %v9268
    %9270 = vmatprep.subr.mxu0 0.0
    %v9271 = vand.u32 %v4096, 4294901760
    %9272 = vmatpush1.msra.mxu0 %v9271
    %9273 = vmatprep.subr.mxu0 0.0
    %v9274 = vand.u32 %v4090, 4294901760
    %9275 = vmatpush1.msra.mxu0 %v9274
    %9276 = vmatprep.subr.mxu0 0.0
    %v9277 = vand.u32 %v4084, 4294901760
    %9278 = vmatpush1.msra.mxu0 %v9277
    %9279 = vmatprep.subr.mxu0 0.0
    %v9280 = vand.u32 %v4078, 4294901760
    %9281 = vmatpush1.msra.mxu0 %v9280
    %9282 = vmatprep.subr.mxu0 0.0
    %9283 = vmatpush2.msra.mxu0 0.0
    %9284 = vmatprep.subr.mxu0 0.0
    %9285 = vmatpush2.msra.mxu0 0.0
    %9286 = vmatprep.subr.mxu0 0.0
    %9287 = vmatpush2.msra.mxu0 0.0
    %9288 = vmatprep.subr.mxu0 0.0
    %9289 = vmatpush2.msra.mxu0 0.0
    %9290 = vmatprep.subr.mxu0 0.0
    %9291 = vmatpush2.msra.mxu0 0.0
    %9292 = vmatprep.subr.mxu0 0.0
    %9293 = vmatpush2.msra.mxu0 0.0
    %9294 = vmatprep.subr.mxu0 0.0
    %9295 = vmatpush2.msra.mxu0 0.0
    %9296 = vmatprep.subr.mxu0 0.0
    %9297 = vmatpush2.msra.mxu0 0.0
    %9298 = vmatprep.subr.mxu0 0.0
    %9299 = vmatpush2.msra.mxu0 0.0
    %9300 = vmatprep.subr.mxu0 0.0
    %9301 = vmatpush2.msra.mxu0 0.0
    %9302 = vmatprep.subr.mxu0 0.0
    %9303 = vmatpush2.msra.mxu0 0.0
    %9304 = vmatprep.subr.mxu0 0.0
    %9305 = vmatpush2.msra.mxu0 0.0
    %9306 = vmatprep.subr.mxu0 0.0
    %9307 = vmatpush2.msra.mxu0 0.0
    %9308 = vmatprep.subr.mxu0 0.0
    %9309 = vmatpush2.msra.mxu0 0.0
    %9310 = vmatprep.subr.mxu0 0.0
    %9311 = vmatpush2.msra.mxu0 0.0
    %9312 = vmatprep.subr.mxu0 0.0
    %9313 = vmatpush2.msra.mxu0 0.0
    %9314 = vmatprep.mubr.f32.mxu0 0.0
    %v9315 = vand.u32 %v104, 4294901760
    %9316 = vmatmul.mubr.f32.gmra.mxu0 %v9315
    %v9317 = vpop.f32.mrf.mxu0
    %v9318 = vadd.f32 %v9141, %v9317
    %v9319 = vpop.f32.mrf.mxu0
    %9320 = vmatprep.mubr.f32.mxu0 0.0
    %v9321 = vand.u32 %v105, 4294901760
    %9322 = vmatmul.mubr.f32.gmra.mxu0 %v9321
    %v9323 = vpop.f32.mrf.mxu0
    %v9324 = vadd.f32 %v9147, %v9323
    %v9325 = vpop.f32.mrf.mxu0
    %9326 = vmatprep.mubr.f32.mxu0 0.0
    %v9327 = vand.u32 %v106, 4294901760
    %9328 = vmatmul.mubr.f32.gmra.mxu0 %v9327
    %v9329 = vpop.f32.mrf.mxu0
    %v9330 = vadd.f32 %v9153, %v9329
    %v9331 = vpop.f32.mrf.mxu0
    %9332 = vmatprep.mubr.f32.mxu0 0.0
    %v9333 = vand.u32 %v107, 4294901760
    %9334 = vmatmul.mubr.f32.gmra.mxu0 %v9333
    %v9335 = vpop.f32.mrf.mxu0
    %v9336 = vadd.f32 %v9159, %v9335
    %v9337 = vpop.f32.mrf.mxu0
    %9338 = vmatprep.mubr.f32.mxu0 0.0
    %v9339 = vand.u32 %v108, 4294901760
    %9340 = vmatmul.mubr.f32.gmra.mxu0 %v9339
    %v9341 = vpop.f32.mrf.mxu0
    %v9342 = vadd.f32 %v9165, %v9341
    %v9343 = vpop.f32.mrf.mxu0
    %9344 = vmatprep.mubr.f32.mxu0 0.0
    %v9345 = vand.u32 %v109, 4294901760
    %9346 = vmatmul.mubr.f32.gmra.mxu0 %v9345
    %v9347 = vpop.f32.mrf.mxu0
    %v9348 = vadd.f32 %v9171, %v9347
    %v9349 = vpop.f32.mrf.mxu0
    %9350 = vmatprep.mubr.f32.mxu0 0.0
    %v9351 = vand.u32 %v110, 4294901760
    %9352 = vmatmul.mubr.f32.gmra.mxu0 %v9351
    %v9353 = vpop.f32.mrf.mxu0
    %v9354 = vadd.f32 %v9177, %v9353
    %v9355 = vpop.f32.mrf.mxu0
    %9356 = vmatprep.mubr.f32.mxu0 0.0
    %v9357 = vand.u32 %v111, 4294901760
    %9358 = vmatmul.mubr.f32.gmra.mxu0 %v9357
    %v9359 = vpop.f32.mrf.mxu0
    %v9360 = vadd.f32 %v9183, %v9359
    %v9361 = vpop.f32.mrf.mxu0
    %9362 = vmatprep.mubr.f32.mxu0 0.0
    %v9363 = vand.u32 %v112, 4294901760
    %9364 = vmatmul.mubr.f32.gmra.mxu0 %v9363
    %v9365 = vpop.f32.mrf.mxu0
    %v9366 = vadd.f32 %v9189, %v9365
    %v9367 = vpop.f32.mrf.mxu0
    %9368 = vmatprep.mubr.f32.mxu0 0.0
    %v9369 = vand.u32 %v113, 4294901760
    %9370 = vmatmul.mubr.f32.gmra.mxu0 %v9369
    %v9371 = vpop.f32.mrf.mxu0
    %v9372 = vadd.f32 %v9195, %v9371
    %v9373 = vpop.f32.mrf.mxu0
    %9374 = vmatprep.mubr.f32.mxu0 0.0
    %v9375 = vand.u32 %v114, 4294901760
    %9376 = vmatmul.mubr.f32.gmra.mxu0 %v9375
    %v9377 = vpop.f32.mrf.mxu0
    %v9378 = vadd.f32 %v9201, %v9377
    %v9379 = vpop.f32.mrf.mxu0
    %9380 = vmatprep.mubr.f32.mxu0 0.0
    %v9381 = vand.u32 %v115, 4294901760
    %9382 = vmatmul.mubr.f32.gmra.mxu0 %v9381
    %v9383 = vpop.f32.mrf.mxu0
    %v9384 = vadd.f32 %v9207, %v9383
    %v9385 = vpop.f32.mrf.mxu0
    %9386 = vmatprep.mubr.f32.mxu0 0.0
    %v9387 = vand.u32 %v116, 4294901760
    %9388 = vmatmul.mubr.f32.gmra.mxu0 %v9387
    %v9389 = vpop.f32.mrf.mxu0
    %v9390 = vadd.f32 %v9213, %v9389
    %v9391 = vpop.f32.mrf.mxu0
    %9392 = vmatprep.mubr.f32.mxu0 0.0
    %v9393 = vand.u32 %v117, 4294901760
    %9394 = vmatmul.mubr.f32.gmra.mxu0 %v9393
    %v9395 = vpop.f32.mrf.mxu0
    %v9396 = vadd.f32 %v9219, %v9395
    %v9397 = vpop.f32.mrf.mxu0
    %9398 = vmatprep.mubr.f32.mxu0 0.0
    %v9399 = vand.u32 %v118, 4294901760
    %9400 = vmatmul.mubr.f32.gmra.mxu0 %v9399
    %v9401 = vpop.f32.mrf.mxu0
    %v9402 = vadd.f32 %v9225, %v9401
    %v9403 = vpop.f32.mrf.mxu0
    %9404 = vmatprep.mubr.f32.mxu0 0.0
    %v9405 = vand.u32 %v119, 4294901760
    %9406 = vmatmul.mubr.f32.gmra.mxu0 %v9405
    %v9407 = vpop.f32.mrf.mxu0
    %v9408 = vadd.f32 %v9231, %v9407
    %v9409 = vpop.f32.mrf.mxu0
    %9410 = vdwg.mxu0
    %9411 = vmatprep.subr.mxu0 0.0
    %v9412 = vand.u32 %v4264, 4294901760
    %9413 = vmatpush1.msra.mxu0 %v9412
    %9414 = vmatprep.subr.mxu0 0.0
    %v9415 = vand.u32 %v4258, 4294901760
    %9416 = vmatpush1.msra.mxu0 %v9415
    %9417 = vmatprep.subr.mxu0 0.0
    %v9418 = vand.u32 %v4252, 4294901760
    %9419 = vmatpush1.msra.mxu0 %v9418
    %9420 = vmatprep.subr.mxu0 0.0
    %v9421 = vand.u32 %v4246, 4294901760
    %9422 = vmatpush1.msra.mxu0 %v9421
    %9423 = vmatprep.subr.mxu0 0.0
    %v9424 = vand.u32 %v4240, 4294901760
    %9425 = vmatpush1.msra.mxu0 %v9424
    %9426 = vmatprep.subr.mxu0 0.0
    %v9427 = vand.u32 %v4234, 4294901760
    %9428 = vmatpush1.msra.mxu0 %v9427
    %9429 = vmatprep.subr.mxu0 0.0
    %v9430 = vand.u32 %v4228, 4294901760
    %9431 = vmatpush1.msra.mxu0 %v9430
    %9432 = vmatprep.subr.mxu0 0.0
    %v9433 = vand.u32 %v4222, 4294901760
    %9434 = vmatpush1.msra.mxu0 %v9433
    %9435 = vmatprep.subr.mxu0 0.0
    %v9436 = vand.u32 %v4216, 4294901760
    %9437 = vmatpush1.msra.mxu0 %v9436
    %9438 = vmatprep.subr.mxu0 0.0
    %v9439 = vand.u32 %v4210, 4294901760
    %9440 = vmatpush1.msra.mxu0 %v9439
    %9441 = vmatprep.subr.mxu0 0.0
    %v9442 = vand.u32 %v4204, 4294901760
    %9443 = vmatpush1.msra.mxu0 %v9442
    %9444 = vmatprep.subr.mxu0 0.0
    %v9445 = vand.u32 %v4198, 4294901760
    %9446 = vmatpush1.msra.mxu0 %v9445
    %9447 = vmatprep.subr.mxu0 0.0
    %v9448 = vand.u32 %v4192, 4294901760
    %9449 = vmatpush1.msra.mxu0 %v9448
    %9450 = vmatprep.subr.mxu0 0.0
    %v9451 = vand.u32 %v4186, 4294901760
    %9452 = vmatpush1.msra.mxu0 %v9451
    %9453 = vmatprep.subr.mxu0 0.0
    %v9454 = vand.u32 %v4180, 4294901760
    %9455 = vmatpush1.msra.mxu0 %v9454
    %9456 = vmatprep.subr.mxu0 0.0
    %v9457 = vand.u32 %v4174, 4294901760
    %9458 = vmatpush1.msra.mxu0 %v9457
    %9459 = vmatprep.subr.mxu0 0.0
    %9460 = vmatpush2.msra.mxu0 0.0
    %9461 = vmatprep.subr.mxu0 0.0
    %9462 = vmatpush2.msra.mxu0 0.0
    %9463 = vmatprep.subr.mxu0 0.0
    %9464 = vmatpush2.msra.mxu0 0.0
    %9465 = vmatprep.subr.mxu0 0.0
    %9466 = vmatpush2.msra.mxu0 0.0
    %9467 = vmatprep.subr.mxu0 0.0
    %9468 = vmatpush2.msra.mxu0 0.0
    %9469 = vmatprep.subr.mxu0 0.0
    %9470 = vmatpush2.msra.mxu0 0.0
    %9471 = vmatprep.subr.mxu0 0.0
    %9472 = vmatpush2.msra.mxu0 0.0
    %9473 = vmatprep.subr.mxu0 0.0
    %9474 = vmatpush2.msra.mxu0 0.0
    %9475 = vmatprep.subr.mxu0 0.0
    %9476 = vmatpush2.msra.mxu0 0.0
    %9477 = vmatprep.subr.mxu0 0.0
    %9478 = vmatpush2.msra.mxu0 0.0
    %9479 = vmatprep.subr.mxu0 0.0
    %9480 = vmatpush2.msra.mxu0 0.0
    %9481 = vmatprep.subr.mxu0 0.0
    %9482 = vmatpush2.msra.mxu0 0.0
    %9483 = vmatprep.subr.mxu0 0.0
    %9484 = vmatpush2.msra.mxu0 0.0
    %9485 = vmatprep.subr.mxu0 0.0
    %9486 = vmatpush2.msra.mxu0 0.0
    %9487 = vmatprep.subr.mxu0 0.0
    %9488 = vmatpush2.msra.mxu0 0.0
    %9489 = vmatprep.subr.mxu0 0.0
    %9490 = vmatpush2.msra.mxu0 0.0
    %9491 = vmatprep.mubr.f32.mxu0 0.0
    %v9492 = vand.u32 %v104, 4294901760
    %v9493 = vsub.f32 %v104, %v9492
    %v9494 = vand.u32 %v9493, 4294901760
    %v9495 = vsub.f32 %v9493, %v9494
    %v9496 = vand.u32 %v9495, 4294901760
    %9497 = vmatmul.mubr.f32.gmra.mxu0 %v9496
    %v9498 = vpop.f32.mrf.mxu0
    %v9499 = vadd.f32 0.0, %v9498
    %v9500 = vpop.f32.mrf.mxu0
    %9501 = vmatprep.mubr.f32.mxu0 0.0
    %v9502 = vand.u32 %v105, 4294901760
    %v9503 = vsub.f32 %v105, %v9502
    %v9504 = vand.u32 %v9503, 4294901760
    %v9505 = vsub.f32 %v9503, %v9504
    %v9506 = vand.u32 %v9505, 4294901760
    %9507 = vmatmul.mubr.f32.gmra.mxu0 %v9506
    %v9508 = vpop.f32.mrf.mxu0
    %v9509 = vadd.f32 0.0, %v9508
    %v9510 = vpop.f32.mrf.mxu0
    %9511 = vmatprep.mubr.f32.mxu0 0.0
    %v9512 = vand.u32 %v106, 4294901760
    %v9513 = vsub.f32 %v106, %v9512
    %v9514 = vand.u32 %v9513, 4294901760
    %v9515 = vsub.f32 %v9513, %v9514
    %v9516 = vand.u32 %v9515, 4294901760
    %9517 = vmatmul.mubr.f32.gmra.mxu0 %v9516
    %v9518 = vpop.f32.mrf.mxu0
    %v9519 = vadd.f32 0.0, %v9518
    %v9520 = vpop.f32.mrf.mxu0
    %9521 = vmatprep.mubr.f32.mxu0 0.0
    %v9522 = vand.u32 %v107, 4294901760
    %v9523 = vsub.f32 %v107, %v9522
    %v9524 = vand.u32 %v9523, 4294901760
    %v9525 = vsub.f32 %v9523, %v9524
    %v9526 = vand.u32 %v9525, 4294901760
    %9527 = vmatmul.mubr.f32.gmra.mxu0 %v9526
    %v9528 = vpop.f32.mrf.mxu0
    %v9529 = vadd.f32 0.0, %v9528
    %v9530 = vpop.f32.mrf.mxu0
    %9531 = vmatprep.mubr.f32.mxu0 0.0
    %v9532 = vand.u32 %v108, 4294901760
    %v9533 = vsub.f32 %v108, %v9532
    %v9534 = vand.u32 %v9533, 4294901760
    %v9535 = vsub.f32 %v9533, %v9534
    %v9536 = vand.u32 %v9535, 4294901760
    %9537 = vmatmul.mubr.f32.gmra.mxu0 %v9536
    %v9538 = vpop.f32.mrf.mxu0
    %v9539 = vadd.f32 0.0, %v9538
    %v9540 = vpop.f32.mrf.mxu0
    %9541 = vmatprep.mubr.f32.mxu0 0.0
    %v9542 = vand.u32 %v109, 4294901760
    %v9543 = vsub.f32 %v109, %v9542
    %v9544 = vand.u32 %v9543, 4294901760
    %v9545 = vsub.f32 %v9543, %v9544
    %v9546 = vand.u32 %v9545, 4294901760
    %9547 = vmatmul.mubr.f32.gmra.mxu0 %v9546
    %v9548 = vpop.f32.mrf.mxu0
    %v9549 = vadd.f32 0.0, %v9548
    %v9550 = vpop.f32.mrf.mxu0
    %9551 = vmatprep.mubr.f32.mxu0 0.0
    %v9552 = vand.u32 %v110, 4294901760
    %v9553 = vsub.f32 %v110, %v9552
    %v9554 = vand.u32 %v9553, 4294901760
    %v9555 = vsub.f32 %v9553, %v9554
    %v9556 = vand.u32 %v9555, 4294901760
    %9557 = vmatmul.mubr.f32.gmra.mxu0 %v9556
    %v9558 = vpop.f32.mrf.mxu0
    %v9559 = vadd.f32 0.0, %v9558
    %v9560 = vpop.f32.mrf.mxu0
    %9561 = vmatprep.mubr.f32.mxu0 0.0
    %v9562 = vand.u32 %v111, 4294901760
    %v9563 = vsub.f32 %v111, %v9562
    %v9564 = vand.u32 %v9563, 4294901760
    %v9565 = vsub.f32 %v9563, %v9564
    %v9566 = vand.u32 %v9565, 4294901760
    %9567 = vmatmul.mubr.f32.gmra.mxu0 %v9566
    %v9568 = vpop.f32.mrf.mxu0
    %v9569 = vadd.f32 0.0, %v9568
    %v9570 = vpop.f32.mrf.mxu0
    %9571 = vmatprep.mubr.f32.mxu0 0.0
    %v9572 = vand.u32 %v112, 4294901760
    %v9573 = vsub.f32 %v112, %v9572
    %v9574 = vand.u32 %v9573, 4294901760
    %v9575 = vsub.f32 %v9573, %v9574
    %v9576 = vand.u32 %v9575, 4294901760
    %9577 = vmatmul.mubr.f32.gmra.mxu0 %v9576
    %v9578 = vpop.f32.mrf.mxu0
    %v9579 = vadd.f32 0.0, %v9578
    %v9580 = vpop.f32.mrf.mxu0
    %9581 = vmatprep.mubr.f32.mxu0 0.0
    %v9582 = vand.u32 %v113, 4294901760
    %v9583 = vsub.f32 %v113, %v9582
    %v9584 = vand.u32 %v9583, 4294901760
    %v9585 = vsub.f32 %v9583, %v9584
    %v9586 = vand.u32 %v9585, 4294901760
    %9587 = vmatmul.mubr.f32.gmra.mxu0 %v9586
    %v9588 = vpop.f32.mrf.mxu0
    %v9589 = vadd.f32 0.0, %v9588
    %v9590 = vpop.f32.mrf.mxu0
    %9591 = vmatprep.mubr.f32.mxu0 0.0
    %v9592 = vand.u32 %v114, 4294901760
    %v9593 = vsub.f32 %v114, %v9592
    %v9594 = vand.u32 %v9593, 4294901760
    %v9595 = vsub.f32 %v9593, %v9594
    %v9596 = vand.u32 %v9595, 4294901760
    %9597 = vmatmul.mubr.f32.gmra.mxu0 %v9596
    %v9598 = vpop.f32.mrf.mxu0
    %v9599 = vadd.f32 0.0, %v9598
    %v9600 = vpop.f32.mrf.mxu0
    %9601 = vmatprep.mubr.f32.mxu0 0.0
    %v9602 = vand.u32 %v115, 4294901760
    %v9603 = vsub.f32 %v115, %v9602
    %v9604 = vand.u32 %v9603, 4294901760
    %v9605 = vsub.f32 %v9603, %v9604
    %v9606 = vand.u32 %v9605, 4294901760
    %9607 = vmatmul.mubr.f32.gmra.mxu0 %v9606
    %v9608 = vpop.f32.mrf.mxu0
    %v9609 = vadd.f32 0.0, %v9608
    %v9610 = vpop.f32.mrf.mxu0
    %9611 = vmatprep.mubr.f32.mxu0 0.0
    %v9612 = vand.u32 %v116, 4294901760
    %v9613 = vsub.f32 %v116, %v9612
    %v9614 = vand.u32 %v9613, 4294901760
    %v9615 = vsub.f32 %v9613, %v9614
    %v9616 = vand.u32 %v9615, 4294901760
    %9617 = vmatmul.mubr.f32.gmra.mxu0 %v9616
    %v9618 = vpop.f32.mrf.mxu0
    %v9619 = vadd.f32 0.0, %v9618
    %v9620 = vpop.f32.mrf.mxu0
    %9621 = vmatprep.mubr.f32.mxu0 0.0
    %v9622 = vand.u32 %v117, 4294901760
    %v9623 = vsub.f32 %v117, %v9622
    %v9624 = vand.u32 %v9623, 4294901760
    %v9625 = vsub.f32 %v9623, %v9624
    %v9626 = vand.u32 %v9625, 4294901760
    %9627 = vmatmul.mubr.f32.gmra.mxu0 %v9626
    %v9628 = vpop.f32.mrf.mxu0
    %v9629 = vadd.f32 0.0, %v9628
    %v9630 = vpop.f32.mrf.mxu0
    %9631 = vmatprep.mubr.f32.mxu0 0.0
    %v9632 = vand.u32 %v118, 4294901760
    %v9633 = vsub.f32 %v118, %v9632
    %v9634 = vand.u32 %v9633, 4294901760
    %v9635 = vsub.f32 %v9633, %v9634
    %v9636 = vand.u32 %v9635, 4294901760
    %9637 = vmatmul.mubr.f32.gmra.mxu0 %v9636
    %v9638 = vpop.f32.mrf.mxu0
    %v9639 = vadd.f32 0.0, %v9638
    %v9640 = vpop.f32.mrf.mxu0
    %9641 = vmatprep.mubr.f32.mxu0 0.0
    %v9642 = vand.u32 %v119, 4294901760
    %v9643 = vsub.f32 %v119, %v9642
    %v9644 = vand.u32 %v9643, 4294901760
    %v9645 = vsub.f32 %v9643, %v9644
    %v9646 = vand.u32 %v9645, 4294901760
    %9647 = vmatmul.mubr.f32.gmra.mxu0 %v9646
    %v9648 = vpop.f32.mrf.mxu0
    %v9649 = vadd.f32 0.0, %v9648
    %v9650 = vpop.f32.mrf.mxu0
    %9651 = vdwg.mxu0
    %9652 = vmatprep.subr.mxu0 0.0
    %v9653 = vand.u32 %v4264, 4294901760
    %v9654 = vsub.f32 %v4264, %v9653
    %v9655 = vand.u32 %v9654, 4294901760
    %v9656 = vsub.f32 %v9654, %v9655
    %v9657 = vand.u32 %v9656, 4294901760
    %9658 = vmatpush1.msra.mxu0 %v9657
    %9659 = vmatprep.subr.mxu0 0.0
    %v9660 = vand.u32 %v4258, 4294901760
    %v9661 = vsub.f32 %v4258, %v9660
    %v9662 = vand.u32 %v9661, 4294901760
    %v9663 = vsub.f32 %v9661, %v9662
    %v9664 = vand.u32 %v9663, 4294901760
    %9665 = vmatpush1.msra.mxu0 %v9664
    %9666 = vmatprep.subr.mxu0 0.0
    %v9667 = vand.u32 %v4252, 4294901760
    %v9668 = vsub.f32 %v4252, %v9667
    %v9669 = vand.u32 %v9668, 4294901760
    %v9670 = vsub.f32 %v9668, %v9669
    %v9671 = vand.u32 %v9670, 4294901760
    %9672 = vmatpush1.msra.mxu0 %v9671
    %9673 = vmatprep.subr.mxu0 0.0
    %v9674 = vand.u32 %v4246, 4294901760
    %v9675 = vsub.f32 %v4246, %v9674
    %v9676 = vand.u32 %v9675, 4294901760
    %v9677 = vsub.f32 %v9675, %v9676
    %v9678 = vand.u32 %v9677, 4294901760
    %9679 = vmatpush1.msra.mxu0 %v9678
    %9680 = vmatprep.subr.mxu0 0.0
    %v9681 = vand.u32 %v4240, 4294901760
    %v9682 = vsub.f32 %v4240, %v9681
    %v9683 = vand.u32 %v9682, 4294901760
    %v9684 = vsub.f32 %v9682, %v9683
    %v9685 = vand.u32 %v9684, 4294901760
    %9686 = vmatpush1.msra.mxu0 %v9685
    %9687 = vmatprep.subr.mxu0 0.0
    %v9688 = vand.u32 %v4234, 4294901760
    %v9689 = vsub.f32 %v4234, %v9688
    %v9690 = vand.u32 %v9689, 4294901760
    %v9691 = vsub.f32 %v9689, %v9690
    %v9692 = vand.u32 %v9691, 4294901760
    %9693 = vmatpush1.msra.mxu0 %v9692
    %9694 = vmatprep.subr.mxu0 0.0
    %v9695 = vand.u32 %v4228, 4294901760
    %v9696 = vsub.f32 %v4228, %v9695
    %v9697 = vand.u32 %v9696, 4294901760
    %v9698 = vsub.f32 %v9696, %v9697
    %v9699 = vand.u32 %v9698, 4294901760
    %9700 = vmatpush1.msra.mxu0 %v9699
    %9701 = vmatprep.subr.mxu0 0.0
    %v9702 = vand.u32 %v4222, 4294901760
    %v9703 = vsub.f32 %v4222, %v9702
    %v9704 = vand.u32 %v9703, 4294901760
    %v9705 = vsub.f32 %v9703, %v9704
    %v9706 = vand.u32 %v9705, 4294901760
    %9707 = vmatpush1.msra.mxu0 %v9706
    %9708 = vmatprep.subr.mxu0 0.0
    %v9709 = vand.u32 %v4216, 4294901760
    %v9710 = vsub.f32 %v4216, %v9709
    %v9711 = vand.u32 %v9710, 4294901760
    %v9712 = vsub.f32 %v9710, %v9711
    %v9713 = vand.u32 %v9712, 4294901760
    %9714 = vmatpush1.msra.mxu0 %v9713
    %9715 = vmatprep.subr.mxu0 0.0
    %v9716 = vand.u32 %v4210, 4294901760
    %v9717 = vsub.f32 %v4210, %v9716
    %v9718 = vand.u32 %v9717, 4294901760
    %v9719 = vsub.f32 %v9717, %v9718
    %v9720 = vand.u32 %v9719, 4294901760
    %9721 = vmatpush1.msra.mxu0 %v9720
    %9722 = vmatprep.subr.mxu0 0.0
    %v9723 = vand.u32 %v4204, 4294901760
    %v9724 = vsub.f32 %v4204, %v9723
    %v9725 = vand.u32 %v9724, 4294901760
    %v9726 = vsub.f32 %v9724, %v9725
    %v9727 = vand.u32 %v9726, 4294901760
    %9728 = vmatpush1.msra.mxu0 %v9727
    %9729 = vmatprep.subr.mxu0 0.0
    %v9730 = vand.u32 %v4198, 4294901760
    %v9731 = vsub.f32 %v4198, %v9730
    %v9732 = vand.u32 %v9731, 4294901760
    %v9733 = vsub.f32 %v9731, %v9732
    %v9734 = vand.u32 %v9733, 4294901760
    %9735 = vmatpush1.msra.mxu0 %v9734
    %9736 = vmatprep.subr.mxu0 0.0
    %v9737 = vand.u32 %v4192, 4294901760
    %v9738 = vsub.f32 %v4192, %v9737
    %v9739 = vand.u32 %v9738, 4294901760
    %v9740 = vsub.f32 %v9738, %v9739
    %v9741 = vand.u32 %v9740, 4294901760
    %9742 = vmatpush1.msra.mxu0 %v9741
    %9743 = vmatprep.subr.mxu0 0.0
    %v9744 = vand.u32 %v4186, 4294901760
    %v9745 = vsub.f32 %v4186, %v9744
    %v9746 = vand.u32 %v9745, 4294901760
    %v9747 = vsub.f32 %v9745, %v9746
    %v9748 = vand.u32 %v9747, 4294901760
    %9749 = vmatpush1.msra.mxu0 %v9748
    %9750 = vmatprep.subr.mxu0 0.0
    %v9751 = vand.u32 %v4180, 4294901760
    %v9752 = vsub.f32 %v4180, %v9751
    %v9753 = vand.u32 %v9752, 4294901760
    %v9754 = vsub.f32 %v9752, %v9753
    %v9755 = vand.u32 %v9754, 4294901760
    %9756 = vmatpush1.msra.mxu0 %v9755
    %9757 = vmatprep.subr.mxu0 0.0
    %v9758 = vand.u32 %v4174, 4294901760
    %v9759 = vsub.f32 %v4174, %v9758
    %v9760 = vand.u32 %v9759, 4294901760
    %v9761 = vsub.f32 %v9759, %v9760
    %v9762 = vand.u32 %v9761, 4294901760
    %9763 = vmatpush1.msra.mxu0 %v9762
    %9764 = vmatprep.subr.mxu0 0.0
    %9765 = vmatpush2.msra.mxu0 0.0
    %9766 = vmatprep.subr.mxu0 0.0
    %9767 = vmatpush2.msra.mxu0 0.0
    %9768 = vmatprep.subr.mxu0 0.0
    %9769 = vmatpush2.msra.mxu0 0.0
    %9770 = vmatprep.subr.mxu0 0.0
    %9771 = vmatpush2.msra.mxu0 0.0
    %9772 = vmatprep.subr.mxu0 0.0
    %9773 = vmatpush2.msra.mxu0 0.0
    %9774 = vmatprep.subr.mxu0 0.0
    %9775 = vmatpush2.msra.mxu0 0.0
    %9776 = vmatprep.subr.mxu0 0.0
    %9777 = vmatpush2.msra.mxu0 0.0
    %9778 = vmatprep.subr.mxu0 0.0
    %9779 = vmatpush2.msra.mxu0 0.0
    %9780 = vmatprep.subr.mxu0 0.0
    %9781 = vmatpush2.msra.mxu0 0.0
    %9782 = vmatprep.subr.mxu0 0.0
    %9783 = vmatpush2.msra.mxu0 0.0
    %9784 = vmatprep.subr.mxu0 0.0
    %9785 = vmatpush2.msra.mxu0 0.0
    %9786 = vmatprep.subr.mxu0 0.0
    %9787 = vmatpush2.msra.mxu0 0.0
    %9788 = vmatprep.subr.mxu0 0.0
    %9789 = vmatpush2.msra.mxu0 0.0
    %9790 = vmatprep.subr.mxu0 0.0
    %9791 = vmatpush2.msra.mxu0 0.0
    %9792 = vmatprep.subr.mxu0 0.0
    %9793 = vmatpush2.msra.mxu0 0.0
    %9794 = vmatprep.subr.mxu0 0.0
    %9795 = vmatpush2.msra.mxu0 0.0
    %9796 = vmatprep.mubr.f32.mxu0 0.0
    %v9797 = vand.u32 %v104, 4294901760
    %9798 = vmatmul.mubr.f32.gmra.mxu0 %v9797
    %v9799 = vpop.f32.mrf.mxu0
    %v9800 = vadd.f32 %v9499, %v9799
    %v9801 = vpop.f32.mrf.mxu0
    %9802 = vmatprep.mubr.f32.mxu0 0.0
    %v9803 = vand.u32 %v105, 4294901760
    %9804 = vmatmul.mubr.f32.gmra.mxu0 %v9803
    %v9805 = vpop.f32.mrf.mxu0
    %v9806 = vadd.f32 %v9509, %v9805
    %v9807 = vpop.f32.mrf.mxu0
    %9808 = vmatprep.mubr.f32.mxu0 0.0
    %v9809 = vand.u32 %v106, 4294901760
    %9810 = vmatmul.mubr.f32.gmra.mxu0 %v9809
    %v9811 = vpop.f32.mrf.mxu0
    %v9812 = vadd.f32 %v9519, %v9811
    %v9813 = vpop.f32.mrf.mxu0
    %9814 = vmatprep.mubr.f32.mxu0 0.0
    %v9815 = vand.u32 %v107, 4294901760
    %9816 = vmatmul.mubr.f32.gmra.mxu0 %v9815
    %v9817 = vpop.f32.mrf.mxu0
    %v9818 = vadd.f32 %v9529, %v9817
    %v9819 = vpop.f32.mrf.mxu0
    %9820 = vmatprep.mubr.f32.mxu0 0.0
    %v9821 = vand.u32 %v108, 4294901760
    %9822 = vmatmul.mubr.f32.gmra.mxu0 %v9821
    %v9823 = vpop.f32.mrf.mxu0
    %v9824 = vadd.f32 %v9539, %v9823
    %v9825 = vpop.f32.mrf.mxu0
    %9826 = vmatprep.mubr.f32.mxu0 0.0
    %v9827 = vand.u32 %v109, 4294901760
    %9828 = vmatmul.mubr.f32.gmra.mxu0 %v9827
    %v9829 = vpop.f32.mrf.mxu0
    %v9830 = vadd.f32 %v9549, %v9829
    %v9831 = vpop.f32.mrf.mxu0
    %9832 = vmatprep.mubr.f32.mxu0 0.0
    %v9833 = vand.u32 %v110, 4294901760
    %9834 = vmatmul.mubr.f32.gmra.mxu0 %v9833
    %v9835 = vpop.f32.mrf.mxu0
    %v9836 = vadd.f32 %v9559, %v9835
    %v9837 = vpop.f32.mrf.mxu0
    %9838 = vmatprep.mubr.f32.mxu0 0.0
    %v9839 = vand.u32 %v111, 4294901760
    %9840 = vmatmul.mubr.f32.gmra.mxu0 %v9839
    %v9841 = vpop.f32.mrf.mxu0
    %v9842 = vadd.f32 %v9569, %v9841
    %v9843 = vpop.f32.mrf.mxu0
    %9844 = vmatprep.mubr.f32.mxu0 0.0
    %v9845 = vand.u32 %v112, 4294901760
    %9846 = vmatmul.mubr.f32.gmra.mxu0 %v9845
    %v9847 = vpop.f32.mrf.mxu0
    %v9848 = vadd.f32 %v9579, %v9847
    %v9849 = vpop.f32.mrf.mxu0
    %9850 = vmatprep.mubr.f32.mxu0 0.0
    %v9851 = vand.u32 %v113, 4294901760
    %9852 = vmatmul.mubr.f32.gmra.mxu0 %v9851
    %v9853 = vpop.f32.mrf.mxu0
    %v9854 = vadd.f32 %v9589, %v9853
    %v9855 = vpop.f32.mrf.mxu0
    %9856 = vmatprep.mubr.f32.mxu0 0.0
    %v9857 = vand.u32 %v114, 4294901760
    %9858 = vmatmul.mubr.f32.gmra.mxu0 %v9857
    %v9859 = vpop.f32.mrf.mxu0
    %v9860 = vadd.f32 %v9599, %v9859
    %v9861 = vpop.f32.mrf.mxu0
    %9862 = vmatprep.mubr.f32.mxu0 0.0
    %v9863 = vand.u32 %v115, 4294901760
    %9864 = vmatmul.mubr.f32.gmra.mxu0 %v9863
    %v9865 = vpop.f32.mrf.mxu0
    %v9866 = vadd.f32 %v9609, %v9865
    %v9867 = vpop.f32.mrf.mxu0
    %9868 = vmatprep.mubr.f32.mxu0 0.0
    %v9869 = vand.u32 %v116, 4294901760
    %9870 = vmatmul.mubr.f32.gmra.mxu0 %v9869
    %v9871 = vpop.f32.mrf.mxu0
    %v9872 = vadd.f32 %v9619, %v9871
    %v9873 = vpop.f32.mrf.mxu0
    %9874 = vmatprep.mubr.f32.mxu0 0.0
    %v9875 = vand.u32 %v117, 4294901760
    %9876 = vmatmul.mubr.f32.gmra.mxu0 %v9875
    %v9877 = vpop.f32.mrf.mxu0
    %v9878 = vadd.f32 %v9629, %v9877
    %v9879 = vpop.f32.mrf.mxu0
    %9880 = vmatprep.mubr.f32.mxu0 0.0
    %v9881 = vand.u32 %v118, 4294901760
    %9882 = vmatmul.mubr.f32.gmra.mxu0 %v9881
    %v9883 = vpop.f32.mrf.mxu0
    %v9884 = vadd.f32 %v9639, %v9883
    %v9885 = vpop.f32.mrf.mxu0
    %9886 = vmatprep.mubr.f32.mxu0 0.0
    %v9887 = vand.u32 %v119, 4294901760
    %9888 = vmatmul.mubr.f32.gmra.mxu0 %v9887
    %v9889 = vpop.f32.mrf.mxu0
    %v9890 = vadd.f32 %v9649, %v9889
    %v9891 = vpop.f32.mrf.mxu0
    %9892 = vdwg.mxu0
    %9893 = vmatprep.subr.mxu0 0.0
    %v9894 = vand.u32 %v4264, 4294901760
    %v9895 = vsub.f32 %v4264, %v9894
    %9896 = vmatpush1.msra.mxu0 %v9895
    %9897 = vmatprep.subr.mxu0 0.0
    %v9898 = vand.u32 %v4258, 4294901760
    %v9899 = vsub.f32 %v4258, %v9898
    %9900 = vmatpush1.msra.mxu0 %v9899
    %9901 = vmatprep.subr.mxu0 0.0
    %v9902 = vand.u32 %v4252, 4294901760
    %v9903 = vsub.f32 %v4252, %v9902
    %9904 = vmatpush1.msra.mxu0 %v9903
    %9905 = vmatprep.subr.mxu0 0.0
    %v9906 = vand.u32 %v4246, 4294901760
    %v9907 = vsub.f32 %v4246, %v9906
    %9908 = vmatpush1.msra.mxu0 %v9907
    %9909 = vmatprep.subr.mxu0 0.0
    %v9910 = vand.u32 %v4240, 4294901760
    %v9911 = vsub.f32 %v4240, %v9910
    %9912 = vmatpush1.msra.mxu0 %v9911
    %9913 = vmatprep.subr.mxu0 0.0
    %v9914 = vand.u32 %v4234, 4294901760
    %v9915 = vsub.f32 %v4234, %v9914
    %9916 = vmatpush1.msra.mxu0 %v9915
    %9917 = vmatprep.subr.mxu0 0.0
    %v9918 = vand.u32 %v4228, 4294901760
    %v9919 = vsub.f32 %v4228, %v9918
    %9920 = vmatpush1.msra.mxu0 %v9919
    %9921 = vmatprep.subr.mxu0 0.0
    %v9922 = vand.u32 %v4222, 4294901760
    %v9923 = vsub.f32 %v4222, %v9922
    %9924 = vmatpush1.msra.mxu0 %v9923
    %9925 = vmatprep.subr.mxu0 0.0
    %v9926 = vand.u32 %v4216, 4294901760
    %v9927 = vsub.f32 %v4216, %v9926
    %9928 = vmatpush1.msra.mxu0 %v9927
    %9929 = vmatprep.subr.mxu0 0.0
    %v9930 = vand.u32 %v4210, 4294901760
    %v9931 = vsub.f32 %v4210, %v9930
    %9932 = vmatpush1.msra.mxu0 %v9931
    %9933 = vmatprep.subr.mxu0 0.0
    %v9934 = vand.u32 %v4204, 4294901760
    %v9935 = vsub.f32 %v4204, %v9934
    %9936 = vmatpush1.msra.mxu0 %v9935
    %9937 = vmatprep.subr.mxu0 0.0
    %v9938 = vand.u32 %v4198, 4294901760
    %v9939 = vsub.f32 %v4198, %v9938
    %9940 = vmatpush1.msra.mxu0 %v9939
    %9941 = vmatprep.subr.mxu0 0.0
    %v9942 = vand.u32 %v4192, 4294901760
    %v9943 = vsub.f32 %v4192, %v9942
    %9944 = vmatpush1.msra.mxu0 %v9943
    %9945 = vmatprep.subr.mxu0 0.0
    %v9946 = vand.u32 %v4186, 4294901760
    %v9947 = vsub.f32 %v4186, %v9946
    %9948 = vmatpush1.msra.mxu0 %v9947
    %9949 = vmatprep.subr.mxu0 0.0
    %v9950 = vand.u32 %v4180, 4294901760
    %v9951 = vsub.f32 %v4180, %v9950
    %9952 = vmatpush1.msra.mxu0 %v9951
    %9953 = vmatprep.subr.mxu0 0.0
    %v9954 = vand.u32 %v4174, 4294901760
    %v9955 = vsub.f32 %v4174, %v9954
    %9956 = vmatpush1.msra.mxu0 %v9955
    %9957 = vmatprep.subr.mxu0 0.0
    %9958 = vmatpush2.msra.mxu0 0.0
    %9959 = vmatprep.subr.mxu0 0.0
    %9960 = vmatpush2.msra.mxu0 0.0
    %9961 = vmatprep.subr.mxu0 0.0
    %9962 = vmatpush2.msra.mxu0 0.0
    %9963 = vmatprep.subr.mxu0 0.0
    %9964 = vmatpush2.msra.mxu0 0.0
    %9965 = vmatprep.subr.mxu0 0.0
    %9966 = vmatpush2.msra.mxu0 0.0
    %9967 = vmatprep.subr.mxu0 0.0
    %9968 = vmatpush2.msra.mxu0 0.0
    %9969 = vmatprep.subr.mxu0 0.0
    %9970 = vmatpush2.msra.mxu0 0.0
    %9971 = vmatprep.subr.mxu0 0.0
    %9972 = vmatpush2.msra.mxu0 0.0
    %9973 = vmatprep.subr.mxu0 0.0
    %9974 = vmatpush2.msra.mxu0 0.0
    %9975 = vmatprep.subr.mxu0 0.0
    %9976 = vmatpush2.msra.mxu0 0.0
    %9977 = vmatprep.subr.mxu0 0.0
    %9978 = vmatpush2.msra.mxu0 0.0
    %9979 = vmatprep.subr.mxu0 0.0
    %9980 = vmatpush2.msra.mxu0 0.0
    %9981 = vmatprep.subr.mxu0 0.0
    %9982 = vmatpush2.msra.mxu0 0.0
    %9983 = vmatprep.subr.mxu0 0.0
    %9984 = vmatpush2.msra.mxu0 0.0
    %9985 = vmatprep.subr.mxu0 0.0
    %9986 = vmatpush2.msra.mxu0 0.0
    %9987 = vmatprep.subr.mxu0 0.0
    %9988 = vmatpush2.msra.mxu0 0.0
    %9989 = vmatprep.mubr.f32.mxu0 0.0
    %v9990 = vand.u32 %v104, 4294901760
    %v9991 = vsub.f32 %v104, %v9990
    %9992 = vmatmul.mubr.f32.gmra.mxu0 %v9991
    %v9993 = vpop.f32.mrf.mxu0
    %v9994 = vadd.f32 %v9800, %v9993
    %v9995 = vpop.f32.mrf.mxu0
    %9996 = vmatprep.mubr.f32.mxu0 0.0
    %v9997 = vand.u32 %v105, 4294901760
    %v9998 = vsub.f32 %v105, %v9997
    %9999 = vmatmul.mubr.f32.gmra.mxu0 %v9998
    %v10000 = vpop.f32.mrf.mxu0
    %v10001 = vadd.f32 %v9806, %v10000
    %v10002 = vpop.f32.mrf.mxu0
    %10003 = vmatprep.mubr.f32.mxu0 0.0
    %v10004 = vand.u32 %v106, 4294901760
    %v10005 = vsub.f32 %v106, %v10004
    %10006 = vmatmul.mubr.f32.gmra.mxu0 %v10005
    %v10007 = vpop.f32.mrf.mxu0
    %v10008 = vadd.f32 %v9812, %v10007
    %v10009 = vpop.f32.mrf.mxu0
    %10010 = vmatprep.mubr.f32.mxu0 0.0
    %v10011 = vand.u32 %v107, 4294901760
    %v10012 = vsub.f32 %v107, %v10011
    %10013 = vmatmul.mubr.f32.gmra.mxu0 %v10012
    %v10014 = vpop.f32.mrf.mxu0
    %v10015 = vadd.f32 %v9818, %v10014
    %v10016 = vpop.f32.mrf.mxu0
    %10017 = vmatprep.mubr.f32.mxu0 0.0
    %v10018 = vand.u32 %v108, 4294901760
    %v10019 = vsub.f32 %v108, %v10018
    %10020 = vmatmul.mubr.f32.gmra.mxu0 %v10019
    %v10021 = vpop.f32.mrf.mxu0
    %v10022 = vadd.f32 %v9824, %v10021
    %v10023 = vpop.f32.mrf.mxu0
    %10024 = vmatprep.mubr.f32.mxu0 0.0
    %v10025 = vand.u32 %v109, 4294901760
    %v10026 = vsub.f32 %v109, %v10025
    %10027 = vmatmul.mubr.f32.gmra.mxu0 %v10026
    %v10028 = vpop.f32.mrf.mxu0
    %v10029 = vadd.f32 %v9830, %v10028
    %v10030 = vpop.f32.mrf.mxu0
    %10031 = vmatprep.mubr.f32.mxu0 0.0
    %v10032 = vand.u32 %v110, 4294901760
    %v10033 = vsub.f32 %v110, %v10032
    %10034 = vmatmul.mubr.f32.gmra.mxu0 %v10033
    %v10035 = vpop.f32.mrf.mxu0
    %v10036 = vadd.f32 %v9836, %v10035
    %v10037 = vpop.f32.mrf.mxu0
    %10038 = vmatprep.mubr.f32.mxu0 0.0
    %v10039 = vand.u32 %v111, 4294901760
    %v10040 = vsub.f32 %v111, %v10039
    %10041 = vmatmul.mubr.f32.gmra.mxu0 %v10040
    %v10042 = vpop.f32.mrf.mxu0
    %v10043 = vadd.f32 %v9842, %v10042
    %v10044 = vpop.f32.mrf.mxu0
    %10045 = vmatprep.mubr.f32.mxu0 0.0
    %v10046 = vand.u32 %v112, 4294901760
    %v10047 = vsub.f32 %v112, %v10046
    %10048 = vmatmul.mubr.f32.gmra.mxu0 %v10047
    %v10049 = vpop.f32.mrf.mxu0
    %v10050 = vadd.f32 %v9848, %v10049
    %v10051 = vpop.f32.mrf.mxu0
    %10052 = vmatprep.mubr.f32.mxu0 0.0
    %v10053 = vand.u32 %v113, 4294901760
    %v10054 = vsub.f32 %v113, %v10053
    %10055 = vmatmul.mubr.f32.gmra.mxu0 %v10054
    %v10056 = vpop.f32.mrf.mxu0
    %v10057 = vadd.f32 %v9854, %v10056
    %v10058 = vpop.f32.mrf.mxu0
    %10059 = vmatprep.mubr.f32.mxu0 0.0
    %v10060 = vand.u32 %v114, 4294901760
    %v10061 = vsub.f32 %v114, %v10060
    %10062 = vmatmul.mubr.f32.gmra.mxu0 %v10061
    %v10063 = vpop.f32.mrf.mxu0
    %v10064 = vadd.f32 %v9860, %v10063
    %v10065 = vpop.f32.mrf.mxu0
    %10066 = vmatprep.mubr.f32.mxu0 0.0
    %v10067 = vand.u32 %v115, 4294901760
    %v10068 = vsub.f32 %v115, %v10067
    %10069 = vmatmul.mubr.f32.gmra.mxu0 %v10068
    %v10070 = vpop.f32.mrf.mxu0
    %v10071 = vadd.f32 %v9866, %v10070
    %v10072 = vpop.f32.mrf.mxu0
    %10073 = vmatprep.mubr.f32.mxu0 0.0
    %v10074 = vand.u32 %v116, 4294901760
    %v10075 = vsub.f32 %v116, %v10074
    %10076 = vmatmul.mubr.f32.gmra.mxu0 %v10075
    %v10077 = vpop.f32.mrf.mxu0
    %v10078 = vadd.f32 %v9872, %v10077
    %v10079 = vpop.f32.mrf.mxu0
    %10080 = vmatprep.mubr.f32.mxu0 0.0
    %v10081 = vand.u32 %v117, 4294901760
    %v10082 = vsub.f32 %v117, %v10081
    %10083 = vmatmul.mubr.f32.gmra.mxu0 %v10082
    %v10084 = vpop.f32.mrf.mxu0
    %v10085 = vadd.f32 %v9878, %v10084
    %v10086 = vpop.f32.mrf.mxu0
    %10087 = vmatprep.mubr.f32.mxu0 0.0
    %v10088 = vand.u32 %v118, 4294901760
    %v10089 = vsub.f32 %v118, %v10088
    %10090 = vmatmul.mubr.f32.gmra.mxu0 %v10089
    %v10091 = vpop.f32.mrf.mxu0
    %v10092 = vadd.f32 %v9884, %v10091
    %v10093 = vpop.f32.mrf.mxu0
    %10094 = vmatprep.mubr.f32.mxu0 0.0
    %v10095 = vand.u32 %v119, 4294901760
    %v10096 = vsub.f32 %v119, %v10095
    %10097 = vmatmul.mubr.f32.gmra.mxu0 %v10096
    %v10098 = vpop.f32.mrf.mxu0
    %v10099 = vadd.f32 %v9890, %v10098
    %v10100 = vpop.f32.mrf.mxu0
    %10101 = vdwg.mxu0
    %10102 = vmatprep.subr.mxu0 0.0
    %v10103 = vand.u32 %v4264, 4294901760
    %10104 = vmatpush1.msra.mxu0 %v10103
    %10105 = vmatprep.subr.mxu0 0.0
    %v10106 = vand.u32 %v4258, 4294901760
    %10107 = vmatpush1.msra.mxu0 %v10106
    %10108 = vmatprep.subr.mxu0 0.0
    %v10109 = vand.u32 %v4252, 4294901760
    %10110 = vmatpush1.msra.mxu0 %v10109
    %10111 = vmatprep.subr.mxu0 0.0
    %v10112 = vand.u32 %v4246, 4294901760
    %10113 = vmatpush1.msra.mxu0 %v10112
    %10114 = vmatprep.subr.mxu0 0.0
    %v10115 = vand.u32 %v4240, 4294901760
    %10116 = vmatpush1.msra.mxu0 %v10115
    %10117 = vmatprep.subr.mxu0 0.0
    %v10118 = vand.u32 %v4234, 4294901760
    %10119 = vmatpush1.msra.mxu0 %v10118
    %10120 = vmatprep.subr.mxu0 0.0
    %v10121 = vand.u32 %v4228, 4294901760
    %10122 = vmatpush1.msra.mxu0 %v10121
    %10123 = vmatprep.subr.mxu0 0.0
    %v10124 = vand.u32 %v4222, 4294901760
    %10125 = vmatpush1.msra.mxu0 %v10124
    %10126 = vmatprep.subr.mxu0 0.0
    %v10127 = vand.u32 %v4216, 4294901760
    %10128 = vmatpush1.msra.mxu0 %v10127
    %10129 = vmatprep.subr.mxu0 0.0
    %v10130 = vand.u32 %v4210, 4294901760
    %10131 = vmatpush1.msra.mxu0 %v10130
    %10132 = vmatprep.subr.mxu0 0.0
    %v10133 = vand.u32 %v4204, 4294901760
    %10134 = vmatpush1.msra.mxu0 %v10133
    %10135 = vmatprep.subr.mxu0 0.0
    %v10136 = vand.u32 %v4198, 4294901760
    %10137 = vmatpush1.msra.mxu0 %v10136
    %10138 = vmatprep.subr.mxu0 0.0
    %v10139 = vand.u32 %v4192, 4294901760
    %10140 = vmatpush1.msra.mxu0 %v10139
    %10141 = vmatprep.subr.mxu0 0.0
    %v10142 = vand.u32 %v4186, 4294901760
    %10143 = vmatpush1.msra.mxu0 %v10142
    %10144 = vmatprep.subr.mxu0 0.0
    %v10145 = vand.u32 %v4180, 4294901760
    %10146 = vmatpush1.msra.mxu0 %v10145
    %10147 = vmatprep.subr.mxu0 0.0
    %v10148 = vand.u32 %v4174, 4294901760
    %10149 = vmatpush1.msra.mxu0 %v10148
    %10150 = vmatprep.subr.mxu0 0.0
    %10151 = vmatpush2.msra.mxu0 0.0
    %10152 = vmatprep.subr.mxu0 0.0
    %10153 = vmatpush2.msra.mxu0 0.0
    %10154 = vmatprep.subr.mxu0 0.0
    %10155 = vmatpush2.msra.mxu0 0.0
    %10156 = vmatprep.subr.mxu0 0.0
    %10157 = vmatpush2.msra.mxu0 0.0
    %10158 = vmatprep.subr.mxu0 0.0
    %10159 = vmatpush2.msra.mxu0 0.0
    %10160 = vmatprep.subr.mxu0 0.0
    %10161 = vmatpush2.msra.mxu0 0.0
    %10162 = vmatprep.subr.mxu0 0.0
    %10163 = vmatpush2.msra.mxu0 0.0
    %10164 = vmatprep.subr.mxu0 0.0
    %10165 = vmatpush2.msra.mxu0 0.0
    %10166 = vmatprep.subr.mxu0 0.0
    %10167 = vmatpush2.msra.mxu0 0.0
    %10168 = vmatprep.subr.mxu0 0.0
    %10169 = vmatpush2.msra.mxu0 0.0
    %10170 = vmatprep.subr.mxu0 0.0
    %10171 = vmatpush2.msra.mxu0 0.0
    %10172 = vmatprep.subr.mxu0 0.0
    %10173 = vmatpush2.msra.mxu0 0.0
    %10174 = vmatprep.subr.mxu0 0.0
    %10175 = vmatpush2.msra.mxu0 0.0
    %10176 = vmatprep.subr.mxu0 0.0
    %10177 = vmatpush2.msra.mxu0 0.0
    %10178 = vmatprep.subr.mxu0 0.0
    %10179 = vmatpush2.msra.mxu0 0.0
    %10180 = vmatprep.subr.mxu0 0.0
    %10181 = vmatpush2.msra.mxu0 0.0
    %10182 = vmatprep.mubr.f32.mxu0 0.0
    %v10183 = vand.u32 %v104, 4294901760
    %v10184 = vsub.f32 %v104, %v10183
    %v10185 = vand.u32 %v10184, 4294901760
    %10186 = vmatmul.mubr.f32.gmra.mxu0 %v10185
    %v10187 = vpop.f32.mrf.mxu0
    %v10188 = vadd.f32 %v9994, %v10187
    %v10189 = vpop.f32.mrf.mxu0
    %10190 = vmatprep.mubr.f32.mxu0 0.0
    %v10191 = vand.u32 %v105, 4294901760
    %v10192 = vsub.f32 %v105, %v10191
    %v10193 = vand.u32 %v10192, 4294901760
    %10194 = vmatmul.mubr.f32.gmra.mxu0 %v10193
    %v10195 = vpop.f32.mrf.mxu0
    %v10196 = vadd.f32 %v10001, %v10195
    %v10197 = vpop.f32.mrf.mxu0
    %10198 = vmatprep.mubr.f32.mxu0 0.0
    %v10199 = vand.u32 %v106, 4294901760
    %v10200 = vsub.f32 %v106, %v10199
    %v10201 = vand.u32 %v10200, 4294901760
    %10202 = vmatmul.mubr.f32.gmra.mxu0 %v10201
    %v10203 = vpop.f32.mrf.mxu0
    %v10204 = vadd.f32 %v10008, %v10203
    %v10205 = vpop.f32.mrf.mxu0
    %10206 = vmatprep.mubr.f32.mxu0 0.0
    %v10207 = vand.u32 %v107, 4294901760
    %v10208 = vsub.f32 %v107, %v10207
    %v10209 = vand.u32 %v10208, 4294901760
    %10210 = vmatmul.mubr.f32.gmra.mxu0 %v10209
    %v10211 = vpop.f32.mrf.mxu0
    %v10212 = vadd.f32 %v10015, %v10211
    %v10213 = vpop.f32.mrf.mxu0
    %10214 = vmatprep.mubr.f32.mxu0 0.0
    %v10215 = vand.u32 %v108, 4294901760
    %v10216 = vsub.f32 %v108, %v10215
    %v10217 = vand.u32 %v10216, 4294901760
    %10218 = vmatmul.mubr.f32.gmra.mxu0 %v10217
    %v10219 = vpop.f32.mrf.mxu0
    %v10220 = vadd.f32 %v10022, %v10219
    %v10221 = vpop.f32.mrf.mxu0
    %10222 = vmatprep.mubr.f32.mxu0 0.0
    %v10223 = vand.u32 %v109, 4294901760
    %v10224 = vsub.f32 %v109, %v10223
    %v10225 = vand.u32 %v10224, 4294901760
    %10226 = vmatmul.mubr.f32.gmra.mxu0 %v10225
    %v10227 = vpop.f32.mrf.mxu0
    %v10228 = vadd.f32 %v10029, %v10227
    %v10229 = vpop.f32.mrf.mxu0
    %10230 = vmatprep.mubr.f32.mxu0 0.0
    %v10231 = vand.u32 %v110, 4294901760
    %v10232 = vsub.f32 %v110, %v10231
    %v10233 = vand.u32 %v10232, 4294901760
    %10234 = vmatmul.mubr.f32.gmra.mxu0 %v10233
    %v10235 = vpop.f32.mrf.mxu0
    %v10236 = vadd.f32 %v10036, %v10235
    %v10237 = vpop.f32.mrf.mxu0
    %10238 = vmatprep.mubr.f32.mxu0 0.0
    %v10239 = vand.u32 %v111, 4294901760
    %v10240 = vsub.f32 %v111, %v10239
    %v10241 = vand.u32 %v10240, 4294901760
    %10242 = vmatmul.mubr.f32.gmra.mxu0 %v10241
    %v10243 = vpop.f32.mrf.mxu0
    %v10244 = vadd.f32 %v10043, %v10243
    %v10245 = vpop.f32.mrf.mxu0
    %10246 = vmatprep.mubr.f32.mxu0 0.0
    %v10247 = vand.u32 %v112, 4294901760
    %v10248 = vsub.f32 %v112, %v10247
    %v10249 = vand.u32 %v10248, 4294901760
    %10250 = vmatmul.mubr.f32.gmra.mxu0 %v10249
    %v10251 = vpop.f32.mrf.mxu0
    %v10252 = vadd.f32 %v10050, %v10251
    %v10253 = vpop.f32.mrf.mxu0
    %10254 = vmatprep.mubr.f32.mxu0 0.0
    %v10255 = vand.u32 %v113, 4294901760
    %v10256 = vsub.f32 %v113, %v10255
    %v10257 = vand.u32 %v10256, 4294901760
    %10258 = vmatmul.mubr.f32.gmra.mxu0 %v10257
    %v10259 = vpop.f32.mrf.mxu0
    %v10260 = vadd.f32 %v10057, %v10259
    %v10261 = vpop.f32.mrf.mxu0
    %10262 = vmatprep.mubr.f32.mxu0 0.0
    %v10263 = vand.u32 %v114, 4294901760
    %v10264 = vsub.f32 %v114, %v10263
    %v10265 = vand.u32 %v10264, 4294901760
    %10266 = vmatmul.mubr.f32.gmra.mxu0 %v10265
    %v10267 = vpop.f32.mrf.mxu0
    %v10268 = vadd.f32 %v10064, %v10267
    %v10269 = vpop.f32.mrf.mxu0
    %10270 = vmatprep.mubr.f32.mxu0 0.0
    %v10271 = vand.u32 %v115, 4294901760
    %v10272 = vsub.f32 %v115, %v10271
    %v10273 = vand.u32 %v10272, 4294901760
    %10274 = vmatmul.mubr.f32.gmra.mxu0 %v10273
    %v10275 = vpop.f32.mrf.mxu0
    %v10276 = vadd.f32 %v10071, %v10275
    %v10277 = vpop.f32.mrf.mxu0
    %10278 = vmatprep.mubr.f32.mxu0 0.0
    %v10279 = vand.u32 %v116, 4294901760
    %v10280 = vsub.f32 %v116, %v10279
    %v10281 = vand.u32 %v10280, 4294901760
    %10282 = vmatmul.mubr.f32.gmra.mxu0 %v10281
    %v10283 = vpop.f32.mrf.mxu0
    %v10284 = vadd.f32 %v10078, %v10283
    %v10285 = vpop.f32.mrf.mxu0
    %10286 = vmatprep.mubr.f32.mxu0 0.0
    %v10287 = vand.u32 %v117, 4294901760
    %v10288 = vsub.f32 %v117, %v10287
    %v10289 = vand.u32 %v10288, 4294901760
    %10290 = vmatmul.mubr.f32.gmra.mxu0 %v10289
    %v10291 = vpop.f32.mrf.mxu0
    %v10292 = vadd.f32 %v10085, %v10291
    %v10293 = vpop.f32.mrf.mxu0
    %10294 = vmatprep.mubr.f32.mxu0 0.0
    %v10295 = vand.u32 %v118, 4294901760
    %v10296 = vsub.f32 %v118, %v10295
    %v10297 = vand.u32 %v10296, 4294901760
    %10298 = vmatmul.mubr.f32.gmra.mxu0 %v10297
    %v10299 = vpop.f32.mrf.mxu0
    %v10300 = vadd.f32 %v10092, %v10299
    %v10301 = vpop.f32.mrf.mxu0
    %10302 = vmatprep.mubr.f32.mxu0 0.0
    %v10303 = vand.u32 %v119, 4294901760
    %v10304 = vsub.f32 %v119, %v10303
    %v10305 = vand.u32 %v10304, 4294901760
    %10306 = vmatmul.mubr.f32.gmra.mxu0 %v10305
    %v10307 = vpop.f32.mrf.mxu0
    %v10308 = vadd.f32 %v10099, %v10307
    %v10309 = vpop.f32.mrf.mxu0
    %10310 = vdwg.mxu0
    %10311 = vmatprep.subr.mxu0 0.0
    %v10312 = vand.u32 %v4264, 4294901760
    %v10313 = vsub.f32 %v4264, %v10312
    %v10314 = vand.u32 %v10313, 4294901760
    %10315 = vmatpush1.msra.mxu0 %v10314
    %10316 = vmatprep.subr.mxu0 0.0
    %v10317 = vand.u32 %v4258, 4294901760
    %v10318 = vsub.f32 %v4258, %v10317
    %v10319 = vand.u32 %v10318, 4294901760
    %10320 = vmatpush1.msra.mxu0 %v10319
    %10321 = vmatprep.subr.mxu0 0.0
    %v10322 = vand.u32 %v4252, 4294901760
    %v10323 = vsub.f32 %v4252, %v10322
    %v10324 = vand.u32 %v10323, 4294901760
    %10325 = vmatpush1.msra.mxu0 %v10324
    %10326 = vmatprep.subr.mxu0 0.0
    %v10327 = vand.u32 %v4246, 4294901760
    %v10328 = vsub.f32 %v4246, %v10327
    %v10329 = vand.u32 %v10328, 4294901760
    %10330 = vmatpush1.msra.mxu0 %v10329
    %10331 = vmatprep.subr.mxu0 0.0
    %v10332 = vand.u32 %v4240, 4294901760
    %v10333 = vsub.f32 %v4240, %v10332
    %v10334 = vand.u32 %v10333, 4294901760
    %10335 = vmatpush1.msra.mxu0 %v10334
    %10336 = vmatprep.subr.mxu0 0.0
    %v10337 = vand.u32 %v4234, 4294901760
    %v10338 = vsub.f32 %v4234, %v10337
    %v10339 = vand.u32 %v10338, 4294901760
    %10340 = vmatpush1.msra.mxu0 %v10339
    %10341 = vmatprep.subr.mxu0 0.0
    %v10342 = vand.u32 %v4228, 4294901760
    %v10343 = vsub.f32 %v4228, %v10342
    %v10344 = vand.u32 %v10343, 4294901760
    %10345 = vmatpush1.msra.mxu0 %v10344
    %10346 = vmatprep.subr.mxu0 0.0
    %v10347 = vand.u32 %v4222, 4294901760
    %v10348 = vsub.f32 %v4222, %v10347
    %v10349 = vand.u32 %v10348, 4294901760
    %10350 = vmatpush1.msra.mxu0 %v10349
    %10351 = vmatprep.subr.mxu0 0.0
    %v10352 = vand.u32 %v4216, 4294901760
    %v10353 = vsub.f32 %v4216, %v10352
    %v10354 = vand.u32 %v10353, 4294901760
    %10355 = vmatpush1.msra.mxu0 %v10354
    %10356 = vmatprep.subr.mxu0 0.0
    %v10357 = vand.u32 %v4210, 4294901760
    %v10358 = vsub.f32 %v4210, %v10357
    %v10359 = vand.u32 %v10358, 4294901760
    %10360 = vmatpush1.msra.mxu0 %v10359
    %10361 = vmatprep.subr.mxu0 0.0
    %v10362 = vand.u32 %v4204, 4294901760
    %v10363 = vsub.f32 %v4204, %v10362
    %v10364 = vand.u32 %v10363, 4294901760
    %10365 = vmatpush1.msra.mxu0 %v10364
    %10366 = vmatprep.subr.mxu0 0.0
    %v10367 = vand.u32 %v4198, 4294901760
    %v10368 = vsub.f32 %v4198, %v10367
    %v10369 = vand.u32 %v10368, 4294901760
    %10370 = vmatpush1.msra.mxu0 %v10369
    %10371 = vmatprep.subr.mxu0 0.0
    %v10372 = vand.u32 %v4192, 4294901760
    %v10373 = vsub.f32 %v4192, %v10372
    %v10374 = vand.u32 %v10373, 4294901760
    %10375 = vmatpush1.msra.mxu0 %v10374
    %10376 = vmatprep.subr.mxu0 0.0
    %v10377 = vand.u32 %v4186, 4294901760
    %v10378 = vsub.f32 %v4186, %v10377
    %v10379 = vand.u32 %v10378, 4294901760
    %10380 = vmatpush1.msra.mxu0 %v10379
    %10381 = vmatprep.subr.mxu0 0.0
    %v10382 = vand.u32 %v4180, 4294901760
    %v10383 = vsub.f32 %v4180, %v10382
    %v10384 = vand.u32 %v10383, 4294901760
    %10385 = vmatpush1.msra.mxu0 %v10384
    %10386 = vmatprep.subr.mxu0 0.0
    %v10387 = vand.u32 %v4174, 4294901760
    %v10388 = vsub.f32 %v4174, %v10387
    %v10389 = vand.u32 %v10388, 4294901760
    %10390 = vmatpush1.msra.mxu0 %v10389
    %10391 = vmatprep.subr.mxu0 0.0
    %10392 = vmatpush2.msra.mxu0 0.0
    %10393 = vmatprep.subr.mxu0 0.0
    %10394 = vmatpush2.msra.mxu0 0.0
    %10395 = vmatprep.subr.mxu0 0.0
    %10396 = vmatpush2.msra.mxu0 0.0
    %10397 = vmatprep.subr.mxu0 0.0
    %10398 = vmatpush2.msra.mxu0 0.0
    %10399 = vmatprep.subr.mxu0 0.0
    %10400 = vmatpush2.msra.mxu0 0.0
    %10401 = vmatprep.subr.mxu0 0.0
    %10402 = vmatpush2.msra.mxu0 0.0
    %10403 = vmatprep.subr.mxu0 0.0
    %10404 = vmatpush2.msra.mxu0 0.0
    %10405 = vmatprep.subr.mxu0 0.0
    %10406 = vmatpush2.msra.mxu0 0.0
    %10407 = vmatprep.subr.mxu0 0.0
    %10408 = vmatpush2.msra.mxu0 0.0
    %10409 = vmatprep.subr.mxu0 0.0
    %10410 = vmatpush2.msra.mxu0 0.0
    %10411 = vmatprep.subr.mxu0 0.0
    %10412 = vmatpush2.msra.mxu0 0.0
    %10413 = vmatprep.subr.mxu0 0.0
    %10414 = vmatpush2.msra.mxu0 0.0
    %10415 = vmatprep.subr.mxu0 0.0
    %10416 = vmatpush2.msra.mxu0 0.0
    %10417 = vmatprep.subr.mxu0 0.0
    %10418 = vmatpush2.msra.mxu0 0.0
    %10419 = vmatprep.subr.mxu0 0.0
    %10420 = vmatpush2.msra.mxu0 0.0
    %10421 = vmatprep.subr.mxu0 0.0
    %10422 = vmatpush2.msra.mxu0 0.0
    %10423 = vmatprep.mubr.f32.mxu0 0.0
    %v10424 = vand.u32 %v104, 4294901760
    %10425 = vmatmul.mubr.f32.gmra.mxu0 %v10424
    %v10426 = vpop.f32.mrf.mxu0
    %v10427 = vadd.f32 %v10188, %v10426
    %v10428 = vpop.f32.mrf.mxu0
    %10429 = vmatprep.mubr.f32.mxu0 0.0
    %v10430 = vand.u32 %v105, 4294901760
    %10431 = vmatmul.mubr.f32.gmra.mxu0 %v10430
    %v10432 = vpop.f32.mrf.mxu0
    %v10433 = vadd.f32 %v10196, %v10432
    %v10434 = vpop.f32.mrf.mxu0
    %10435 = vmatprep.mubr.f32.mxu0 0.0
    %v10436 = vand.u32 %v106, 4294901760
    %10437 = vmatmul.mubr.f32.gmra.mxu0 %v10436
    %v10438 = vpop.f32.mrf.mxu0
    %v10439 = vadd.f32 %v10204, %v10438
    %v10440 = vpop.f32.mrf.mxu0
    %10441 = vmatprep.mubr.f32.mxu0 0.0
    %v10442 = vand.u32 %v107, 4294901760
    %10443 = vmatmul.mubr.f32.gmra.mxu0 %v10442
    %v10444 = vpop.f32.mrf.mxu0
    %v10445 = vadd.f32 %v10212, %v10444
    %v10446 = vpop.f32.mrf.mxu0
    %10447 = vmatprep.mubr.f32.mxu0 0.0
    %v10448 = vand.u32 %v108, 4294901760
    %10449 = vmatmul.mubr.f32.gmra.mxu0 %v10448
    %v10450 = vpop.f32.mrf.mxu0
    %v10451 = vadd.f32 %v10220, %v10450
    %v10452 = vpop.f32.mrf.mxu0
    %10453 = vmatprep.mubr.f32.mxu0 0.0
    %v10454 = vand.u32 %v109, 4294901760
    %10455 = vmatmul.mubr.f32.gmra.mxu0 %v10454
    %v10456 = vpop.f32.mrf.mxu0
    %v10457 = vadd.f32 %v10228, %v10456
    %v10458 = vpop.f32.mrf.mxu0
    %10459 = vmatprep.mubr.f32.mxu0 0.0
    %v10460 = vand.u32 %v110, 4294901760
    %10461 = vmatmul.mubr.f32.gmra.mxu0 %v10460
    %v10462 = vpop.f32.mrf.mxu0
    %v10463 = vadd.f32 %v10236, %v10462
    %v10464 = vpop.f32.mrf.mxu0
    %10465 = vmatprep.mubr.f32.mxu0 0.0
    %v10466 = vand.u32 %v111, 4294901760
    %10467 = vmatmul.mubr.f32.gmra.mxu0 %v10466
    %v10468 = vpop.f32.mrf.mxu0
    %v10469 = vadd.f32 %v10244, %v10468
    %v10470 = vpop.f32.mrf.mxu0
    %10471 = vmatprep.mubr.f32.mxu0 0.0
    %v10472 = vand.u32 %v112, 4294901760
    %10473 = vmatmul.mubr.f32.gmra.mxu0 %v10472
    %v10474 = vpop.f32.mrf.mxu0
    %v10475 = vadd.f32 %v10252, %v10474
    %v10476 = vpop.f32.mrf.mxu0
    %10477 = vmatprep.mubr.f32.mxu0 0.0
    %v10478 = vand.u32 %v113, 4294901760
    %10479 = vmatmul.mubr.f32.gmra.mxu0 %v10478
    %v10480 = vpop.f32.mrf.mxu0
    %v10481 = vadd.f32 %v10260, %v10480
    %v10482 = vpop.f32.mrf.mxu0
    %10483 = vmatprep.mubr.f32.mxu0 0.0
    %v10484 = vand.u32 %v114, 4294901760
    %10485 = vmatmul.mubr.f32.gmra.mxu0 %v10484
    %v10486 = vpop.f32.mrf.mxu0
    %v10487 = vadd.f32 %v10268, %v10486
    %v10488 = vpop.f32.mrf.mxu0
    %10489 = vmatprep.mubr.f32.mxu0 0.0
    %v10490 = vand.u32 %v115, 4294901760
    %10491 = vmatmul.mubr.f32.gmra.mxu0 %v10490
    %v10492 = vpop.f32.mrf.mxu0
    %v10493 = vadd.f32 %v10276, %v10492
    %v10494 = vpop.f32.mrf.mxu0
    %10495 = vmatprep.mubr.f32.mxu0 0.0
    %v10496 = vand.u32 %v116, 4294901760
    %10497 = vmatmul.mubr.f32.gmra.mxu0 %v10496
    %v10498 = vpop.f32.mrf.mxu0
    %v10499 = vadd.f32 %v10284, %v10498
    %v10500 = vpop.f32.mrf.mxu0
    %10501 = vmatprep.mubr.f32.mxu0 0.0
    %v10502 = vand.u32 %v117, 4294901760
    %10503 = vmatmul.mubr.f32.gmra.mxu0 %v10502
    %v10504 = vpop.f32.mrf.mxu0
    %v10505 = vadd.f32 %v10292, %v10504
    %v10506 = vpop.f32.mrf.mxu0
    %10507 = vmatprep.mubr.f32.mxu0 0.0
    %v10508 = vand.u32 %v118, 4294901760
    %10509 = vmatmul.mubr.f32.gmra.mxu0 %v10508
    %v10510 = vpop.f32.mrf.mxu0
    %v10511 = vadd.f32 %v10300, %v10510
    %v10512 = vpop.f32.mrf.mxu0
    %10513 = vmatprep.mubr.f32.mxu0 0.0
    %v10514 = vand.u32 %v119, 4294901760
    %10515 = vmatmul.mubr.f32.gmra.mxu0 %v10514
    %v10516 = vpop.f32.mrf.mxu0
    %v10517 = vadd.f32 %v10308, %v10516
    %v10518 = vpop.f32.mrf.mxu0
    %10519 = vdwg.mxu0
    %10520 = vmatprep.subr.mxu0 0.0
    %v10521 = vand.u32 %v4264, 4294901760
    %10522 = vmatpush1.msra.mxu0 %v10521
    %10523 = vmatprep.subr.mxu0 0.0
    %v10524 = vand.u32 %v4258, 4294901760
    %10525 = vmatpush1.msra.mxu0 %v10524
    %10526 = vmatprep.subr.mxu0 0.0
    %v10527 = vand.u32 %v4252, 4294901760
    %10528 = vmatpush1.msra.mxu0 %v10527
    %10529 = vmatprep.subr.mxu0 0.0
    %v10530 = vand.u32 %v4246, 4294901760
    %10531 = vmatpush1.msra.mxu0 %v10530
    %10532 = vmatprep.subr.mxu0 0.0
    %v10533 = vand.u32 %v4240, 4294901760
    %10534 = vmatpush1.msra.mxu0 %v10533
    %10535 = vmatprep.subr.mxu0 0.0
    %v10536 = vand.u32 %v4234, 4294901760
    %10537 = vmatpush1.msra.mxu0 %v10536
    %10538 = vmatprep.subr.mxu0 0.0
    %v10539 = vand.u32 %v4228, 4294901760
    %10540 = vmatpush1.msra.mxu0 %v10539
    %10541 = vmatprep.subr.mxu0 0.0
    %v10542 = vand.u32 %v4222, 4294901760
    %10543 = vmatpush1.msra.mxu0 %v10542
    %10544 = vmatprep.subr.mxu0 0.0
    %v10545 = vand.u32 %v4216, 4294901760
    %10546 = vmatpush1.msra.mxu0 %v10545
    %10547 = vmatprep.subr.mxu0 0.0
    %v10548 = vand.u32 %v4210, 4294901760
    %10549 = vmatpush1.msra.mxu0 %v10548
    %10550 = vmatprep.subr.mxu0 0.0
    %v10551 = vand.u32 %v4204, 4294901760
    %10552 = vmatpush1.msra.mxu0 %v10551
    %10553 = vmatprep.subr.mxu0 0.0
    %v10554 = vand.u32 %v4198, 4294901760
    %10555 = vmatpush1.msra.mxu0 %v10554
    %10556 = vmatprep.subr.mxu0 0.0
    %v10557 = vand.u32 %v4192, 4294901760
    %10558 = vmatpush1.msra.mxu0 %v10557
    %10559 = vmatprep.subr.mxu0 0.0
    %v10560 = vand.u32 %v4186, 4294901760
    %10561 = vmatpush1.msra.mxu0 %v10560
    %10562 = vmatprep.subr.mxu0 0.0
    %v10563 = vand.u32 %v4180, 4294901760
    %10564 = vmatpush1.msra.mxu0 %v10563
    %10565 = vmatprep.subr.mxu0 0.0
    %v10566 = vand.u32 %v4174, 4294901760
    %10567 = vmatpush1.msra.mxu0 %v10566
    %10568 = vmatprep.subr.mxu0 0.0
    %10569 = vmatpush2.msra.mxu0 0.0
    %10570 = vmatprep.subr.mxu0 0.0
    %10571 = vmatpush2.msra.mxu0 0.0
    %10572 = vmatprep.subr.mxu0 0.0
    %10573 = vmatpush2.msra.mxu0 0.0
    %10574 = vmatprep.subr.mxu0 0.0
    %10575 = vmatpush2.msra.mxu0 0.0
    %10576 = vmatprep.subr.mxu0 0.0
    %10577 = vmatpush2.msra.mxu0 0.0
    %10578 = vmatprep.subr.mxu0 0.0
    %10579 = vmatpush2.msra.mxu0 0.0
    %10580 = vmatprep.subr.mxu0 0.0
    %10581 = vmatpush2.msra.mxu0 0.0
    %10582 = vmatprep.subr.mxu0 0.0
    %10583 = vmatpush2.msra.mxu0 0.0
    %10584 = vmatprep.subr.mxu0 0.0
    %10585 = vmatpush2.msra.mxu0 0.0
    %10586 = vmatprep.subr.mxu0 0.0
    %10587 = vmatpush2.msra.mxu0 0.0
    %10588 = vmatprep.subr.mxu0 0.0
    %10589 = vmatpush2.msra.mxu0 0.0
    %10590 = vmatprep.subr.mxu0 0.0
    %10591 = vmatpush2.msra.mxu0 0.0
    %10592 = vmatprep.subr.mxu0 0.0
    %10593 = vmatpush2.msra.mxu0 0.0
    %10594 = vmatprep.subr.mxu0 0.0
    %10595 = vmatpush2.msra.mxu0 0.0
    %10596 = vmatprep.subr.mxu0 0.0
    %10597 = vmatpush2.msra.mxu0 0.0
    %10598 = vmatprep.subr.mxu0 0.0
    %10599 = vmatpush2.msra.mxu0 0.0
    %10600 = vmatprep.mubr.f32.mxu0 0.0
    %v10601 = vand.u32 %v104, 4294901760
    %10602 = vmatmul.mubr.f32.gmra.mxu0 %v10601
    %v10603 = vpop.f32.mrf.mxu0
    %v10604 = vadd.f32 %v10427, %v10603
    %v10605 = vpop.f32.mrf.mxu0
    %10606 = vmatprep.mubr.f32.mxu0 0.0
    %v10607 = vand.u32 %v105, 4294901760
    %10608 = vmatmul.mubr.f32.gmra.mxu0 %v10607
    %v10609 = vpop.f32.mrf.mxu0
    %v10610 = vadd.f32 %v10433, %v10609
    %v10611 = vpop.f32.mrf.mxu0
    %10612 = vmatprep.mubr.f32.mxu0 0.0
    %v10613 = vand.u32 %v106, 4294901760
    %10614 = vmatmul.mubr.f32.gmra.mxu0 %v10613
    %v10615 = vpop.f32.mrf.mxu0
    %v10616 = vadd.f32 %v10439, %v10615
    %v10617 = vpop.f32.mrf.mxu0
    %10618 = vmatprep.mubr.f32.mxu0 0.0
    %v10619 = vand.u32 %v107, 4294901760
    %10620 = vmatmul.mubr.f32.gmra.mxu0 %v10619
    %v10621 = vpop.f32.mrf.mxu0
    %v10622 = vadd.f32 %v10445, %v10621
    %v10623 = vpop.f32.mrf.mxu0
    %10624 = vmatprep.mubr.f32.mxu0 0.0
    %v10625 = vand.u32 %v108, 4294901760
    %10626 = vmatmul.mubr.f32.gmra.mxu0 %v10625
    %v10627 = vpop.f32.mrf.mxu0
    %v10628 = vadd.f32 %v10451, %v10627
    %v10629 = vpop.f32.mrf.mxu0
    %10630 = vmatprep.mubr.f32.mxu0 0.0
    %v10631 = vand.u32 %v109, 4294901760
    %10632 = vmatmul.mubr.f32.gmra.mxu0 %v10631
    %v10633 = vpop.f32.mrf.mxu0
    %v10634 = vadd.f32 %v10457, %v10633
    %v10635 = vpop.f32.mrf.mxu0
    %10636 = vmatprep.mubr.f32.mxu0 0.0
    %v10637 = vand.u32 %v110, 4294901760
    %10638 = vmatmul.mubr.f32.gmra.mxu0 %v10637
    %v10639 = vpop.f32.mrf.mxu0
    %v10640 = vadd.f32 %v10463, %v10639
    %v10641 = vpop.f32.mrf.mxu0
    %10642 = vmatprep.mubr.f32.mxu0 0.0
    %v10643 = vand.u32 %v111, 4294901760
    %10644 = vmatmul.mubr.f32.gmra.mxu0 %v10643
    %v10645 = vpop.f32.mrf.mxu0
    %v10646 = vadd.f32 %v10469, %v10645
    %v10647 = vpop.f32.mrf.mxu0
    %10648 = vmatprep.mubr.f32.mxu0 0.0
    %v10649 = vand.u32 %v112, 4294901760
    %10650 = vmatmul.mubr.f32.gmra.mxu0 %v10649
    %v10651 = vpop.f32.mrf.mxu0
    %v10652 = vadd.f32 %v10475, %v10651
    %v10653 = vpop.f32.mrf.mxu0
    %10654 = vmatprep.mubr.f32.mxu0 0.0
    %v10655 = vand.u32 %v113, 4294901760
    %10656 = vmatmul.mubr.f32.gmra.mxu0 %v10655
    %v10657 = vpop.f32.mrf.mxu0
    %v10658 = vadd.f32 %v10481, %v10657
    %v10659 = vpop.f32.mrf.mxu0
    %10660 = vmatprep.mubr.f32.mxu0 0.0
    %v10661 = vand.u32 %v114, 4294901760
    %10662 = vmatmul.mubr.f32.gmra.mxu0 %v10661
    %v10663 = vpop.f32.mrf.mxu0
    %v10664 = vadd.f32 %v10487, %v10663
    %v10665 = vpop.f32.mrf.mxu0
    %10666 = vmatprep.mubr.f32.mxu0 0.0
    %v10667 = vand.u32 %v115, 4294901760
    %10668 = vmatmul.mubr.f32.gmra.mxu0 %v10667
    %v10669 = vpop.f32.mrf.mxu0
    %v10670 = vadd.f32 %v10493, %v10669
    %v10671 = vpop.f32.mrf.mxu0
    %10672 = vmatprep.mubr.f32.mxu0 0.0
    %v10673 = vand.u32 %v116, 4294901760
    %10674 = vmatmul.mubr.f32.gmra.mxu0 %v10673
    %v10675 = vpop.f32.mrf.mxu0
    %v10676 = vadd.f32 %v10499, %v10675
    %v10677 = vpop.f32.mrf.mxu0
    %10678 = vmatprep.mubr.f32.mxu0 0.0
    %v10679 = vand.u32 %v117, 4294901760
    %10680 = vmatmul.mubr.f32.gmra.mxu0 %v10679
    %v10681 = vpop.f32.mrf.mxu0
    %v10682 = vadd.f32 %v10505, %v10681
    %v10683 = vpop.f32.mrf.mxu0
    %10684 = vmatprep.mubr.f32.mxu0 0.0
    %v10685 = vand.u32 %v118, 4294901760
    %10686 = vmatmul.mubr.f32.gmra.mxu0 %v10685
    %v10687 = vpop.f32.mrf.mxu0
    %v10688 = vadd.f32 %v10511, %v10687
    %v10689 = vpop.f32.mrf.mxu0
    %10690 = vmatprep.mubr.f32.mxu0 0.0
    %v10691 = vand.u32 %v119, 4294901760
    %10692 = vmatmul.mubr.f32.gmra.mxu0 %v10691
    %v10693 = vpop.f32.mrf.mxu0
    %v10694 = vadd.f32 %v10517, %v10693
    %v10695 = vpop.f32.mrf.mxu0
    %10696 = vdwg.mxu0
    %v10697 = vmul.f32 %v5460, %v5460
    %v10698 = vmul.f32 %v5466, %v5466
    %v10699 = vmul.f32 %v5472, %v5472
    %v10700 = vmul.f32 %v5478, %v5478
    %v10701 = vmul.f32 %v5484, %v5484
    %v10702 = vmul.f32 %v5490, %v5490
    %v10703 = vmul.f32 %v5496, %v5496
    %v10704 = vmul.f32 %v5502, %v5502
    %v10705 = vmul.f32 %v5508, %v5508
    %v10706 = vmul.f32 %v5514, %v5514
    %v10707 = vmul.f32 %v5520, %v5520
    %v10708 = vmul.f32 %v5526, %v5526
    %v10709 = vmul.f32 %v5532, %v5532
    %v10710 = vmul.f32 %v5538, %v5538
    %v10711 = vmul.f32 %v5544, %v5544
    %v10712 = vmul.f32 %v5550, %v5550
    %v10713 = vmul.f32 %v6746, %v6746
    %v10714 = vmul.f32 %v6752, %v6752
    %v10715 = vmul.f32 %v6758, %v6758
    %v10716 = vmul.f32 %v6764, %v6764
    %v10717 = vmul.f32 %v6770, %v6770
    %v10718 = vmul.f32 %v6776, %v6776
    %v10719 = vmul.f32 %v6782, %v6782
    %v10720 = vmul.f32 %v6788, %v6788
    %v10721 = vmul.f32 %v6794, %v6794
    %v10722 = vmul.f32 %v6800, %v6800
    %v10723 = vmul.f32 %v6806, %v6806
    %v10724 = vmul.f32 %v6812, %v6812
    %v10725 = vmul.f32 %v6818, %v6818
    %v10726 = vmul.f32 %v6824, %v6824
    %v10727 = vmul.f32 %v6830, %v6830
    %v10728 = vmul.f32 %v6836, %v6836
    %v10729 = vmul.f32 %v5460, %v6746
    %v10730 = vmul.f32 %v5466, %v6752
    %v10731 = vmul.f32 %v5472, %v6758
    %v10732 = vmul.f32 %v5478, %v6764
    %v10733 = vmul.f32 %v5484, %v6770
    %v10734 = vmul.f32 %v5490, %v6776
    %v10735 = vmul.f32 %v5496, %v6782
    %v10736 = vmul.f32 %v5502, %v6788
    %v10737 = vmul.f32 %v5508, %v6794
    %v10738 = vmul.f32 %v5514, %v6800
    %v10739 = vmul.f32 %v5520, %v6806
    %v10740 = vmul.f32 %v5526, %v6812
    %v10741 = vmul.f32 %v5532, %v6818
    %v10742 = vmul.f32 %v5538, %v6824
    %v10743 = vmul.f32 %v5544, %v6830
    %v10744 = vmul.f32 %v5550, %v6836
    %v10745 = vsub.f32 %v8032, %v10697
    %v10746 = vsub.f32 %v8038, %v10698
    %v10747 = vsub.f32 %v8044, %v10699
    %v10748 = vsub.f32 %v8050, %v10700
    %v10749 = vsub.f32 %v8056, %v10701
    %v10750 = vsub.f32 %v8062, %v10702
    %v10751 = vsub.f32 %v8068, %v10703
    %v10752 = vsub.f32 %v8074, %v10704
    %v10753 = vsub.f32 %v8080, %v10705
    %v10754 = vsub.f32 %v8086, %v10706
    %v10755 = vsub.f32 %v8092, %v10707
    %v10756 = vsub.f32 %v8098, %v10708
    %v10757 = vsub.f32 %v8104, %v10709
    %v10758 = vsub.f32 %v8110, %v10710
    %v10759 = vsub.f32 %v8116, %v10711
    %v10760 = vsub.f32 %v8122, %v10712
    %v10761 = vsub.f32 %v9318, %v10713
    %v10762 = vsub.f32 %v9324, %v10714
    %v10763 = vsub.f32 %v9330, %v10715
    %v10764 = vsub.f32 %v9336, %v10716
    %v10765 = vsub.f32 %v9342, %v10717
    %v10766 = vsub.f32 %v9348, %v10718
    %v10767 = vsub.f32 %v9354, %v10719
    %v10768 = vsub.f32 %v9360, %v10720
    %v10769 = vsub.f32 %v9366, %v10721
    %v10770 = vsub.f32 %v9372, %v10722
    %v10771 = vsub.f32 %v9378, %v10723
    %v10772 = vsub.f32 %v9384, %v10724
    %v10773 = vsub.f32 %v9390, %v10725
    %v10774 = vsub.f32 %v9396, %v10726
    %v10775 = vsub.f32 %v9402, %v10727
    %v10776 = vsub.f32 %v9408, %v10728
    %v10777 = vsub.f32 %v10604, %v10729
    %v10778 = vsub.f32 %v10610, %v10730
    %v10779 = vsub.f32 %v10616, %v10731
    %v10780 = vsub.f32 %v10622, %v10732
    %v10781 = vsub.f32 %v10628, %v10733
    %v10782 = vsub.f32 %v10634, %v10734
    %v10783 = vsub.f32 %v10640, %v10735
    %v10784 = vsub.f32 %v10646, %v10736
    %v10785 = vsub.f32 %v10652, %v10737
    %v10786 = vsub.f32 %v10658, %v10738
    %v10787 = vsub.f32 %v10664, %v10739
    %v10788 = vsub.f32 %v10670, %v10740
    %v10789 = vsub.f32 %v10676, %v10741
    %v10790 = vsub.f32 %v10682, %v10742
    %v10791 = vsub.f32 %v10688, %v10743
    %v10792 = vsub.f32 %v10694, %v10744
    %v10793 = vmul.f32 %v10729, 2.0
    %v10794 = vmul.f32 %v10730, 2.0
    %v10795 = vmul.f32 %v10731, 2.0
    %v10796 = vmul.f32 %v10732, 2.0
    %v10797 = vmul.f32 %v10733, 2.0
    %v10798 = vmul.f32 %v10734, 2.0
    %v10799 = vmul.f32 %v10735, 2.0
    %v10800 = vmul.f32 %v10736, 2.0
    %v10801 = vmul.f32 %v10737, 2.0
    %v10802 = vmul.f32 %v10738, 2.0
    %v10803 = vmul.f32 %v10739, 2.0
    %v10804 = vmul.f32 %v10740, 2.0
    %v10805 = vmul.f32 %v10741, 2.0
    %v10806 = vmul.f32 %v10742, 2.0
    %v10807 = vmul.f32 %v10743, 2.0
    %v10808 = vmul.f32 %v10744, 2.0
    %v10809 = vadd.f32 %v10793, 0.0001
    %v10810 = vadd.f32 %v10794, 0.0001
    %v10811 = vadd.f32 %v10795, 0.0001
    %v10812 = vadd.f32 %v10796, 0.0001
    %v10813 = vadd.f32 %v10797, 0.0001
    %v10814 = vadd.f32 %v10798, 0.0001
    %v10815 = vadd.f32 %v10799, 0.0001
    %v10816 = vadd.f32 %v10800, 0.0001
    %v10817 = vadd.f32 %v10801, 0.0001
    %v10818 = vadd.f32 %v10802, 0.0001
    %v10819 = vadd.f32 %v10803, 0.0001
    %v10820 = vadd.f32 %v10804, 0.0001
    %v10821 = vadd.f32 %v10805, 0.0001
    %v10822 = vadd.f32 %v10806, 0.0001
    %v10823 = vadd.f32 %v10807, 0.0001
    %v10824 = vadd.f32 %v10808, 0.0001
    %v10825 = vmul.f32 %v10777, 2.0
    %v10826 = vmul.f32 %v10778, 2.0
    %v10827 = vmul.f32 %v10779, 2.0
    %v10828 = vmul.f32 %v10780, 2.0
    %v10829 = vmul.f32 %v10781, 2.0
    %v10830 = vmul.f32 %v10782, 2.0
    %v10831 = vmul.f32 %v10783, 2.0
    %v10832 = vmul.f32 %v10784, 2.0
    %v10833 = vmul.f32 %v10785, 2.0
    %v10834 = vmul.f32 %v10786, 2.0
    %v10835 = vmul.f32 %v10787, 2.0
    %v10836 = vmul.f32 %v10788, 2.0
    %v10837 = vmul.f32 %v10789, 2.0
    %v10838 = vmul.f32 %v10790, 2.0
    %v10839 = vmul.f32 %v10791, 2.0
    %v10840 = vmul.f32 %v10792, 2.0
    %v10841 = vadd.f32 %v10825, 0.0009
    %v10842 = vadd.f32 %v10826, 0.0009
    %v10843 = vadd.f32 %v10827, 0.0009
    %v10844 = vadd.f32 %v10828, 0.0009
    %v10845 = vadd.f32 %v10829, 0.0009
    %v10846 = vadd.f32 %v10830, 0.0009
    %v10847 = vadd.f32 %v10831, 0.0009
    %v10848 = vadd.f32 %v10832, 0.0009
    %v10849 = vadd.f32 %v10833, 0.0009
    %v10850 = vadd.f32 %v10834, 0.0009
    %v10851 = vadd.f32 %v10835, 0.0009
    %v10852 = vadd.f32 %v10836, 0.0009
    %v10853 = vadd.f32 %v10837, 0.0009
    %v10854 = vadd.f32 %v10838, 0.0009
    %v10855 = vadd.f32 %v10839, 0.0009
    %v10856 = vadd.f32 %v10840, 0.0009
    %v10857 = vmul.f32 %v10809, %v10841
    %v10858 = vmul.f32 %v10810, %v10842
    %v10859 = vmul.f32 %v10811, %v10843
    %v10860 = vmul.f32 %v10812, %v10844
    %v10861 = vmul.f32 %v10813, %v10845
    %v10862 = vmul.f32 %v10814, %v10846
    %v10863 = vmul.f32 %v10815, %v10847
    %v10864 = vmul.f32 %v10816, %v10848
    %v10865 = vmul.f32 %v10817, %v10849
    %v10866 = vmul.f32 %v10818, %v10850
    %v10867 = vmul.f32 %v10819, %v10851
    %v10868 = vmul.f32 %v10820, %v10852
    %v10869 = vmul.f32 %v10821, %v10853
    %v10870 = vmul.f32 %v10822, %v10854
    %v10871 = vmul.f32 %v10823, %v10855
    %v10872 = vmul.f32 %v10824, %v10856
    %v10873 = vadd.f32 %v10697, %v10713
    %v10874 = vadd.f32 %v10698, %v10714
    %v10875 = vadd.f32 %v10699, %v10715
    %v10876 = vadd.f32 %v10700, %v10716
    %v10877 = vadd.f32 %v10701, %v10717
    %v10878 = vadd.f32 %v10702, %v10718
    %v10879 = vadd.f32 %v10703, %v10719
    %v10880 = vadd.f32 %v10704, %v10720
    %v10881 = vadd.f32 %v10705, %v10721
    %v10882 = vadd.f32 %v10706, %v10722
    %v10883 = vadd.f32 %v10707, %v10723
    %v10884 = vadd.f32 %v10708, %v10724
    %v10885 = vadd.f32 %v10709, %v10725
    %v10886 = vadd.f32 %v10710, %v10726
    %v10887 = vadd.f32 %v10711, %v10727
    %v10888 = vadd.f32 %v10712, %v10728
    %v10889 = vadd.f32 %v10873, 0.0001
    %v10890 = vadd.f32 %v10874, 0.0001
    %v10891 = vadd.f32 %v10875, 0.0001
    %v10892 = vadd.f32 %v10876, 0.0001
    %v10893 = vadd.f32 %v10877, 0.0001
    %v10894 = vadd.f32 %v10878, 0.0001
    %v10895 = vadd.f32 %v10879, 0.0001
    %v10896 = vadd.f32 %v10880, 0.0001
    %v10897 = vadd.f32 %v10881, 0.0001
    %v10898 = vadd.f32 %v10882, 0.0001
    %v10899 = vadd.f32 %v10883, 0.0001
    %v10900 = vadd.f32 %v10884, 0.0001
    %v10901 = vadd.f32 %v10885, 0.0001
    %v10902 = vadd.f32 %v10886, 0.0001
    %v10903 = vadd.f32 %v10887, 0.0001
    %v10904 = vadd.f32 %v10888, 0.0001
    %v10905 = vadd.f32 %v10745, %v10761
    %v10906 = vadd.f32 %v10746, %v10762
    %v10907 = vadd.f32 %v10747, %v10763
    %v10908 = vadd.f32 %v10748, %v10764
    %v10909 = vadd.f32 %v10749, %v10765
    %v10910 = vadd.f32 %v10750, %v10766
    %v10911 = vadd.f32 %v10751, %v10767
    %v10912 = vadd.f32 %v10752, %v10768
    %v10913 = vadd.f32 %v10753, %v10769
    %v10914 = vadd.f32 %v10754, %v10770
    %v10915 = vadd.f32 %v10755, %v10771
    %v10916 = vadd.f32 %v10756, %v10772
    %v10917 = vadd.f32 %v10757, %v10773
    %v10918 = vadd.f32 %v10758, %v10774
    %v10919 = vadd.f32 %v10759, %v10775
    %v10920 = vadd.f32 %v10760, %v10776
    %v10921 = vadd.f32 %v10905, 0.0009
    %v10922 = vadd.f32 %v10906, 0.0009
    %v10923 = vadd.f32 %v10907, 0.0009
    %v10924 = vadd.f32 %v10908, 0.0009
    %v10925 = vadd.f32 %v10909, 0.0009
    %v10926 = vadd.f32 %v10910, 0.0009
    %v10927 = vadd.f32 %v10911, 0.0009
    %v10928 = vadd.f32 %v10912, 0.0009
    %v10929 = vadd.f32 %v10913, 0.0009
    %v10930 = vadd.f32 %v10914, 0.0009
    %v10931 = vadd.f32 %v10915, 0.0009
    %v10932 = vadd.f32 %v10916, 0.0009
    %v10933 = vadd.f32 %v10917, 0.0009
    %v10934 = vadd.f32 %v10918, 0.0009
    %v10935 = vadd.f32 %v10919, 0.0009
    %v10936 = vadd.f32 %v10920, 0.0009
    %v10937 = vmul.f32 %v10889, %v10921
    %v10938 = vmul.f32 %v10890, %v10922
    %v10939 = vmul.f32 %v10891, %v10923
    %v10940 = vmul.f32 %v10892, %v10924
    %v10941 = vmul.f32 %v10893, %v10925
    %v10942 = vmul.f32 %v10894, %v10926
    %v10943 = vmul.f32 %v10895, %v10927
    %v10944 = vmul.f32 %v10896, %v10928
    %v10945 = vmul.f32 %v10897, %v10929
    %v10946 = vmul.f32 %v10898, %v10930
    %v10947 = vmul.f32 %v10899, %v10931
    %v10948 = vmul.f32 %v10900, %v10932
    %v10949 = vmul.f32 %v10901, %v10933
    %v10950 = vmul.f32 %v10902, %v10934
    %v10951 = vmul.f32 %v10903, %v10935
    %v10952 = vmul.f32 %v10904, %v10936
    %v10953 = vrcp.pop %v10937
    %v10954 = vmul.f32 %v10857, %v10953
    %v10955 = vrcp.pop %v10938
    %v10956 = vmul.f32 %v10858, %v10955
    %v10957 = vrcp.pop %v10939
    %v10958 = vmul.f32 %v10859, %v10957
    %v10959 = vrcp.pop %v10940
    %v10960 = vmul.f32 %v10860, %v10959
    %v10961 = vrcp.pop %v10941
    %v10962 = vmul.f32 %v10861, %v10961
    %v10963 = vrcp.pop %v10942
    %v10964 = vmul.f32 %v10862, %v10963
    %v10965 = vrcp.pop %v10943
    %v10966 = vmul.f32 %v10863, %v10965
    %v10967 = vrcp.pop %v10944
    %v10968 = vmul.f32 %v10864, %v10967
    %v10969 = vrcp.pop %v10945
    %v10970 = vmul.f32 %v10865, %v10969
    %v10971 = vrcp.pop %v10946
    %v10972 = vmul.f32 %v10866, %v10971
    %v10973 = vrcp.pop %v10947
    %v10974 = vmul.f32 %v10867, %v10973
    %v10975 = vrcp.pop %v10948
    %v10976 = vmul.f32 %v10868, %v10975
    %v10977 = vrcp.pop %v10949
    %v10978 = vmul.f32 %v10869, %v10977
    %v10979 = vrcp.pop %v10950
    %v10980 = vmul.f32 %v10870, %v10979
    %v10981 = vrcp.pop %v10951
    %v10982 = vmul.f32 %v10871, %v10981
    %v10983 = vrcp.pop %v10952
    %v10984 = vmul.f32 %v10872, %v10983
    %v10985 = vsel %vm170, %v10954, 0.0
    %v10986 = vsel %vm170, %v10956, 0.0
    %v10987 = vadd.f32 %v10985, %v10986
    %v10988 = vrot.slane %v10987, 4
    %v10989 = vadd.f32 %v10987, %v10988
    %v10990 = vrot.slane %v10989, 2
    %v10991 = vadd.f32 %v10989, %v10990
    %v10992 = vrot.slane %v10991, 1
    %v10993 = vadd.f32 %v10991, %v10992
    %v10994 = vsel %vm170, %v10958, 0.0
    %v10995 = vsel %vm170, %v10960, 0.0
    %v10996 = vadd.f32 %v10994, %v10995
    %v10997 = vrot.slane %v10996, 4
    %v10998 = vadd.f32 %v10996, %v10997
    %v10999 = vrot.slane %v10998, 2
    %v11000 = vadd.f32 %v10998, %v10999
    %v11001 = vrot.slane %v11000, 1
    %v11002 = vadd.f32 %v11000, %v11001
    %v11003 = vsel %vm170, %v10962, 0.0
    %v11004 = vsel %vm170, %v10964, 0.0
    %v11005 = vadd.f32 %v11003, %v11004
    %v11006 = vrot.slane %v11005, 4
    %v11007 = vadd.f32 %v11005, %v11006
    %v11008 = vrot.slane %v11007, 2
    %v11009 = vadd.f32 %v11007, %v11008
    %v11010 = vrot.slane %v11009, 1
    %v11011 = vadd.f32 %v11009, %v11010
    %v11012 = vsel %vm170, %v10966, 0.0
    %v11013 = vsel %vm170, %v10968, 0.0
    %v11014 = vadd.f32 %v11012, %v11013
    %v11015 = vrot.slane %v11014, 4
    %v11016 = vadd.f32 %v11014, %v11015
    %v11017 = vrot.slane %v11016, 2
    %v11018 = vadd.f32 %v11016, %v11017
    %v11019 = vrot.slane %v11018, 1
    %v11020 = vadd.f32 %v11018, %v11019
    %v11021 = vsel %vm170, %v10970, 0.0
    %v11022 = vsel %vm170, %v10972, 0.0
    %v11023 = vadd.f32 %v11021, %v11022
    %v11024 = vrot.slane %v11023, 4
    %v11025 = vadd.f32 %v11023, %v11024
    %v11026 = vrot.slane %v11025, 2
    %v11027 = vadd.f32 %v11025, %v11026
    %v11028 = vrot.slane %v11027, 1
    %v11029 = vadd.f32 %v11027, %v11028
    %v11030 = vsel %vm170, %v10974, 0.0
    %v11031 = vsel %vm170, %v10976, 0.0
    %v11032 = vadd.f32 %v11030, %v11031
    %v11033 = vrot.slane %v11032, 4
    %v11034 = vadd.f32 %v11032, %v11033
    %v11035 = vrot.slane %v11034, 2
    %v11036 = vadd.f32 %v11034, %v11035
    %v11037 = vrot.slane %v11036, 1
    %v11038 = vadd.f32 %v11036, %v11037
    %v11039 = vsel %vm170, %v10978, 0.0
    %v11040 = vsel %vm170, %v10980, 0.0
    %v11041 = vadd.f32 %v11039, %v11040
    %v11042 = vrot.slane %v11041, 4
    %v11043 = vadd.f32 %v11041, %v11042
    %v11044 = vrot.slane %v11043, 2
    %v11045 = vadd.f32 %v11043, %v11044
    %v11046 = vrot.slane %v11045, 1
    %v11047 = vadd.f32 %v11045, %v11046
    %v11048 = vsel %vm170, %v10982, 0.0
    %v11049 = vsel %vm170, %v10984, 0.0
    %v11050 = vadd.f32 %v11048, %v11049
    %v11051 = vrot.slane %v11050, 4
    %v11052 = vadd.f32 %v11050, %v11051
    %v11053 = vrot.slane %v11052, 2
    %v11054 = vadd.f32 %v11052, %v11053
    %v11055 = vrot.slane %v11054, 1
    %v11056 = vadd.f32 %v11054, %v11055
    %vm11057 = vcmask 122880
    %11058 = vst.msk [vmem:[%s4] sm:$0x1] %vm11057, %v10993
    %11059 = vst.msk [vmem:[%s4 + $0x1] sm:$0x1] %vm11057, %v11002
    %11060 = vst.msk [vmem:[%s4 + $0x2] sm:$0x1] %vm11057, %v11011
    %11061 = vst.msk [vmem:[%s4 + $0x3] sm:$0x1] %vm11057, %v11020
    %11062 = vst.msk [vmem:[%s4 + $0x4] sm:$0x1] %vm11057, %v11029
    %11063 = vst.msk [vmem:[%s4 + $0x5] sm:$0x1] %vm11057, %v11038
    %11064 = vst.msk [vmem:[%s4 + $0x6] sm:$0x1] %vm11057, %v11047
    %11065 = vst.msk [vmem:[%s4 + $0x7] sm:$0x1] %vm11057, %v11056
    // Predicated region
    $region34: #{ssim.1} parent=1 // pred_check
      _
    $region35: #{ssim.1} parent=1 // pred_check_branch
      %11067 = sbr.rel (0) target = $region37
    $region36: #{ssim.1} parent=1 // pred_region
      _
    $region37: #{ssim.1} parent=1 // pred_fallthru
      _
    // Predicated region
    $region38: #{ssim.1} parent=1 // pred_check
      _
    $region39: #{ssim.1} parent=1 // pred_check_branch
      %11069 = sbr.rel (0) target = $region41
    $region40: #{ssim.1} parent=1 // pred_region
      _
    $region41: #{ssim.1} parent=1 // pred_fallthru
      _
    %11070 = vsyncpa [#allocation3], 1
    %11071 = vsyncpa [#allocation5], 1
    %11072 = vsyncpa [#allocation8], 1

</llo_original>
